<compile_context>
chip_gen: v5e
topology: v5e:2x2
jax: 0.10.0
libtpu: 0.0.40
codegen_flags: <defaults>
</compile_context>

<pallas_src>
import functools

import jax
import jax.numpy as jnp
from jax.experimental import pallas as pl
from jax.experimental.pallas import tpu as pltpu

KSIZE = 3
GROUPS = 64      # hard-coded in the PyTorch module (group_conv groups=64)
BN_EPS = 1e-5


# ---------------------------------------------------------------------------
# Pallas kernel: per-step im2col -> one shared-weight MXU matmul -> per-sample
# output mixing with SMEM-prefetched softmax gates.
# ---------------------------------------------------------------------------
def _paradise_b_kernel(mix_ref, x_ref, w_ref, b_ref, out_ref, col_ref, y_ref, *,
                       b_tile, h, w, cin, cout):
    """One grid step processes b_tile samples.

    mix_ref : SMEM (4*N_pad,) f32               flattened softmax gates (prefetch)
    x_ref   : VMEM (b_tile, H+2, W+2, Cin) bf16 zero-padded NHWC activations
    w_ref   : VMEM (9*Cin, 4*Cout) bf16         fused conv+BN weights, branches on N
    b_ref   : VMEM (4, Cout) f32                fused conv+BN biases per branch
    out_ref : VMEM (b_tile, H*W, Cout)          output block
    col_ref : VMEM (b_tile*H*W, 9*Cin) bf16     im2col slab (scratch)
    y_ref   : VMEM (b_tile*H*W, 4*Cout) f32     per-branch conv outputs (scratch)
    """
    hw = h * w
    m_rows = b_tile * hw

    # 1) Build the im2col slab once per grid step (9 shifted-window copies total,
    #    not 9*b_tile): column block t holds conv tap (dy, dx) for every sample/pixel.
    for t in range(KSIZE * KSIZE):
        dy, dx = t // KSIZE, t % KSIZE
        col_ref[:, t * cin:(t + 1) * cin] = (
            x_ref[:, dy:dy + h, dx:dx + w, :].reshape(m_rows, cin))

    # 2) One shared-weight MXU matmul covering all folded samples and all 4 branches:
    #    M = b_tile*H*W, K = 9*Cin, N = 4*Cout.  bf16 operands, f32 accumulation.
    y_ref[...] = jnp.dot(col_ref[...], w_ref[...],
                         preferred_element_type=jnp.float32)

    # 3) Per-sample output mixing on the VPU (4 scalar*vector FMAs + bias per sample;
    #    ~64x cheaper than the old per-sample weight mixing).  Each unrolled iteration
    #    ends in a store, so vreg live ranges stay bounded.
    g = pl.program_id(0)
    for b in range(b_tile):
        n = g * b_tile + b
        m0 = mix_ref[4 * n + 0]
        m1 = mix_ref[4 * n + 1]
        m2 = mix_ref[4 * n + 2]
        m3 = mix_ref[4 * n + 3]
        bm = (m0 * b_ref[0:1, :] + m1 * b_ref[1:2, :]
              + m2 * b_ref[2:3, :] + m3 * b_ref[3:4, :])           # (1, Cout) f32
        r0, r1 = b * hw, (b + 1) * hw
        out_ref[b] = (m0 * y_ref[r0:r1, 0 * cout:1 * cout]
                      + m1 * y_ref[r0:r1, 1 * cout:2 * cout]
                      + m2 * y_ref[r0:r1, 2 * cout:3 * cout]
                      + m3 * y_ref[r0:r1, 3 * cout:4 * cout]
                      + bm).astype(out_ref.dtype)


def paradise_b_conv(x_nchw, params, *, b_tile=8, out_dtype=jnp.float32):
    """Runs the ParaDiseBConv forward. x_nchw: (N, Cin, H, W) float32."""
    N, Cin, H, W = x_nchw.shape
    w_cat = params["w_cat"]                      # (9*Cin, 4*Cout) bf16
    b_cat = params["b_cat"]                      # (4, Cout) f32
    Cout = b_cat.shape[-1]

    # ---- Gate: GAP -> FC -> ReLU -> FC -> softmax.  Tiny; computed in XLA and
    # handed to the kernel as an SMEM scalar-prefetch operand. ----
    gap = jnp.mean(x_nchw, axis=(2, 3))                                    # (N, Cin)
    h1 = jnp.maximum(gap @ params["wfc1"] + params["bfc1"], 0.0)
    mix = jax.nn.softmax(h1 @ params["wfc2"] + params["bfc2"], axis=-1)    # (N, 4)
    mix = mix.astype(jnp.float32)

    # ---- NCHW -> NHWC, bf16, spatial zero-pad (one fused XLA pass producing the
    # activation slab the kernel streams exactly once). ----
    x = jnp.transpose(x_nchw, (0, 2, 3, 1)).astype(jnp.bfloat16)
    xpad = jnp.pad(x, ((0, 0), (1, 1), (1, 1), (0, 0)))

    # ---- Fold several samples per grid step, but keep >= 2 grid steps whenever
    # possible so v7x's two TensorCores both get work on the "parallel" axis. ----
    if b_tile > 1:
        b_tile = max(1, min(b_tile, N // 2))
    n_pad = pl.cdiv(N, b_tile) * b_tile
    if n_pad != N:
        # mix is padded with zeros AFTER the softmax: padded samples produce exact
        # zeros (zero gates, zero bias) and are sliced off below.
        xpad = jnp.pad(xpad, ((0, n_pad - N), (0, 0), (0, 0), (0, 0)))
        mix = jnp.pad(mix, ((0, n_pad - N), (0, 0)))
    mix_flat = mix.reshape(-1)                   # 1-D prefetch (no 2-D SMEM padding)

    Hp, Wp = H + 2, W + 2
    m_rows = b_tile * H * W
    grid = (n_pad // b_tile,)

    out_isz = jnp.dtype(out_dtype).itemsize
    flops = 2 * n_pad * H * W * (KSIZE * KSIZE * Cin) * (4 * Cout)
    bytes_accessed = (n_pad * Hp * Wp * Cin * 2            # bf16 activations
                      + KSIZE * KSIZE * Cin * 4 * Cout * 2  # bf16 weights (read once)
                      + 4 * Cout * 4                        # f32 biases
                      + n_pad * H * W * Cout * out_isz      # output
                      + n_pad * 4 * 4)                      # gate scalars
    vmem_bytes = int(2 * b_tile * Hp * Wp * Cin * 2 * 2     # dbl-buffered x (+ layout pad margin)
                     + 2 * b_tile * H * W * Cout * out_isz  # dbl-buffered out
                     + KSIZE * KSIZE * Cin * 4 * Cout * 2   # resident bf16 weights (single copy)
                     + 4 * Cout * 4                         # resident bias
                     + m_rows * KSIZE * KSIZE * Cin * 2     # im2col scratch
                     + m_rows * 4 * Cout * 4                # branch-output scratch
                     + (16 << 20))
    vmem_bytes = min(vmem_bytes, 128 << 20)

    kernel = functools.partial(_paradise_b_kernel, b_tile=b_tile,
                               h=H, w=W, cin=Cin, cout=Cout)
    out = pl.pallas_call(
        kernel,
        out_shape=jax.ShapeDtypeStruct((n_pad, H * W, Cout), out_dtype),
        grid_spec=pltpu.PrefetchScalarGridSpec(
            num_scalar_prefetch=1,               # flat gates land in SMEM
            grid=grid,
            in_specs=[
                pl.BlockSpec((b_tile, Hp, Wp, Cin), lambda g, _mix: (g, 0, 0, 0)),
                # Weights/bias never change across the grid: keep a single fully
                # resident VMEM copy (no double buffering).
                pl.BlockSpec(memory_space=pltpu.MemorySpace.VMEM),
                pl.BlockSpec(memory_space=pltpu.MemorySpace.VMEM),
            ],
            out_specs=pl.BlockSpec((b_tile, H * W, Cout), lambda g, _mix: (g, 0, 0)),
            scratch_shapes=[
                pltpu.VMEM((m_rows, KSIZE * KSIZE * Cin), jnp.bfloat16),  # im2col
                pltpu.VMEM((m_rows, 4 * Cout), jnp.float32),              # branch outs
            ]),
        compiler_params=pltpu.CompilerParams(
            dimension_semantics=("parallel",),
            vmem_limit_bytes=vmem_bytes),
        cost_estimate=pl.CostEstimate(flops=int(flops), transcendentals=0,
                                      bytes_accessed=int(bytes_accessed)),
    )(mix_flat, xpad, w_cat, b_cat)

    out = out[:N].reshape(N, H, W, Cout)
    # TODO(synk): if the surrounding model is NHWC, return `out` directly and skip
    # this transpose (one full extra HBM pass at these memory-bound shapes).
    return jnp.transpose(out, (0, 3, 1, 2))       # back to NCHW


# ---------------------------------------------------------------------------
# Deterministic parameter construction (mirrors module __init__ shapes)
# ---------------------------------------------------------------------------
def make_raw_params(key, in_channels, out_channels):
    assert in_channels % GROUPS == 0 and out_channels % GROUPS == 0
    keys = iter(jax.random.split(key, 40))
    Cin, Cout = in_channels, out_channels

    def w(shape, scale=0.05):
        return scale * jax.random.normal(next(keys), shape, jnp.float32)

    def bn(c):
        gamma = 1.0 + 0.1 * jax.random.normal(next(keys), (c,), jnp.float32)
        beta = 0.1 * jax.random.normal(next(keys), (c,), jnp.float32)
        mean = 0.1 * jax.random.normal(next(keys), (c,), jnp.float32)
        var = 1.0 + 0.1 * jax.random.uniform(next(keys), (c,), jnp.float32)
        return gamma, beta, mean, var

    raw = {
        "ori_w": w((Cout, Cin, 3, 3)), "ori_bn": bn(Cout),
        "new_w": w((Cout, Cin, 3, 3)), "new_bn": bn(Cout),
        "sq_w":  w((Cout, Cin, 3, 3)), "sq_bn":  bn(Cout),
        "ver_w": w((Cout, Cin, 3, 1)), "ver_bn": bn(Cout),
        "hor_w": w((Cout, Cin, 1, 3)), "hor_bn": bn(Cout),
        "grp_w": w((Cout, Cin // GROUPS, 3, 3)), "grp_bn": bn(Cout),
        "fc1_w": w((Cin // 4, Cin), scale=0.1),
        "fc1_b": 0.05 * jax.random.normal(next(keys), (Cin // 4,), jnp.float32),
        "fc2_w": w((4, Cin // 4), scale=0.1),
        "fc2_b": 0.05 * jax.random.normal(next(keys), (4,), jnp.float32),
    }
    return raw


def _fuse_conv_bn(w, bn):
    gamma, beta, mean, var = bn
    scale = gamma / jnp.sqrt(var + BN_EPS)
    return w * scale[:, None, None, None], beta - scale * mean


def build_kernel_params(raw, in_channels, out_channels):
    Cin, Cout = in_channels, out_channels
    w_ori, b_ori = _fuse_conv_bn(raw["ori_w"], raw["ori_bn"])
    w_new, b_new = _fuse_conv_bn(raw["new_w"], raw["new_bn"])

    # ACBlock (kernel=3, pad=1): 3x3 + 3x1(pad (1,0)) + 1x3(pad (0,1)), each conv+BN, summed.
    w_sq, b_sq = _fuse_conv_bn(raw["sq_w"], raw["sq_bn"])
    w_ver, b_ver = _fuse_conv_bn(raw["ver_w"], raw["ver_bn"])
    w_hor, b_hor = _fuse_conv_bn(raw["hor_w"], raw["hor_bn"])
    w_ac = w_sq.at[:, :, :, 1:2].add(w_ver).at[:, :, 1:2, :].add(w_hor)
    b_ac = b_sq + b_ver + b_hor

    # group conv -> equivalent standard (block-diagonal) conv, then fuse its BN.
    in_pg, out_pg = Cin // GROUPS, Cout // GROUPS
    grp_std = jnp.zeros((GROUPS, out_pg, GROUPS, in_pg, 3, 3), jnp.float32)
    gidx = jnp.arange(GROUPS)
    grp_std = grp_std.at[gidx, :, gidx, :, :, :].set(
        raw["grp_w"].reshape(GROUPS, out_pg, in_pg, 3, 3))
    grp_std = grp_std.reshape(Cout, Cin, 3, 3)
    w_grp, b_grp = _fuse_conv_bn(grp_std, raw["grp_bn"])

    def to_tap(w):   # (Cout, Cin, kh, kw) -> (9, Cin, Cout), tap-major (dy*3+dx)
        return jnp.transpose(w, (2, 3, 1, 0)).reshape(KSIZE * KSIZE, Cin, Cout)

    w_all = jnp.stack([to_tap(w_ori), to_tap(w_new),
                       to_tap(w_ac), to_tap(w_grp)], 0)            # (4, 9, Cin, Cout)
    # Branches concatenated along the matmul N dim:
    #   W_cat[t*Cin + ci, br*Cout + co] = W[br, t, ci, co]
    w_cat = jnp.transpose(w_all, (1, 2, 0, 3)).reshape(
        KSIZE * KSIZE * Cin, 4 * Cout).astype(jnp.bfloat16)
    b_cat = jnp.stack([b_ori, b_new, b_ac, b_grp], 0)              # (4, Cout) f32

    return {
        "w_cat": w_cat, "b_cat": b_cat,
        "wfc1": raw["fc1_w"].T, "bfc1": raw["fc1_b"][None, :],
        "wfc2": raw["fc2_w"].T, "bfc2": raw["fc2_b"][None, :],
    }


# ---------------------------------------------------------------------------
# Pure-JAX reference mimicking the PyTorch non-deploy forward (eval-mode BN)
# ---------------------------------------------------------------------------
def reference_forward(x, raw):
    dn = ("NCHW", "OIHW", "NCHW")

    def conv(xx, ww, padding, groups=1):
        return jax.lax.conv_general_dilated(
            xx, ww, window_strides=(1, 1), padding=padding,
            dimension_numbers=dn, feature_group_count=groups)

    def bn(y, p):
        gamma, beta, mean, var = p
        inv = gamma / jnp.sqrt(var + BN_EPS)
        return inv[None, :, None, None] * (y - mean[None, :, None, None]) \
            + beta[None, :, None, None]

    gap = x.mean(axis=(2, 3))
    h1 = jnp.maximum(gap @ raw["fc1_w"].T + raw["fc1_b"], 0.0)
    wts = jax.nn.softmax(h1 @ raw["fc2_w"].T + raw["fc2_b"], axis=1)        # (N, 4)

    p11 = ((1, 1), (1, 1))
    ori = bn(conv(x, raw["ori_w"], p11), raw["ori_bn"])
    new = bn(conv(x, raw["new_w"], p11), raw["new_bn"])
    ac = (bn(conv(x, raw["sq_w"], p11), raw["sq_bn"])
          + bn(conv(x, raw["ver_w"], ((1, 1), (0, 0))), raw["ver_bn"])
          + bn(conv(x, raw["hor_w"], ((0, 0), (1, 1))), raw["hor_bn"]))
    grp = bn(conv(x, raw["grp_w"], p11, groups=GROUPS), raw["grp_bn"])
    all_out = jnp.stack([ori, new, ac, grp], axis=1)                        # (N,4,Cout,H,W)
    return (wts[:, :, None, None, None] * all_out).sum(axis=1)


if __name__ == "__main__":
    # group_conv has groups=64 hard-coded -> channels must be multiples of 64.
    # Cin = Cout = 128 keeps activation lanes and output stores lane-dense, and the
    # matmul N dim (4*Cout = 512) fills the 256-wide MXUs on v6e/v7x.
    N, Cin, Cout, H, W = 8, 128, 128, 8, 8
    key = jax.random.PRNGKey(0)
    k_x, k_p = jax.random.split(key)
    x = jax.random.normal(k_x, (N, Cin, H, W), jnp.float32)

    raw = make_raw_params(k_p, Cin, Cout)
    params = build_kernel_params(raw, Cin, Cout)

    out = jax.block_until_ready(paradise_b_conv(x, params, b_tile=8))
    ref = jax.block_until_ready(reference_forward(x, raw))

    assert out.shape == (N, Cout, H, W), out.shape
    err = float(jnp.max(jnp.abs(out - ref)))
    assert err < 1e-1, f"max abs err {err}"     # bf16 MXU operands, f32 accumulation
    print("KERNEL_OK")
</pallas_src>

<mosaic_0001>
module attributes {stable_mosaic.version = 11 : i64} {
  func.func @_paradise_b_kernel(%arg0: i32, %arg1: memref<32xf32, #tpu.memory_space<smem>>, %arg2: memref<4x10x10x128xbf16, #tpu.memory_space<vmem>>, %arg3: memref<1152x512xbf16, #tpu.memory_space<vmem>>, %arg4: memref<4x128xf32, #tpu.memory_space<vmem>>, %arg5: memref<4x64x128xf32, #tpu.memory_space<vmem>>, %arg6: memref<256x1152xbf16, #tpu.memory_space<vmem>>, %arg7: memref<256x512xf32, #tpu.memory_space<vmem>>) attributes {dimension_semantics = [#tpu.dimension_semantics<parallel>], iteration_bounds = array<i64: 2>, scalar_prefetch = 1 : i64, scratch_operands = 2 : i64, tpu.core_type = #tpu.core_type<tc>, window_params = [{transform_indices = @transform_0, window_bounds = array<i64: 4, 10, 10, 128>}, {pipeline_mode = #tpu.pipeline_mode<synchronous>, transform_indices = @transform_1, window_bounds = array<i64: 1152, 512>}, {pipeline_mode = #tpu.pipeline_mode<synchronous>, transform_indices = @transform_2, window_bounds = array<i64: 4, 128>}, {transform_indices = @transform_3, window_bounds = array<i64: 4, 64, 128>}]} {
    %c0 = arith.constant 0 : index
    %c0_0 = arith.constant 0 : index
    %c0_1 = arith.constant 0 : index
    %c0_2 = arith.constant 0 : index
    %0 = vector.load %arg2[%c0, %c0_0, %c0_1, %c0_2] : memref<4x10x10x128xbf16, #tpu.memory_space<vmem>>, vector<4x8x8x128xbf16>
    %1 = vector.shape_cast %0 : vector<4x8x8x128xbf16> to vector<256x128xbf16>
    %c0_3 = arith.constant 0 : index
    %c0_4 = arith.constant 0 : index
    %2 = vector.load %arg6[%c0_3, %c0_4] : memref<256x1152xbf16, #tpu.memory_space<vmem>>, vector<256x128xbf16>
    tpu.vector_store %arg6[%c0_3, %c0_4], %1 {strides = array<i32>} : memref<256x1152xbf16, #tpu.memory_space<vmem>>, vector<256x128xbf16>,
    %c0_5 = arith.constant 0 : index
    %c0_6 = arith.constant 0 : index
    %c1 = arith.constant 1 : index
    %c0_7 = arith.constant 0 : index
    %3 = vector.load %arg2[%c0_5, %c0_6, %c1, %c0_7] : memref<4x10x10x128xbf16, #tpu.memory_space<vmem>>, vector<4x8x8x128xbf16>
    %4 = vector.shape_cast %3 : vector<4x8x8x128xbf16> to vector<256x128xbf16>
    %c0_8 = arith.constant 0 : index
    %c128 = arith.constant 128 : index
    %5 = vector.load %arg6[%c0_8, %c128] : memref<256x1152xbf16, #tpu.memory_space<vmem>>, vector<256x128xbf16>
    tpu.vector_store %arg6[%c0_8, %c128], %4 {strides = array<i32>} : memref<256x1152xbf16, #tpu.memory_space<vmem>>, vector<256x128xbf16>,
    %c0_9 = arith.constant 0 : index
    %c0_10 = arith.constant 0 : index
    %c2 = arith.constant 2 : index
    %c0_11 = arith.constant 0 : index
    %6 = vector.load %arg2[%c0_9, %c0_10, %c2, %c0_11] : memref<4x10x10x128xbf16, #tpu.memory_space<vmem>>, vector<4x8x8x128xbf16>
    %7 = vector.shape_cast %6 : vector<4x8x8x128xbf16> to vector<256x128xbf16>
    %c0_12 = arith.constant 0 : index
    %c256 = arith.constant 256 : index
    %8 = vector.load %arg6[%c0_12, %c256] : memref<256x1152xbf16, #tpu.memory_space<vmem>>, vector<256x128xbf16>
    tpu.vector_store %arg6[%c0_12, %c256], %7 {strides = array<i32>} : memref<256x1152xbf16, #tpu.memory_space<vmem>>, vector<256x128xbf16>,
    %c0_13 = arith.constant 0 : index
    %c1_14 = arith.constant 1 : index
    %c0_15 = arith.constant 0 : index
    %c0_16 = arith.constant 0 : index
    %9 = vector.load %arg2[%c0_13, %c1_14, %c0_15, %c0_16] : memref<4x10x10x128xbf16, #tpu.memory_space<vmem>>, vector<4x8x8x128xbf16>
    %10 = vector.shape_cast %9 : vector<4x8x8x128xbf16> to vector<256x128xbf16>
    %c0_17 = arith.constant 0 : index
    %c384 = arith.constant 384 : index
    %11 = vector.load %arg6[%c0_17, %c384] : memref<256x1152xbf16, #tpu.memory_space<vmem>>, vector<256x128xbf16>
    tpu.vector_store %arg6[%c0_17, %c384], %10 {strides = array<i32>} : memref<256x1152xbf16, #tpu.memory_space<vmem>>, vector<256x128xbf16>,
    %c0_18 = arith.constant 0 : index
    %c1_19 = arith.constant 1 : index
    %c1_20 = arith.constant 1 : index
    %c0_21 = arith.constant 0 : index
    %12 = vector.load %arg2[%c0_18, %c1_19, %c1_20, %c0_21] : memref<4x10x10x128xbf16, #tpu.memory_space<vmem>>, vector<4x8x8x128xbf16>
    %13 = vector.shape_cast %12 : vector<4x8x8x128xbf16> to vector<256x128xbf16>
    %c0_22 = arith.constant 0 : index
    %c512 = arith.constant 512 : index
    %14 = vector.load %arg6[%c0_22, %c512] : memref<256x1152xbf16, #tpu.memory_space<vmem>>, vector<256x128xbf16>
    tpu.vector_store %arg6[%c0_22, %c512], %13 {strides = array<i32>} : memref<256x1152xbf16, #tpu.memory_space<vmem>>, vector<256x128xbf16>,
    %c0_23 = arith.constant 0 : index
    %c1_24 = arith.constant 1 : index
    %c2_25 = arith.constant 2 : index
    %c0_26 = arith.constant 0 : index
    %15 = vector.load %arg2[%c0_23, %c1_24, %c2_25, %c0_26] : memref<4x10x10x128xbf16, #tpu.memory_space<vmem>>, vector<4x8x8x128xbf16>
    %16 = vector.shape_cast %15 : vector<4x8x8x128xbf16> to vector<256x128xbf16>
    %c0_27 = arith.constant 0 : index
    %c640 = arith.constant 640 : index
    %17 = vector.load %arg6[%c0_27, %c640] : memref<256x1152xbf16, #tpu.memory_space<vmem>>, vector<256x128xbf16>
    tpu.vector_store %arg6[%c0_27, %c640], %16 {strides = array<i32>} : memref<256x1152xbf16, #tpu.memory_space<vmem>>, vector<256x128xbf16>,
    %c0_28 = arith.constant 0 : index
    %c2_29 = arith.constant 2 : index
    %c0_30 = arith.constant 0 : index
    %c0_31 = arith.constant 0 : index
    %18 = vector.load %arg2[%c0_28, %c2_29, %c0_30, %c0_31] : memref<4x10x10x128xbf16, #tpu.memory_space<vmem>>, vector<4x8x8x128xbf16>
    %19 = vector.shape_cast %18 : vector<4x8x8x128xbf16> to vector<256x128xbf16>
    %c0_32 = arith.constant 0 : index
    %c768 = arith.constant 768 : index
    %20 = vector.load %arg6[%c0_32, %c768] : memref<256x1152xbf16, #tpu.memory_space<vmem>>, vector<256x128xbf16>
    tpu.vector_store %arg6[%c0_32, %c768], %19 {strides = array<i32>} : memref<256x1152xbf16, #tpu.memory_space<vmem>>, vector<256x128xbf16>,
    %c0_33 = arith.constant 0 : index
    %c2_34 = arith.constant 2 : index
    %c1_35 = arith.constant 1 : index
    %c0_36 = arith.constant 0 : index
    %21 = vector.load %arg2[%c0_33, %c2_34, %c1_35, %c0_36] : memref<4x10x10x128xbf16, #tpu.memory_space<vmem>>, vector<4x8x8x128xbf16>
    %22 = vector.shape_cast %21 : vector<4x8x8x128xbf16> to vector<256x128xbf16>
    %c0_37 = arith.constant 0 : index
    %c896 = arith.constant 896 : index
    %23 = vector.load %arg6[%c0_37, %c896] : memref<256x1152xbf16, #tpu.memory_space<vmem>>, vector<256x128xbf16>
    tpu.vector_store %arg6[%c0_37, %c896], %22 {strides = array<i32>} : memref<256x1152xbf16, #tpu.memory_space<vmem>>, vector<256x128xbf16>,
    %c0_38 = arith.constant 0 : index
    %c2_39 = arith.constant 2 : index
    %c2_40 = arith.constant 2 : index
    %c0_41 = arith.constant 0 : index
    %24 = vector.load %arg2[%c0_38, %c2_39, %c2_40, %c0_41] : memref<4x10x10x128xbf16, #tpu.memory_space<vmem>>, vector<4x8x8x128xbf16>
    %25 = vector.shape_cast %24 : vector<4x8x8x128xbf16> to vector<256x128xbf16>
    %c0_42 = arith.constant 0 : index
    %c1024 = arith.constant 1024 : index
    %26 = vector.load %arg6[%c0_42, %c1024] : memref<256x1152xbf16, #tpu.memory_space<vmem>>, vector<256x128xbf16>
    tpu.vector_store %arg6[%c0_42, %c1024], %25 {strides = array<i32>} : memref<256x1152xbf16, #tpu.memory_space<vmem>>, vector<256x128xbf16>,
    %c0_43 = arith.constant 0 : index
    %c0_44 = arith.constant 0 : index
    %27 = vector.load %arg6[%c0_43, %c0_44] : memref<256x1152xbf16, #tpu.memory_space<vmem>>, vector<256x1152xbf16>
    %c0_45 = arith.constant 0 : index
    %c0_46 = arith.constant 0 : index
    %28 = vector.load %arg3[%c0_45, %c0_46] : memref<1152x512xbf16, #tpu.memory_space<vmem>>, vector<1152x512xbf16>
    %cst = arith.constant dense<0.000000e+00> : vector<256x512xf32>
    %29 = tpu.matmul %27, %28, %cst {dimension_numbers = #tpu.dot_dimension_numbers<[1], [0], [0], [1], [0, 0, 1, 1], [], []>} : vector<256x1152xbf16>, vector<1152x512xbf16>, vector<256x512xf32> -> vector<256x512xf32>
    %c0_47 = arith.constant 0 : index
    %c0_48 = arith.constant 0 : index
    %30 = vector.load %arg7[%c0_47, %c0_48] : memref<256x512xf32, #tpu.memory_space<vmem>>, vector<256x512xf32>
    tpu.vector_store %arg7[%c0_47, %c0_48], %29 {strides = array<i32>} : memref<256x512xf32, #tpu.memory_space<vmem>>, vector<256x512xf32>,
    %c4_i32 = arith.constant 4 : i32
    %31 = arith.muli %arg0, %c4_i32 : i32
    %c0_i32 = arith.constant 0 : i32
    %32 = arith.addi %31, %c0_i32 : i32
    %c4_i32_49 = arith.constant 4 : i32
    %33 = arith.muli %c4_i32_49, %32 : i32
    %c0_i32_50 = arith.constant 0 : i32
    %34 = arith.addi %33, %c0_i32_50 : i32
    %35 = arith.index_cast %34 : i32 to index
    %36 = memref.load %arg1[%35] : memref<32xf32, #tpu.memory_space<smem>>
    %c4_i32_51 = arith.constant 4 : i32
    %37 = arith.muli %c4_i32_51, %32 : i32
    %c1_i32 = arith.constant 1 : i32
    %38 = arith.addi %37, %c1_i32 : i32
    %39 = arith.index_cast %38 : i32 to index
    %40 = memref.load %arg1[%39] : memref<32xf32, #tpu.memory_space<smem>>
    %c4_i32_52 = arith.constant 4 : i32
    %41 = arith.muli %c4_i32_52, %32 : i32
    %c2_i32 = arith.constant 2 : i32
    %42 = arith.addi %41, %c2_i32 : i32
    %43 = arith.index_cast %42 : i32 to index
    %44 = memref.load %arg1[%43] : memref<32xf32, #tpu.memory_space<smem>>
    %c4_i32_53 = arith.constant 4 : i32
    %45 = arith.muli %c4_i32_53, %32 : i32
    %c3_i32 = arith.constant 3 : i32
    %46 = arith.addi %45, %c3_i32 : i32
    %47 = arith.index_cast %46 : i32 to index
    %48 = memref.load %arg1[%47] : memref<32xf32, #tpu.memory_space<smem>>
    %c0_54 = arith.constant 0 : index
    %c0_55 = arith.constant 0 : index
    %49 = vector.load %arg4[%c0_54, %c0_55] : memref<4x128xf32, #tpu.memory_space<vmem>>, vector<1x128xf32>
    %50 = vector.broadcast %36 : f32 to vector<1x128xf32>
    %51 = arith.mulf %50, %49 : vector<1x128xf32>
    %c1_56 = arith.constant 1 : index
    %c0_57 = arith.constant 0 : index
    %52 = vector.load %arg4[%c1_56, %c0_57] : memref<4x128xf32, #tpu.memory_space<vmem>>, vector<1x128xf32>
    %53 = vector.broadcast %40 : f32 to vector<1x128xf32>
    %54 = arith.mulf %53, %52 : vector<1x128xf32>
    %55 = arith.addf %51, %54 : vector<1x128xf32>
    %c2_58 = arith.constant 2 : index
    %c0_59 = arith.constant 0 : index
    %56 = vector.load %arg4[%c2_58, %c0_59] : memref<4x128xf32, #tpu.memory_space<vmem>>, vector<1x128xf32>
    %57 = vector.broadcast %44 : f32 to vector<1x128xf32>
    %58 = arith.mulf %57, %56 : vector<1x128xf32>
    %59 = arith.addf %55, %58 : vector<1x128xf32>
    %c3 = arith.constant 3 : index
    %c0_60 = arith.constant 0 : index
    %60 = vector.load %arg4[%c3, %c0_60] : memref<4x128xf32, #tpu.memory_space<vmem>>, vector<1x128xf32>
    %61 = vector.broadcast %48 : f32 to vector<1x128xf32>
    %62 = arith.mulf %61, %60 : vector<1x128xf32>
    %63 = arith.addf %59, %62 : vector<1x128xf32>
    %c0_61 = arith.constant 0 : index
    %c0_62 = arith.constant 0 : index
    %64 = vector.load %arg7[%c0_61, %c0_62] : memref<256x512xf32, #tpu.memory_space<vmem>>, vector<64x128xf32>
    %65 = vector.broadcast %36 : f32 to vector<64x128xf32>
    %66 = arith.mulf %65, %64 : vector<64x128xf32>
    %c0_63 = arith.constant 0 : index
    %c128_64 = arith.constant 128 : index
    %67 = vector.load %arg7[%c0_63, %c128_64] : memref<256x512xf32, #tpu.memory_space<vmem>>, vector<64x128xf32>
    %68 = vector.broadcast %40 : f32 to vector<64x128xf32>
    %69 = arith.mulf %68, %67 : vector<64x128xf32>
    %70 = arith.addf %66, %69 : vector<64x128xf32>
    %c0_65 = arith.constant 0 : index
    %c256_66 = arith.constant 256 : index
    %71 = vector.load %arg7[%c0_65, %c256_66] : memref<256x512xf32, #tpu.memory_space<vmem>>, vector<64x128xf32>
    %72 = vector.broadcast %44 : f32 to vector<64x128xf32>
    %73 = arith.mulf %72, %71 : vector<64x128xf32>
    %74 = arith.addf %70, %73 : vector<64x128xf32>
    %c0_67 = arith.constant 0 : index
    %c384_68 = arith.constant 384 : index
    %75 = vector.load %arg7[%c0_67, %c384_68] : memref<256x512xf32, #tpu.memory_space<vmem>>, vector<64x128xf32>
    %76 = vector.broadcast %48 : f32 to vector<64x128xf32>
    %77 = arith.mulf %76, %75 : vector<64x128xf32>
    %78 = arith.addf %74, %77 : vector<64x128xf32>
    %79 = vector.broadcast %63 : vector<1x128xf32> to vector<64x128xf32>
    %80 = arith.addf %78, %79 : vector<64x128xf32>
    %c0_69 = arith.constant 0 : index
    %c0_70 = arith.constant 0 : index
    %c0_71 = arith.constant 0 : index
    %81 = vector.load %arg5[%c0_69, %c0_70, %c0_71] : memref<4x64x128xf32, #tpu.memory_space<vmem>>, vector<1x64x128xf32>
    %82 = vector.shape_cast %81 : vector<1x64x128xf32> to vector<64x128xf32>
    %83 = vector.shape_cast %80 : vector<64x128xf32> to vector<1x64x128xf32>
    tpu.vector_store %arg5[%c0_69, %c0_70, %c0_71], %83 {strides = array<i32>} : memref<4x64x128xf32, #tpu.memory_space<vmem>>, vector<1x64x128xf32>,
    %c4_i32_72 = arith.constant 4 : i32
    %84 = arith.muli %arg0, %c4_i32_72 : i32
    %c1_i32_73 = arith.constant 1 : i32
    %85 = arith.addi %84, %c1_i32_73 : i32
    %c4_i32_74 = arith.constant 4 : i32
    %86 = arith.muli %c4_i32_74, %85 : i32
    %c0_i32_75 = arith.constant 0 : i32
    %87 = arith.addi %86, %c0_i32_75 : i32
    %88 = arith.index_cast %87 : i32 to index
    %89 = memref.load %arg1[%88] : memref<32xf32, #tpu.memory_space<smem>>
    %c4_i32_76 = arith.constant 4 : i32
    %90 = arith.muli %c4_i32_76, %85 : i32
    %c1_i32_77 = arith.constant 1 : i32
    %91 = arith.addi %90, %c1_i32_77 : i32
    %92 = arith.index_cast %91 : i32 to index
    %93 = memref.load %arg1[%92] : memref<32xf32, #tpu.memory_space<smem>>
    %c4_i32_78 = arith.constant 4 : i32
    %94 = arith.muli %c4_i32_78, %85 : i32
    %c2_i32_79 = arith.constant 2 : i32
    %95 = arith.addi %94, %c2_i32_79 : i32
    %96 = arith.index_cast %95 : i32 to index
    %97 = memref.load %arg1[%96] : memref<32xf32, #tpu.memory_space<smem>>
    %c4_i32_80 = arith.constant 4 : i32
    %98 = arith.muli %c4_i32_80, %85 : i32
    %c3_i32_81 = arith.constant 3 : i32
    %99 = arith.addi %98, %c3_i32_81 : i32
    %100 = arith.index_cast %99 : i32 to index
    %101 = memref.load %arg1[%100] : memref<32xf32, #tpu.memory_space<smem>>
    %c0_82 = arith.constant 0 : index
    %c0_83 = arith.constant 0 : index
    %102 = vector.load %arg4[%c0_82, %c0_83] : memref<4x128xf32, #tpu.memory_space<vmem>>, vector<1x128xf32>
    %103 = vector.broadcast %89 : f32 to vector<1x128xf32>
    %104 = arith.mulf %103, %102 : vector<1x128xf32>
    %c1_84 = arith.constant 1 : index
    %c0_85 = arith.constant 0 : index
    %105 = vector.load %arg4[%c1_84, %c0_85] : memref<4x128xf32, #tpu.memory_space<vmem>>, vector<1x128xf32>
    %106 = vector.broadcast %93 : f32 to vector<1x128xf32>
    %107 = arith.mulf %106, %105 : vector<1x128xf32>
    %108 = arith.addf %104, %107 : vector<1x128xf32>
    %c2_86 = arith.constant 2 : index
    %c0_87 = arith.constant 0 : index
    %109 = vector.load %arg4[%c2_86, %c0_87] : memref<4x128xf32, #tpu.memory_space<vmem>>, vector<1x128xf32>
    %110 = vector.broadcast %97 : f32 to vector<1x128xf32>
    %111 = arith.mulf %110, %109 : vector<1x128xf32>
    %112 = arith.addf %108, %111 : vector<1x128xf32>
    %c3_88 = arith.constant 3 : index
    %c0_89 = arith.constant 0 : index
    %113 = vector.load %arg4[%c3_88, %c0_89] : memref<4x128xf32, #tpu.memory_space<vmem>>, vector<1x128xf32>
    %114 = vector.broadcast %101 : f32 to vector<1x128xf32>
    %115 = arith.mulf %114, %113 : vector<1x128xf32>
    %116 = arith.addf %112, %115 : vector<1x128xf32>
    %c64 = arith.constant 64 : index
    %c0_90 = arith.constant 0 : index
    %117 = vector.load %arg7[%c64, %c0_90] : memref<256x512xf32, #tpu.memory_space<vmem>>, vector<64x128xf32>
    %118 = vector.broadcast %89 : f32 to vector<64x128xf32>
    %119 = arith.mulf %118, %117 : vector<64x128xf32>
    %c64_91 = arith.constant 64 : index
    %c128_92 = arith.constant 128 : index
    %120 = vector.load %arg7[%c64_91, %c128_92] : memref<256x512xf32, #tpu.memory_space<vmem>>, vector<64x128xf32>
    %121 = vector.broadcast %93 : f32 to vector<64x128xf32>
    %122 = arith.mulf %121, %120 : vector<64x128xf32>
    %123 = arith.addf %119, %122 : vector<64x128xf32>
    %c64_93 = arith.constant 64 : index
    %c256_94 = arith.constant 256 : index
    %124 = vector.load %arg7[%c64_93, %c256_94] : memref<256x512xf32, #tpu.memory_space<vmem>>, vector<64x128xf32>
    %125 = vector.broadcast %97 : f32 to vector<64x128xf32>
    %126 = arith.mulf %125, %124 : vector<64x128xf32>
    %127 = arith.addf %123, %126 : vector<64x128xf32>
    %c64_95 = arith.constant 64 : index
    %c384_96 = arith.constant 384 : index
    %128 = vector.load %arg7[%c64_95, %c384_96] : memref<256x512xf32, #tpu.memory_space<vmem>>, vector<64x128xf32>
    %129 = vector.broadcast %101 : f32 to vector<64x128xf32>
    %130 = arith.mulf %129, %128 : vector<64x128xf32>
    %131 = arith.addf %127, %130 : vector<64x128xf32>
    %132 = vector.broadcast %116 : vector<1x128xf32> to vector<64x128xf32>
    %133 = arith.addf %131, %132 : vector<64x128xf32>
    %c1_97 = arith.constant 1 : index
    %c0_98 = arith.constant 0 : index
    %c0_99 = arith.constant 0 : index
    %134 = vector.load %arg5[%c1_97, %c0_98, %c0_99] : memref<4x64x128xf32, #tpu.memory_space<vmem>>, vector<1x64x128xf32>
    %135 = vector.shape_cast %134 : vector<1x64x128xf32> to vector<64x128xf32>
    %136 = vector.shape_cast %133 : vector<64x128xf32> to vector<1x64x128xf32>
    tpu.vector_store %arg5[%c1_97, %c0_98, %c0_99], %136 {strides = array<i32>} : memref<4x64x128xf32, #tpu.memory_space<vmem>>, vector<1x64x128xf32>,
    %c4_i32_100 = arith.constant 4 : i32
    %137 = arith.muli %arg0, %c4_i32_100 : i32
    %c2_i32_101 = arith.constant 2 : i32
    %138 = arith.addi %137, %c2_i32_101 : i32
    %c4_i32_102 = arith.constant 4 : i32
    %139 = arith.muli %c4_i32_102, %138 : i32
    %c0_i32_103 = arith.constant 0 : i32
    %140 = arith.addi %139, %c0_i32_103 : i32
    %141 = arith.index_cast %140 : i32 to index
    %142 = memref.load %arg1[%141] : memref<32xf32, #tpu.memory_space<smem>>
    %c4_i32_104 = arith.constant 4 : i32
    %143 = arith.muli %c4_i32_104, %138 : i32
    %c1_i32_105 = arith.constant 1 : i32
    %144 = arith.addi %143, %c1_i32_105 : i32
    %145 = arith.index_cast %144 : i32 to index
    %146 = memref.load %arg1[%145] : memref<32xf32, #tpu.memory_space<smem>>
    %c4_i32_106 = arith.constant 4 : i32
    %147 = arith.muli %c4_i32_106, %138 : i32
    %c2_i32_107 = arith.constant 2 : i32
    %148 = arith.addi %147, %c2_i32_107 : i32
    %149 = arith.index_cast %148 : i32 to index
    %150 = memref.load %arg1[%149] : memref<32xf32, #tpu.memory_space<smem>>
    %c4_i32_108 = arith.constant 4 : i32
    %151 = arith.muli %c4_i32_108, %138 : i32
    %c3_i32_109 = arith.constant 3 : i32
    %152 = arith.addi %151, %c3_i32_109 : i32
    %153 = arith.index_cast %152 : i32 to index
    %154 = memref.load %arg1[%153] : memref<32xf32, #tpu.memory_space<smem>>
    %c0_110 = arith.constant 0 : index
    %c0_111 = arith.constant 0 : index
    %155 = vector.load %arg4[%c0_110, %c0_111] : memref<4x128xf32, #tpu.memory_space<vmem>>, vector<1x128xf32>
    %156 = vector.broadcast %142 : f32 to vector<1x128xf32>
    %157 = arith.mulf %156, %155 : vector<1x128xf32>
    %c1_112 = arith.constant 1 : index
    %c0_113 = arith.constant 0 : index
    %158 = vector.load %arg4[%c1_112, %c0_113] : memref<4x128xf32, #tpu.memory_space<vmem>>, vector<1x128xf32>
    %159 = vector.broadcast %146 : f32 to vector<1x128xf32>
    %160 = arith.mulf %159, %158 : vector<1x128xf32>
    %161 = arith.addf %157, %160 : vector<1x128xf32>
    %c2_114 = arith.constant 2 : index
    %c0_115 = arith.constant 0 : index
    %162 = vector.load %arg4[%c2_114, %c0_115] : memref<4x128xf32, #tpu.memory_space<vmem>>, vector<1x128xf32>
    %163 = vector.broadcast %150 : f32 to vector<1x128xf32>
    %164 = arith.mulf %163, %162 : vector<1x128xf32>
    %165 = arith.addf %161, %164 : vector<1x128xf32>
    %c3_116 = arith.constant 3 : index
    %c0_117 = arith.constant 0 : index
    %166 = vector.load %arg4[%c3_116, %c0_117] : memref<4x128xf32, #tpu.memory_space<vmem>>, vector<1x128xf32>
    %167 = vector.broadcast %154 : f32 to vector<1x128xf32>
    %168 = arith.mulf %167, %166 : vector<1x128xf32>
    %169 = arith.addf %165, %168 : vector<1x128xf32>
    %c128_118 = arith.constant 128 : index
    %c0_119 = arith.constant 0 : index
    %170 = vector.load %arg7[%c128_118, %c0_119] : memref<256x512xf32, #tpu.memory_space<vmem>>, vector<64x128xf32>
    %171 = vector.broadcast %142 : f32 to vector<64x128xf32>
    %172 = arith.mulf %171, %170 : vector<64x128xf32>
    %c128_120 = arith.constant 128 : index
    %c128_121 = arith.constant 128 : index
    %173 = vector.load %arg7[%c128_120, %c128_121] : memref<256x512xf32, #tpu.memory_space<vmem>>, vector<64x128xf32>
    %174 = vector.broadcast %146 : f32 to vector<64x128xf32>
    %175 = arith.mulf %174, %173 : vector<64x128xf32>
    %176 = arith.addf %172, %175 : vector<64x128xf32>
    %c128_122 = arith.constant 128 : index
    %c256_123 = arith.constant 256 : index
    %177 = vector.load %arg7[%c128_122, %c256_123] : memref<256x512xf32, #tpu.memory_space<vmem>>, vector<64x128xf32>
    %178 = vector.broadcast %150 : f32 to vector<64x128xf32>
    %179 = arith.mulf %178, %177 : vector<64x128xf32>
    %180 = arith.addf %176, %179 : vector<64x128xf32>
    %c128_124 = arith.constant 128 : index
    %c384_125 = arith.constant 384 : index
    %181 = vector.load %arg7[%c128_124, %c384_125] : memref<256x512xf32, #tpu.memory_space<vmem>>, vector<64x128xf32>
    %182 = vector.broadcast %154 : f32 to vector<64x128xf32>
    %183 = arith.mulf %182, %181 : vector<64x128xf32>
    %184 = arith.addf %180, %183 : vector<64x128xf32>
    %185 = vector.broadcast %169 : vector<1x128xf32> to vector<64x128xf32>
    %186 = arith.addf %184, %185 : vector<64x128xf32>
    %c2_126 = arith.constant 2 : index
    %c0_127 = arith.constant 0 : index
    %c0_128 = arith.constant 0 : index
    %187 = vector.load %arg5[%c2_126, %c0_127, %c0_128] : memref<4x64x128xf32, #tpu.memory_space<vmem>>, vector<1x64x128xf32>
    %188 = vector.shape_cast %187 : vector<1x64x128xf32> to vector<64x128xf32>
    %189 = vector.shape_cast %186 : vector<64x128xf32> to vector<1x64x128xf32>
    tpu.vector_store %arg5[%c2_126, %c0_127, %c0_128], %189 {strides = array<i32>} : memref<4x64x128xf32, #tpu.memory_space<vmem>>, vector<1x64x128xf32>,
    %c4_i32_129 = arith.constant 4 : i32
    %190 = arith.muli %arg0, %c4_i32_129 : i32
    %c3_i32_130 = arith.constant 3 : i32
    %191 = arith.addi %190, %c3_i32_130 : i32
    %c4_i32_131 = arith.constant 4 : i32
    %192 = arith.muli %c4_i32_131, %191 : i32
    %c0_i32_132 = arith.constant 0 : i32
    %193 = arith.addi %192, %c0_i32_132 : i32
    %194 = arith.index_cast %193 : i32 to index
    %195 = memref.load %arg1[%194] : memref<32xf32, #tpu.memory_space<smem>>
    %c4_i32_133 = arith.constant 4 : i32
    %196 = arith.muli %c4_i32_133, %191 : i32
    %c1_i32_134 = arith.constant 1 : i32
    %197 = arith.addi %196, %c1_i32_134 : i32
    %198 = arith.index_cast %197 : i32 to index
    %199 = memref.load %arg1[%198] : memref<32xf32, #tpu.memory_space<smem>>
    %c4_i32_135 = arith.constant 4 : i32
    %200 = arith.muli %c4_i32_135, %191 : i32
    %c2_i32_136 = arith.constant 2 : i32
    %201 = arith.addi %200, %c2_i32_136 : i32
    %202 = arith.index_cast %201 : i32 to index
    %203 = memref.load %arg1[%202] : memref<32xf32, #tpu.memory_space<smem>>
    %c4_i32_137 = arith.constant 4 : i32
    %204 = arith.muli %c4_i32_137, %191 : i32
    %c3_i32_138 = arith.constant 3 : i32
    %205 = arith.addi %204, %c3_i32_138 : i32
    %206 = arith.index_cast %205 : i32 to index
    %207 = memref.load %arg1[%206] : memref<32xf32, #tpu.memory_space<smem>>
    %c0_139 = arith.constant 0 : index
    %c0_140 = arith.constant 0 : index
    %208 = vector.load %arg4[%c0_139, %c0_140] : memref<4x128xf32, #tpu.memory_space<vmem>>, vector<1x128xf32>
    %209 = vector.broadcast %195 : f32 to vector<1x128xf32>
    %210 = arith.mulf %209, %208 : vector<1x128xf32>
    %c1_141 = arith.constant 1 : index
    %c0_142 = arith.constant 0 : index
    %211 = vector.load %arg4[%c1_141, %c0_142] : memref<4x128xf32, #tpu.memory_space<vmem>>, vector<1x128xf32>
    %212 = vector.broadcast %199 : f32 to vector<1x128xf32>
    %213 = arith.mulf %212, %211 : vector<1x128xf32>
    %214 = arith.addf %210, %213 : vector<1x128xf32>
    %c2_143 = arith.constant 2 : index
    %c0_144 = arith.constant 0 : index
    %215 = vector.load %arg4[%c2_143, %c0_144] : memref<4x128xf32, #tpu.memory_space<vmem>>, vector<1x128xf32>
    %216 = vector.broadcast %203 : f32 to vector<1x128xf32>
    %217 = arith.mulf %216, %215 : vector<1x128xf32>
    %218 = arith.addf %214, %217 : vector<1x128xf32>
    %c3_145 = arith.constant 3 : index
    %c0_146 = arith.constant 0 : index
    %219 = vector.load %arg4[%c3_145, %c0_146] : memref<4x128xf32, #tpu.memory_space<vmem>>, vector<1x128xf32>
    %220 = vector.broadcast %207 : f32 to vector<1x128xf32>
    %221 = arith.mulf %220, %219 : vector<1x128xf32>
    %222 = arith.addf %218, %221 : vector<1x128xf32>
    %c192 = arith.constant 192 : index
    %c0_147 = arith.constant 0 : index
    %223 = vector.load %arg7[%c192, %c0_147] : memref<256x512xf32, #tpu.memory_space<vmem>>, vector<64x128xf32>
    %224 = vector.broadcast %195 : f32 to vector<64x128xf32>
    %225 = arith.mulf %224, %223 : vector<64x128xf32>
    %c192_148 = arith.constant 192 : index
    %c128_149 = arith.constant 128 : index
    %226 = vector.load %arg7[%c192_148, %c128_149] : memref<256x512xf32, #tpu.memory_space<vmem>>, vector<64x128xf32>
    %227 = vector.broadcast %199 : f32 to vector<64x128xf32>
    %228 = arith.mulf %227, %226 : vector<64x128xf32>
    %229 = arith.addf %225, %228 : vector<64x128xf32>
    %c192_150 = arith.constant 192 : index
    %c256_151 = arith.constant 256 : index
    %230 = vector.load %arg7[%c192_150, %c256_151] : memref<256x512xf32, #tpu.memory_space<vmem>>, vector<64x128xf32>
    %231 = vector.broadcast %203 : f32 to vector<64x128xf32>
    %232 = arith.mulf %231, %230 : vector<64x128xf32>
    %233 = arith.addf %229, %232 : vector<64x128xf32>
    %c192_152 = arith.constant 192 : index
    %c384_153 = arith.constant 384 : index
    %234 = vector.load %arg7[%c192_152, %c384_153] : memref<256x512xf32, #tpu.memory_space<vmem>>, vector<64x128xf32>
    %235 = vector.broadcast %207 : f32 to vector<64x128xf32>
    %236 = arith.mulf %235, %234 : vector<64x128xf32>
    %237 = arith.addf %233, %236 : vector<64x128xf32>
    %238 = vector.broadcast %222 : vector<1x128xf32> to vector<64x128xf32>
    %239 = arith.addf %237, %238 : vector<64x128xf32>
    %c3_154 = arith.constant 3 : index
    %c0_155 = arith.constant 0 : index
    %c0_156 = arith.constant 0 : index
    %240 = vector.load %arg5[%c3_154, %c0_155, %c0_156] : memref<4x64x128xf32, #tpu.memory_space<vmem>>, vector<1x64x128xf32>
    %241 = vector.shape_cast %240 : vector<1x64x128xf32> to vector<64x128xf32>
    %242 = vector.shape_cast %239 : vector<64x128xf32> to vector<1x64x128xf32>
    tpu.vector_store %arg5[%c3_154, %c0_155, %c0_156], %242 {strides = array<i32>} : memref<4x64x128xf32, #tpu.memory_space<vmem>>, vector<1x64x128xf32>,
    return
  }
  func.func @transform_0(%arg0: i32, %arg1: memref<32xf32, #tpu.memory_space<smem>>) -> (i32, i32, i32, i32) {
    %c0_i32 = arith.constant 0 : i32
    %c0_i32_0 = arith.constant 0 : i32
    %c0_i32_1 = arith.constant 0 : i32
    %c0_i32_2 = arith.constant 0 : i32
    return %arg0, %c0_i32, %c0_i32_0, %c0_i32_1 : i32, i32, i32, i32
  }
  func.func @transform_1(%arg0: i32, %arg1: memref<32xf32, #tpu.memory_space<smem>>) -> (i32, i32) {
    %c0_i32 = arith.constant 0 : i32
    %c0_i32_0 = arith.constant 0 : i32
    %c0_i32_1 = arith.constant 0 : i32
    return %c0_i32, %c0_i32_0 : i32, i32
  }
  func.func @transform_2(%arg0: i32, %arg1: memref<32xf32, #tpu.memory_space<smem>>) -> (i32, i32) {
    %c0_i32 = arith.constant 0 : i32
    %c0_i32_0 = arith.constant 0 : i32
    %c0_i32_1 = arith.constant 0 : i32
    return %c0_i32, %c0_i32_0 : i32, i32
  }
  func.func @transform_3(%arg0: i32, %arg1: memref<32xf32, #tpu.memory_space<smem>>) -> (i32, i32, i32) {
    %c0_i32 = arith.constant 0 : i32
    %c0_i32_0 = arith.constant 0 : i32
    %c0_i32_1 = arith.constant 0 : i32
    return %arg0, %c0_i32, %c0_i32_0 : i32, i32, i32
  }
}

</mosaic_0001>

<llo_original>
// kernel: tpu_custom_call.1
$region0: #{tpu_custom_call.1}
  #allocation0 [shape = 'u32[]', space=smem, size = 0x4, offset = 0x4, fixed_abs, tag = 'smem constant byte address 0x4 - core index']
  #allocation1 [shape = 'u32[72,128]{1,0:T(1,128)}', space=vmem, size = 0x9000, scoped, tag = 'internal scratch']
  #allocation2 [shape = 'bf16[256,1152]{1,0:T(8,128)(2,1)}', space=vmem, size = 0x90000, scoped, tag = 'scratch operand']
  #allocation3 [shape = 'f32[256,512]{1,0:T(8,128)}', space=vmem, size = 0x80000, scoped, tag = 'scratch operand']
  #allocation4 [shape = 's32[1]{0}', space=sflag, size = 0x4, scoped, tag = 'scoped memory for tpu_custom_call.1']
  #allocation5 [shape = 'u8[512]{0}', space=smem, size = 0x200, scoped, tag = 'prefetched SMEM operand 0']
  %s0 = inlined_call_operand.hbm [shape: f32[32], index: 0, kind: input, shape index: {}]
  %s1 = inlined_call_operand.vmem [shape: bf16[8,10,10,128], index: 1, kind: input, shape index: {}]
  %s2 = inlined_call_operand.hbm [shape: bf16[1152,512], index: 2, kind: input, shape index: {}]
  %s3 = inlined_call_operand.hbm [shape: f32[4,128], index: 3, kind: input, shape index: {}]
  %s4 = inlined_call_operand.hbm [shape: f32[8,64,128], index: 4, kind: output, shape index: {}]
  %s5 = sld [smem:[#allocation0]]
  $region53: #{tpu_custom_call.1} parent=0
    _
  %s7 = ssub.s32 1, %s5
  %s8 = scalar_select 0, %s7, %s5
  %s10 = sshll.u32 %s0, 4
  %s11 = int_to_ptr.hbm [resolvable:$true] %s10
  %13 = dma.hbm_to_smem %s11, 16, [#allocation5], [#allocation4]
  %15 = dma.done [#allocation4], 16
  %16 = sfence
  $region1: #{tpu_custom_call.1} parent=0
    #allocation6 [shape = 'u8[1179648]{0}', space=vmem, size = 0x120000, scoped, tag = 'input window, operand 2, single buffered']
    #allocation7 [shape = 's32[2]{0}', space=sflag, size = 0x8, scoped, tag = 'scoped memory for tpu_custom_call.1']
    #allocation8 [shape = 's32[2]{0}', space=sflag, size = 0x8, scoped, tag = 'scoped memory for tpu_custom_call.1']
    #allocation9 [shape = 'u8[2048]{0}', space=vmem, size = 0x800, scoped, tag = 'input window, operand 3, single buffered']
    #allocation10 [shape = 's32[1]{0}', space=sflag, size = 0x4, scoped, tag = 'scoped memory for tpu_custom_call.1']
    #allocation11 [shape = 'u8[262144]{0}', space=vmem, size = 0x40000, scoped, tag = 'output window, operand 0']
    %17 = vsyncpa [#allocation7], 0
    %18 = vsyncpa [#allocation10], 0
    %19 = vsyncpa [#allocation8], 0
    %s20 = scalar_lea.sflag [#allocation8], 1
    %21 = vsyncpa %s20, 0
    loop: start=0, step=1, limit=4
    $region2: #{tpu_custom_call.1} parent=1 // loop_pre_header
      _
    $region3: #{tpu_custom_call.1} parent=1 // loop_header
      %s23 = sphi 0, %s27
      %p24 = scmp.ge.s32.totalorder %s23, 4
      %s33 = sphi 0, %s35
      %s36 = sphi 0, %s33
      %s37 = sphi 0, %s36
      %s53 = sphi 0, %s37
      %s57 = sphi 0, %s57
      %s59 = sphi 0, %s57
      %s60 = sphi 0, %s59
      %s74 = sphi 0, %s60
      %s78 = sphi 0, %s78
      %s80 = sphi 0, %s78
      %s81 = sphi 0, %s80
      %s95 = sphi 0, %s81
      %s101 = sphi 0, %s103
      %s104 = sphi 0, %s101
      %s105 = sphi 0, %s104
      %s121 = sphi 0, %s105
    $region4: #{tpu_custom_call.1} parent=1 // loop_header_branch
      %26 = sbr.rel (%p24) target = $region8
    $region5: #{tpu_custom_call.1} parent=1 // loop_body
      %s28 = ssub.s32 %s23, 1
      %s29 = ssub.s32 %s23, 2
      %s30 = sadd.s32 %s23, 1
      %s31 = ssub.s32 %s23, %s30
      %p32 = scmp.eq.s32.totalorder %s31, 0
      %s34 = sadd.s32 %s33, 1
      %s35 = scalar_select %p32, %s33, %s34
      %p38 = pneg %p32
      %p39 = scmp.eq.s32.totalorder %s23, 1
      %p40 = por %p38, %p39
      %p41 = scmp.ne.s32.totalorder %s33, %s36
      %p42 = scmp.eq.s32.totalorder %s23, 0
      %p43 = por %p41, %p42
      %p44 = scmp.ne.s32.totalorder %s33, %s36
      %p45 = scmp.eq.s32.totalorder %s28, 1
      %p46 = por %p44, %p45
      %p47 = scmp.ne.s32.totalorder %s36, %s37
      %p48 = scmp.eq.s32.totalorder %s28, 0
      %p49 = por %p47, %p48
      %p50 = scmp.ne.s32.totalorder %s36, %s37
      %p51 = scmp.eq.s32.totalorder %s29, 1
      %p52 = por %p50, %p51
      %p54 = scmp.ne.s32.totalorder %s37, %s53
      %p55 = scmp.eq.s32.totalorder %s29, 0
      %p56 = por %p54, %p55
      %s58 = sadd.s32 %s57, 1
      %p61 = scmp.eq.s32.totalorder %s23, 1
      %p62 = scmp.ne.s32.totalorder %s57, %s59
      %p63 = scmp.eq.s32.totalorder %s23, 0
      %p64 = por %p62, %p63
      %p65 = scmp.ne.s32.totalorder %s57, %s59
      %p66 = scmp.eq.s32.totalorder %s28, 1
      %p67 = por %p65, %p66
      %p68 = scmp.ne.s32.totalorder %s59, %s60
      %p69 = scmp.eq.s32.totalorder %s28, 0
      %p70 = por %p68, %p69
      %p71 = scmp.ne.s32.totalorder %s59, %s60
      %p72 = scmp.eq.s32.totalorder %s29, 1
      %p73 = por %p71, %p72
      %p75 = scmp.ne.s32.totalorder %s60, %s74
      %p76 = scmp.eq.s32.totalorder %s29, 0
      %p77 = por %p75, %p76
      %s79 = sadd.s32 %s78, 1
      %p82 = scmp.eq.s32.totalorder %s23, 1
      %p83 = scmp.ne.s32.totalorder %s78, %s80
      %p84 = scmp.eq.s32.totalorder %s23, 0
      %p85 = por %p83, %p84
      %p86 = scmp.ne.s32.totalorder %s78, %s80
      %p87 = scmp.eq.s32.totalorder %s28, 1
      %p88 = por %p86, %p87
      %p89 = scmp.ne.s32.totalorder %s80, %s81
      %p90 = scmp.eq.s32.totalorder %s28, 0
      %p91 = por %p89, %p90
      %p92 = scmp.ne.s32.totalorder %s80, %s81
      %p93 = scmp.eq.s32.totalorder %s29, 1
      %p94 = por %p92, %p93
      %p96 = scmp.ne.s32.totalorder %s81, %s95
      %p97 = scmp.eq.s32.totalorder %s29, 0
      %p98 = por %p96, %p97
      %s99 = ssub.s32 %s23, %s30
      %p100 = scmp.eq.s32.totalorder %s99, 0
      %s102 = sadd.s32 %s101, 1
      %s103 = scalar_select %p100, %s101, %s102
      %p106 = pneg %p100
      %p107 = scmp.eq.s32.totalorder %s23, 1
      %p108 = por %p106, %p107
      %p109 = scmp.ne.s32.totalorder %s101, %s104
      %p110 = scmp.eq.s32.totalorder %s23, 0
      %p111 = por %p109, %p110
      %p112 = scmp.ne.s32.totalorder %s101, %s104
      %p113 = scmp.eq.s32.totalorder %s28, 1
      %p114 = por %p112, %p113
      %p115 = scmp.ne.s32.totalorder %s104, %s105
      %p116 = scmp.eq.s32.totalorder %s28, 0
      %p117 = por %p115, %p116
      %p118 = scmp.ne.s32.totalorder %s104, %s105
      %p119 = scmp.eq.s32.totalorder %s29, 1
      %p120 = por %p118, %p119
      %p122 = scmp.ne.s32.totalorder %s105, %s121
      %p123 = scmp.eq.s32.totalorder %s29, 0
      %p124 = por %p122, %p123
      %p125 = scmp.le.s32.totalorder 1, %s23
      %p126 = scmp.lt.s32.totalorder %s23, 3
      %p127 = pnand %p125, %p126
      %p128 = pneg %p127
      // Predicated region
      $region9: #{tpu_custom_call.1} parent=5 // pred_check
        _
      $region10: #{tpu_custom_call.1} parent=5 // pred_check_branch
        %130 = sbr.rel (%p127) target = $region12
      $region11: #{tpu_custom_call.1} parent=5 // pred_region
        %s131 = ssub.s32 %s23, 1
        // Predicated region
        $region13: #{tpu_custom_call.1} parent=11 // pred_check
          %p132 = pneg %p70
        $region14: #{tpu_custom_call.1} parent=11 // pred_check_branch
          %134 = sbr.rel (%p132) target = $region16
        $region15: #{tpu_custom_call.1} parent=11 // pred_region
          %136 = vsyncadd [#allocation7], 0
          %s137 = sshll.u32 %s2, 4
          %s138 = int_to_ptr.hbm [resolvable:$true] %s137
          %s139 = sshll.u32 [#allocation6], 4
          %s140 = int_to_ptr.vmem [resolvable:$true] %s139
          %145 = dma.hbm_to_vmem [thread:$0]  %s138, 36864, %s140, [#allocation7], 256, 256, 16
        $region16: #{tpu_custom_call.1} parent=11 // pred_fallthru
          _
        // Predicated region
        $region17: #{tpu_custom_call.1} parent=11 // pred_check
          %p146 = pneg %p91
        $region18: #{tpu_custom_call.1} parent=11 // pred_check_branch
          %148 = sbr.rel (%p146) target = $region20
        $region19: #{tpu_custom_call.1} parent=11 // pred_region
          %150 = vsyncadd [#allocation10], 0
          %s152 = sshll.u32 %s3, 4
          %s153 = int_to_ptr.hbm [resolvable:$true] %s152
          %s154 = sshll.u32 [#allocation9], 4
          %s155 = int_to_ptr.vmem [resolvable:$true] %s154
          %157 = dma.hbm_to_vmem [thread:$0]  %s153, 64, %s155, [#allocation10]
        $region20: #{tpu_custom_call.1} parent=11 // pred_fallthru
          _
      $region12: #{tpu_custom_call.1} parent=5 // pred_fallthru
        _
      %p158 = scmp.lt.s32.totalorder %s23, 2
      // Predicated region
      $region21: #{tpu_custom_call.1} parent=5 // pred_check
        %p159 = pneg %p158
      $region22: #{tpu_custom_call.1} parent=5 // pred_check_branch
        %161 = sbr.rel (%p159) target = $region24
      $region23: #{tpu_custom_call.1} parent=5 // pred_region
        // Predicated region
        $region25: #{tpu_custom_call.1} parent=23 // pred_check
          %p162 = pneg %p43
        $region26: #{tpu_custom_call.1} parent=23 // pred_check_branch
          %164 = sbr.rel (%p162) target = $region28
        $region27: #{tpu_custom_call.1} parent=23 // pred_region
          %s165 = smul.u32 4, %s23
          %p166 = scmp.lt.s32.totalorder %s165, 7
          %s167 = scalar_select %p166, %s165, 7
          %s168 = smul.addr %s167, 20
          %s169 = smul.addr %s168, 4
          %s170 = scalar_lea.vmem %s1, %s169
          %s171 = smul.u32 4, %s23
        $region28: #{tpu_custom_call.1} parent=23 // pred_fallthru
          _
      $region24: #{tpu_custom_call.1} parent=5 // pred_fallthru
        _
      %p172 = scmp.le.s32.totalorder 1, %s23
      %p173 = scmp.lt.s32.totalorder %s23, 3
      %p174 = pnand %p172, %p173
      %p175 = pneg %p174
      // Predicated region
      $region29: #{tpu_custom_call.1} parent=5 // pred_check
        _
      $region30: #{tpu_custom_call.1} parent=5 // pred_check_branch
        %177 = sbr.rel (%p174) target = $region32
      $region31: #{tpu_custom_call.1} parent=5 // pred_region
        %s178 = ssub.s32 %s23, 1
        // Predicated region
        $region33: #{tpu_custom_call.1} parent=31 // pred_check
          %p179 = pneg %p70
        $region34: #{tpu_custom_call.1} parent=31 // pred_check_branch
          %181 = sbr.rel (%p179) target = $region36
        $region35: #{tpu_custom_call.1} parent=31 // pred_region
          %183 = dma.done [#allocation7], 36864
        $region36: #{tpu_custom_call.1} parent=31 // pred_fallthru
          _
        // Predicated region
        $region37: #{tpu_custom_call.1} parent=31 // pred_check
          %p184 = pneg %p91
        $region38: #{tpu_custom_call.1} parent=31 // pred_check_branch
          %186 = sbr.rel (%p184) target = $region40
        $region39: #{tpu_custom_call.1} parent=31 // pred_region
          %188 = dma.done [#allocation10], 64
        $region40: #{tpu_custom_call.1} parent=31 // pred_fallthru
          _
        %s189 = smul.u32 4, %s28
        %p190 = scmp.lt.s32.totalorder %s189, 7
        %s191 = scalar_select %p190, %s189, 7
        %s192 = smul.addr %s191, 20
        %s193 = smul.addr %s192, 4
        %s194 = scalar_lea.vmem %s1, %s193
        %p195 = pneg %p49
        %p196 = pneg %p46
        %p197 = pneg %p70
        %p198 = pneg %p67
        %p199 = pneg %p91
        %p200 = pneg %p88
        %p201 = pneg %p117
        %p202 = pneg %p114
        %s203 = sand.u32 %s104, 1
        %s204 = scalar_lea.sflag [#allocation8], %s203
        %s205 = sand.u32 %s104, 1
        %s206 = smul.addr %s205, 256
        %s207 = scalar_lea.vmem [#allocation11], %s206
        %s208 = smul.u32 4, %s28
        %p209 = scmp.lt.s32.totalorder %s208, 7
        %s210 = scalar_select %p209, %s208, 7
        %s211 = smul.addr %s210, 20
        %s212 = smul.addr %s211, 4
        %s213 = scalar_lea.vmem %s1, %s212
        %s214 = smul.u32 4, %s28
        %s215 = smul.u32 4, %s28
        %v216 = vld [vmem:[%s213] sm:$0xf]
        %v217 = vld [vmem:[%s213 + $0x8] sm:$0xf]
        %v218 = vld [vmem:[%s213 + $0x10] sm:$0xf]
        %v219 = vld [vmem:[%s213 + $0x18] sm:$0xf]
        %v220 = vld [vmem:[%s213 + $0x20] sm:$0xf]
        %v221 = vld [vmem:[%s213 + $0x28] sm:$0xf]
        %v222 = vld [vmem:[%s213 + $0x30] sm:$0xf]
        %v223 = vld [vmem:[%s213 + $0x38] sm:$0xf]
        %v224 = vld [vmem:[%s213 + $0x50] sm:$0xf]
        %v225 = vld [vmem:[%s213 + $0x58] sm:$0xf]
        %v226 = vld [vmem:[%s213 + $0x60] sm:$0xf]
        %v227 = vld [vmem:[%s213 + $0x68] sm:$0xf]
        %v228 = vld [vmem:[%s213 + $0x70] sm:$0xf]
        %v229 = vld [vmem:[%s213 + $0x78] sm:$0xf]
        %v230 = vld [vmem:[%s213 + $0x80] sm:$0xf]
        %v231 = vld [vmem:[%s213 + $0x88] sm:$0xf]
        %v232 = vld [vmem:[%s213 + $0xa0] sm:$0xf]
        %v233 = vld [vmem:[%s213 + $0xa8] sm:$0xf]
        %v234 = vld [vmem:[%s213 + $0xb0] sm:$0xf]
        %v235 = vld [vmem:[%s213 + $0xb8] sm:$0xf]
        %v236 = vld [vmem:[%s213 + $0xc0] sm:$0xf]
        %v237 = vld [vmem:[%s213 + $0xc8] sm:$0xf]
        %v238 = vld [vmem:[%s213 + $0xd0] sm:$0xf]
        %v239 = vld [vmem:[%s213 + $0xd8] sm:$0xf]
        %v240 = vld [vmem:[%s213 + $0xf0] sm:$0xf]
        %v241 = vld [vmem:[%s213 + $0xf8] sm:$0xf]
        %v242 = vld [vmem:[%s213 + $0x100] sm:$0xf]
        %v243 = vld [vmem:[%s213 + $0x108] sm:$0xf]
        %v244 = vld [vmem:[%s213 + $0x110] sm:$0xf]
        %v245 = vld [vmem:[%s213 + $0x118] sm:$0xf]
        %v246 = vld [vmem:[%s213 + $0x120] sm:$0xf]
        %v247 = vld [vmem:[%s213 + $0x128] sm:$0xf]
        %248 = vst [vmem:[#allocation2] sm:$0xf] %v216
        %249 = vst [vmem:[#allocation2 + $0x24] sm:$0xf] %v217
        %250 = vst [vmem:[#allocation2 + $0x48] sm:$0xf] %v218
        %251 = vst [vmem:[#allocation2 + $0x6c] sm:$0xf] %v219
        %252 = vst [vmem:[#allocation2 + $0x90] sm:$0xf] %v220
        %253 = vst [vmem:[#allocation2 + $0xb4] sm:$0xf] %v221
        %254 = vst [vmem:[#allocation2 + $0xd8] sm:$0xf] %v222
        %255 = vst [vmem:[#allocation2 + $0xfc] sm:$0xf] %v223
        %256 = vst [vmem:[#allocation2 + $0x120] sm:$0xf] %v224
        %257 = vst [vmem:[#allocation2 + $0x144] sm:$0xf] %v225
        %258 = vst [vmem:[#allocation2 + $0x168] sm:$0xf] %v226
        %259 = vst [vmem:[#allocation2 + $0x18c] sm:$0xf] %v227
        %260 = vst [vmem:[#allocation2 + $0x1b0] sm:$0xf] %v228
        %261 = vst [vmem:[#allocation2 + $0x1d4] sm:$0xf] %v229
        %262 = vst [vmem:[#allocation2 + $0x1f8] sm:$0xf] %v230
        %263 = vst [vmem:[#allocation2 + $0x21c] sm:$0xf] %v231
        %264 = vst [vmem:[#allocation2 + $0x240] sm:$0xf] %v232
        %265 = vst [vmem:[#allocation2 + $0x264] sm:$0xf] %v233
        %266 = vst [vmem:[#allocation2 + $0x288] sm:$0xf] %v234
        %267 = vst [vmem:[#allocation2 + $0x2ac] sm:$0xf] %v235
        %268 = vst [vmem:[#allocation2 + $0x2d0] sm:$0xf] %v236
        %269 = vst [vmem:[#allocation2 + $0x2f4] sm:$0xf] %v237
        %270 = vst [vmem:[#allocation2 + $0x318] sm:$0xf] %v238
        %271 = vst [vmem:[#allocation2 + $0x33c] sm:$0xf] %v239
        %272 = vst [vmem:[#allocation2 + $0x360] sm:$0xf] %v240
        %273 = vst [vmem:[#allocation2 + $0x384] sm:$0xf] %v241
        %274 = vst [vmem:[#allocation2 + $0x3a8] sm:$0xf] %v242
        %275 = vst [vmem:[#allocation2 + $0x3cc] sm:$0xf] %v243
        %276 = vst [vmem:[#allocation2 + $0x3f0] sm:$0xf] %v244
        %277 = vst [vmem:[#allocation2 + $0x414] sm:$0xf] %v245
        %278 = vst [vmem:[#allocation2 + $0x438] sm:$0xf] %v246
        %279 = vst [vmem:[#allocation2 + $0x45c] sm:$0xf] %v247
        %v280 = vld [vmem:[%s213] sm:$0xf]
        %v281 = vld [vmem:[%s213 + $0x4] sm:$0x1]
        %v282 = vld [vmem:[%s213 + $0x8] sm:$0xf]
        %v283 = vld [vmem:[%s213 + $0xc] sm:$0x1]
        %v284 = vld [vmem:[%s213 + $0x10] sm:$0xf]
        %v285 = vld [vmem:[%s213 + $0x14] sm:$0x1]
        %v286 = vld [vmem:[%s213 + $0x18] sm:$0xf]
        %v287 = vld [vmem:[%s213 + $0x1c] sm:$0x1]
        %v288 = vld [vmem:[%s213 + $0x20] sm:$0xf]
        %v289 = vld [vmem:[%s213 + $0x24] sm:$0x1]
        %v290 = vld [vmem:[%s213 + $0x28] sm:$0xf]
        %v291 = vld [vmem:[%s213 + $0x2c] sm:$0x1]
        %v292 = vld [vmem:[%s213 + $0x30] sm:$0xf]
        %v293 = vld [vmem:[%s213 + $0x34] sm:$0x1]
        %v294 = vld [vmem:[%s213 + $0x38] sm:$0xf]
        %v295 = vld [vmem:[%s213 + $0x3c] sm:$0x1]
        %v296 = vld [vmem:[%s213 + $0x50] sm:$0xf]
        %v297 = vld [vmem:[%s213 + $0x54] sm:$0x1]
        %v298 = vld [vmem:[%s213 + $0x58] sm:$0xf]
        %v299 = vld [vmem:[%s213 + $0x5c] sm:$0x1]
        %v300 = vld [vmem:[%s213 + $0x60] sm:$0xf]
        %v301 = vld [vmem:[%s213 + $0x64] sm:$0x1]
        %v302 = vld [vmem:[%s213 + $0x68] sm:$0xf]
        %v303 = vld [vmem:[%s213 + $0x6c] sm:$0x1]
        %v304 = vld [vmem:[%s213 + $0x70] sm:$0xf]
        %v305 = vld [vmem:[%s213 + $0x74] sm:$0x1]
        %v306 = vld [vmem:[%s213 + $0x78] sm:$0xf]
        %v307 = vld [vmem:[%s213 + $0x7c] sm:$0x1]
        %v308 = vld [vmem:[%s213 + $0x80] sm:$0xf]
        %v309 = vld [vmem:[%s213 + $0x84] sm:$0x1]
        %v310 = vld [vmem:[%s213 + $0x88] sm:$0xf]
        %v311 = vld [vmem:[%s213 + $0x8c] sm:$0x1]
        %v312 = vld [vmem:[%s213 + $0xa0] sm:$0xf]
        %v313 = vld [vmem:[%s213 + $0xa4] sm:$0x1]
        %v314 = vld [vmem:[%s213 + $0xa8] sm:$0xf]
        %v315 = vld [vmem:[%s213 + $0xac] sm:$0x1]
        %v316 = vld [vmem:[%s213 + $0xb0] sm:$0xf]
        %v317 = vld [vmem:[%s213 + $0xb4] sm:$0x1]
        %v318 = vld [vmem:[%s213 + $0xb8] sm:$0xf]
        %v319 = vld [vmem:[%s213 + $0xbc] sm:$0x1]
        %v320 = vld [vmem:[%s213 + $0xc0] sm:$0xf]
        %v321 = vld [vmem:[%s213 + $0xc4] sm:$0x1]
        %v322 = vld [vmem:[%s213 + $0xc8] sm:$0xf]
        %v323 = vld [vmem:[%s213 + $0xcc] sm:$0x1]
        %v324 = vld [vmem:[%s213 + $0xd0] sm:$0xf]
        %v325 = vld [vmem:[%s213 + $0xd4] sm:$0x1]
        %v326 = vld [vmem:[%s213 + $0xd8] sm:$0xf]
        %v327 = vld [vmem:[%s213 + $0xdc] sm:$0x1]
        %v328 = vld [vmem:[%s213 + $0xf0] sm:$0xf]
        %v329 = vld [vmem:[%s213 + $0xf4] sm:$0x1]
        %v330 = vld [vmem:[%s213 + $0xf8] sm:$0xf]
        %v331 = vld [vmem:[%s213 + $0xfc] sm:$0x1]
        %v332 = vld [vmem:[%s213 + $0x100] sm:$0xf]
        %v333 = vld [vmem:[%s213 + $0x104] sm:$0x1]
        %v334 = vld [vmem:[%s213 + $0x108] sm:$0xf]
        %v335 = vld [vmem:[%s213 + $0x10c] sm:$0x1]
        %v336 = vld [vmem:[%s213 + $0x110] sm:$0xf]
        %v337 = vld [vmem:[%s213 + $0x114] sm:$0x1]
        %v338 = vld [vmem:[%s213 + $0x118] sm:$0xf]
        %v339 = vld [vmem:[%s213 + $0x11c] sm:$0x1]
        %v340 = vld [vmem:[%s213 + $0x120] sm:$0xf]
        %v341 = vld [vmem:[%s213 + $0x124] sm:$0x1]
        %v342 = vld [vmem:[%s213 + $0x128] sm:$0xf]
        %v343 = vld [vmem:[%s213 + $0x12c] sm:$0x1]
        %vm344 = vsmask.f32 3328
        %vm345 = vsmask.f32 7440
        %vm346 = vmor %vm344, %vm345
        %v348 = vshrl.u32 %v280, 16
        %v350 = vrot.slane %v348, 4
        %v351 = vshll.u32 %v280, 16
        %v353 = vrot.slane %v351, 5
        %v354 = vor.u32 %v350, %v353
        %v355 = vrot.slane %v354, 4
        %v357 = vshll.u32 %v281, 16
        %v359 = vrot.slane %v357, 5
        %v360 = vsel %vm346, %v355, %v359
        %v362 = vshrl.u32 %v282, 16
        %v364 = vrot.slane %v362, 4
        %v365 = vshll.u32 %v282, 16
        %v367 = vrot.slane %v365, 5
        %v368 = vor.u32 %v364, %v367
        %v369 = vrot.slane %v368, 4
        %v371 = vshll.u32 %v283, 16
        %v373 = vrot.slane %v371, 5
        %v374 = vsel %vm346, %v369, %v373
        %v376 = vshrl.u32 %v284, 16
        %v378 = vrot.slane %v376, 4
        %v379 = vshll.u32 %v284, 16
        %v381 = vrot.slane %v379, 5
        %v382 = vor.u32 %v378, %v381
        %v383 = vrot.slane %v382, 4
        %v385 = vshll.u32 %v285, 16
        %v387 = vrot.slane %v385, 5
        %v388 = vsel %vm346, %v383, %v387
        %v390 = vshrl.u32 %v286, 16
        %v392 = vrot.slane %v390, 4
        %v393 = vshll.u32 %v286, 16
        %v395 = vrot.slane %v393, 5
        %v396 = vor.u32 %v392, %v395
        %v397 = vrot.slane %v396, 4
        %v399 = vshll.u32 %v287, 16
        %v401 = vrot.slane %v399, 5
        %v402 = vsel %vm346, %v397, %v401
        %v404 = vshrl.u32 %v288, 16
        %v406 = vrot.slane %v404, 4
        %v407 = vshll.u32 %v288, 16
        %v409 = vrot.slane %v407, 5
        %v410 = vor.u32 %v406, %v409
        %v411 = vrot.slane %v410, 4
        %v413 = vshll.u32 %v289, 16
        %v415 = vrot.slane %v413, 5
        %v416 = vsel %vm346, %v411, %v415
        %v418 = vshrl.u32 %v290, 16
        %v420 = vrot.slane %v418, 4
        %v421 = vshll.u32 %v290, 16
        %v423 = vrot.slane %v421, 5
        %v424 = vor.u32 %v420, %v423
        %v425 = vrot.slane %v424, 4
        %v427 = vshll.u32 %v291, 16
        %v429 = vrot.slane %v427, 5
        %v430 = vsel %vm346, %v425, %v429
        %v432 = vshrl.u32 %v292, 16
        %v434 = vrot.slane %v432, 4
        %v435 = vshll.u32 %v292, 16
        %v437 = vrot.slane %v435, 5
        %v438 = vor.u32 %v434, %v437
        %v439 = vrot.slane %v438, 4
        %v441 = vshll.u32 %v293, 16
        %v443 = vrot.slane %v441, 5
        %v444 = vsel %vm346, %v439, %v443
        %v446 = vshrl.u32 %v294, 16
        %v448 = vrot.slane %v446, 4
        %v449 = vshll.u32 %v294, 16
        %v451 = vrot.slane %v449, 5
        %v452 = vor.u32 %v448, %v451
        %v453 = vrot.slane %v452, 4
        %v455 = vshll.u32 %v295, 16
        %v457 = vrot.slane %v455, 5
        %v458 = vsel %vm346, %v453, %v457
        %v460 = vshrl.u32 %v296, 16
        %v462 = vrot.slane %v460, 4
        %v463 = vshll.u32 %v296, 16
        %v465 = vrot.slane %v463, 5
        %v466 = vor.u32 %v462, %v465
        %v467 = vrot.slane %v466, 4
        %v469 = vshll.u32 %v297, 16
        %v471 = vrot.slane %v469, 5
        %v472 = vsel %vm346, %v467, %v471
        %v474 = vshrl.u32 %v298, 16
        %v476 = vrot.slane %v474, 4
        %v477 = vshll.u32 %v298, 16
        %v479 = vrot.slane %v477, 5
        %v480 = vor.u32 %v476, %v479
        %v481 = vrot.slane %v480, 4
        %v483 = vshll.u32 %v299, 16
        %v485 = vrot.slane %v483, 5
        %v486 = vsel %vm346, %v481, %v485
        %v488 = vshrl.u32 %v300, 16
        %v490 = vrot.slane %v488, 4
        %v491 = vshll.u32 %v300, 16
        %v493 = vrot.slane %v491, 5
        %v494 = vor.u32 %v490, %v493
        %v495 = vrot.slane %v494, 4
        %v497 = vshll.u32 %v301, 16
        %v499 = vrot.slane %v497, 5
        %v500 = vsel %vm346, %v495, %v499
        %v502 = vshrl.u32 %v302, 16
        %v504 = vrot.slane %v502, 4
        %v505 = vshll.u32 %v302, 16
        %v507 = vrot.slane %v505, 5
        %v508 = vor.u32 %v504, %v507
        %v509 = vrot.slane %v508, 4
        %v511 = vshll.u32 %v303, 16
        %v513 = vrot.slane %v511, 5
        %v514 = vsel %vm346, %v509, %v513
        %v516 = vshrl.u32 %v304, 16
        %v518 = vrot.slane %v516, 4
        %v519 = vshll.u32 %v304, 16
        %v521 = vrot.slane %v519, 5
        %v522 = vor.u32 %v518, %v521
        %v523 = vrot.slane %v522, 4
        %v525 = vshll.u32 %v305, 16
        %v527 = vrot.slane %v525, 5
        %v528 = vsel %vm346, %v523, %v527
        %v530 = vshrl.u32 %v306, 16
        %v532 = vrot.slane %v530, 4
        %v533 = vshll.u32 %v306, 16
        %v535 = vrot.slane %v533, 5
        %v536 = vor.u32 %v532, %v535
        %v537 = vrot.slane %v536, 4
        %v539 = vshll.u32 %v307, 16
        %v541 = vrot.slane %v539, 5
        %v542 = vsel %vm346, %v537, %v541
        %v544 = vshrl.u32 %v308, 16
        %v546 = vrot.slane %v544, 4
        %v547 = vshll.u32 %v308, 16
        %v549 = vrot.slane %v547, 5
        %v550 = vor.u32 %v546, %v549
        %v551 = vrot.slane %v550, 4
        %v553 = vshll.u32 %v309, 16
        %v555 = vrot.slane %v553, 5
        %v556 = vsel %vm346, %v551, %v555
        %v558 = vshrl.u32 %v310, 16
        %v560 = vrot.slane %v558, 4
        %v561 = vshll.u32 %v310, 16
        %v563 = vrot.slane %v561, 5
        %v564 = vor.u32 %v560, %v563
        %v565 = vrot.slane %v564, 4
        %v567 = vshll.u32 %v311, 16
        %v569 = vrot.slane %v567, 5
        %v570 = vsel %vm346, %v565, %v569
        %v572 = vshrl.u32 %v312, 16
        %v574 = vrot.slane %v572, 4
        %v575 = vshll.u32 %v312, 16
        %v577 = vrot.slane %v575, 5
        %v578 = vor.u32 %v574, %v577
        %v579 = vrot.slane %v578, 4
        %v581 = vshll.u32 %v313, 16
        %v583 = vrot.slane %v581, 5
        %v584 = vsel %vm346, %v579, %v583
        %v586 = vshrl.u32 %v314, 16
        %v588 = vrot.slane %v586, 4
        %v589 = vshll.u32 %v314, 16
        %v591 = vrot.slane %v589, 5
        %v592 = vor.u32 %v588, %v591
        %v593 = vrot.slane %v592, 4
        %v595 = vshll.u32 %v315, 16
        %v597 = vrot.slane %v595, 5
        %v598 = vsel %vm346, %v593, %v597
        %v600 = vshrl.u32 %v316, 16
        %v602 = vrot.slane %v600, 4
        %v603 = vshll.u32 %v316, 16
        %v605 = vrot.slane %v603, 5
        %v606 = vor.u32 %v602, %v605
        %v607 = vrot.slane %v606, 4
        %v609 = vshll.u32 %v317, 16
        %v611 = vrot.slane %v609, 5
        %v612 = vsel %vm346, %v607, %v611
        %v614 = vshrl.u32 %v318, 16
        %v616 = vrot.slane %v614, 4
        %v617 = vshll.u32 %v318, 16
        %v619 = vrot.slane %v617, 5
        %v620 = vor.u32 %v616, %v619
        %v621 = vrot.slane %v620, 4
        %v623 = vshll.u32 %v319, 16
        %v625 = vrot.slane %v623, 5
        %v626 = vsel %vm346, %v621, %v625
        %v628 = vshrl.u32 %v320, 16
        %v630 = vrot.slane %v628, 4
        %v631 = vshll.u32 %v320, 16
        %v633 = vrot.slane %v631, 5
        %v634 = vor.u32 %v630, %v633
        %v635 = vrot.slane %v634, 4
        %v637 = vshll.u32 %v321, 16
        %v639 = vrot.slane %v637, 5
        %v640 = vsel %vm346, %v635, %v639
        %v642 = vshrl.u32 %v322, 16
        %v644 = vrot.slane %v642, 4
        %v645 = vshll.u32 %v322, 16
        %v647 = vrot.slane %v645, 5
        %v648 = vor.u32 %v644, %v647
        %v649 = vrot.slane %v648, 4
        %v651 = vshll.u32 %v323, 16
        %v653 = vrot.slane %v651, 5
        %v654 = vsel %vm346, %v649, %v653
        %v656 = vshrl.u32 %v324, 16
        %v658 = vrot.slane %v656, 4
        %v659 = vshll.u32 %v324, 16
        %v661 = vrot.slane %v659, 5
        %v662 = vor.u32 %v658, %v661
        %v663 = vrot.slane %v662, 4
        %v665 = vshll.u32 %v325, 16
        %v667 = vrot.slane %v665, 5
        %v668 = vsel %vm346, %v663, %v667
        %v670 = vshrl.u32 %v326, 16
        %v672 = vrot.slane %v670, 4
        %v673 = vshll.u32 %v326, 16
        %v675 = vrot.slane %v673, 5
        %v676 = vor.u32 %v672, %v675
        %v677 = vrot.slane %v676, 4
        %v679 = vshll.u32 %v327, 16
        %v681 = vrot.slane %v679, 5
        %v682 = vsel %vm346, %v677, %v681
        %v684 = vshrl.u32 %v328, 16
        %v686 = vrot.slane %v684, 4
        %v687 = vshll.u32 %v328, 16
        %v689 = vrot.slane %v687, 5
        %v690 = vor.u32 %v686, %v689
        %v691 = vrot.slane %v690, 4
        %v693 = vshll.u32 %v329, 16
        %v695 = vrot.slane %v693, 5
        %v696 = vsel %vm346, %v691, %v695
        %v698 = vshrl.u32 %v330, 16
        %v700 = vrot.slane %v698, 4
        %v701 = vshll.u32 %v330, 16
        %v703 = vrot.slane %v701, 5
        %v704 = vor.u32 %v700, %v703
        %v705 = vrot.slane %v704, 4
        %v707 = vshll.u32 %v331, 16
        %v709 = vrot.slane %v707, 5
        %v710 = vsel %vm346, %v705, %v709
        %v712 = vshrl.u32 %v332, 16
        %v714 = vrot.slane %v712, 4
        %v715 = vshll.u32 %v332, 16
        %v717 = vrot.slane %v715, 5
        %v718 = vor.u32 %v714, %v717
        %v719 = vrot.slane %v718, 4
        %v721 = vshll.u32 %v333, 16
        %v723 = vrot.slane %v721, 5
        %v724 = vsel %vm346, %v719, %v723
        %v726 = vshrl.u32 %v334, 16
        %v728 = vrot.slane %v726, 4
        %v729 = vshll.u32 %v334, 16
        %v731 = vrot.slane %v729, 5
        %v732 = vor.u32 %v728, %v731
        %v733 = vrot.slane %v732, 4
        %v735 = vshll.u32 %v335, 16
        %v737 = vrot.slane %v735, 5
        %v738 = vsel %vm346, %v733, %v737
        %v740 = vshrl.u32 %v336, 16
        %v742 = vrot.slane %v740, 4
        %v743 = vshll.u32 %v336, 16
        %v745 = vrot.slane %v743, 5
        %v746 = vor.u32 %v742, %v745
        %v747 = vrot.slane %v746, 4
        %v749 = vshll.u32 %v337, 16
        %v751 = vrot.slane %v749, 5
        %v752 = vsel %vm346, %v747, %v751
        %v754 = vshrl.u32 %v338, 16
        %v756 = vrot.slane %v754, 4
        %v757 = vshll.u32 %v338, 16
        %v759 = vrot.slane %v757, 5
        %v760 = vor.u32 %v756, %v759
        %v761 = vrot.slane %v760, 4
        %v763 = vshll.u32 %v339, 16
        %v765 = vrot.slane %v763, 5
        %v766 = vsel %vm346, %v761, %v765
        %v768 = vshrl.u32 %v340, 16
        %v770 = vrot.slane %v768, 4
        %v771 = vshll.u32 %v340, 16
        %v773 = vrot.slane %v771, 5
        %v774 = vor.u32 %v770, %v773
        %v775 = vrot.slane %v774, 4
        %v777 = vshll.u32 %v341, 16
        %v779 = vrot.slane %v777, 5
        %v780 = vsel %vm346, %v775, %v779
        %v782 = vshrl.u32 %v342, 16
        %v784 = vrot.slane %v782, 4
        %v785 = vshll.u32 %v342, 16
        %v787 = vrot.slane %v785, 5
        %v788 = vor.u32 %v784, %v787
        %v789 = vrot.slane %v788, 4
        %v791 = vshll.u32 %v343, 16
        %v793 = vrot.slane %v791, 5
        %v794 = vsel %vm346, %v789, %v793
        %827 = vst [vmem:[#allocation2 + $0x4] sm:$0xf] %v360
        %828 = vst [vmem:[#allocation2 + $0x28] sm:$0xf] %v374
        %829 = vst [vmem:[#allocation2 + $0x4c] sm:$0xf] %v388
        %830 = vst [vmem:[#allocation2 + $0x70] sm:$0xf] %v402
        %831 = vst [vmem:[#allocation2 + $0x94] sm:$0xf] %v416
        %832 = vst [vmem:[#allocation2 + $0xb8] sm:$0xf] %v430
        %833 = vst [vmem:[#allocation2 + $0xdc] sm:$0xf] %v444
        %834 = vst [vmem:[#allocation2 + $0x100] sm:$0xf] %v458
        %835 = vst [vmem:[#allocation2 + $0x124] sm:$0xf] %v472
        %836 = vst [vmem:[#allocation2 + $0x148] sm:$0xf] %v486
        %837 = vst [vmem:[#allocation2 + $0x16c] sm:$0xf] %v500
        %838 = vst [vmem:[#allocation2 + $0x190] sm:$0xf] %v514
        %839 = vst [vmem:[#allocation2 + $0x1b4] sm:$0xf] %v528
        %840 = vst [vmem:[#allocation2 + $0x1d8] sm:$0xf] %v542
        %841 = vst [vmem:[#allocation2 + $0x1fc] sm:$0xf] %v556
        %842 = vst [vmem:[#allocation2 + $0x220] sm:$0xf] %v570
        %843 = vst [vmem:[#allocation2 + $0x244] sm:$0xf] %v584
        %844 = vst [vmem:[#allocation2 + $0x268] sm:$0xf] %v598
        %845 = vst [vmem:[#allocation2 + $0x28c] sm:$0xf] %v612
        %846 = vst [vmem:[#allocation2 + $0x2b0] sm:$0xf] %v626
        %847 = vst [vmem:[#allocation2 + $0x2d4] sm:$0xf] %v640
        %848 = vst [vmem:[#allocation2 + $0x2f8] sm:$0xf] %v654
        %849 = vst [vmem:[#allocation2 + $0x31c] sm:$0xf] %v668
        %850 = vst [vmem:[#allocation2 + $0x340] sm:$0xf] %v682
        %851 = vst [vmem:[#allocation2 + $0x364] sm:$0xf] %v696
        %852 = vst [vmem:[#allocation2 + $0x388] sm:$0xf] %v710
        %853 = vst [vmem:[#allocation2 + $0x3ac] sm:$0xf] %v724
        %854 = vst [vmem:[#allocation2 + $0x3d0] sm:$0xf] %v738
        %855 = vst [vmem:[#allocation2 + $0x3f4] sm:$0xf] %v752
        %856 = vst [vmem:[#allocation2 + $0x418] sm:$0xf] %v766
        %857 = vst [vmem:[#allocation2 + $0x43c] sm:$0xf] %v780
        %858 = vst [vmem:[#allocation2 + $0x460] sm:$0xf] %v794
        %v859 = vld [vmem:[%s213] sm:$0xe]
        %v860 = vld [vmem:[%s213 + $0x4] sm:$0x1]
        %v861 = vld [vmem:[%s213 + $0x8] sm:$0xe]
        %v862 = vld [vmem:[%s213 + $0xc] sm:$0x1]
        %v863 = vld [vmem:[%s213 + $0x10] sm:$0xe]
        %v864 = vld [vmem:[%s213 + $0x14] sm:$0x1]
        %v865 = vld [vmem:[%s213 + $0x18] sm:$0xe]
        %v866 = vld [vmem:[%s213 + $0x1c] sm:$0x1]
        %v867 = vld [vmem:[%s213 + $0x20] sm:$0xe]
        %v868 = vld [vmem:[%s213 + $0x24] sm:$0x1]
        %v869 = vld [vmem:[%s213 + $0x28] sm:$0xe]
        %v870 = vld [vmem:[%s213 + $0x2c] sm:$0x1]
        %v871 = vld [vmem:[%s213 + $0x30] sm:$0xe]
        %v872 = vld [vmem:[%s213 + $0x34] sm:$0x1]
        %v873 = vld [vmem:[%s213 + $0x38] sm:$0xe]
        %v874 = vld [vmem:[%s213 + $0x3c] sm:$0x1]
        %v875 = vld [vmem:[%s213 + $0x50] sm:$0xe]
        %v876 = vld [vmem:[%s213 + $0x54] sm:$0x1]
        %v877 = vld [vmem:[%s213 + $0x58] sm:$0xe]
        %v878 = vld [vmem:[%s213 + $0x5c] sm:$0x1]
        %v879 = vld [vmem:[%s213 + $0x60] sm:$0xe]
        %v880 = vld [vmem:[%s213 + $0x64] sm:$0x1]
        %v881 = vld [vmem:[%s213 + $0x68] sm:$0xe]
        %v882 = vld [vmem:[%s213 + $0x6c] sm:$0x1]
        %v883 = vld [vmem:[%s213 + $0x70] sm:$0xe]
        %v884 = vld [vmem:[%s213 + $0x74] sm:$0x1]
        %v885 = vld [vmem:[%s213 + $0x78] sm:$0xe]
        %v886 = vld [vmem:[%s213 + $0x7c] sm:$0x1]
        %v887 = vld [vmem:[%s213 + $0x80] sm:$0xe]
        %v888 = vld [vmem:[%s213 + $0x84] sm:$0x1]
        %v889 = vld [vmem:[%s213 + $0x88] sm:$0xe]
        %v890 = vld [vmem:[%s213 + $0x8c] sm:$0x1]
        %v891 = vld [vmem:[%s213 + $0xa0] sm:$0xe]
        %v892 = vld [vmem:[%s213 + $0xa4] sm:$0x1]
        %v893 = vld [vmem:[%s213 + $0xa8] sm:$0xe]
        %v894 = vld [vmem:[%s213 + $0xac] sm:$0x1]
        %v895 = vld [vmem:[%s213 + $0xb0] sm:$0xe]
        %v896 = vld [vmem:[%s213 + $0xb4] sm:$0x1]
        %v897 = vld [vmem:[%s213 + $0xb8] sm:$0xe]
        %v898 = vld [vmem:[%s213 + $0xbc] sm:$0x1]
        %v899 = vld [vmem:[%s213 + $0xc0] sm:$0xe]
        %v900 = vld [vmem:[%s213 + $0xc4] sm:$0x1]
        %v901 = vld [vmem:[%s213 + $0xc8] sm:$0xe]
        %v902 = vld [vmem:[%s213 + $0xcc] sm:$0x1]
        %v903 = vld [vmem:[%s213 + $0xd0] sm:$0xe]
        %v904 = vld [vmem:[%s213 + $0xd4] sm:$0x1]
        %v905 = vld [vmem:[%s213 + $0xd8] sm:$0xe]
        %v906 = vld [vmem:[%s213 + $0xdc] sm:$0x1]
        %v907 = vld [vmem:[%s213 + $0xf0] sm:$0xe]
        %v908 = vld [vmem:[%s213 + $0xf4] sm:$0x1]
        %v909 = vld [vmem:[%s213 + $0xf8] sm:$0xe]
        %v910 = vld [vmem:[%s213 + $0xfc] sm:$0x1]
        %v911 = vld [vmem:[%s213 + $0x100] sm:$0xe]
        %v912 = vld [vmem:[%s213 + $0x104] sm:$0x1]
        %v913 = vld [vmem:[%s213 + $0x108] sm:$0xe]
        %v914 = vld [vmem:[%s213 + $0x10c] sm:$0x1]
        %v915 = vld [vmem:[%s213 + $0x110] sm:$0xe]
        %v916 = vld [vmem:[%s213 + $0x114] sm:$0x1]
        %v917 = vld [vmem:[%s213 + $0x118] sm:$0xe]
        %v918 = vld [vmem:[%s213 + $0x11c] sm:$0x1]
        %v919 = vld [vmem:[%s213 + $0x120] sm:$0xe]
        %v920 = vld [vmem:[%s213 + $0x124] sm:$0x1]
        %v921 = vld [vmem:[%s213 + $0x128] sm:$0xe]
        %v922 = vld [vmem:[%s213 + $0x12c] sm:$0x1]
        %vm987 = vcmask 1042432
        %vm988 = vcmask 1046532
        %vm989 = vmor %vm987, %vm988
        %v990 = vrot.slane %v859, 5
        %v991 = vrot.slane %v990, 4
        %v992 = vrot.slane %v860, 5
        %v993 = vsel %vm989, %v991, %v992
        %v994 = vrot.slane %v861, 5
        %v995 = vrot.slane %v994, 4
        %v996 = vrot.slane %v862, 5
        %v997 = vsel %vm989, %v995, %v996
        %v998 = vrot.slane %v863, 5
        %v999 = vrot.slane %v998, 4
        %v1000 = vrot.slane %v864, 5
        %v1001 = vsel %vm989, %v999, %v1000
        %v1002 = vrot.slane %v865, 5
        %v1003 = vrot.slane %v1002, 4
        %v1004 = vrot.slane %v866, 5
        %v1005 = vsel %vm989, %v1003, %v1004
        %v1006 = vrot.slane %v867, 5
        %v1007 = vrot.slane %v1006, 4
        %v1008 = vrot.slane %v868, 5
        %v1009 = vsel %vm989, %v1007, %v1008
        %v1010 = vrot.slane %v869, 5
        %v1011 = vrot.slane %v1010, 4
        %v1012 = vrot.slane %v870, 5
        %v1013 = vsel %vm989, %v1011, %v1012
        %v1014 = vrot.slane %v871, 5
        %v1015 = vrot.slane %v1014, 4
        %v1016 = vrot.slane %v872, 5
        %v1017 = vsel %vm989, %v1015, %v1016
        %v1018 = vrot.slane %v873, 5
        %v1019 = vrot.slane %v1018, 4
        %v1020 = vrot.slane %v874, 5
        %v1021 = vsel %vm989, %v1019, %v1020
        %v1022 = vrot.slane %v875, 5
        %v1023 = vrot.slane %v1022, 4
        %v1024 = vrot.slane %v876, 5
        %v1025 = vsel %vm989, %v1023, %v1024
        %v1026 = vrot.slane %v877, 5
        %v1027 = vrot.slane %v1026, 4
        %v1028 = vrot.slane %v878, 5
        %v1029 = vsel %vm989, %v1027, %v1028
        %v1030 = vrot.slane %v879, 5
        %v1031 = vrot.slane %v1030, 4
        %v1032 = vrot.slane %v880, 5
        %v1033 = vsel %vm989, %v1031, %v1032
        %v1034 = vrot.slane %v881, 5
        %v1035 = vrot.slane %v1034, 4
        %v1036 = vrot.slane %v882, 5
        %v1037 = vsel %vm989, %v1035, %v1036
        %v1038 = vrot.slane %v883, 5
        %v1039 = vrot.slane %v1038, 4
        %v1040 = vrot.slane %v884, 5
        %v1041 = vsel %vm989, %v1039, %v1040
        %v1042 = vrot.slane %v885, 5
        %v1043 = vrot.slane %v1042, 4
        %v1044 = vrot.slane %v886, 5
        %v1045 = vsel %vm989, %v1043, %v1044
        %v1046 = vrot.slane %v887, 5
        %v1047 = vrot.slane %v1046, 4
        %v1048 = vrot.slane %v888, 5
        %v1049 = vsel %vm989, %v1047, %v1048
        %v1050 = vrot.slane %v889, 5
        %v1051 = vrot.slane %v1050, 4
        %v1052 = vrot.slane %v890, 5
        %v1053 = vsel %vm989, %v1051, %v1052
        %v1054 = vrot.slane %v891, 5
        %v1055 = vrot.slane %v1054, 4
        %v1056 = vrot.slane %v892, 5
        %v1057 = vsel %vm989, %v1055, %v1056
        %v1058 = vrot.slane %v893, 5
        %v1059 = vrot.slane %v1058, 4
        %v1060 = vrot.slane %v894, 5
        %v1061 = vsel %vm989, %v1059, %v1060
        %v1062 = vrot.slane %v895, 5
        %v1063 = vrot.slane %v1062, 4
        %v1064 = vrot.slane %v896, 5
        %v1065 = vsel %vm989, %v1063, %v1064
        %v1066 = vrot.slane %v897, 5
        %v1067 = vrot.slane %v1066, 4
        %v1068 = vrot.slane %v898, 5
        %v1069 = vsel %vm989, %v1067, %v1068
        %v1070 = vrot.slane %v899, 5
        %v1071 = vrot.slane %v1070, 4
        %v1072 = vrot.slane %v900, 5
        %v1073 = vsel %vm989, %v1071, %v1072
        %v1074 = vrot.slane %v901, 5
        %v1075 = vrot.slane %v1074, 4
        %v1076 = vrot.slane %v902, 5
        %v1077 = vsel %vm989, %v1075, %v1076
        %v1078 = vrot.slane %v903, 5
        %v1079 = vrot.slane %v1078, 4
        %v1080 = vrot.slane %v904, 5
        %v1081 = vsel %vm989, %v1079, %v1080
        %v1082 = vrot.slane %v905, 5
        %v1083 = vrot.slane %v1082, 4
        %v1084 = vrot.slane %v906, 5
        %v1085 = vsel %vm989, %v1083, %v1084
        %v1086 = vrot.slane %v907, 5
        %v1087 = vrot.slane %v1086, 4
        %v1088 = vrot.slane %v908, 5
        %v1089 = vsel %vm989, %v1087, %v1088
        %v1090 = vrot.slane %v909, 5
        %v1091 = vrot.slane %v1090, 4
        %v1092 = vrot.slane %v910, 5
        %v1093 = vsel %vm989, %v1091, %v1092
        %v1094 = vrot.slane %v911, 5
        %v1095 = vrot.slane %v1094, 4
        %v1096 = vrot.slane %v912, 5
        %v1097 = vsel %vm989, %v1095, %v1096
        %v1098 = vrot.slane %v913, 5
        %v1099 = vrot.slane %v1098, 4
        %v1100 = vrot.slane %v914, 5
        %v1101 = vsel %vm989, %v1099, %v1100
        %v1102 = vrot.slane %v915, 5
        %v1103 = vrot.slane %v1102, 4
        %v1104 = vrot.slane %v916, 5
        %v1105 = vsel %vm989, %v1103, %v1104
        %v1106 = vrot.slane %v917, 5
        %v1107 = vrot.slane %v1106, 4
        %v1108 = vrot.slane %v918, 5
        %v1109 = vsel %vm989, %v1107, %v1108
        %v1110 = vrot.slane %v919, 5
        %v1111 = vrot.slane %v1110, 4
        %v1112 = vrot.slane %v920, 5
        %v1113 = vsel %vm989, %v1111, %v1112
        %v1114 = vrot.slane %v921, 5
        %v1115 = vrot.slane %v1114, 4
        %v1116 = vrot.slane %v922, 5
        %v1117 = vsel %vm989, %v1115, %v1116
        %1150 = vst [vmem:[#allocation2 + $0x8] sm:$0xf] %v993
        %1151 = vst [vmem:[#allocation2 + $0x2c] sm:$0xf] %v997
        %1152 = vst [vmem:[#allocation2 + $0x50] sm:$0xf] %v1001
        %1153 = vst [vmem:[#allocation2 + $0x74] sm:$0xf] %v1005
        %1154 = vst [vmem:[#allocation2 + $0x98] sm:$0xf] %v1009
        %1155 = vst [vmem:[#allocation2 + $0xbc] sm:$0xf] %v1013
        %1156 = vst [vmem:[#allocation2 + $0xe0] sm:$0xf] %v1017
        %1157 = vst [vmem:[#allocation2 + $0x104] sm:$0xf] %v1021
        %1158 = vst [vmem:[#allocation2 + $0x128] sm:$0xf] %v1025
        %1159 = vst [vmem:[#allocation2 + $0x14c] sm:$0xf] %v1029
        %1160 = vst [vmem:[#allocation2 + $0x170] sm:$0xf] %v1033
        %1161 = vst [vmem:[#allocation2 + $0x194] sm:$0xf] %v1037
        %1162 = vst [vmem:[#allocation2 + $0x1b8] sm:$0xf] %v1041
        %1163 = vst [vmem:[#allocation2 + $0x1dc] sm:$0xf] %v1045
        %1164 = vst [vmem:[#allocation2 + $0x200] sm:$0xf] %v1049
        %1165 = vst [vmem:[#allocation2 + $0x224] sm:$0xf] %v1053
        %1166 = vst [vmem:[#allocation2 + $0x248] sm:$0xf] %v1057
        %1167 = vst [vmem:[#allocation2 + $0x26c] sm:$0xf] %v1061
        %1168 = vst [vmem:[#allocation2 + $0x290] sm:$0xf] %v1065
        %1169 = vst [vmem:[#allocation2 + $0x2b4] sm:$0xf] %v1069
        %1170 = vst [vmem:[#allocation2 + $0x2d8] sm:$0xf] %v1073
        %1171 = vst [vmem:[#allocation2 + $0x2fc] sm:$0xf] %v1077
        %1172 = vst [vmem:[#allocation2 + $0x320] sm:$0xf] %v1081
        %1173 = vst [vmem:[#allocation2 + $0x344] sm:$0xf] %v1085
        %1174 = vst [vmem:[#allocation2 + $0x368] sm:$0xf] %v1089
        %1175 = vst [vmem:[#allocation2 + $0x38c] sm:$0xf] %v1093
        %1176 = vst [vmem:[#allocation2 + $0x3b0] sm:$0xf] %v1097
        %1177 = vst [vmem:[#allocation2 + $0x3d4] sm:$0xf] %v1101
        %1178 = vst [vmem:[#allocation2 + $0x3f8] sm:$0xf] %v1105
        %1179 = vst [vmem:[#allocation2 + $0x41c] sm:$0xf] %v1109
        %1180 = vst [vmem:[#allocation2 + $0x440] sm:$0xf] %v1113
        %1181 = vst [vmem:[#allocation2 + $0x464] sm:$0xf] %v1117
        %s1182 = scalar_lea.vmem %s213, 8
        %v1183 = vld [vmem:[%s1182] sm:$0xf]
        %v1184 = vld [vmem:[%s1182 + $0x8] sm:$0xf]
        %v1185 = vld [vmem:[%s1182 + $0x10] sm:$0xf]
        %v1186 = vld [vmem:[%s1182 + $0x18] sm:$0xf]
        %v1187 = vld [vmem:[%s1182 + $0x20] sm:$0xf]
        %v1188 = vld [vmem:[%s1182 + $0x28] sm:$0xf]
        %v1189 = vld [vmem:[%s1182 + $0x30] sm:$0xf]
        %v1190 = vld [vmem:[%s1182 + $0x38] sm:$0xf]
        %v1191 = vld [vmem:[%s1182 + $0x50] sm:$0xf]
        %v1192 = vld [vmem:[%s1182 + $0x58] sm:$0xf]
        %v1193 = vld [vmem:[%s1182 + $0x60] sm:$0xf]
        %v1194 = vld [vmem:[%s1182 + $0x68] sm:$0xf]
        %v1195 = vld [vmem:[%s1182 + $0x70] sm:$0xf]
        %v1196 = vld [vmem:[%s1182 + $0x78] sm:$0xf]
        %v1197 = vld [vmem:[%s1182 + $0x80] sm:$0xf]
        %v1198 = vld [vmem:[%s1182 + $0x88] sm:$0xf]
        %v1199 = vld [vmem:[%s1182 + $0xa0] sm:$0xf]
        %v1200 = vld [vmem:[%s1182 + $0xa8] sm:$0xf]
        %v1201 = vld [vmem:[%s1182 + $0xb0] sm:$0xf]
        %v1202 = vld [vmem:[%s1182 + $0xb8] sm:$0xf]
        %v1203 = vld [vmem:[%s1182 + $0xc0] sm:$0xf]
        %v1204 = vld [vmem:[%s1182 + $0xc8] sm:$0xf]
        %v1205 = vld [vmem:[%s1182 + $0xd0] sm:$0xf]
        %v1206 = vld [vmem:[%s1182 + $0xd8] sm:$0xf]
        %v1207 = vld [vmem:[%s1182 + $0xf0] sm:$0xf]
        %v1208 = vld [vmem:[%s1182 + $0xf8] sm:$0xf]
        %v1209 = vld [vmem:[%s1182 + $0x100] sm:$0xf]
        %v1210 = vld [vmem:[%s1182 + $0x108] sm:$0xf]
        %v1211 = vld [vmem:[%s1182 + $0x110] sm:$0xf]
        %v1212 = vld [vmem:[%s1182 + $0x118] sm:$0xf]
        %v1213 = vld [vmem:[%s1182 + $0x120] sm:$0xf]
        %v1214 = vld [vmem:[%s1182 + $0x128] sm:$0xf]
        %1215 = vst [vmem:[#allocation2 + $0xc] sm:$0xf] %v1183
        %1216 = vst [vmem:[#allocation2 + $0x30] sm:$0xf] %v1184
        %1217 = vst [vmem:[#allocation2 + $0x54] sm:$0xf] %v1185
        %1218 = vst [vmem:[#allocation2 + $0x78] sm:$0xf] %v1186
        %1219 = vst [vmem:[#allocation2 + $0x9c] sm:$0xf] %v1187
        %1220 = vst [vmem:[#allocation2 + $0xc0] sm:$0xf] %v1188
        %1221 = vst [vmem:[#allocation2 + $0xe4] sm:$0xf] %v1189
        %1222 = vst [vmem:[#allocation2 + $0x108] sm:$0xf] %v1190
        %1223 = vst [vmem:[#allocation2 + $0x12c] sm:$0xf] %v1191
        %1224 = vst [vmem:[#allocation2 + $0x150] sm:$0xf] %v1192
        %1225 = vst [vmem:[#allocation2 + $0x174] sm:$0xf] %v1193
        %1226 = vst [vmem:[#allocation2 + $0x198] sm:$0xf] %v1194
        %1227 = vst [vmem:[#allocation2 + $0x1bc] sm:$0xf] %v1195
        %1228 = vst [vmem:[#allocation2 + $0x1e0] sm:$0xf] %v1196
        %1229 = vst [vmem:[#allocation2 + $0x204] sm:$0xf] %v1197
        %1230 = vst [vmem:[#allocation2 + $0x228] sm:$0xf] %v1198
        %1231 = vst [vmem:[#allocation2 + $0x24c] sm:$0xf] %v1199
        %1232 = vst [vmem:[#allocation2 + $0x270] sm:$0xf] %v1200
        %1233 = vst [vmem:[#allocation2 + $0x294] sm:$0xf] %v1201
        %1234 = vst [vmem:[#allocation2 + $0x2b8] sm:$0xf] %v1202
        %1235 = vst [vmem:[#allocation2 + $0x2dc] sm:$0xf] %v1203
        %1236 = vst [vmem:[#allocation2 + $0x300] sm:$0xf] %v1204
        %1237 = vst [vmem:[#allocation2 + $0x324] sm:$0xf] %v1205
        %1238 = vst [vmem:[#allocation2 + $0x348] sm:$0xf] %v1206
        %1239 = vst [vmem:[#allocation2 + $0x36c] sm:$0xf] %v1207
        %1240 = vst [vmem:[#allocation2 + $0x390] sm:$0xf] %v1208
        %1241 = vst [vmem:[#allocation2 + $0x3b4] sm:$0xf] %v1209
        %1242 = vst [vmem:[#allocation2 + $0x3d8] sm:$0xf] %v1210
        %1243 = vst [vmem:[#allocation2 + $0x3fc] sm:$0xf] %v1211
        %1244 = vst [vmem:[#allocation2 + $0x420] sm:$0xf] %v1212
        %1245 = vst [vmem:[#allocation2 + $0x444] sm:$0xf] %v1213
        %1246 = vst [vmem:[#allocation2 + $0x468] sm:$0xf] %v1214
        %v1247 = vld [vmem:[%s1182] sm:$0xf]
        %v1248 = vld [vmem:[%s1182 + $0x4] sm:$0x1]
        %v1249 = vld [vmem:[%s1182 + $0x8] sm:$0xf]
        %v1250 = vld [vmem:[%s1182 + $0xc] sm:$0x1]
        %v1251 = vld [vmem:[%s1182 + $0x10] sm:$0xf]
        %v1252 = vld [vmem:[%s1182 + $0x14] sm:$0x1]
        %v1253 = vld [vmem:[%s1182 + $0x18] sm:$0xf]
        %v1254 = vld [vmem:[%s1182 + $0x1c] sm:$0x1]
        %v1255 = vld [vmem:[%s1182 + $0x20] sm:$0xf]
        %v1256 = vld [vmem:[%s1182 + $0x24] sm:$0x1]
        %v1257 = vld [vmem:[%s1182 + $0x28] sm:$0xf]
        %v1258 = vld [vmem:[%s1182 + $0x2c] sm:$0x1]
        %v1259 = vld [vmem:[%s1182 + $0x30] sm:$0xf]
        %v1260 = vld [vmem:[%s1182 + $0x34] sm:$0x1]
        %v1261 = vld [vmem:[%s1182 + $0x38] sm:$0xf]
        %v1262 = vld [vmem:[%s1182 + $0x3c] sm:$0x1]
        %v1263 = vld [vmem:[%s1182 + $0x50] sm:$0xf]
        %v1264 = vld [vmem:[%s1182 + $0x54] sm:$0x1]
        %v1265 = vld [vmem:[%s1182 + $0x58] sm:$0xf]
        %v1266 = vld [vmem:[%s1182 + $0x5c] sm:$0x1]
        %v1267 = vld [vmem:[%s1182 + $0x60] sm:$0xf]
        %v1268 = vld [vmem:[%s1182 + $0x64] sm:$0x1]
        %v1269 = vld [vmem:[%s1182 + $0x68] sm:$0xf]
        %v1270 = vld [vmem:[%s1182 + $0x6c] sm:$0x1]
        %v1271 = vld [vmem:[%s1182 + $0x70] sm:$0xf]
        %v1272 = vld [vmem:[%s1182 + $0x74] sm:$0x1]
        %v1273 = vld [vmem:[%s1182 + $0x78] sm:$0xf]
        %v1274 = vld [vmem:[%s1182 + $0x7c] sm:$0x1]
        %v1275 = vld [vmem:[%s1182 + $0x80] sm:$0xf]
        %v1276 = vld [vmem:[%s1182 + $0x84] sm:$0x1]
        %v1277 = vld [vmem:[%s1182 + $0x88] sm:$0xf]
        %v1278 = vld [vmem:[%s1182 + $0x8c] sm:$0x1]
        %v1279 = vld [vmem:[%s1182 + $0xa0] sm:$0xf]
        %v1280 = vld [vmem:[%s1182 + $0xa4] sm:$0x1]
        %v1281 = vld [vmem:[%s1182 + $0xa8] sm:$0xf]
        %v1282 = vld [vmem:[%s1182 + $0xac] sm:$0x1]
        %v1283 = vld [vmem:[%s1182 + $0xb0] sm:$0xf]
        %v1284 = vld [vmem:[%s1182 + $0xb4] sm:$0x1]
        %v1285 = vld [vmem:[%s1182 + $0xb8] sm:$0xf]
        %v1286 = vld [vmem:[%s1182 + $0xbc] sm:$0x1]
        %v1287 = vld [vmem:[%s1182 + $0xc0] sm:$0xf]
        %v1288 = vld [vmem:[%s1182 + $0xc4] sm:$0x1]
        %v1289 = vld [vmem:[%s1182 + $0xc8] sm:$0xf]
        %v1290 = vld [vmem:[%s1182 + $0xcc] sm:$0x1]
        %v1291 = vld [vmem:[%s1182 + $0xd0] sm:$0xf]
        %v1292 = vld [vmem:[%s1182 + $0xd4] sm:$0x1]
        %v1293 = vld [vmem:[%s1182 + $0xd8] sm:$0xf]
        %v1294 = vld [vmem:[%s1182 + $0xdc] sm:$0x1]
        %v1295 = vld [vmem:[%s1182 + $0xf0] sm:$0xf]
        %v1296 = vld [vmem:[%s1182 + $0xf4] sm:$0x1]
        %v1297 = vld [vmem:[%s1182 + $0xf8] sm:$0xf]
        %v1298 = vld [vmem:[%s1182 + $0xfc] sm:$0x1]
        %v1299 = vld [vmem:[%s1182 + $0x100] sm:$0xf]
        %v1300 = vld [vmem:[%s1182 + $0x104] sm:$0x1]
        %v1301 = vld [vmem:[%s1182 + $0x108] sm:$0xf]
        %v1302 = vld [vmem:[%s1182 + $0x10c] sm:$0x1]
        %v1303 = vld [vmem:[%s1182 + $0x110] sm:$0xf]
        %v1304 = vld [vmem:[%s1182 + $0x114] sm:$0x1]
        %v1305 = vld [vmem:[%s1182 + $0x118] sm:$0xf]
        %v1306 = vld [vmem:[%s1182 + $0x11c] sm:$0x1]
        %v1307 = vld [vmem:[%s1182 + $0x120] sm:$0xf]
        %v1308 = vld [vmem:[%s1182 + $0x124] sm:$0x1]
        %v1309 = vld [vmem:[%s1182 + $0x128] sm:$0xf]
        %v1310 = vld [vmem:[%s1182 + $0x12c] sm:$0x1]
        %v1312 = vshrl.u32 %v1247, 16
        %v1314 = vrot.slane %v1312, 4
        %v1315 = vshll.u32 %v1247, 16
        %v1317 = vrot.slane %v1315, 5
        %v1318 = vor.u32 %v1314, %v1317
        %v1319 = vrot.slane %v1318, 4
        %v1321 = vshll.u32 %v1248, 16
        %v1323 = vrot.slane %v1321, 5
        %v1324 = vsel %vm346, %v1319, %v1323
        %v1326 = vshrl.u32 %v1249, 16
        %v1328 = vrot.slane %v1326, 4
        %v1329 = vshll.u32 %v1249, 16
        %v1331 = vrot.slane %v1329, 5
        %v1332 = vor.u32 %v1328, %v1331
        %v1333 = vrot.slane %v1332, 4
        %v1335 = vshll.u32 %v1250, 16
        %v1337 = vrot.slane %v1335, 5
        %v1338 = vsel %vm346, %v1333, %v1337
        %v1340 = vshrl.u32 %v1251, 16
        %v1342 = vrot.slane %v1340, 4
        %v1343 = vshll.u32 %v1251, 16
        %v1345 = vrot.slane %v1343, 5
        %v1346 = vor.u32 %v1342, %v1345
        %v1347 = vrot.slane %v1346, 4
        %v1349 = vshll.u32 %v1252, 16
        %v1351 = vrot.slane %v1349, 5
        %v1352 = vsel %vm346, %v1347, %v1351
        %v1354 = vshrl.u32 %v1253, 16
        %v1356 = vrot.slane %v1354, 4
        %v1357 = vshll.u32 %v1253, 16
        %v1359 = vrot.slane %v1357, 5
        %v1360 = vor.u32 %v1356, %v1359
        %v1361 = vrot.slane %v1360, 4
        %v1363 = vshll.u32 %v1254, 16
        %v1365 = vrot.slane %v1363, 5
        %v1366 = vsel %vm346, %v1361, %v1365
        %v1368 = vshrl.u32 %v1255, 16
        %v1370 = vrot.slane %v1368, 4
        %v1371 = vshll.u32 %v1255, 16
        %v1373 = vrot.slane %v1371, 5
        %v1374 = vor.u32 %v1370, %v1373
        %v1375 = vrot.slane %v1374, 4
        %v1377 = vshll.u32 %v1256, 16
        %v1379 = vrot.slane %v1377, 5
        %v1380 = vsel %vm346, %v1375, %v1379
        %v1382 = vshrl.u32 %v1257, 16
        %v1384 = vrot.slane %v1382, 4
        %v1385 = vshll.u32 %v1257, 16
        %v1387 = vrot.slane %v1385, 5
        %v1388 = vor.u32 %v1384, %v1387
        %v1389 = vrot.slane %v1388, 4
        %v1391 = vshll.u32 %v1258, 16
        %v1393 = vrot.slane %v1391, 5
        %v1394 = vsel %vm346, %v1389, %v1393
        %v1396 = vshrl.u32 %v1259, 16
        %v1398 = vrot.slane %v1396, 4
        %v1399 = vshll.u32 %v1259, 16
        %v1401 = vrot.slane %v1399, 5
        %v1402 = vor.u32 %v1398, %v1401
        %v1403 = vrot.slane %v1402, 4
        %v1405 = vshll.u32 %v1260, 16
        %v1407 = vrot.slane %v1405, 5
        %v1408 = vsel %vm346, %v1403, %v1407
        %v1410 = vshrl.u32 %v1261, 16
        %v1412 = vrot.slane %v1410, 4
        %v1413 = vshll.u32 %v1261, 16
        %v1415 = vrot.slane %v1413, 5
        %v1416 = vor.u32 %v1412, %v1415
        %v1417 = vrot.slane %v1416, 4
        %v1419 = vshll.u32 %v1262, 16
        %v1421 = vrot.slane %v1419, 5
        %v1422 = vsel %vm346, %v1417, %v1421
        %v1424 = vshrl.u32 %v1263, 16
        %v1426 = vrot.slane %v1424, 4
        %v1427 = vshll.u32 %v1263, 16
        %v1429 = vrot.slane %v1427, 5
        %v1430 = vor.u32 %v1426, %v1429
        %v1431 = vrot.slane %v1430, 4
        %v1433 = vshll.u32 %v1264, 16
        %v1435 = vrot.slane %v1433, 5
        %v1436 = vsel %vm346, %v1431, %v1435
        %v1438 = vshrl.u32 %v1265, 16
        %v1440 = vrot.slane %v1438, 4
        %v1441 = vshll.u32 %v1265, 16
        %v1443 = vrot.slane %v1441, 5
        %v1444 = vor.u32 %v1440, %v1443
        %v1445 = vrot.slane %v1444, 4
        %v1447 = vshll.u32 %v1266, 16
        %v1449 = vrot.slane %v1447, 5
        %v1450 = vsel %vm346, %v1445, %v1449
        %v1452 = vshrl.u32 %v1267, 16
        %v1454 = vrot.slane %v1452, 4
        %v1455 = vshll.u32 %v1267, 16
        %v1457 = vrot.slane %v1455, 5
        %v1458 = vor.u32 %v1454, %v1457
        %v1459 = vrot.slane %v1458, 4
        %v1461 = vshll.u32 %v1268, 16
        %v1463 = vrot.slane %v1461, 5
        %v1464 = vsel %vm346, %v1459, %v1463
        %v1466 = vshrl.u32 %v1269, 16
        %v1468 = vrot.slane %v1466, 4
        %v1469 = vshll.u32 %v1269, 16
        %v1471 = vrot.slane %v1469, 5
        %v1472 = vor.u32 %v1468, %v1471
        %v1473 = vrot.slane %v1472, 4
        %v1475 = vshll.u32 %v1270, 16
        %v1477 = vrot.slane %v1475, 5
        %v1478 = vsel %vm346, %v1473, %v1477
        %v1480 = vshrl.u32 %v1271, 16
        %v1482 = vrot.slane %v1480, 4
        %v1483 = vshll.u32 %v1271, 16
        %v1485 = vrot.slane %v1483, 5
        %v1486 = vor.u32 %v1482, %v1485
        %v1487 = vrot.slane %v1486, 4
        %v1489 = vshll.u32 %v1272, 16
        %v1491 = vrot.slane %v1489, 5
        %v1492 = vsel %vm346, %v1487, %v1491
        %v1494 = vshrl.u32 %v1273, 16
        %v1496 = vrot.slane %v1494, 4
        %v1497 = vshll.u32 %v1273, 16
        %v1499 = vrot.slane %v1497, 5
        %v1500 = vor.u32 %v1496, %v1499
        %v1501 = vrot.slane %v1500, 4
        %v1503 = vshll.u32 %v1274, 16
        %v1505 = vrot.slane %v1503, 5
        %v1506 = vsel %vm346, %v1501, %v1505
        %v1508 = vshrl.u32 %v1275, 16
        %v1510 = vrot.slane %v1508, 4
        %v1511 = vshll.u32 %v1275, 16
        %v1513 = vrot.slane %v1511, 5
        %v1514 = vor.u32 %v1510, %v1513
        %v1515 = vrot.slane %v1514, 4
        %v1517 = vshll.u32 %v1276, 16
        %v1519 = vrot.slane %v1517, 5
        %v1520 = vsel %vm346, %v1515, %v1519
        %v1522 = vshrl.u32 %v1277, 16
        %v1524 = vrot.slane %v1522, 4
        %v1525 = vshll.u32 %v1277, 16
        %v1527 = vrot.slane %v1525, 5
        %v1528 = vor.u32 %v1524, %v1527
        %v1529 = vrot.slane %v1528, 4
        %v1531 = vshll.u32 %v1278, 16
        %v1533 = vrot.slane %v1531, 5
        %v1534 = vsel %vm346, %v1529, %v1533
        %v1536 = vshrl.u32 %v1279, 16
        %v1538 = vrot.slane %v1536, 4
        %v1539 = vshll.u32 %v1279, 16
        %v1541 = vrot.slane %v1539, 5
        %v1542 = vor.u32 %v1538, %v1541
        %v1543 = vrot.slane %v1542, 4
        %v1545 = vshll.u32 %v1280, 16
        %v1547 = vrot.slane %v1545, 5
        %v1548 = vsel %vm346, %v1543, %v1547
        %v1550 = vshrl.u32 %v1281, 16
        %v1552 = vrot.slane %v1550, 4
        %v1553 = vshll.u32 %v1281, 16
        %v1555 = vrot.slane %v1553, 5
        %v1556 = vor.u32 %v1552, %v1555
        %v1557 = vrot.slane %v1556, 4
        %v1559 = vshll.u32 %v1282, 16
        %v1561 = vrot.slane %v1559, 5
        %v1562 = vsel %vm346, %v1557, %v1561
        %v1564 = vshrl.u32 %v1283, 16
        %v1566 = vrot.slane %v1564, 4
        %v1567 = vshll.u32 %v1283, 16
        %v1569 = vrot.slane %v1567, 5
        %v1570 = vor.u32 %v1566, %v1569
        %v1571 = vrot.slane %v1570, 4
        %v1573 = vshll.u32 %v1284, 16
        %v1575 = vrot.slane %v1573, 5
        %v1576 = vsel %vm346, %v1571, %v1575
        %v1578 = vshrl.u32 %v1285, 16
        %v1580 = vrot.slane %v1578, 4
        %v1581 = vshll.u32 %v1285, 16
        %v1583 = vrot.slane %v1581, 5
        %v1584 = vor.u32 %v1580, %v1583
        %v1585 = vrot.slane %v1584, 4
        %v1587 = vshll.u32 %v1286, 16
        %v1589 = vrot.slane %v1587, 5
        %v1590 = vsel %vm346, %v1585, %v1589
        %v1592 = vshrl.u32 %v1287, 16
        %v1594 = vrot.slane %v1592, 4
        %v1595 = vshll.u32 %v1287, 16
        %v1597 = vrot.slane %v1595, 5
        %v1598 = vor.u32 %v1594, %v1597
        %v1599 = vrot.slane %v1598, 4
        %v1601 = vshll.u32 %v1288, 16
        %v1603 = vrot.slane %v1601, 5
        %v1604 = vsel %vm346, %v1599, %v1603
        %v1606 = vshrl.u32 %v1289, 16
        %v1608 = vrot.slane %v1606, 4
        %v1609 = vshll.u32 %v1289, 16
        %v1611 = vrot.slane %v1609, 5
        %v1612 = vor.u32 %v1608, %v1611
        %v1613 = vrot.slane %v1612, 4
        %v1615 = vshll.u32 %v1290, 16
        %v1617 = vrot.slane %v1615, 5
        %v1618 = vsel %vm346, %v1613, %v1617
        %v1620 = vshrl.u32 %v1291, 16
        %v1622 = vrot.slane %v1620, 4
        %v1623 = vshll.u32 %v1291, 16
        %v1625 = vrot.slane %v1623, 5
        %v1626 = vor.u32 %v1622, %v1625
        %v1627 = vrot.slane %v1626, 4
        %v1629 = vshll.u32 %v1292, 16
        %v1631 = vrot.slane %v1629, 5
        %v1632 = vsel %vm346, %v1627, %v1631
        %v1634 = vshrl.u32 %v1293, 16
        %v1636 = vrot.slane %v1634, 4
        %v1637 = vshll.u32 %v1293, 16
        %v1639 = vrot.slane %v1637, 5
        %v1640 = vor.u32 %v1636, %v1639
        %v1641 = vrot.slane %v1640, 4
        %v1643 = vshll.u32 %v1294, 16
        %v1645 = vrot.slane %v1643, 5
        %v1646 = vsel %vm346, %v1641, %v1645
        %v1648 = vshrl.u32 %v1295, 16
        %v1650 = vrot.slane %v1648, 4
        %v1651 = vshll.u32 %v1295, 16
        %v1653 = vrot.slane %v1651, 5
        %v1654 = vor.u32 %v1650, %v1653
        %v1655 = vrot.slane %v1654, 4
        %v1657 = vshll.u32 %v1296, 16
        %v1659 = vrot.slane %v1657, 5
        %v1660 = vsel %vm346, %v1655, %v1659
        %v1662 = vshrl.u32 %v1297, 16
        %v1664 = vrot.slane %v1662, 4
        %v1665 = vshll.u32 %v1297, 16
        %v1667 = vrot.slane %v1665, 5
        %v1668 = vor.u32 %v1664, %v1667
        %v1669 = vrot.slane %v1668, 4
        %v1671 = vshll.u32 %v1298, 16
        %v1673 = vrot.slane %v1671, 5
        %v1674 = vsel %vm346, %v1669, %v1673
        %v1676 = vshrl.u32 %v1299, 16
        %v1678 = vrot.slane %v1676, 4
        %v1679 = vshll.u32 %v1299, 16
        %v1681 = vrot.slane %v1679, 5
        %v1682 = vor.u32 %v1678, %v1681
        %v1683 = vrot.slane %v1682, 4
        %v1685 = vshll.u32 %v1300, 16
        %v1687 = vrot.slane %v1685, 5
        %v1688 = vsel %vm346, %v1683, %v1687
        %v1690 = vshrl.u32 %v1301, 16
        %v1692 = vrot.slane %v1690, 4
        %v1693 = vshll.u32 %v1301, 16
        %v1695 = vrot.slane %v1693, 5
        %v1696 = vor.u32 %v1692, %v1695
        %v1697 = vrot.slane %v1696, 4
        %v1699 = vshll.u32 %v1302, 16
        %v1701 = vrot.slane %v1699, 5
        %v1702 = vsel %vm346, %v1697, %v1701
        %v1704 = vshrl.u32 %v1303, 16
        %v1706 = vrot.slane %v1704, 4
        %v1707 = vshll.u32 %v1303, 16
        %v1709 = vrot.slane %v1707, 5
        %v1710 = vor.u32 %v1706, %v1709
        %v1711 = vrot.slane %v1710, 4
        %v1713 = vshll.u32 %v1304, 16
        %v1715 = vrot.slane %v1713, 5
        %v1716 = vsel %vm346, %v1711, %v1715
        %v1718 = vshrl.u32 %v1305, 16
        %v1720 = vrot.slane %v1718, 4
        %v1721 = vshll.u32 %v1305, 16
        %v1723 = vrot.slane %v1721, 5
        %v1724 = vor.u32 %v1720, %v1723
        %v1725 = vrot.slane %v1724, 4
        %v1727 = vshll.u32 %v1306, 16
        %v1729 = vrot.slane %v1727, 5
        %v1730 = vsel %vm346, %v1725, %v1729
        %v1732 = vshrl.u32 %v1307, 16
        %v1734 = vrot.slane %v1732, 4
        %v1735 = vshll.u32 %v1307, 16
        %v1737 = vrot.slane %v1735, 5
        %v1738 = vor.u32 %v1734, %v1737
        %v1739 = vrot.slane %v1738, 4
        %v1741 = vshll.u32 %v1308, 16
        %v1743 = vrot.slane %v1741, 5
        %v1744 = vsel %vm346, %v1739, %v1743
        %v1746 = vshrl.u32 %v1309, 16
        %v1748 = vrot.slane %v1746, 4
        %v1749 = vshll.u32 %v1309, 16
        %v1751 = vrot.slane %v1749, 5
        %v1752 = vor.u32 %v1748, %v1751
        %v1753 = vrot.slane %v1752, 4
        %v1755 = vshll.u32 %v1310, 16
        %v1757 = vrot.slane %v1755, 5
        %v1758 = vsel %vm346, %v1753, %v1757
        %1791 = vst [vmem:[#allocation2 + $0x10] sm:$0xf] %v1324
        %1792 = vst [vmem:[#allocation2 + $0x34] sm:$0xf] %v1338
        %1793 = vst [vmem:[#allocation2 + $0x58] sm:$0xf] %v1352
        %1794 = vst [vmem:[#allocation2 + $0x7c] sm:$0xf] %v1366
        %1795 = vst [vmem:[#allocation2 + $0xa0] sm:$0xf] %v1380
        %1796 = vst [vmem:[#allocation2 + $0xc4] sm:$0xf] %v1394
        %1797 = vst [vmem:[#allocation2 + $0xe8] sm:$0xf] %v1408
        %1798 = vst [vmem:[#allocation2 + $0x10c] sm:$0xf] %v1422
        %1799 = vst [vmem:[#allocation2 + $0x130] sm:$0xf] %v1436
        %1800 = vst [vmem:[#allocation2 + $0x154] sm:$0xf] %v1450
        %1801 = vst [vmem:[#allocation2 + $0x178] sm:$0xf] %v1464
        %1802 = vst [vmem:[#allocation2 + $0x19c] sm:$0xf] %v1478
        %1803 = vst [vmem:[#allocation2 + $0x1c0] sm:$0xf] %v1492
        %1804 = vst [vmem:[#allocation2 + $0x1e4] sm:$0xf] %v1506
        %1805 = vst [vmem:[#allocation2 + $0x208] sm:$0xf] %v1520
        %1806 = vst [vmem:[#allocation2 + $0x22c] sm:$0xf] %v1534
        %1807 = vst [vmem:[#allocation2 + $0x250] sm:$0xf] %v1548
        %1808 = vst [vmem:[#allocation2 + $0x274] sm:$0xf] %v1562
        %1809 = vst [vmem:[#allocation2 + $0x298] sm:$0xf] %v1576
        %1810 = vst [vmem:[#allocation2 + $0x2bc] sm:$0xf] %v1590
        %1811 = vst [vmem:[#allocation2 + $0x2e0] sm:$0xf] %v1604
        %1812 = vst [vmem:[#allocation2 + $0x304] sm:$0xf] %v1618
        %1813 = vst [vmem:[#allocation2 + $0x328] sm:$0xf] %v1632
        %1814 = vst [vmem:[#allocation2 + $0x34c] sm:$0xf] %v1646
        %1815 = vst [vmem:[#allocation2 + $0x370] sm:$0xf] %v1660
        %1816 = vst [vmem:[#allocation2 + $0x394] sm:$0xf] %v1674
        %1817 = vst [vmem:[#allocation2 + $0x3b8] sm:$0xf] %v1688
        %1818 = vst [vmem:[#allocation2 + $0x3dc] sm:$0xf] %v1702
        %1819 = vst [vmem:[#allocation2 + $0x400] sm:$0xf] %v1716
        %1820 = vst [vmem:[#allocation2 + $0x424] sm:$0xf] %v1730
        %1821 = vst [vmem:[#allocation2 + $0x448] sm:$0xf] %v1744
        %1822 = vst [vmem:[#allocation2 + $0x46c] sm:$0xf] %v1758
        %v1823 = vld [vmem:[%s1182] sm:$0xe]
        %v1824 = vld [vmem:[%s1182 + $0x4] sm:$0x1]
        %v1825 = vld [vmem:[%s1182 + $0x8] sm:$0xe]
        %v1826 = vld [vmem:[%s1182 + $0xc] sm:$0x1]
        %v1827 = vld [vmem:[%s1182 + $0x10] sm:$0xe]
        %v1828 = vld [vmem:[%s1182 + $0x14] sm:$0x1]
        %v1829 = vld [vmem:[%s1182 + $0x18] sm:$0xe]
        %v1830 = vld [vmem:[%s1182 + $0x1c] sm:$0x1]
        %v1831 = vld [vmem:[%s1182 + $0x20] sm:$0xe]
        %v1832 = vld [vmem:[%s1182 + $0x24] sm:$0x1]
        %v1833 = vld [vmem:[%s1182 + $0x28] sm:$0xe]
        %v1834 = vld [vmem:[%s1182 + $0x2c] sm:$0x1]
        %v1835 = vld [vmem:[%s1182 + $0x30] sm:$0xe]
        %v1836 = vld [vmem:[%s1182 + $0x34] sm:$0x1]
        %v1837 = vld [vmem:[%s1182 + $0x38] sm:$0xe]
        %v1838 = vld [vmem:[%s1182 + $0x3c] sm:$0x1]
        %v1839 = vld [vmem:[%s1182 + $0x50] sm:$0xe]
        %v1840 = vld [vmem:[%s1182 + $0x54] sm:$0x1]
        %v1841 = vld [vmem:[%s1182 + $0x58] sm:$0xe]
        %v1842 = vld [vmem:[%s1182 + $0x5c] sm:$0x1]
        %v1843 = vld [vmem:[%s1182 + $0x60] sm:$0xe]
        %v1844 = vld [vmem:[%s1182 + $0x64] sm:$0x1]
        %v1845 = vld [vmem:[%s1182 + $0x68] sm:$0xe]
        %v1846 = vld [vmem:[%s1182 + $0x6c] sm:$0x1]
        %v1847 = vld [vmem:[%s1182 + $0x70] sm:$0xe]
        %v1848 = vld [vmem:[%s1182 + $0x74] sm:$0x1]
        %v1849 = vld [vmem:[%s1182 + $0x78] sm:$0xe]
        %v1850 = vld [vmem:[%s1182 + $0x7c] sm:$0x1]
        %v1851 = vld [vmem:[%s1182 + $0x80] sm:$0xe]
        %v1852 = vld [vmem:[%s1182 + $0x84] sm:$0x1]
        %v1853 = vld [vmem:[%s1182 + $0x88] sm:$0xe]
        %v1854 = vld [vmem:[%s1182 + $0x8c] sm:$0x1]
        %v1855 = vld [vmem:[%s1182 + $0xa0] sm:$0xe]
        %v1856 = vld [vmem:[%s1182 + $0xa4] sm:$0x1]
        %v1857 = vld [vmem:[%s1182 + $0xa8] sm:$0xe]
        %v1858 = vld [vmem:[%s1182 + $0xac] sm:$0x1]
        %v1859 = vld [vmem:[%s1182 + $0xb0] sm:$0xe]
        %v1860 = vld [vmem:[%s1182 + $0xb4] sm:$0x1]
        %v1861 = vld [vmem:[%s1182 + $0xb8] sm:$0xe]
        %v1862 = vld [vmem:[%s1182 + $0xbc] sm:$0x1]
        %v1863 = vld [vmem:[%s1182 + $0xc0] sm:$0xe]
        %v1864 = vld [vmem:[%s1182 + $0xc4] sm:$0x1]
        %v1865 = vld [vmem:[%s1182 + $0xc8] sm:$0xe]
        %v1866 = vld [vmem:[%s1182 + $0xcc] sm:$0x1]
        %v1867 = vld [vmem:[%s1182 + $0xd0] sm:$0xe]
        %v1868 = vld [vmem:[%s1182 + $0xd4] sm:$0x1]
        %v1869 = vld [vmem:[%s1182 + $0xd8] sm:$0xe]
        %v1870 = vld [vmem:[%s1182 + $0xdc] sm:$0x1]
        %v1871 = vld [vmem:[%s1182 + $0xf0] sm:$0xe]
        %v1872 = vld [vmem:[%s1182 + $0xf4] sm:$0x1]
        %v1873 = vld [vmem:[%s1182 + $0xf8] sm:$0xe]
        %v1874 = vld [vmem:[%s1182 + $0xfc] sm:$0x1]
        %v1875 = vld [vmem:[%s1182 + $0x100] sm:$0xe]
        %v1876 = vld [vmem:[%s1182 + $0x104] sm:$0x1]
        %v1877 = vld [vmem:[%s1182 + $0x108] sm:$0xe]
        %v1878 = vld [vmem:[%s1182 + $0x10c] sm:$0x1]
        %v1879 = vld [vmem:[%s1182 + $0x110] sm:$0xe]
        %v1880 = vld [vmem:[%s1182 + $0x114] sm:$0x1]
        %v1881 = vld [vmem:[%s1182 + $0x118] sm:$0xe]
        %v1882 = vld [vmem:[%s1182 + $0x11c] sm:$0x1]
        %v1883 = vld [vmem:[%s1182 + $0x120] sm:$0xe]
        %v1884 = vld [vmem:[%s1182 + $0x124] sm:$0x1]
        %v1885 = vld [vmem:[%s1182 + $0x128] sm:$0xe]
        %v1886 = vld [vmem:[%s1182 + $0x12c] sm:$0x1]
        %v1951 = vrot.slane %v1823, 5
        %v1952 = vrot.slane %v1951, 4
        %v1953 = vrot.slane %v1824, 5
        %v1954 = vsel %vm989, %v1952, %v1953
        %v1955 = vrot.slane %v1825, 5
        %v1956 = vrot.slane %v1955, 4
        %v1957 = vrot.slane %v1826, 5
        %v1958 = vsel %vm989, %v1956, %v1957
        %v1959 = vrot.slane %v1827, 5
        %v1960 = vrot.slane %v1959, 4
        %v1961 = vrot.slane %v1828, 5
        %v1962 = vsel %vm989, %v1960, %v1961
        %v1963 = vrot.slane %v1829, 5
        %v1964 = vrot.slane %v1963, 4
        %v1965 = vrot.slane %v1830, 5
        %v1966 = vsel %vm989, %v1964, %v1965
        %v1967 = vrot.slane %v1831, 5
        %v1968 = vrot.slane %v1967, 4
        %v1969 = vrot.slane %v1832, 5
        %v1970 = vsel %vm989, %v1968, %v1969
        %v1971 = vrot.slane %v1833, 5
        %v1972 = vrot.slane %v1971, 4
        %v1973 = vrot.slane %v1834, 5
        %v1974 = vsel %vm989, %v1972, %v1973
        %v1975 = vrot.slane %v1835, 5
        %v1976 = vrot.slane %v1975, 4
        %v1977 = vrot.slane %v1836, 5
        %v1978 = vsel %vm989, %v1976, %v1977
        %v1979 = vrot.slane %v1837, 5
        %v1980 = vrot.slane %v1979, 4
        %v1981 = vrot.slane %v1838, 5
        %v1982 = vsel %vm989, %v1980, %v1981
        %v1983 = vrot.slane %v1839, 5
        %v1984 = vrot.slane %v1983, 4
        %v1985 = vrot.slane %v1840, 5
        %v1986 = vsel %vm989, %v1984, %v1985
        %v1987 = vrot.slane %v1841, 5
        %v1988 = vrot.slane %v1987, 4
        %v1989 = vrot.slane %v1842, 5
        %v1990 = vsel %vm989, %v1988, %v1989
        %v1991 = vrot.slane %v1843, 5
        %v1992 = vrot.slane %v1991, 4
        %v1993 = vrot.slane %v1844, 5
        %v1994 = vsel %vm989, %v1992, %v1993
        %v1995 = vrot.slane %v1845, 5
        %v1996 = vrot.slane %v1995, 4
        %v1997 = vrot.slane %v1846, 5
        %v1998 = vsel %vm989, %v1996, %v1997
        %v1999 = vrot.slane %v1847, 5
        %v2000 = vrot.slane %v1999, 4
        %v2001 = vrot.slane %v1848, 5
        %v2002 = vsel %vm989, %v2000, %v2001
        %v2003 = vrot.slane %v1849, 5
        %v2004 = vrot.slane %v2003, 4
        %v2005 = vrot.slane %v1850, 5
        %v2006 = vsel %vm989, %v2004, %v2005
        %v2007 = vrot.slane %v1851, 5
        %v2008 = vrot.slane %v2007, 4
        %v2009 = vrot.slane %v1852, 5
        %v2010 = vsel %vm989, %v2008, %v2009
        %v2011 = vrot.slane %v1853, 5
        %v2012 = vrot.slane %v2011, 4
        %v2013 = vrot.slane %v1854, 5
        %v2014 = vsel %vm989, %v2012, %v2013
        %v2015 = vrot.slane %v1855, 5
        %v2016 = vrot.slane %v2015, 4
        %v2017 = vrot.slane %v1856, 5
        %v2018 = vsel %vm989, %v2016, %v2017
        %v2019 = vrot.slane %v1857, 5
        %v2020 = vrot.slane %v2019, 4
        %v2021 = vrot.slane %v1858, 5
        %v2022 = vsel %vm989, %v2020, %v2021
        %v2023 = vrot.slane %v1859, 5
        %v2024 = vrot.slane %v2023, 4
        %v2025 = vrot.slane %v1860, 5
        %v2026 = vsel %vm989, %v2024, %v2025
        %v2027 = vrot.slane %v1861, 5
        %v2028 = vrot.slane %v2027, 4
        %v2029 = vrot.slane %v1862, 5
        %v2030 = vsel %vm989, %v2028, %v2029
        %v2031 = vrot.slane %v1863, 5
        %v2032 = vrot.slane %v2031, 4
        %v2033 = vrot.slane %v1864, 5
        %v2034 = vsel %vm989, %v2032, %v2033
        %v2035 = vrot.slane %v1865, 5
        %v2036 = vrot.slane %v2035, 4
        %v2037 = vrot.slane %v1866, 5
        %v2038 = vsel %vm989, %v2036, %v2037
        %v2039 = vrot.slane %v1867, 5
        %v2040 = vrot.slane %v2039, 4
        %v2041 = vrot.slane %v1868, 5
        %v2042 = vsel %vm989, %v2040, %v2041
        %v2043 = vrot.slane %v1869, 5
        %v2044 = vrot.slane %v2043, 4
        %v2045 = vrot.slane %v1870, 5
        %v2046 = vsel %vm989, %v2044, %v2045
        %v2047 = vrot.slane %v1871, 5
        %v2048 = vrot.slane %v2047, 4
        %v2049 = vrot.slane %v1872, 5
        %v2050 = vsel %vm989, %v2048, %v2049
        %v2051 = vrot.slane %v1873, 5
        %v2052 = vrot.slane %v2051, 4
        %v2053 = vrot.slane %v1874, 5
        %v2054 = vsel %vm989, %v2052, %v2053
        %v2055 = vrot.slane %v1875, 5
        %v2056 = vrot.slane %v2055, 4
        %v2057 = vrot.slane %v1876, 5
        %v2058 = vsel %vm989, %v2056, %v2057
        %v2059 = vrot.slane %v1877, 5
        %v2060 = vrot.slane %v2059, 4
        %v2061 = vrot.slane %v1878, 5
        %v2062 = vsel %vm989, %v2060, %v2061
        %v2063 = vrot.slane %v1879, 5
        %v2064 = vrot.slane %v2063, 4
        %v2065 = vrot.slane %v1880, 5
        %v2066 = vsel %vm989, %v2064, %v2065
        %v2067 = vrot.slane %v1881, 5
        %v2068 = vrot.slane %v2067, 4
        %v2069 = vrot.slane %v1882, 5
        %v2070 = vsel %vm989, %v2068, %v2069
        %v2071 = vrot.slane %v1883, 5
        %v2072 = vrot.slane %v2071, 4
        %v2073 = vrot.slane %v1884, 5
        %v2074 = vsel %vm989, %v2072, %v2073
        %v2075 = vrot.slane %v1885, 5
        %v2076 = vrot.slane %v2075, 4
        %v2077 = vrot.slane %v1886, 5
        %v2078 = vsel %vm989, %v2076, %v2077
        %2111 = vst [vmem:[#allocation2 + $0x14] sm:$0xf] %v1954
        %2112 = vst [vmem:[#allocation2 + $0x38] sm:$0xf] %v1958
        %2113 = vst [vmem:[#allocation2 + $0x5c] sm:$0xf] %v1962
        %2114 = vst [vmem:[#allocation2 + $0x80] sm:$0xf] %v1966
        %2115 = vst [vmem:[#allocation2 + $0xa4] sm:$0xf] %v1970
        %2116 = vst [vmem:[#allocation2 + $0xc8] sm:$0xf] %v1974
        %2117 = vst [vmem:[#allocation2 + $0xec] sm:$0xf] %v1978
        %2118 = vst [vmem:[#allocation2 + $0x110] sm:$0xf] %v1982
        %2119 = vst [vmem:[#allocation2 + $0x134] sm:$0xf] %v1986
        %2120 = vst [vmem:[#allocation2 + $0x158] sm:$0xf] %v1990
        %2121 = vst [vmem:[#allocation2 + $0x17c] sm:$0xf] %v1994
        %2122 = vst [vmem:[#allocation2 + $0x1a0] sm:$0xf] %v1998
        %2123 = vst [vmem:[#allocation2 + $0x1c4] sm:$0xf] %v2002
        %2124 = vst [vmem:[#allocation2 + $0x1e8] sm:$0xf] %v2006
        %2125 = vst [vmem:[#allocation2 + $0x20c] sm:$0xf] %v2010
        %2126 = vst [vmem:[#allocation2 + $0x230] sm:$0xf] %v2014
        %2127 = vst [vmem:[#allocation2 + $0x254] sm:$0xf] %v2018
        %2128 = vst [vmem:[#allocation2 + $0x278] sm:$0xf] %v2022
        %2129 = vst [vmem:[#allocation2 + $0x29c] sm:$0xf] %v2026
        %2130 = vst [vmem:[#allocation2 + $0x2c0] sm:$0xf] %v2030
        %2131 = vst [vmem:[#allocation2 + $0x2e4] sm:$0xf] %v2034
        %2132 = vst [vmem:[#allocation2 + $0x308] sm:$0xf] %v2038
        %2133 = vst [vmem:[#allocation2 + $0x32c] sm:$0xf] %v2042
        %2134 = vst [vmem:[#allocation2 + $0x350] sm:$0xf] %v2046
        %2135 = vst [vmem:[#allocation2 + $0x374] sm:$0xf] %v2050
        %2136 = vst [vmem:[#allocation2 + $0x398] sm:$0xf] %v2054
        %2137 = vst [vmem:[#allocation2 + $0x3bc] sm:$0xf] %v2058
        %2138 = vst [vmem:[#allocation2 + $0x3e0] sm:$0xf] %v2062
        %2139 = vst [vmem:[#allocation2 + $0x404] sm:$0xf] %v2066
        %2140 = vst [vmem:[#allocation2 + $0x428] sm:$0xf] %v2070
        %2141 = vst [vmem:[#allocation2 + $0x44c] sm:$0xf] %v2074
        %2142 = vst [vmem:[#allocation2 + $0x470] sm:$0xf] %v2078
        %s2143 = scalar_lea.vmem %s213, 16
        %v2144 = vld [vmem:[%s2143] sm:$0xf]
        %v2145 = vld [vmem:[%s2143 + $0x8] sm:$0xf]
        %v2146 = vld [vmem:[%s2143 + $0x10] sm:$0xf]
        %v2147 = vld [vmem:[%s2143 + $0x18] sm:$0xf]
        %v2148 = vld [vmem:[%s2143 + $0x20] sm:$0xf]
        %v2149 = vld [vmem:[%s2143 + $0x28] sm:$0xf]
        %v2150 = vld [vmem:[%s2143 + $0x30] sm:$0xf]
        %v2151 = vld [vmem:[%s2143 + $0x38] sm:$0xf]
        %v2152 = vld [vmem:[%s2143 + $0x50] sm:$0xf]
        %v2153 = vld [vmem:[%s2143 + $0x58] sm:$0xf]
        %v2154 = vld [vmem:[%s2143 + $0x60] sm:$0xf]
        %v2155 = vld [vmem:[%s2143 + $0x68] sm:$0xf]
        %v2156 = vld [vmem:[%s2143 + $0x70] sm:$0xf]
        %v2157 = vld [vmem:[%s2143 + $0x78] sm:$0xf]
        %v2158 = vld [vmem:[%s2143 + $0x80] sm:$0xf]
        %v2159 = vld [vmem:[%s2143 + $0x88] sm:$0xf]
        %v2160 = vld [vmem:[%s2143 + $0xa0] sm:$0xf]
        %v2161 = vld [vmem:[%s2143 + $0xa8] sm:$0xf]
        %v2162 = vld [vmem:[%s2143 + $0xb0] sm:$0xf]
        %v2163 = vld [vmem:[%s2143 + $0xb8] sm:$0xf]
        %v2164 = vld [vmem:[%s2143 + $0xc0] sm:$0xf]
        %v2165 = vld [vmem:[%s2143 + $0xc8] sm:$0xf]
        %v2166 = vld [vmem:[%s2143 + $0xd0] sm:$0xf]
        %v2167 = vld [vmem:[%s2143 + $0xd8] sm:$0xf]
        %v2168 = vld [vmem:[%s2143 + $0xf0] sm:$0xf]
        %v2169 = vld [vmem:[%s2143 + $0xf8] sm:$0xf]
        %v2170 = vld [vmem:[%s2143 + $0x100] sm:$0xf]
        %v2171 = vld [vmem:[%s2143 + $0x108] sm:$0xf]
        %v2172 = vld [vmem:[%s2143 + $0x110] sm:$0xf]
        %v2173 = vld [vmem:[%s2143 + $0x118] sm:$0xf]
        %v2174 = vld [vmem:[%s2143 + $0x120] sm:$0xf]
        %v2175 = vld [vmem:[%s2143 + $0x128] sm:$0xf]
        %2176 = vst [vmem:[#allocation2 + $0x18] sm:$0xf] %v2144
        %2177 = vst [vmem:[#allocation2 + $0x3c] sm:$0xf] %v2145
        %2178 = vst [vmem:[#allocation2 + $0x60] sm:$0xf] %v2146
        %2179 = vst [vmem:[#allocation2 + $0x84] sm:$0xf] %v2147
        %2180 = vst [vmem:[#allocation2 + $0xa8] sm:$0xf] %v2148
        %2181 = vst [vmem:[#allocation2 + $0xcc] sm:$0xf] %v2149
        %2182 = vst [vmem:[#allocation2 + $0xf0] sm:$0xf] %v2150
        %2183 = vst [vmem:[#allocation2 + $0x114] sm:$0xf] %v2151
        %2184 = vst [vmem:[#allocation2 + $0x138] sm:$0xf] %v2152
        %2185 = vst [vmem:[#allocation2 + $0x15c] sm:$0xf] %v2153
        %2186 = vst [vmem:[#allocation2 + $0x180] sm:$0xf] %v2154
        %2187 = vst [vmem:[#allocation2 + $0x1a4] sm:$0xf] %v2155
        %2188 = vst [vmem:[#allocation2 + $0x1c8] sm:$0xf] %v2156
        %2189 = vst [vmem:[#allocation2 + $0x1ec] sm:$0xf] %v2157
        %2190 = vst [vmem:[#allocation2 + $0x210] sm:$0xf] %v2158
        %2191 = vst [vmem:[#allocation2 + $0x234] sm:$0xf] %v2159
        %2192 = vst [vmem:[#allocation2 + $0x258] sm:$0xf] %v2160
        %2193 = vst [vmem:[#allocation2 + $0x27c] sm:$0xf] %v2161
        %2194 = vst [vmem:[#allocation2 + $0x2a0] sm:$0xf] %v2162
        %2195 = vst [vmem:[#allocation2 + $0x2c4] sm:$0xf] %v2163
        %2196 = vst [vmem:[#allocation2 + $0x2e8] sm:$0xf] %v2164
        %2197 = vst [vmem:[#allocation2 + $0x30c] sm:$0xf] %v2165
        %2198 = vst [vmem:[#allocation2 + $0x330] sm:$0xf] %v2166
        %2199 = vst [vmem:[#allocation2 + $0x354] sm:$0xf] %v2167
        %2200 = vst [vmem:[#allocation2 + $0x378] sm:$0xf] %v2168
        %2201 = vst [vmem:[#allocation2 + $0x39c] sm:$0xf] %v2169
        %2202 = vst [vmem:[#allocation2 + $0x3c0] sm:$0xf] %v2170
        %2203 = vst [vmem:[#allocation2 + $0x3e4] sm:$0xf] %v2171
        %2204 = vst [vmem:[#allocation2 + $0x408] sm:$0xf] %v2172
        %2205 = vst [vmem:[#allocation2 + $0x42c] sm:$0xf] %v2173
        %2206 = vst [vmem:[#allocation2 + $0x450] sm:$0xf] %v2174
        %2207 = vst [vmem:[#allocation2 + $0x474] sm:$0xf] %v2175
        %v2208 = vld [vmem:[%s2143] sm:$0xf]
        %v2209 = vld [vmem:[%s2143 + $0x4] sm:$0x1]
        %v2210 = vld [vmem:[%s2143 + $0x8] sm:$0xf]
        %v2211 = vld [vmem:[%s2143 + $0xc] sm:$0x1]
        %v2212 = vld [vmem:[%s2143 + $0x10] sm:$0xf]
        %v2213 = vld [vmem:[%s2143 + $0x14] sm:$0x1]
        %v2214 = vld [vmem:[%s2143 + $0x18] sm:$0xf]
        %v2215 = vld [vmem:[%s2143 + $0x1c] sm:$0x1]
        %v2216 = vld [vmem:[%s2143 + $0x20] sm:$0xf]
        %v2217 = vld [vmem:[%s2143 + $0x24] sm:$0x1]
        %v2218 = vld [vmem:[%s2143 + $0x28] sm:$0xf]
        %v2219 = vld [vmem:[%s2143 + $0x2c] sm:$0x1]
        %v2220 = vld [vmem:[%s2143 + $0x30] sm:$0xf]
        %v2221 = vld [vmem:[%s2143 + $0x34] sm:$0x1]
        %v2222 = vld [vmem:[%s2143 + $0x38] sm:$0xf]
        %v2223 = vld [vmem:[%s2143 + $0x3c] sm:$0x1]
        %v2224 = vld [vmem:[%s2143 + $0x50] sm:$0xf]
        %v2225 = vld [vmem:[%s2143 + $0x54] sm:$0x1]
        %v2226 = vld [vmem:[%s2143 + $0x58] sm:$0xf]
        %v2227 = vld [vmem:[%s2143 + $0x5c] sm:$0x1]
        %v2228 = vld [vmem:[%s2143 + $0x60] sm:$0xf]
        %v2229 = vld [vmem:[%s2143 + $0x64] sm:$0x1]
        %v2230 = vld [vmem:[%s2143 + $0x68] sm:$0xf]
        %v2231 = vld [vmem:[%s2143 + $0x6c] sm:$0x1]
        %v2232 = vld [vmem:[%s2143 + $0x70] sm:$0xf]
        %v2233 = vld [vmem:[%s2143 + $0x74] sm:$0x1]
        %v2234 = vld [vmem:[%s2143 + $0x78] sm:$0xf]
        %v2235 = vld [vmem:[%s2143 + $0x7c] sm:$0x1]
        %v2236 = vld [vmem:[%s2143 + $0x80] sm:$0xf]
        %v2237 = vld [vmem:[%s2143 + $0x84] sm:$0x1]
        %v2238 = vld [vmem:[%s2143 + $0x88] sm:$0xf]
        %v2239 = vld [vmem:[%s2143 + $0x8c] sm:$0x1]
        %v2240 = vld [vmem:[%s2143 + $0xa0] sm:$0xf]
        %v2241 = vld [vmem:[%s2143 + $0xa4] sm:$0x1]
        %v2242 = vld [vmem:[%s2143 + $0xa8] sm:$0xf]
        %v2243 = vld [vmem:[%s2143 + $0xac] sm:$0x1]
        %v2244 = vld [vmem:[%s2143 + $0xb0] sm:$0xf]
        %v2245 = vld [vmem:[%s2143 + $0xb4] sm:$0x1]
        %v2246 = vld [vmem:[%s2143 + $0xb8] sm:$0xf]
        %v2247 = vld [vmem:[%s2143 + $0xbc] sm:$0x1]
        %v2248 = vld [vmem:[%s2143 + $0xc0] sm:$0xf]
        %v2249 = vld [vmem:[%s2143 + $0xc4] sm:$0x1]
        %v2250 = vld [vmem:[%s2143 + $0xc8] sm:$0xf]
        %v2251 = vld [vmem:[%s2143 + $0xcc] sm:$0x1]
        %v2252 = vld [vmem:[%s2143 + $0xd0] sm:$0xf]
        %v2253 = vld [vmem:[%s2143 + $0xd4] sm:$0x1]
        %v2254 = vld [vmem:[%s2143 + $0xd8] sm:$0xf]
        %v2255 = vld [vmem:[%s2143 + $0xdc] sm:$0x1]
        %v2256 = vld [vmem:[%s2143 + $0xf0] sm:$0xf]
        %v2257 = vld [vmem:[%s2143 + $0xf4] sm:$0x1]
        %v2258 = vld [vmem:[%s2143 + $0xf8] sm:$0xf]
        %v2259 = vld [vmem:[%s2143 + $0xfc] sm:$0x1]
        %v2260 = vld [vmem:[%s2143 + $0x100] sm:$0xf]
        %v2261 = vld [vmem:[%s2143 + $0x104] sm:$0x1]
        %v2262 = vld [vmem:[%s2143 + $0x108] sm:$0xf]
        %v2263 = vld [vmem:[%s2143 + $0x10c] sm:$0x1]
        %v2264 = vld [vmem:[%s2143 + $0x110] sm:$0xf]
        %v2265 = vld [vmem:[%s2143 + $0x114] sm:$0x1]
        %v2266 = vld [vmem:[%s2143 + $0x118] sm:$0xf]
        %v2267 = vld [vmem:[%s2143 + $0x11c] sm:$0x1]
        %v2268 = vld [vmem:[%s2143 + $0x120] sm:$0xf]
        %v2269 = vld [vmem:[%s2143 + $0x124] sm:$0x1]
        %v2270 = vld [vmem:[%s2143 + $0x128] sm:$0xf]
        %v2271 = vld [vmem:[%s2143 + $0x12c] sm:$0x1]
        %v2273 = vshrl.u32 %v2208, 16
        %v2275 = vrot.slane %v2273, 4
        %v2276 = vshll.u32 %v2208, 16
        %v2278 = vrot.slane %v2276, 5
        %v2279 = vor.u32 %v2275, %v2278
        %v2280 = vrot.slane %v2279, 4
        %v2282 = vshll.u32 %v2209, 16
        %v2284 = vrot.slane %v2282, 5
        %v2285 = vsel %vm346, %v2280, %v2284
        %v2287 = vshrl.u32 %v2210, 16
        %v2289 = vrot.slane %v2287, 4
        %v2290 = vshll.u32 %v2210, 16
        %v2292 = vrot.slane %v2290, 5
        %v2293 = vor.u32 %v2289, %v2292
        %v2294 = vrot.slane %v2293, 4
        %v2296 = vshll.u32 %v2211, 16
        %v2298 = vrot.slane %v2296, 5
        %v2299 = vsel %vm346, %v2294, %v2298
        %v2301 = vshrl.u32 %v2212, 16
        %v2303 = vrot.slane %v2301, 4
        %v2304 = vshll.u32 %v2212, 16
        %v2306 = vrot.slane %v2304, 5
        %v2307 = vor.u32 %v2303, %v2306
        %v2308 = vrot.slane %v2307, 4
        %v2310 = vshll.u32 %v2213, 16
        %v2312 = vrot.slane %v2310, 5
        %v2313 = vsel %vm346, %v2308, %v2312
        %v2315 = vshrl.u32 %v2214, 16
        %v2317 = vrot.slane %v2315, 4
        %v2318 = vshll.u32 %v2214, 16
        %v2320 = vrot.slane %v2318, 5
        %v2321 = vor.u32 %v2317, %v2320
        %v2322 = vrot.slane %v2321, 4
        %v2324 = vshll.u32 %v2215, 16
        %v2326 = vrot.slane %v2324, 5
        %v2327 = vsel %vm346, %v2322, %v2326
        %v2329 = vshrl.u32 %v2216, 16
        %v2331 = vrot.slane %v2329, 4
        %v2332 = vshll.u32 %v2216, 16
        %v2334 = vrot.slane %v2332, 5
        %v2335 = vor.u32 %v2331, %v2334
        %v2336 = vrot.slane %v2335, 4
        %v2338 = vshll.u32 %v2217, 16
        %v2340 = vrot.slane %v2338, 5
        %v2341 = vsel %vm346, %v2336, %v2340
        %v2343 = vshrl.u32 %v2218, 16
        %v2345 = vrot.slane %v2343, 4
        %v2346 = vshll.u32 %v2218, 16
        %v2348 = vrot.slane %v2346, 5
        %v2349 = vor.u32 %v2345, %v2348
        %v2350 = vrot.slane %v2349, 4
        %v2352 = vshll.u32 %v2219, 16
        %v2354 = vrot.slane %v2352, 5
        %v2355 = vsel %vm346, %v2350, %v2354
        %v2357 = vshrl.u32 %v2220, 16
        %v2359 = vrot.slane %v2357, 4
        %v2360 = vshll.u32 %v2220, 16
        %v2362 = vrot.slane %v2360, 5
        %v2363 = vor.u32 %v2359, %v2362
        %v2364 = vrot.slane %v2363, 4
        %v2366 = vshll.u32 %v2221, 16
        %v2368 = vrot.slane %v2366, 5
        %v2369 = vsel %vm346, %v2364, %v2368
        %v2371 = vshrl.u32 %v2222, 16
        %v2373 = vrot.slane %v2371, 4
        %v2374 = vshll.u32 %v2222, 16
        %v2376 = vrot.slane %v2374, 5
        %v2377 = vor.u32 %v2373, %v2376
        %v2378 = vrot.slane %v2377, 4
        %v2380 = vshll.u32 %v2223, 16
        %v2382 = vrot.slane %v2380, 5
        %v2383 = vsel %vm346, %v2378, %v2382
        %v2385 = vshrl.u32 %v2224, 16
        %v2387 = vrot.slane %v2385, 4
        %v2388 = vshll.u32 %v2224, 16
        %v2390 = vrot.slane %v2388, 5
        %v2391 = vor.u32 %v2387, %v2390
        %v2392 = vrot.slane %v2391, 4
        %v2394 = vshll.u32 %v2225, 16
        %v2396 = vrot.slane %v2394, 5
        %v2397 = vsel %vm346, %v2392, %v2396
        %v2399 = vshrl.u32 %v2226, 16
        %v2401 = vrot.slane %v2399, 4
        %v2402 = vshll.u32 %v2226, 16
        %v2404 = vrot.slane %v2402, 5
        %v2405 = vor.u32 %v2401, %v2404
        %v2406 = vrot.slane %v2405, 4
        %v2408 = vshll.u32 %v2227, 16
        %v2410 = vrot.slane %v2408, 5
        %v2411 = vsel %vm346, %v2406, %v2410
        %v2413 = vshrl.u32 %v2228, 16
        %v2415 = vrot.slane %v2413, 4
        %v2416 = vshll.u32 %v2228, 16
        %v2418 = vrot.slane %v2416, 5
        %v2419 = vor.u32 %v2415, %v2418
        %v2420 = vrot.slane %v2419, 4
        %v2422 = vshll.u32 %v2229, 16
        %v2424 = vrot.slane %v2422, 5
        %v2425 = vsel %vm346, %v2420, %v2424
        %v2427 = vshrl.u32 %v2230, 16
        %v2429 = vrot.slane %v2427, 4
        %v2430 = vshll.u32 %v2230, 16
        %v2432 = vrot.slane %v2430, 5
        %v2433 = vor.u32 %v2429, %v2432
        %v2434 = vrot.slane %v2433, 4
        %v2436 = vshll.u32 %v2231, 16
        %v2438 = vrot.slane %v2436, 5
        %v2439 = vsel %vm346, %v2434, %v2438
        %v2441 = vshrl.u32 %v2232, 16
        %v2443 = vrot.slane %v2441, 4
        %v2444 = vshll.u32 %v2232, 16
        %v2446 = vrot.slane %v2444, 5
        %v2447 = vor.u32 %v2443, %v2446
        %v2448 = vrot.slane %v2447, 4
        %v2450 = vshll.u32 %v2233, 16
        %v2452 = vrot.slane %v2450, 5
        %v2453 = vsel %vm346, %v2448, %v2452
        %v2455 = vshrl.u32 %v2234, 16
        %v2457 = vrot.slane %v2455, 4
        %v2458 = vshll.u32 %v2234, 16
        %v2460 = vrot.slane %v2458, 5
        %v2461 = vor.u32 %v2457, %v2460
        %v2462 = vrot.slane %v2461, 4
        %v2464 = vshll.u32 %v2235, 16
        %v2466 = vrot.slane %v2464, 5
        %v2467 = vsel %vm346, %v2462, %v2466
        %v2469 = vshrl.u32 %v2236, 16
        %v2471 = vrot.slane %v2469, 4
        %v2472 = vshll.u32 %v2236, 16
        %v2474 = vrot.slane %v2472, 5
        %v2475 = vor.u32 %v2471, %v2474
        %v2476 = vrot.slane %v2475, 4
        %v2478 = vshll.u32 %v2237, 16
        %v2480 = vrot.slane %v2478, 5
        %v2481 = vsel %vm346, %v2476, %v2480
        %v2483 = vshrl.u32 %v2238, 16
        %v2485 = vrot.slane %v2483, 4
        %v2486 = vshll.u32 %v2238, 16
        %v2488 = vrot.slane %v2486, 5
        %v2489 = vor.u32 %v2485, %v2488
        %v2490 = vrot.slane %v2489, 4
        %v2492 = vshll.u32 %v2239, 16
        %v2494 = vrot.slane %v2492, 5
        %v2495 = vsel %vm346, %v2490, %v2494
        %v2497 = vshrl.u32 %v2240, 16
        %v2499 = vrot.slane %v2497, 4
        %v2500 = vshll.u32 %v2240, 16
        %v2502 = vrot.slane %v2500, 5
        %v2503 = vor.u32 %v2499, %v2502
        %v2504 = vrot.slane %v2503, 4
        %v2506 = vshll.u32 %v2241, 16
        %v2508 = vrot.slane %v2506, 5
        %v2509 = vsel %vm346, %v2504, %v2508
        %v2511 = vshrl.u32 %v2242, 16
        %v2513 = vrot.slane %v2511, 4
        %v2514 = vshll.u32 %v2242, 16
        %v2516 = vrot.slane %v2514, 5
        %v2517 = vor.u32 %v2513, %v2516
        %v2518 = vrot.slane %v2517, 4
        %v2520 = vshll.u32 %v2243, 16
        %v2522 = vrot.slane %v2520, 5
        %v2523 = vsel %vm346, %v2518, %v2522
        %v2525 = vshrl.u32 %v2244, 16
        %v2527 = vrot.slane %v2525, 4
        %v2528 = vshll.u32 %v2244, 16
        %v2530 = vrot.slane %v2528, 5
        %v2531 = vor.u32 %v2527, %v2530
        %v2532 = vrot.slane %v2531, 4
        %v2534 = vshll.u32 %v2245, 16
        %v2536 = vrot.slane %v2534, 5
        %v2537 = vsel %vm346, %v2532, %v2536
        %v2539 = vshrl.u32 %v2246, 16
        %v2541 = vrot.slane %v2539, 4
        %v2542 = vshll.u32 %v2246, 16
        %v2544 = vrot.slane %v2542, 5
        %v2545 = vor.u32 %v2541, %v2544
        %v2546 = vrot.slane %v2545, 4
        %v2548 = vshll.u32 %v2247, 16
        %v2550 = vrot.slane %v2548, 5
        %v2551 = vsel %vm346, %v2546, %v2550
        %v2553 = vshrl.u32 %v2248, 16
        %v2555 = vrot.slane %v2553, 4
        %v2556 = vshll.u32 %v2248, 16
        %v2558 = vrot.slane %v2556, 5
        %v2559 = vor.u32 %v2555, %v2558
        %v2560 = vrot.slane %v2559, 4
        %v2562 = vshll.u32 %v2249, 16
        %v2564 = vrot.slane %v2562, 5
        %v2565 = vsel %vm346, %v2560, %v2564
        %v2567 = vshrl.u32 %v2250, 16
        %v2569 = vrot.slane %v2567, 4
        %v2570 = vshll.u32 %v2250, 16
        %v2572 = vrot.slane %v2570, 5
        %v2573 = vor.u32 %v2569, %v2572
        %v2574 = vrot.slane %v2573, 4
        %v2576 = vshll.u32 %v2251, 16
        %v2578 = vrot.slane %v2576, 5
        %v2579 = vsel %vm346, %v2574, %v2578
        %v2581 = vshrl.u32 %v2252, 16
        %v2583 = vrot.slane %v2581, 4
        %v2584 = vshll.u32 %v2252, 16
        %v2586 = vrot.slane %v2584, 5
        %v2587 = vor.u32 %v2583, %v2586
        %v2588 = vrot.slane %v2587, 4
        %v2590 = vshll.u32 %v2253, 16
        %v2592 = vrot.slane %v2590, 5
        %v2593 = vsel %vm346, %v2588, %v2592
        %v2595 = vshrl.u32 %v2254, 16
        %v2597 = vrot.slane %v2595, 4
        %v2598 = vshll.u32 %v2254, 16
        %v2600 = vrot.slane %v2598, 5
        %v2601 = vor.u32 %v2597, %v2600
        %v2602 = vrot.slane %v2601, 4
        %v2604 = vshll.u32 %v2255, 16
        %v2606 = vrot.slane %v2604, 5
        %v2607 = vsel %vm346, %v2602, %v2606
        %v2609 = vshrl.u32 %v2256, 16
        %v2611 = vrot.slane %v2609, 4
        %v2612 = vshll.u32 %v2256, 16
        %v2614 = vrot.slane %v2612, 5
        %v2615 = vor.u32 %v2611, %v2614
        %v2616 = vrot.slane %v2615, 4
        %v2618 = vshll.u32 %v2257, 16
        %v2620 = vrot.slane %v2618, 5
        %v2621 = vsel %vm346, %v2616, %v2620
        %v2623 = vshrl.u32 %v2258, 16
        %v2625 = vrot.slane %v2623, 4
        %v2626 = vshll.u32 %v2258, 16
        %v2628 = vrot.slane %v2626, 5
        %v2629 = vor.u32 %v2625, %v2628
        %v2630 = vrot.slane %v2629, 4
        %v2632 = vshll.u32 %v2259, 16
        %v2634 = vrot.slane %v2632, 5
        %v2635 = vsel %vm346, %v2630, %v2634
        %v2637 = vshrl.u32 %v2260, 16
        %v2639 = vrot.slane %v2637, 4
        %v2640 = vshll.u32 %v2260, 16
        %v2642 = vrot.slane %v2640, 5
        %v2643 = vor.u32 %v2639, %v2642
        %v2644 = vrot.slane %v2643, 4
        %v2646 = vshll.u32 %v2261, 16
        %v2648 = vrot.slane %v2646, 5
        %v2649 = vsel %vm346, %v2644, %v2648
        %v2651 = vshrl.u32 %v2262, 16
        %v2653 = vrot.slane %v2651, 4
        %v2654 = vshll.u32 %v2262, 16
        %v2656 = vrot.slane %v2654, 5
        %v2657 = vor.u32 %v2653, %v2656
        %v2658 = vrot.slane %v2657, 4
        %v2660 = vshll.u32 %v2263, 16
        %v2662 = vrot.slane %v2660, 5
        %v2663 = vsel %vm346, %v2658, %v2662
        %v2665 = vshrl.u32 %v2264, 16
        %v2667 = vrot.slane %v2665, 4
        %v2668 = vshll.u32 %v2264, 16
        %v2670 = vrot.slane %v2668, 5
        %v2671 = vor.u32 %v2667, %v2670
        %v2672 = vrot.slane %v2671, 4
        %v2674 = vshll.u32 %v2265, 16
        %v2676 = vrot.slane %v2674, 5
        %v2677 = vsel %vm346, %v2672, %v2676
        %v2679 = vshrl.u32 %v2266, 16
        %v2681 = vrot.slane %v2679, 4
        %v2682 = vshll.u32 %v2266, 16
        %v2684 = vrot.slane %v2682, 5
        %v2685 = vor.u32 %v2681, %v2684
        %v2686 = vrot.slane %v2685, 4
        %v2688 = vshll.u32 %v2267, 16
        %v2690 = vrot.slane %v2688, 5
        %v2691 = vsel %vm346, %v2686, %v2690
        %v2693 = vshrl.u32 %v2268, 16
        %v2695 = vrot.slane %v2693, 4
        %v2696 = vshll.u32 %v2268, 16
        %v2698 = vrot.slane %v2696, 5
        %v2699 = vor.u32 %v2695, %v2698
        %v2700 = vrot.slane %v2699, 4
        %v2702 = vshll.u32 %v2269, 16
        %v2704 = vrot.slane %v2702, 5
        %v2705 = vsel %vm346, %v2700, %v2704
        %v2707 = vshrl.u32 %v2270, 16
        %v2709 = vrot.slane %v2707, 4
        %v2710 = vshll.u32 %v2270, 16
        %v2712 = vrot.slane %v2710, 5
        %v2713 = vor.u32 %v2709, %v2712
        %v2714 = vrot.slane %v2713, 4
        %v2716 = vshll.u32 %v2271, 16
        %v2718 = vrot.slane %v2716, 5
        %v2719 = vsel %vm346, %v2714, %v2718
        %2752 = vst [vmem:[#allocation2 + $0x1c] sm:$0xf] %v2285
        %2753 = vst [vmem:[#allocation2 + $0x40] sm:$0xf] %v2299
        %2754 = vst [vmem:[#allocation2 + $0x64] sm:$0xf] %v2313
        %2755 = vst [vmem:[#allocation2 + $0x88] sm:$0xf] %v2327
        %2756 = vst [vmem:[#allocation2 + $0xac] sm:$0xf] %v2341
        %2757 = vst [vmem:[#allocation2 + $0xd0] sm:$0xf] %v2355
        %2758 = vst [vmem:[#allocation2 + $0xf4] sm:$0xf] %v2369
        %2759 = vst [vmem:[#allocation2 + $0x118] sm:$0xf] %v2383
        %2760 = vst [vmem:[#allocation2 + $0x13c] sm:$0xf] %v2397
        %2761 = vst [vmem:[#allocation2 + $0x160] sm:$0xf] %v2411
        %2762 = vst [vmem:[#allocation2 + $0x184] sm:$0xf] %v2425
        %2763 = vst [vmem:[#allocation2 + $0x1a8] sm:$0xf] %v2439
        %2764 = vst [vmem:[#allocation2 + $0x1cc] sm:$0xf] %v2453
        %2765 = vst [vmem:[#allocation2 + $0x1f0] sm:$0xf] %v2467
        %2766 = vst [vmem:[#allocation2 + $0x214] sm:$0xf] %v2481
        %2767 = vst [vmem:[#allocation2 + $0x238] sm:$0xf] %v2495
        %2768 = vst [vmem:[#allocation2 + $0x25c] sm:$0xf] %v2509
        %2769 = vst [vmem:[#allocation2 + $0x280] sm:$0xf] %v2523
        %2770 = vst [vmem:[#allocation2 + $0x2a4] sm:$0xf] %v2537
        %2771 = vst [vmem:[#allocation2 + $0x2c8] sm:$0xf] %v2551
        %2772 = vst [vmem:[#allocation2 + $0x2ec] sm:$0xf] %v2565
        %2773 = vst [vmem:[#allocation2 + $0x310] sm:$0xf] %v2579
        %2774 = vst [vmem:[#allocation2 + $0x334] sm:$0xf] %v2593
        %2775 = vst [vmem:[#allocation2 + $0x358] sm:$0xf] %v2607
        %2776 = vst [vmem:[#allocation2 + $0x37c] sm:$0xf] %v2621
        %2777 = vst [vmem:[#allocation2 + $0x3a0] sm:$0xf] %v2635
        %2778 = vst [vmem:[#allocation2 + $0x3c4] sm:$0xf] %v2649
        %2779 = vst [vmem:[#allocation2 + $0x3e8] sm:$0xf] %v2663
        %2780 = vst [vmem:[#allocation2 + $0x40c] sm:$0xf] %v2677
        %2781 = vst [vmem:[#allocation2 + $0x430] sm:$0xf] %v2691
        %2782 = vst [vmem:[#allocation2 + $0x454] sm:$0xf] %v2705
        %2783 = vst [vmem:[#allocation2 + $0x478] sm:$0xf] %v2719
        %v2784 = vld [vmem:[%s2143] sm:$0xe]
        %v2785 = vld [vmem:[%s2143 + $0x4] sm:$0x1]
        %v2786 = vld [vmem:[%s2143 + $0x8] sm:$0xe]
        %v2787 = vld [vmem:[%s2143 + $0xc] sm:$0x1]
        %v2788 = vld [vmem:[%s2143 + $0x10] sm:$0xe]
        %v2789 = vld [vmem:[%s2143 + $0x14] sm:$0x1]
        %v2790 = vld [vmem:[%s2143 + $0x18] sm:$0xe]
        %v2791 = vld [vmem:[%s2143 + $0x1c] sm:$0x1]
        %v2792 = vld [vmem:[%s2143 + $0x20] sm:$0xe]
        %v2793 = vld [vmem:[%s2143 + $0x24] sm:$0x1]
        %v2794 = vld [vmem:[%s2143 + $0x28] sm:$0xe]
        %v2795 = vld [vmem:[%s2143 + $0x2c] sm:$0x1]
        %v2796 = vld [vmem:[%s2143 + $0x30] sm:$0xe]
        %v2797 = vld [vmem:[%s2143 + $0x34] sm:$0x1]
        %v2798 = vld [vmem:[%s2143 + $0x38] sm:$0xe]
        %v2799 = vld [vmem:[%s2143 + $0x3c] sm:$0x1]
        %v2800 = vld [vmem:[%s2143 + $0x50] sm:$0xe]
        %v2801 = vld [vmem:[%s2143 + $0x54] sm:$0x1]
        %v2802 = vld [vmem:[%s2143 + $0x58] sm:$0xe]
        %v2803 = vld [vmem:[%s2143 + $0x5c] sm:$0x1]
        %v2804 = vld [vmem:[%s2143 + $0x60] sm:$0xe]
        %v2805 = vld [vmem:[%s2143 + $0x64] sm:$0x1]
        %v2806 = vld [vmem:[%s2143 + $0x68] sm:$0xe]
        %v2807 = vld [vmem:[%s2143 + $0x6c] sm:$0x1]
        %v2808 = vld [vmem:[%s2143 + $0x70] sm:$0xe]
        %v2809 = vld [vmem:[%s2143 + $0x74] sm:$0x1]
        %v2810 = vld [vmem:[%s2143 + $0x78] sm:$0xe]
        %v2811 = vld [vmem:[%s2143 + $0x7c] sm:$0x1]
        %v2812 = vld [vmem:[%s2143 + $0x80] sm:$0xe]
        %v2813 = vld [vmem:[%s2143 + $0x84] sm:$0x1]
        %v2814 = vld [vmem:[%s2143 + $0x88] sm:$0xe]
        %v2815 = vld [vmem:[%s2143 + $0x8c] sm:$0x1]
        %v2816 = vld [vmem:[%s2143 + $0xa0] sm:$0xe]
        %v2817 = vld [vmem:[%s2143 + $0xa4] sm:$0x1]
        %v2818 = vld [vmem:[%s2143 + $0xa8] sm:$0xe]
        %v2819 = vld [vmem:[%s2143 + $0xac] sm:$0x1]
        %v2820 = vld [vmem:[%s2143 + $0xb0] sm:$0xe]
        %v2821 = vld [vmem:[%s2143 + $0xb4] sm:$0x1]
        %v2822 = vld [vmem:[%s2143 + $0xb8] sm:$0xe]
        %v2823 = vld [vmem:[%s2143 + $0xbc] sm:$0x1]
        %v2824 = vld [vmem:[%s2143 + $0xc0] sm:$0xe]
        %v2825 = vld [vmem:[%s2143 + $0xc4] sm:$0x1]
        %v2826 = vld [vmem:[%s2143 + $0xc8] sm:$0xe]
        %v2827 = vld [vmem:[%s2143 + $0xcc] sm:$0x1]
        %v2828 = vld [vmem:[%s2143 + $0xd0] sm:$0xe]
        %v2829 = vld [vmem:[%s2143 + $0xd4] sm:$0x1]
        %v2830 = vld [vmem:[%s2143 + $0xd8] sm:$0xe]
        %v2831 = vld [vmem:[%s2143 + $0xdc] sm:$0x1]
        %v2832 = vld [vmem:[%s2143 + $0xf0] sm:$0xe]
        %v2833 = vld [vmem:[%s2143 + $0xf4] sm:$0x1]
        %v2834 = vld [vmem:[%s2143 + $0xf8] sm:$0xe]
        %v2835 = vld [vmem:[%s2143 + $0xfc] sm:$0x1]
        %v2836 = vld [vmem:[%s2143 + $0x100] sm:$0xe]
        %v2837 = vld [vmem:[%s2143 + $0x104] sm:$0x1]
        %v2838 = vld [vmem:[%s2143 + $0x108] sm:$0xe]
        %v2839 = vld [vmem:[%s2143 + $0x10c] sm:$0x1]
        %v2840 = vld [vmem:[%s2143 + $0x110] sm:$0xe]
        %v2841 = vld [vmem:[%s2143 + $0x114] sm:$0x1]
        %v2842 = vld [vmem:[%s2143 + $0x118] sm:$0xe]
        %v2843 = vld [vmem:[%s2143 + $0x11c] sm:$0x1]
        %v2844 = vld [vmem:[%s2143 + $0x120] sm:$0xe]
        %v2845 = vld [vmem:[%s2143 + $0x124] sm:$0x1]
        %v2846 = vld [vmem:[%s2143 + $0x128] sm:$0xe]
        %v2847 = vld [vmem:[%s2143 + $0x12c] sm:$0x1]
        %v2912 = vrot.slane %v2784, 5
        %v2913 = vrot.slane %v2912, 4
        %v2914 = vrot.slane %v2785, 5
        %v2915 = vsel %vm989, %v2913, %v2914
        %v2916 = vrot.slane %v2786, 5
        %v2917 = vrot.slane %v2916, 4
        %v2918 = vrot.slane %v2787, 5
        %v2919 = vsel %vm989, %v2917, %v2918
        %v2920 = vrot.slane %v2788, 5
        %v2921 = vrot.slane %v2920, 4
        %v2922 = vrot.slane %v2789, 5
        %v2923 = vsel %vm989, %v2921, %v2922
        %v2924 = vrot.slane %v2790, 5
        %v2925 = vrot.slane %v2924, 4
        %v2926 = vrot.slane %v2791, 5
        %v2927 = vsel %vm989, %v2925, %v2926
        %v2928 = vrot.slane %v2792, 5
        %v2929 = vrot.slane %v2928, 4
        %v2930 = vrot.slane %v2793, 5
        %v2931 = vsel %vm989, %v2929, %v2930
        %v2932 = vrot.slane %v2794, 5
        %v2933 = vrot.slane %v2932, 4
        %v2934 = vrot.slane %v2795, 5
        %v2935 = vsel %vm989, %v2933, %v2934
        %v2936 = vrot.slane %v2796, 5
        %v2937 = vrot.slane %v2936, 4
        %v2938 = vrot.slane %v2797, 5
        %v2939 = vsel %vm989, %v2937, %v2938
        %v2940 = vrot.slane %v2798, 5
        %v2941 = vrot.slane %v2940, 4
        %v2942 = vrot.slane %v2799, 5
        %v2943 = vsel %vm989, %v2941, %v2942
        %v2944 = vrot.slane %v2800, 5
        %v2945 = vrot.slane %v2944, 4
        %v2946 = vrot.slane %v2801, 5
        %v2947 = vsel %vm989, %v2945, %v2946
        %v2948 = vrot.slane %v2802, 5
        %v2949 = vrot.slane %v2948, 4
        %v2950 = vrot.slane %v2803, 5
        %v2951 = vsel %vm989, %v2949, %v2950
        %v2952 = vrot.slane %v2804, 5
        %v2953 = vrot.slane %v2952, 4
        %v2954 = vrot.slane %v2805, 5
        %v2955 = vsel %vm989, %v2953, %v2954
        %v2956 = vrot.slane %v2806, 5
        %v2957 = vrot.slane %v2956, 4
        %v2958 = vrot.slane %v2807, 5
        %v2959 = vsel %vm989, %v2957, %v2958
        %v2960 = vrot.slane %v2808, 5
        %v2961 = vrot.slane %v2960, 4
        %v2962 = vrot.slane %v2809, 5
        %v2963 = vsel %vm989, %v2961, %v2962
        %v2964 = vrot.slane %v2810, 5
        %v2965 = vrot.slane %v2964, 4
        %v2966 = vrot.slane %v2811, 5
        %v2967 = vsel %vm989, %v2965, %v2966
        %v2968 = vrot.slane %v2812, 5
        %v2969 = vrot.slane %v2968, 4
        %v2970 = vrot.slane %v2813, 5
        %v2971 = vsel %vm989, %v2969, %v2970
        %v2972 = vrot.slane %v2814, 5
        %v2973 = vrot.slane %v2972, 4
        %v2974 = vrot.slane %v2815, 5
        %v2975 = vsel %vm989, %v2973, %v2974
        %v2976 = vrot.slane %v2816, 5
        %v2977 = vrot.slane %v2976, 4
        %v2978 = vrot.slane %v2817, 5
        %v2979 = vsel %vm989, %v2977, %v2978
        %v2980 = vrot.slane %v2818, 5
        %v2981 = vrot.slane %v2980, 4
        %v2982 = vrot.slane %v2819, 5
        %v2983 = vsel %vm989, %v2981, %v2982
        %v2984 = vrot.slane %v2820, 5
        %v2985 = vrot.slane %v2984, 4
        %v2986 = vrot.slane %v2821, 5
        %v2987 = vsel %vm989, %v2985, %v2986
        %v2988 = vrot.slane %v2822, 5
        %v2989 = vrot.slane %v2988, 4
        %v2990 = vrot.slane %v2823, 5
        %v2991 = vsel %vm989, %v2989, %v2990
        %v2992 = vrot.slane %v2824, 5
        %v2993 = vrot.slane %v2992, 4
        %v2994 = vrot.slane %v2825, 5
        %v2995 = vsel %vm989, %v2993, %v2994
        %v2996 = vrot.slane %v2826, 5
        %v2997 = vrot.slane %v2996, 4
        %v2998 = vrot.slane %v2827, 5
        %v2999 = vsel %vm989, %v2997, %v2998
        %v3000 = vrot.slane %v2828, 5
        %v3001 = vrot.slane %v3000, 4
        %v3002 = vrot.slane %v2829, 5
        %v3003 = vsel %vm989, %v3001, %v3002
        %v3004 = vrot.slane %v2830, 5
        %v3005 = vrot.slane %v3004, 4
        %v3006 = vrot.slane %v2831, 5
        %v3007 = vsel %vm989, %v3005, %v3006
        %v3008 = vrot.slane %v2832, 5
        %v3009 = vrot.slane %v3008, 4
        %v3010 = vrot.slane %v2833, 5
        %v3011 = vsel %vm989, %v3009, %v3010
        %v3012 = vrot.slane %v2834, 5
        %v3013 = vrot.slane %v3012, 4
        %v3014 = vrot.slane %v2835, 5
        %v3015 = vsel %vm989, %v3013, %v3014
        %v3016 = vrot.slane %v2836, 5
        %v3017 = vrot.slane %v3016, 4
        %v3018 = vrot.slane %v2837, 5
        %v3019 = vsel %vm989, %v3017, %v3018
        %v3020 = vrot.slane %v2838, 5
        %v3021 = vrot.slane %v3020, 4
        %v3022 = vrot.slane %v2839, 5
        %v3023 = vsel %vm989, %v3021, %v3022
        %v3024 = vrot.slane %v2840, 5
        %v3025 = vrot.slane %v3024, 4
        %v3026 = vrot.slane %v2841, 5
        %v3027 = vsel %vm989, %v3025, %v3026
        %v3028 = vrot.slane %v2842, 5
        %v3029 = vrot.slane %v3028, 4
        %v3030 = vrot.slane %v2843, 5
        %v3031 = vsel %vm989, %v3029, %v3030
        %v3032 = vrot.slane %v2844, 5
        %v3033 = vrot.slane %v3032, 4
        %v3034 = vrot.slane %v2845, 5
        %v3035 = vsel %vm989, %v3033, %v3034
        %v3036 = vrot.slane %v2846, 5
        %v3037 = vrot.slane %v3036, 4
        %v3038 = vrot.slane %v2847, 5
        %v3039 = vsel %vm989, %v3037, %v3038
        %3072 = vst [vmem:[#allocation2 + $0x20] sm:$0xf] %v2915
        %3073 = vst [vmem:[#allocation2 + $0x44] sm:$0xf] %v2919
        %3074 = vst [vmem:[#allocation2 + $0x68] sm:$0xf] %v2923
        %3075 = vst [vmem:[#allocation2 + $0x8c] sm:$0xf] %v2927
        %3076 = vst [vmem:[#allocation2 + $0xb0] sm:$0xf] %v2931
        %3077 = vst [vmem:[#allocation2 + $0xd4] sm:$0xf] %v2935
        %3078 = vst [vmem:[#allocation2 + $0xf8] sm:$0xf] %v2939
        %3079 = vst [vmem:[#allocation2 + $0x11c] sm:$0xf] %v2943
        %3080 = vst [vmem:[#allocation2 + $0x140] sm:$0xf] %v2947
        %3081 = vst [vmem:[#allocation2 + $0x164] sm:$0xf] %v2951
        %3082 = vst [vmem:[#allocation2 + $0x188] sm:$0xf] %v2955
        %3083 = vst [vmem:[#allocation2 + $0x1ac] sm:$0xf] %v2959
        %3084 = vst [vmem:[#allocation2 + $0x1d0] sm:$0xf] %v2963
        %3085 = vst [vmem:[#allocation2 + $0x1f4] sm:$0xf] %v2967
        %3086 = vst [vmem:[#allocation2 + $0x218] sm:$0xf] %v2971
        %3087 = vst [vmem:[#allocation2 + $0x23c] sm:$0xf] %v2975
        %3088 = vst [vmem:[#allocation2 + $0x260] sm:$0xf] %v2979
        %3089 = vst [vmem:[#allocation2 + $0x284] sm:$0xf] %v2983
        %3090 = vst [vmem:[#allocation2 + $0x2a8] sm:$0xf] %v2987
        %3091 = vst [vmem:[#allocation2 + $0x2cc] sm:$0xf] %v2991
        %3092 = vst [vmem:[#allocation2 + $0x2f0] sm:$0xf] %v2995
        %3093 = vst [vmem:[#allocation2 + $0x314] sm:$0xf] %v2999
        %3094 = vst [vmem:[#allocation2 + $0x338] sm:$0xf] %v3003
        %3095 = vst [vmem:[#allocation2 + $0x35c] sm:$0xf] %v3007
        %3096 = vst [vmem:[#allocation2 + $0x380] sm:$0xf] %v3011
        %3097 = vst [vmem:[#allocation2 + $0x3a4] sm:$0xf] %v3015
        %3098 = vst [vmem:[#allocation2 + $0x3c8] sm:$0xf] %v3019
        %3099 = vst [vmem:[#allocation2 + $0x3ec] sm:$0xf] %v3023
        %3100 = vst [vmem:[#allocation2 + $0x410] sm:$0xf] %v3027
        %3101 = vst [vmem:[#allocation2 + $0x434] sm:$0xf] %v3031
        %3102 = vst [vmem:[#allocation2 + $0x458] sm:$0xf] %v3035
        %3103 = vst [vmem:[#allocation2 + $0x47c] sm:$0xf] %v3039
        %v3104 = vld [vmem:[#allocation2] sm:$0xff]
        %v3105 = vld [vmem:[#allocation2 + $0x8] sm:$0xff]
        %v3106 = vld [vmem:[#allocation2 + $0x10] sm:$0xff]
        %v3107 = vld [vmem:[#allocation2 + $0x18] sm:$0xff]
        %v3108 = vld [vmem:[#allocation2 + $0x20] sm:$0xf]
        %v3109 = vld [vmem:[#allocation2 + $0x24] sm:$0xff]
        %v3110 = vld [vmem:[#allocation2 + $0x2c] sm:$0xff]
        %v3111 = vld [vmem:[#allocation2 + $0x34] sm:$0xff]
        %v3112 = vld [vmem:[#allocation2 + $0x3c] sm:$0xff]
        %v3113 = vld [vmem:[#allocation2 + $0x44] sm:$0xf]
        %v3114 = vld [vmem:[#allocation2 + $0x48] sm:$0xff]
        %v3115 = vld [vmem:[#allocation2 + $0x50] sm:$0xff]
        %v3116 = vld [vmem:[#allocation2 + $0x58] sm:$0xff]
        %v3117 = vld [vmem:[#allocation2 + $0x60] sm:$0xff]
        %v3118 = vld [vmem:[#allocation2 + $0x68] sm:$0xf]
        %v3119 = vld [vmem:[#allocation2 + $0x6c] sm:$0xff]
        %v3120 = vld [vmem:[#allocation2 + $0x74] sm:$0xff]
        %v3121 = vld [vmem:[#allocation2 + $0x7c] sm:$0xff]
        %v3122 = vld [vmem:[#allocation2 + $0x84] sm:$0xff]
        %v3123 = vld [vmem:[#allocation2 + $0x8c] sm:$0xf]
        %v3124 = vld [vmem:[#allocation2 + $0x90] sm:$0xff]
        %v3125 = vld [vmem:[#allocation2 + $0x98] sm:$0xff]
        %v3126 = vld [vmem:[#allocation2 + $0xa0] sm:$0xff]
        %v3127 = vld [vmem:[#allocation2 + $0xa8] sm:$0xff]
        %v3128 = vld [vmem:[#allocation2 + $0xb0] sm:$0xf]
        %v3129 = vld [vmem:[#allocation2 + $0xb4] sm:$0xff]
        %v3130 = vld [vmem:[#allocation2 + $0xbc] sm:$0xff]
        %v3131 = vld [vmem:[#allocation2 + $0xc4] sm:$0xff]
        %v3132 = vld [vmem:[#allocation2 + $0xcc] sm:$0xff]
        %v3133 = vld [vmem:[#allocation2 + $0xd4] sm:$0xf]
        %v3134 = vld [vmem:[#allocation2 + $0xd8] sm:$0xff]
        %v3135 = vld [vmem:[#allocation2 + $0xe0] sm:$0xff]
        %v3136 = vld [vmem:[#allocation2 + $0xe8] sm:$0xff]
        %v3137 = vld [vmem:[#allocation2 + $0xf0] sm:$0xff]
        %v3138 = vld [vmem:[#allocation2 + $0xf8] sm:$0xf]
        %v3139 = vld [vmem:[#allocation2 + $0xfc] sm:$0xff]
        %v3140 = vld [vmem:[#allocation2 + $0x104] sm:$0xff]
        %v3141 = vld [vmem:[#allocation2 + $0x10c] sm:$0xff]
        %v3142 = vld [vmem:[#allocation2 + $0x114] sm:$0xff]
        %v3143 = vld [vmem:[#allocation2 + $0x11c] sm:$0xf]
        %v3144 = vld [vmem:[#allocation2 + $0x120] sm:$0xff]
        %v3145 = vld [vmem:[#allocation2 + $0x128] sm:$0xff]
        %v3146 = vld [vmem:[#allocation2 + $0x130] sm:$0xff]
        %v3147 = vld [vmem:[#allocation2 + $0x138] sm:$0xff]
        %v3148 = vld [vmem:[#allocation2 + $0x140] sm:$0xf]
        %v3149 = vld [vmem:[#allocation2 + $0x144] sm:$0xff]
        %v3150 = vld [vmem:[#allocation2 + $0x14c] sm:$0xff]
        %v3151 = vld [vmem:[#allocation2 + $0x154] sm:$0xff]
        %v3152 = vld [vmem:[#allocation2 + $0x15c] sm:$0xff]
        %v3153 = vld [vmem:[#allocation2 + $0x164] sm:$0xf]
        %v3154 = vld [vmem:[#allocation2 + $0x168] sm:$0xff]
        %v3155 = vld [vmem:[#allocation2 + $0x170] sm:$0xff]
        %v3156 = vld [vmem:[#allocation2 + $0x178] sm:$0xff]
        %v3157 = vld [vmem:[#allocation2 + $0x180] sm:$0xff]
        %v3158 = vld [vmem:[#allocation2 + $0x188] sm:$0xf]
        %v3159 = vld [vmem:[#allocation2 + $0x18c] sm:$0xff]
        %v3160 = vld [vmem:[#allocation2 + $0x194] sm:$0xff]
        %v3161 = vld [vmem:[#allocation2 + $0x19c] sm:$0xff]
        %v3162 = vld [vmem:[#allocation2 + $0x1a4] sm:$0xff]
        %v3163 = vld [vmem:[#allocation2 + $0x1ac] sm:$0xf]
        %v3164 = vld [vmem:[#allocation2 + $0x1b0] sm:$0xff]
        %v3165 = vld [vmem:[#allocation2 + $0x1b8] sm:$0xff]
        %v3166 = vld [vmem:[#allocation2 + $0x1c0] sm:$0xff]
        %v3167 = vld [vmem:[#allocation2 + $0x1c8] sm:$0xff]
        %v3168 = vld [vmem:[#allocation2 + $0x1d0] sm:$0xf]
        %v3169 = vld [vmem:[#allocation2 + $0x1d4] sm:$0xff]
        %v3170 = vld [vmem:[#allocation2 + $0x1dc] sm:$0xff]
        %v3171 = vld [vmem:[#allocation2 + $0x1e4] sm:$0xff]
        %v3172 = vld [vmem:[#allocation2 + $0x1ec] sm:$0xff]
        %v3173 = vld [vmem:[#allocation2 + $0x1f4] sm:$0xf]
        %v3174 = vld [vmem:[#allocation2 + $0x1f8] sm:$0xff]
        %v3175 = vld [vmem:[#allocation2 + $0x200] sm:$0xff]
        %v3176 = vld [vmem:[#allocation2 + $0x208] sm:$0xff]
        %v3177 = vld [vmem:[#allocation2 + $0x210] sm:$0xff]
        %v3178 = vld [vmem:[#allocation2 + $0x218] sm:$0xf]
        %v3179 = vld [vmem:[#allocation2 + $0x21c] sm:$0xff]
        %v3180 = vld [vmem:[#allocation2 + $0x224] sm:$0xff]
        %v3181 = vld [vmem:[#allocation2 + $0x22c] sm:$0xff]
        %v3182 = vld [vmem:[#allocation2 + $0x234] sm:$0xff]
        %v3183 = vld [vmem:[#allocation2 + $0x23c] sm:$0xf]
        %v3184 = vld [vmem:[#allocation2 + $0x240] sm:$0xff]
        %v3185 = vld [vmem:[#allocation2 + $0x248] sm:$0xff]
        %v3186 = vld [vmem:[#allocation2 + $0x250] sm:$0xff]
        %v3187 = vld [vmem:[#allocation2 + $0x258] sm:$0xff]
        %v3188 = vld [vmem:[#allocation2 + $0x260] sm:$0xf]
        %v3189 = vld [vmem:[#allocation2 + $0x264] sm:$0xff]
        %v3190 = vld [vmem:[#allocation2 + $0x26c] sm:$0xff]
        %v3191 = vld [vmem:[#allocation2 + $0x274] sm:$0xff]
        %v3192 = vld [vmem:[#allocation2 + $0x27c] sm:$0xff]
        %v3193 = vld [vmem:[#allocation2 + $0x284] sm:$0xf]
        %v3194 = vld [vmem:[#allocation2 + $0x288] sm:$0xff]
        %v3195 = vld [vmem:[#allocation2 + $0x290] sm:$0xff]
        %v3196 = vld [vmem:[#allocation2 + $0x298] sm:$0xff]
        %v3197 = vld [vmem:[#allocation2 + $0x2a0] sm:$0xff]
        %v3198 = vld [vmem:[#allocation2 + $0x2a8] sm:$0xf]
        %v3199 = vld [vmem:[#allocation2 + $0x2ac] sm:$0xff]
        %v3200 = vld [vmem:[#allocation2 + $0x2b4] sm:$0xff]
        %v3201 = vld [vmem:[#allocation2 + $0x2bc] sm:$0xff]
        %v3202 = vld [vmem:[#allocation2 + $0x2c4] sm:$0xff]
        %v3203 = vld [vmem:[#allocation2 + $0x2cc] sm:$0xf]
        %v3204 = vld [vmem:[#allocation2 + $0x2d0] sm:$0xff]
        %v3205 = vld [vmem:[#allocation2 + $0x2d8] sm:$0xff]
        %v3206 = vld [vmem:[#allocation2 + $0x2e0] sm:$0xff]
        %v3207 = vld [vmem:[#allocation2 + $0x2e8] sm:$0xff]
        %v3208 = vld [vmem:[#allocation2 + $0x2f0] sm:$0xf]
        %v3209 = vld [vmem:[#allocation2 + $0x2f4] sm:$0xff]
        %v3210 = vld [vmem:[#allocation2 + $0x2fc] sm:$0xff]
        %v3211 = vld [vmem:[#allocation2 + $0x304] sm:$0xff]
        %v3212 = vld [vmem:[#allocation2 + $0x30c] sm:$0xff]
        %v3213 = vld [vmem:[#allocation2 + $0x314] sm:$0xf]
        %v3214 = vld [vmem:[#allocation2 + $0x318] sm:$0xff]
        %v3215 = vld [vmem:[#allocation2 + $0x320] sm:$0xff]
        %v3216 = vld [vmem:[#allocation2 + $0x328] sm:$0xff]
        %v3217 = vld [vmem:[#allocation2 + $0x330] sm:$0xff]
        %v3218 = vld [vmem:[#allocation2 + $0x338] sm:$0xf]
        %v3219 = vld [vmem:[#allocation2 + $0x33c] sm:$0xff]
        %v3220 = vld [vmem:[#allocation2 + $0x344] sm:$0xff]
        %v3221 = vld [vmem:[#allocation2 + $0x34c] sm:$0xff]
        %v3222 = vld [vmem:[#allocation2 + $0x354] sm:$0xff]
        %v3223 = vld [vmem:[#allocation2 + $0x35c] sm:$0xf]
        %v3224 = vld [vmem:[#allocation2 + $0x360] sm:$0xff]
        %v3225 = vld [vmem:[#allocation2 + $0x368] sm:$0xff]
        %v3226 = vld [vmem:[#allocation2 + $0x370] sm:$0xff]
        %v3227 = vld [vmem:[#allocation2 + $0x378] sm:$0xff]
        %v3228 = vld [vmem:[#allocation2 + $0x380] sm:$0xf]
        %v3229 = vld [vmem:[#allocation2 + $0x384] sm:$0xff]
        %v3230 = vld [vmem:[#allocation2 + $0x38c] sm:$0xff]
        %v3231 = vld [vmem:[#allocation2 + $0x394] sm:$0xff]
        %v3232 = vld [vmem:[#allocation2 + $0x39c] sm:$0xff]
        %v3233 = vld [vmem:[#allocation2 + $0x3a4] sm:$0xf]
        %v3234 = vld [vmem:[#allocation2 + $0x3a8] sm:$0xff]
        %v3235 = vld [vmem:[#allocation2 + $0x3b0] sm:$0xff]
        %v3236 = vld [vmem:[#allocation2 + $0x3b8] sm:$0xff]
        %v3237 = vld [vmem:[#allocation2 + $0x3c0] sm:$0xff]
        %v3238 = vld [vmem:[#allocation2 + $0x3c8] sm:$0xf]
        %v3239 = vld [vmem:[#allocation2 + $0x3cc] sm:$0xff]
        %v3240 = vld [vmem:[#allocation2 + $0x3d4] sm:$0xff]
        %v3241 = vld [vmem:[#allocation2 + $0x3dc] sm:$0xff]
        %v3242 = vld [vmem:[#allocation2 + $0x3e4] sm:$0xff]
        %v3243 = vld [vmem:[#allocation2 + $0x3ec] sm:$0xf]
        %v3244 = vld [vmem:[#allocation2 + $0x3f0] sm:$0xff]
        %v3245 = vld [vmem:[#allocation2 + $0x3f8] sm:$0xff]
        %v3246 = vld [vmem:[#allocation2 + $0x400] sm:$0xff]
        %v3247 = vld [vmem:[#allocation2 + $0x408] sm:$0xff]
        %v3248 = vld [vmem:[#allocation2 + $0x410] sm:$0xf]
        %v3249 = vld [vmem:[#allocation2 + $0x414] sm:$0xff]
        %v3250 = vld [vmem:[#allocation2 + $0x41c] sm:$0xff]
        %v3251 = vld [vmem:[#allocation2 + $0x424] sm:$0xff]
        %v3252 = vld [vmem:[#allocation2 + $0x42c] sm:$0xff]
        %v3253 = vld [vmem:[#allocation2 + $0x434] sm:$0xf]
        %v3254 = vld [vmem:[#allocation2 + $0x438] sm:$0xff]
        %v3255 = vld [vmem:[#allocation2 + $0x440] sm:$0xff]
        %v3256 = vld [vmem:[#allocation2 + $0x448] sm:$0xff]
        %v3257 = vld [vmem:[#allocation2 + $0x450] sm:$0xff]
        %v3258 = vld [vmem:[#allocation2 + $0x458] sm:$0xf]
        %v3259 = vld [vmem:[#allocation2 + $0x45c] sm:$0xff]
        %v3260 = vld [vmem:[#allocation2 + $0x464] sm:$0xff]
        %v3261 = vld [vmem:[#allocation2 + $0x46c] sm:$0xff]
        %v3262 = vld [vmem:[#allocation2 + $0x474] sm:$0xff]
        %v3263 = vld [vmem:[#allocation2 + $0x47c] sm:$0xf]
        %v3264 = vld [vmem:[#allocation6] sm:$0xff]
        %v3265 = vld [vmem:[#allocation6 + $0x8] sm:$0xff]
        %v3266 = vld [vmem:[#allocation6 + $0x10] sm:$0xff]
        %v3267 = vld [vmem:[#allocation6 + $0x18] sm:$0xff]
        %v3268 = vld [vmem:[#allocation6 + $0x20] sm:$0xff]
        %v3269 = vld [vmem:[#allocation6 + $0x28] sm:$0xff]
        %v3270 = vld [vmem:[#allocation6 + $0x30] sm:$0xff]
        %v3271 = vld [vmem:[#allocation6 + $0x38] sm:$0xff]
        %v3272 = vld [vmem:[#allocation6 + $0x40] sm:$0xff]
        %v3273 = vld [vmem:[#allocation6 + $0x48] sm:$0xff]
        %v3274 = vld [vmem:[#allocation6 + $0x50] sm:$0xff]
        %v3275 = vld [vmem:[#allocation6 + $0x58] sm:$0xff]
        %v3276 = vld [vmem:[#allocation6 + $0x60] sm:$0xff]
        %v3277 = vld [vmem:[#allocation6 + $0x68] sm:$0xff]
        %v3278 = vld [vmem:[#allocation6 + $0x70] sm:$0xff]
        %v3279 = vld [vmem:[#allocation6 + $0x78] sm:$0xff]
        %v3280 = vld [vmem:[#allocation6 + $0x80] sm:$0xff]
        %v3281 = vld [vmem:[#allocation6 + $0x88] sm:$0xff]
        %v3282 = vld [vmem:[#allocation6 + $0x90] sm:$0xff]
        %v3283 = vld [vmem:[#allocation6 + $0x98] sm:$0xff]
        %v3284 = vld [vmem:[#allocation6 + $0xa0] sm:$0xff]
        %v3285 = vld [vmem:[#allocation6 + $0xa8] sm:$0xff]
        %v3286 = vld [vmem:[#allocation6 + $0xb0] sm:$0xff]
        %v3287 = vld [vmem:[#allocation6 + $0xb8] sm:$0xff]
        %v3288 = vld [vmem:[#allocation6 + $0xc0] sm:$0xff]
        %v3289 = vld [vmem:[#allocation6 + $0xc8] sm:$0xff]
        %v3290 = vld [vmem:[#allocation6 + $0xd0] sm:$0xff]
        %v3291 = vld [vmem:[#allocation6 + $0xd8] sm:$0xff]
        %v3292 = vld [vmem:[#allocation6 + $0xe0] sm:$0xff]
        %v3293 = vld [vmem:[#allocation6 + $0xe8] sm:$0xff]
        %v3294 = vld [vmem:[#allocation6 + $0xf0] sm:$0xff]
        %v3295 = vld [vmem:[#allocation6 + $0xf8] sm:$0xff]
        %v3296 = vld [vmem:[#allocation6 + $0x100] sm:$0xff]
        %v3297 = vld [vmem:[#allocation6 + $0x108] sm:$0xff]
        %v3298 = vld [vmem:[#allocation6 + $0x110] sm:$0xff]
        %v3299 = vld [vmem:[#allocation6 + $0x118] sm:$0xff]
        %v3300 = vld [vmem:[#allocation6 + $0x120] sm:$0xff]
        %v3301 = vld [vmem:[#allocation6 + $0x128] sm:$0xff]
        %v3302 = vld [vmem:[#allocation6 + $0x130] sm:$0xff]
        %v3303 = vld [vmem:[#allocation6 + $0x138] sm:$0xff]
        %v3304 = vld [vmem:[#allocation6 + $0x140] sm:$0xff]
        %v3305 = vld [vmem:[#allocation6 + $0x148] sm:$0xff]
        %v3306 = vld [vmem:[#allocation6 + $0x150] sm:$0xff]
        %v3307 = vld [vmem:[#allocation6 + $0x158] sm:$0xff]
        %v3308 = vld [vmem:[#allocation6 + $0x160] sm:$0xff]
        %v3309 = vld [vmem:[#allocation6 + $0x168] sm:$0xff]
        %v3310 = vld [vmem:[#allocation6 + $0x170] sm:$0xff]
        %v3311 = vld [vmem:[#allocation6 + $0x178] sm:$0xff]
        %v3312 = vld [vmem:[#allocation6 + $0x180] sm:$0xff]
        %v3313 = vld [vmem:[#allocation6 + $0x188] sm:$0xff]
        %v3314 = vld [vmem:[#allocation6 + $0x190] sm:$0xff]
        %v3315 = vld [vmem:[#allocation6 + $0x198] sm:$0xff]
        %v3316 = vld [vmem:[#allocation6 + $0x1a0] sm:$0xff]
        %v3317 = vld [vmem:[#allocation6 + $0x1a8] sm:$0xff]
        %v3318 = vld [vmem:[#allocation6 + $0x1b0] sm:$0xff]
        %v3319 = vld [vmem:[#allocation6 + $0x1b8] sm:$0xff]
        %v3320 = vld [vmem:[#allocation6 + $0x1c0] sm:$0xff]
        %v3321 = vld [vmem:[#allocation6 + $0x1c8] sm:$0xff]
        %v3322 = vld [vmem:[#allocation6 + $0x1d0] sm:$0xff]
        %v3323 = vld [vmem:[#allocation6 + $0x1d8] sm:$0xff]
        %v3324 = vld [vmem:[#allocation6 + $0x1e0] sm:$0xff]
        %v3325 = vld [vmem:[#allocation6 + $0x1e8] sm:$0xff]
        %v3326 = vld [vmem:[#allocation6 + $0x1f0] sm:$0xff]
        %v3327 = vld [vmem:[#allocation6 + $0x1f8] sm:$0xff]
        %v3328 = vld [vmem:[#allocation6 + $0x200] sm:$0xff]
        %v3329 = vld [vmem:[#allocation6 + $0x208] sm:$0xff]
        %v3330 = vld [vmem:[#allocation6 + $0x210] sm:$0xff]
        %v3331 = vld [vmem:[#allocation6 + $0x218] sm:$0xff]
        %v3332 = vld [vmem:[#allocation6 + $0x220] sm:$0xff]
        %v3333 = vld [vmem:[#allocation6 + $0x228] sm:$0xff]
        %v3334 = vld [vmem:[#allocation6 + $0x230] sm:$0xff]
        %v3335 = vld [vmem:[#allocation6 + $0x238] sm:$0xff]
        %v3336 = vld [vmem:[#allocation6 + $0x240] sm:$0xff]
        %v3337 = vld [vmem:[#allocation6 + $0x248] sm:$0xff]
        %v3338 = vld [vmem:[#allocation6 + $0x250] sm:$0xff]
        %v3339 = vld [vmem:[#allocation6 + $0x258] sm:$0xff]
        %v3340 = vld [vmem:[#allocation6 + $0x260] sm:$0xff]
        %v3341 = vld [vmem:[#allocation6 + $0x268] sm:$0xff]
        %v3342 = vld [vmem:[#allocation6 + $0x270] sm:$0xff]
        %v3343 = vld [vmem:[#allocation6 + $0x278] sm:$0xff]
        %v3344 = vld [vmem:[#allocation6 + $0x280] sm:$0xff]
        %v3345 = vld [vmem:[#allocation6 + $0x288] sm:$0xff]
        %v3346 = vld [vmem:[#allocation6 + $0x290] sm:$0xff]
        %v3347 = vld [vmem:[#allocation6 + $0x298] sm:$0xff]
        %v3348 = vld [vmem:[#allocation6 + $0x2a0] sm:$0xff]
        %v3349 = vld [vmem:[#allocation6 + $0x2a8] sm:$0xff]
        %v3350 = vld [vmem:[#allocation6 + $0x2b0] sm:$0xff]
        %v3351 = vld [vmem:[#allocation6 + $0x2b8] sm:$0xff]
        %v3352 = vld [vmem:[#allocation6 + $0x2c0] sm:$0xff]
        %v3353 = vld [vmem:[#allocation6 + $0x2c8] sm:$0xff]
        %v3354 = vld [vmem:[#allocation6 + $0x2d0] sm:$0xff]
        %v3355 = vld [vmem:[#allocation6 + $0x2d8] sm:$0xff]
        %v3356 = vld [vmem:[#allocation6 + $0x2e0] sm:$0xff]
        %v3357 = vld [vmem:[#allocation6 + $0x2e8] sm:$0xff]
        %v3358 = vld [vmem:[#allocation6 + $0x2f0] sm:$0xff]
        %v3359 = vld [vmem:[#allocation6 + $0x2f8] sm:$0xff]
        %v3360 = vld [vmem:[#allocation6 + $0x300] sm:$0xff]
        %v3361 = vld [vmem:[#allocation6 + $0x308] sm:$0xff]
        %v3362 = vld [vmem:[#allocation6 + $0x310] sm:$0xff]
        %v3363 = vld [vmem:[#allocation6 + $0x318] sm:$0xff]
        %v3364 = vld [vmem:[#allocation6 + $0x320] sm:$0xff]
        %v3365 = vld [vmem:[#allocation6 + $0x328] sm:$0xff]
        %v3366 = vld [vmem:[#allocation6 + $0x330] sm:$0xff]
        %v3367 = vld [vmem:[#allocation6 + $0x338] sm:$0xff]
        %v3368 = vld [vmem:[#allocation6 + $0x340] sm:$0xff]
        %v3369 = vld [vmem:[#allocation6 + $0x348] sm:$0xff]
        %v3370 = vld [vmem:[#allocation6 + $0x350] sm:$0xff]
        %v3371 = vld [vmem:[#allocation6 + $0x358] sm:$0xff]
        %v3372 = vld [vmem:[#allocation6 + $0x360] sm:$0xff]
        %v3373 = vld [vmem:[#allocation6 + $0x368] sm:$0xff]
        %v3374 = vld [vmem:[#allocation6 + $0x370] sm:$0xff]
        %v3375 = vld [vmem:[#allocation6 + $0x378] sm:$0xff]
        %v3376 = vld [vmem:[#allocation6 + $0x380] sm:$0xff]
        %v3377 = vld [vmem:[#allocation6 + $0x388] sm:$0xff]
        %v3378 = vld [vmem:[#allocation6 + $0x390] sm:$0xff]
        %v3379 = vld [vmem:[#allocation6 + $0x398] sm:$0xff]
        %v3380 = vld [vmem:[#allocation6 + $0x3a0] sm:$0xff]
        %v3381 = vld [vmem:[#allocation6 + $0x3a8] sm:$0xff]
        %v3382 = vld [vmem:[#allocation6 + $0x3b0] sm:$0xff]
        %v3383 = vld [vmem:[#allocation6 + $0x3b8] sm:$0xff]
        %v3384 = vld [vmem:[#allocation6 + $0x3c0] sm:$0xff]
        %v3385 = vld [vmem:[#allocation6 + $0x3c8] sm:$0xff]
        %v3386 = vld [vmem:[#allocation6 + $0x3d0] sm:$0xff]
        %v3387 = vld [vmem:[#allocation6 + $0x3d8] sm:$0xff]
        %v3388 = vld [vmem:[#allocation6 + $0x3e0] sm:$0xff]
        %v3389 = vld [vmem:[#allocation6 + $0x3e8] sm:$0xff]
        %v3390 = vld [vmem:[#allocation6 + $0x3f0] sm:$0xff]
        %v3391 = vld [vmem:[#allocation6 + $0x3f8] sm:$0xff]
        %v3392 = vld [vmem:[#allocation6 + $0x400] sm:$0xff]
        %v3393 = vld [vmem:[#allocation6 + $0x408] sm:$0xff]
        %v3394 = vld [vmem:[#allocation6 + $0x410] sm:$0xff]
        %v3395 = vld [vmem:[#allocation6 + $0x418] sm:$0xff]
        %v3396 = vld [vmem:[#allocation6 + $0x420] sm:$0xff]
        %v3397 = vld [vmem:[#allocation6 + $0x428] sm:$0xff]
        %v3398 = vld [vmem:[#allocation6 + $0x430] sm:$0xff]
        %v3399 = vld [vmem:[#allocation6 + $0x438] sm:$0xff]
        %v3400 = vld [vmem:[#allocation6 + $0x440] sm:$0xff]
        %v3401 = vld [vmem:[#allocation6 + $0x448] sm:$0xff]
        %v3402 = vld [vmem:[#allocation6 + $0x450] sm:$0xff]
        %v3403 = vld [vmem:[#allocation6 + $0x458] sm:$0xff]
        %v3404 = vld [vmem:[#allocation6 + $0x460] sm:$0xff]
        %v3405 = vld [vmem:[#allocation6 + $0x468] sm:$0xff]
        %v3406 = vld [vmem:[#allocation6 + $0x470] sm:$0xff]
        %v3407 = vld [vmem:[#allocation6 + $0x478] sm:$0xff]
        %v3408 = vld [vmem:[#allocation6 + $0x480] sm:$0xff]
        %v3409 = vld [vmem:[#allocation6 + $0x488] sm:$0xff]
        %v3410 = vld [vmem:[#allocation6 + $0x490] sm:$0xff]
        %v3411 = vld [vmem:[#allocation6 + $0x498] sm:$0xff]
        %v3412 = vld [vmem:[#allocation6 + $0x4a0] sm:$0xff]
        %v3413 = vld [vmem:[#allocation6 + $0x4a8] sm:$0xff]
        %v3414 = vld [vmem:[#allocation6 + $0x4b0] sm:$0xff]
        %v3415 = vld [vmem:[#allocation6 + $0x4b8] sm:$0xff]
        %v3416 = vld [vmem:[#allocation6 + $0x4c0] sm:$0xff]
        %v3417 = vld [vmem:[#allocation6 + $0x4c8] sm:$0xff]
        %v3418 = vld [vmem:[#allocation6 + $0x4d0] sm:$0xff]
        %v3419 = vld [vmem:[#allocation6 + $0x4d8] sm:$0xff]
        %v3420 = vld [vmem:[#allocation6 + $0x4e0] sm:$0xff]
        %v3421 = vld [vmem:[#allocation6 + $0x4e8] sm:$0xff]
        %v3422 = vld [vmem:[#allocation6 + $0x4f0] sm:$0xff]
        %v3423 = vld [vmem:[#allocation6 + $0x4f8] sm:$0xff]
        %v3424 = vld [vmem:[#allocation6 + $0x500] sm:$0xff]
        %v3425 = vld [vmem:[#allocation6 + $0x508] sm:$0xff]
        %v3426 = vld [vmem:[#allocation6 + $0x510] sm:$0xff]
        %v3427 = vld [vmem:[#allocation6 + $0x518] sm:$0xff]
        %v3428 = vld [vmem:[#allocation6 + $0x520] sm:$0xff]
        %v3429 = vld [vmem:[#allocation6 + $0x528] sm:$0xff]
        %v3430 = vld [vmem:[#allocation6 + $0x530] sm:$0xff]
        %v3431 = vld [vmem:[#allocation6 + $0x538] sm:$0xff]
        %v3432 = vld [vmem:[#allocation6 + $0x540] sm:$0xff]
        %v3433 = vld [vmem:[#allocation6 + $0x548] sm:$0xff]
        %v3434 = vld [vmem:[#allocation6 + $0x550] sm:$0xff]
        %v3435 = vld [vmem:[#allocation6 + $0x558] sm:$0xff]
        %v3436 = vld [vmem:[#allocation6 + $0x560] sm:$0xff]
        %v3437 = vld [vmem:[#allocation6 + $0x568] sm:$0xff]
        %v3438 = vld [vmem:[#allocation6 + $0x570] sm:$0xff]
        %v3439 = vld [vmem:[#allocation6 + $0x578] sm:$0xff]
        %v3440 = vld [vmem:[#allocation6 + $0x580] sm:$0xff]
        %v3441 = vld [vmem:[#allocation6 + $0x588] sm:$0xff]
        %v3442 = vld [vmem:[#allocation6 + $0x590] sm:$0xff]
        %v3443 = vld [vmem:[#allocation6 + $0x598] sm:$0xff]
        %v3444 = vld [vmem:[#allocation6 + $0x5a0] sm:$0xff]
        %v3445 = vld [vmem:[#allocation6 + $0x5a8] sm:$0xff]
        %v3446 = vld [vmem:[#allocation6 + $0x5b0] sm:$0xff]
        %v3447 = vld [vmem:[#allocation6 + $0x5b8] sm:$0xff]
        %v3448 = vld [vmem:[#allocation6 + $0x5c0] sm:$0xff]
        %v3449 = vld [vmem:[#allocation6 + $0x5c8] sm:$0xff]
        %v3450 = vld [vmem:[#allocation6 + $0x5d0] sm:$0xff]
        %v3451 = vld [vmem:[#allocation6 + $0x5d8] sm:$0xff]
        %v3452 = vld [vmem:[#allocation6 + $0x5e0] sm:$0xff]
        %v3453 = vld [vmem:[#allocation6 + $0x5e8] sm:$0xff]
        %v3454 = vld [vmem:[#allocation6 + $0x5f0] sm:$0xff]
        %v3455 = vld [vmem:[#allocation6 + $0x5f8] sm:$0xff]
        %v3456 = vld [vmem:[#allocation6 + $0x600] sm:$0xff]
        %v3457 = vld [vmem:[#allocation6 + $0x608] sm:$0xff]
        %v3458 = vld [vmem:[#allocation6 + $0x610] sm:$0xff]
        %v3459 = vld [vmem:[#allocation6 + $0x618] sm:$0xff]
        %v3460 = vld [vmem:[#allocation6 + $0x620] sm:$0xff]
        %v3461 = vld [vmem:[#allocation6 + $0x628] sm:$0xff]
        %v3462 = vld [vmem:[#allocation6 + $0x630] sm:$0xff]
        %v3463 = vld [vmem:[#allocation6 + $0x638] sm:$0xff]
        %v3464 = vld [vmem:[#allocation6 + $0x640] sm:$0xff]
        %v3465 = vld [vmem:[#allocation6 + $0x648] sm:$0xff]
        %v3466 = vld [vmem:[#allocation6 + $0x650] sm:$0xff]
        %v3467 = vld [vmem:[#allocation6 + $0x658] sm:$0xff]
        %v3468 = vld [vmem:[#allocation6 + $0x660] sm:$0xff]
        %v3469 = vld [vmem:[#allocation6 + $0x668] sm:$0xff]
        %v3470 = vld [vmem:[#allocation6 + $0x670] sm:$0xff]
        %v3471 = vld [vmem:[#allocation6 + $0x678] sm:$0xff]
        %v3472 = vld [vmem:[#allocation6 + $0x680] sm:$0xff]
        %v3473 = vld [vmem:[#allocation6 + $0x688] sm:$0xff]
        %v3474 = vld [vmem:[#allocation6 + $0x690] sm:$0xff]
        %v3475 = vld [vmem:[#allocation6 + $0x698] sm:$0xff]
        %v3476 = vld [vmem:[#allocation6 + $0x6a0] sm:$0xff]
        %v3477 = vld [vmem:[#allocation6 + $0x6a8] sm:$0xff]
        %v3478 = vld [vmem:[#allocation6 + $0x6b0] sm:$0xff]
        %v3479 = vld [vmem:[#allocation6 + $0x6b8] sm:$0xff]
        %v3480 = vld [vmem:[#allocation6 + $0x6c0] sm:$0xff]
        %v3481 = vld [vmem:[#allocation6 + $0x6c8] sm:$0xff]
        %v3482 = vld [vmem:[#allocation6 + $0x6d0] sm:$0xff]
        %v3483 = vld [vmem:[#allocation6 + $0x6d8] sm:$0xff]
        %v3484 = vld [vmem:[#allocation6 + $0x6e0] sm:$0xff]
        %v3485 = vld [vmem:[#allocation6 + $0x6e8] sm:$0xff]
        %v3486 = vld [vmem:[#allocation6 + $0x6f0] sm:$0xff]
        %v3487 = vld [vmem:[#allocation6 + $0x6f8] sm:$0xff]
        %v3488 = vld [vmem:[#allocation6 + $0x700] sm:$0xff]
        %v3489 = vld [vmem:[#allocation6 + $0x708] sm:$0xff]
        %v3490 = vld [vmem:[#allocation6 + $0x710] sm:$0xff]
        %v3491 = vld [vmem:[#allocation6 + $0x718] sm:$0xff]
        %v3492 = vld [vmem:[#allocation6 + $0x720] sm:$0xff]
        %v3493 = vld [vmem:[#allocation6 + $0x728] sm:$0xff]
        %v3494 = vld [vmem:[#allocation6 + $0x730] sm:$0xff]
        %v3495 = vld [vmem:[#allocation6 + $0x738] sm:$0xff]
        %v3496 = vld [vmem:[#allocation6 + $0x740] sm:$0xff]
        %v3497 = vld [vmem:[#allocation6 + $0x748] sm:$0xff]
        %v3498 = vld [vmem:[#allocation6 + $0x750] sm:$0xff]
        %v3499 = vld [vmem:[#allocation6 + $0x758] sm:$0xff]
        %v3500 = vld [vmem:[#allocation6 + $0x760] sm:$0xff]
        %v3501 = vld [vmem:[#allocation6 + $0x768] sm:$0xff]
        %v3502 = vld [vmem:[#allocation6 + $0x770] sm:$0xff]
        %v3503 = vld [vmem:[#allocation6 + $0x778] sm:$0xff]
        %v3504 = vld [vmem:[#allocation6 + $0x780] sm:$0xff]
        %v3505 = vld [vmem:[#allocation6 + $0x788] sm:$0xff]
        %v3506 = vld [vmem:[#allocation6 + $0x790] sm:$0xff]
        %v3507 = vld [vmem:[#allocation6 + $0x798] sm:$0xff]
        %v3508 = vld [vmem:[#allocation6 + $0x7a0] sm:$0xff]
        %v3509 = vld [vmem:[#allocation6 + $0x7a8] sm:$0xff]
        %v3510 = vld [vmem:[#allocation6 + $0x7b0] sm:$0xff]
        %v3511 = vld [vmem:[#allocation6 + $0x7b8] sm:$0xff]
        %v3512 = vld [vmem:[#allocation6 + $0x7c0] sm:$0xff]
        %v3513 = vld [vmem:[#allocation6 + $0x7c8] sm:$0xff]
        %v3514 = vld [vmem:[#allocation6 + $0x7d0] sm:$0xff]
        %v3515 = vld [vmem:[#allocation6 + $0x7d8] sm:$0xff]
        %v3516 = vld [vmem:[#allocation6 + $0x7e0] sm:$0xff]
        %v3517 = vld [vmem:[#allocation6 + $0x7e8] sm:$0xff]
        %v3518 = vld [vmem:[#allocation6 + $0x7f0] sm:$0xff]
        %v3519 = vld [vmem:[#allocation6 + $0x7f8] sm:$0xff]
        %v3520 = vld [vmem:[#allocation6 + $0x800] sm:$0xff]
        %v3521 = vld [vmem:[#allocation6 + $0x808] sm:$0xff]
        %v3522 = vld [vmem:[#allocation6 + $0x810] sm:$0xff]
        %v3523 = vld [vmem:[#allocation6 + $0x818] sm:$0xff]
        %v3524 = vld [vmem:[#allocation6 + $0x820] sm:$0xff]
        %v3525 = vld [vmem:[#allocation6 + $0x828] sm:$0xff]
        %v3526 = vld [vmem:[#allocation6 + $0x830] sm:$0xff]
        %v3527 = vld [vmem:[#allocation6 + $0x838] sm:$0xff]
        %v3528 = vld [vmem:[#allocation6 + $0x840] sm:$0xff]
        %v3529 = vld [vmem:[#allocation6 + $0x848] sm:$0xff]
        %v3530 = vld [vmem:[#allocation6 + $0x850] sm:$0xff]
        %v3531 = vld [vmem:[#allocation6 + $0x858] sm:$0xff]
        %v3532 = vld [vmem:[#allocation6 + $0x860] sm:$0xff]
        %v3533 = vld [vmem:[#allocation6 + $0x868] sm:$0xff]
        %v3534 = vld [vmem:[#allocation6 + $0x870] sm:$0xff]
        %v3535 = vld [vmem:[#allocation6 + $0x878] sm:$0xff]
        %v3536 = vld [vmem:[#allocation6 + $0x880] sm:$0xff]
        %v3537 = vld [vmem:[#allocation6 + $0x888] sm:$0xff]
        %v3538 = vld [vmem:[#allocation6 + $0x890] sm:$0xff]
        %v3539 = vld [vmem:[#allocation6 + $0x898] sm:$0xff]
        %v3540 = vld [vmem:[#allocation6 + $0x8a0] sm:$0xff]
        %v3541 = vld [vmem:[#allocation6 + $0x8a8] sm:$0xff]
        %v3542 = vld [vmem:[#allocation6 + $0x8b0] sm:$0xff]
        %v3543 = vld [vmem:[#allocation6 + $0x8b8] sm:$0xff]
        %v3544 = vld [vmem:[#allocation6 + $0x8c0] sm:$0xff]
        %v3545 = vld [vmem:[#allocation6 + $0x8c8] sm:$0xff]
        %v3546 = vld [vmem:[#allocation6 + $0x8d0] sm:$0xff]
        %v3547 = vld [vmem:[#allocation6 + $0x8d8] sm:$0xff]
        %v3548 = vld [vmem:[#allocation6 + $0x8e0] sm:$0xff]
        %v3549 = vld [vmem:[#allocation6 + $0x8e8] sm:$0xff]
        %v3550 = vld [vmem:[#allocation6 + $0x8f0] sm:$0xff]
        %v3551 = vld [vmem:[#allocation6 + $0x8f8] sm:$0xff]
        %v3712 = vunpack.c.l.b16 %v3104
        %v3713 = vunpack.c.h.b16 %v3104
        %v3714 = vunpack.c.l.b16 %v3105
        %v3715 = vunpack.c.h.b16 %v3105
        %v3716 = vunpack.c.l.b16 %v3106
        %v3717 = vunpack.c.h.b16 %v3106
        %v3718 = vunpack.c.l.b16 %v3107
        %v3719 = vunpack.c.h.b16 %v3107
        %v3720 = vunpack.c.l.b16 %v3108
        %v3721 = vunpack.c.l.b16 %v3109
        %v3722 = vunpack.c.h.b16 %v3109
        %v3723 = vunpack.c.l.b16 %v3110
        %v3724 = vunpack.c.h.b16 %v3110
        %v3725 = vunpack.c.l.b16 %v3111
        %v3726 = vunpack.c.h.b16 %v3111
        %v3727 = vunpack.c.l.b16 %v3112
        %v3728 = vunpack.c.h.b16 %v3112
        %v3729 = vunpack.c.l.b16 %v3113
        %v3730 = vunpack.c.l.b16 %v3114
        %v3731 = vunpack.c.h.b16 %v3114
        %v3732 = vunpack.c.l.b16 %v3115
        %v3733 = vunpack.c.h.b16 %v3115
        %v3734 = vunpack.c.l.b16 %v3116
        %v3735 = vunpack.c.h.b16 %v3116
        %v3736 = vunpack.c.l.b16 %v3117
        %v3737 = vunpack.c.h.b16 %v3117
        %v3738 = vunpack.c.l.b16 %v3118
        %v3739 = vunpack.c.l.b16 %v3119
        %v3740 = vunpack.c.h.b16 %v3119
        %v3741 = vunpack.c.l.b16 %v3120
        %v3742 = vunpack.c.h.b16 %v3120
        %v3743 = vunpack.c.l.b16 %v3121
        %v3744 = vunpack.c.h.b16 %v3121
        %v3745 = vunpack.c.l.b16 %v3122
        %v3746 = vunpack.c.h.b16 %v3122
        %v3747 = vunpack.c.l.b16 %v3123
        %v3748 = vunpack.c.l.b16 %v3124
        %v3749 = vunpack.c.h.b16 %v3124
        %v3750 = vunpack.c.l.b16 %v3125
        %v3751 = vunpack.c.h.b16 %v3125
        %v3752 = vunpack.c.l.b16 %v3126
        %v3753 = vunpack.c.h.b16 %v3126
        %v3754 = vunpack.c.l.b16 %v3127
        %v3755 = vunpack.c.h.b16 %v3127
        %v3756 = vunpack.c.l.b16 %v3128
        %v3757 = vunpack.c.l.b16 %v3129
        %v3758 = vunpack.c.h.b16 %v3129
        %v3759 = vunpack.c.l.b16 %v3130
        %v3760 = vunpack.c.h.b16 %v3130
        %v3761 = vunpack.c.l.b16 %v3131
        %v3762 = vunpack.c.h.b16 %v3131
        %v3763 = vunpack.c.l.b16 %v3132
        %v3764 = vunpack.c.h.b16 %v3132
        %v3765 = vunpack.c.l.b16 %v3133
        %v3766 = vunpack.c.l.b16 %v3134
        %v3767 = vunpack.c.h.b16 %v3134
        %v3768 = vunpack.c.l.b16 %v3135
        %v3769 = vunpack.c.h.b16 %v3135
        %v3770 = vunpack.c.l.b16 %v3136
        %v3771 = vunpack.c.h.b16 %v3136
        %v3772 = vunpack.c.l.b16 %v3137
        %v3773 = vunpack.c.h.b16 %v3137
        %v3774 = vunpack.c.l.b16 %v3138
        %v3775 = vunpack.c.l.b16 %v3139
        %v3776 = vunpack.c.h.b16 %v3139
        %v3777 = vunpack.c.l.b16 %v3140
        %v3778 = vunpack.c.h.b16 %v3140
        %v3779 = vunpack.c.l.b16 %v3141
        %v3780 = vunpack.c.h.b16 %v3141
        %v3781 = vunpack.c.l.b16 %v3142
        %v3782 = vunpack.c.h.b16 %v3142
        %v3783 = vunpack.c.l.b16 %v3143
        %v3784 = vunpack.c.l.b16 %v3144
        %v3785 = vunpack.c.h.b16 %v3144
        %v3786 = vunpack.c.l.b16 %v3145
        %v3787 = vunpack.c.h.b16 %v3145
        %v3788 = vunpack.c.l.b16 %v3146
        %v3789 = vunpack.c.h.b16 %v3146
        %v3790 = vunpack.c.l.b16 %v3147
        %v3791 = vunpack.c.h.b16 %v3147
        %v3792 = vunpack.c.l.b16 %v3148
        %v3793 = vunpack.c.l.b16 %v3149
        %v3794 = vunpack.c.h.b16 %v3149
        %v3795 = vunpack.c.l.b16 %v3150
        %v3796 = vunpack.c.h.b16 %v3150
        %v3797 = vunpack.c.l.b16 %v3151
        %v3798 = vunpack.c.h.b16 %v3151
        %v3799 = vunpack.c.l.b16 %v3152
        %v3800 = vunpack.c.h.b16 %v3152
        %v3801 = vunpack.c.l.b16 %v3153
        %v3802 = vunpack.c.l.b16 %v3154
        %v3803 = vunpack.c.h.b16 %v3154
        %v3804 = vunpack.c.l.b16 %v3155
        %v3805 = vunpack.c.h.b16 %v3155
        %v3806 = vunpack.c.l.b16 %v3156
        %v3807 = vunpack.c.h.b16 %v3156
        %v3808 = vunpack.c.l.b16 %v3157
        %v3809 = vunpack.c.h.b16 %v3157
        %v3810 = vunpack.c.l.b16 %v3158
        %v3811 = vunpack.c.l.b16 %v3159
        %v3812 = vunpack.c.h.b16 %v3159
        %v3813 = vunpack.c.l.b16 %v3160
        %v3814 = vunpack.c.h.b16 %v3160
        %v3815 = vunpack.c.l.b16 %v3161
        %v3816 = vunpack.c.h.b16 %v3161
        %v3817 = vunpack.c.l.b16 %v3162
        %v3818 = vunpack.c.h.b16 %v3162
        %v3819 = vunpack.c.l.b16 %v3163
        %v3820 = vunpack.c.l.b16 %v3164
        %v3821 = vunpack.c.h.b16 %v3164
        %v3822 = vunpack.c.l.b16 %v3165
        %v3823 = vunpack.c.h.b16 %v3165
        %v3824 = vunpack.c.l.b16 %v3166
        %v3825 = vunpack.c.h.b16 %v3166
        %v3826 = vunpack.c.l.b16 %v3167
        %v3827 = vunpack.c.h.b16 %v3167
        %v3828 = vunpack.c.l.b16 %v3168
        %v3829 = vunpack.c.l.b16 %v3169
        %v3830 = vunpack.c.h.b16 %v3169
        %v3831 = vunpack.c.l.b16 %v3170
        %v3832 = vunpack.c.h.b16 %v3170
        %v3833 = vunpack.c.l.b16 %v3171
        %v3834 = vunpack.c.h.b16 %v3171
        %v3835 = vunpack.c.l.b16 %v3172
        %v3836 = vunpack.c.h.b16 %v3172
        %v3837 = vunpack.c.l.b16 %v3173
        %v3838 = vunpack.c.l.b16 %v3174
        %v3839 = vunpack.c.h.b16 %v3174
        %v3840 = vunpack.c.l.b16 %v3175
        %v3841 = vunpack.c.h.b16 %v3175
        %v3842 = vunpack.c.l.b16 %v3176
        %v3843 = vunpack.c.h.b16 %v3176
        %v3844 = vunpack.c.l.b16 %v3177
        %v3845 = vunpack.c.h.b16 %v3177
        %v3846 = vunpack.c.l.b16 %v3178
        %v3847 = vunpack.c.l.b16 %v3179
        %v3848 = vunpack.c.h.b16 %v3179
        %v3849 = vunpack.c.l.b16 %v3180
        %v3850 = vunpack.c.h.b16 %v3180
        %v3851 = vunpack.c.l.b16 %v3181
        %v3852 = vunpack.c.h.b16 %v3181
        %v3853 = vunpack.c.l.b16 %v3182
        %v3854 = vunpack.c.h.b16 %v3182
        %v3855 = vunpack.c.l.b16 %v3183
        %v3856 = vunpack.c.l.b16 %v3184
        %v3857 = vunpack.c.h.b16 %v3184
        %v3858 = vunpack.c.l.b16 %v3185
        %v3859 = vunpack.c.h.b16 %v3185
        %v3860 = vunpack.c.l.b16 %v3186
        %v3861 = vunpack.c.h.b16 %v3186
        %v3862 = vunpack.c.l.b16 %v3187
        %v3863 = vunpack.c.h.b16 %v3187
        %v3864 = vunpack.c.l.b16 %v3188
        %v3865 = vunpack.c.l.b16 %v3189
        %v3866 = vunpack.c.h.b16 %v3189
        %v3867 = vunpack.c.l.b16 %v3190
        %v3868 = vunpack.c.h.b16 %v3190
        %v3869 = vunpack.c.l.b16 %v3191
        %v3870 = vunpack.c.h.b16 %v3191
        %v3871 = vunpack.c.l.b16 %v3192
        %v3872 = vunpack.c.h.b16 %v3192
        %v3873 = vunpack.c.l.b16 %v3193
        %v3874 = vunpack.c.l.b16 %v3194
        %v3875 = vunpack.c.h.b16 %v3194
        %v3876 = vunpack.c.l.b16 %v3195
        %v3877 = vunpack.c.h.b16 %v3195
        %v3878 = vunpack.c.l.b16 %v3196
        %v3879 = vunpack.c.h.b16 %v3196
        %v3880 = vunpack.c.l.b16 %v3197
        %v3881 = vunpack.c.h.b16 %v3197
        %v3882 = vunpack.c.l.b16 %v3198
        %v3883 = vunpack.c.l.b16 %v3199
        %v3884 = vunpack.c.h.b16 %v3199
        %v3885 = vunpack.c.l.b16 %v3200
        %v3886 = vunpack.c.h.b16 %v3200
        %v3887 = vunpack.c.l.b16 %v3201
        %v3888 = vunpack.c.h.b16 %v3201
        %v3889 = vunpack.c.l.b16 %v3202
        %v3890 = vunpack.c.h.b16 %v3202
        %v3891 = vunpack.c.l.b16 %v3203
        %v3892 = vunpack.c.l.b16 %v3204
        %v3893 = vunpack.c.h.b16 %v3204
        %v3894 = vunpack.c.l.b16 %v3205
        %v3895 = vunpack.c.h.b16 %v3205
        %v3896 = vunpack.c.l.b16 %v3206
        %v3897 = vunpack.c.h.b16 %v3206
        %v3898 = vunpack.c.l.b16 %v3207
        %v3899 = vunpack.c.h.b16 %v3207
        %v3900 = vunpack.c.l.b16 %v3208
        %v3901 = vunpack.c.l.b16 %v3209
        %v3902 = vunpack.c.h.b16 %v3209
        %v3903 = vunpack.c.l.b16 %v3210
        %v3904 = vunpack.c.h.b16 %v3210
        %v3905 = vunpack.c.l.b16 %v3211
        %v3906 = vunpack.c.h.b16 %v3211
        %v3907 = vunpack.c.l.b16 %v3212
        %v3908 = vunpack.c.h.b16 %v3212
        %v3909 = vunpack.c.l.b16 %v3213
        %v3910 = vunpack.c.l.b16 %v3214
        %v3911 = vunpack.c.h.b16 %v3214
        %v3912 = vunpack.c.l.b16 %v3215
        %v3913 = vunpack.c.h.b16 %v3215
        %v3914 = vunpack.c.l.b16 %v3216
        %v3915 = vunpack.c.h.b16 %v3216
        %v3916 = vunpack.c.l.b16 %v3217
        %v3917 = vunpack.c.h.b16 %v3217
        %v3918 = vunpack.c.l.b16 %v3218
        %v3919 = vunpack.c.l.b16 %v3219
        %v3920 = vunpack.c.h.b16 %v3219
        %v3921 = vunpack.c.l.b16 %v3220
        %v3922 = vunpack.c.h.b16 %v3220
        %v3923 = vunpack.c.l.b16 %v3221
        %v3924 = vunpack.c.h.b16 %v3221
        %v3925 = vunpack.c.l.b16 %v3222
        %v3926 = vunpack.c.h.b16 %v3222
        %v3927 = vunpack.c.l.b16 %v3223
        %v3928 = vunpack.c.l.b16 %v3224
        %v3929 = vunpack.c.h.b16 %v3224
        %v3930 = vunpack.c.l.b16 %v3225
        %v3931 = vunpack.c.h.b16 %v3225
        %v3932 = vunpack.c.l.b16 %v3226
        %v3933 = vunpack.c.h.b16 %v3226
        %v3934 = vunpack.c.l.b16 %v3227
        %v3935 = vunpack.c.h.b16 %v3227
        %v3936 = vunpack.c.l.b16 %v3228
        %v3937 = vunpack.c.l.b16 %v3229
        %v3938 = vunpack.c.h.b16 %v3229
        %v3939 = vunpack.c.l.b16 %v3230
        %v3940 = vunpack.c.h.b16 %v3230
        %v3941 = vunpack.c.l.b16 %v3231
        %v3942 = vunpack.c.h.b16 %v3231
        %v3943 = vunpack.c.l.b16 %v3232
        %v3944 = vunpack.c.h.b16 %v3232
        %v3945 = vunpack.c.l.b16 %v3233
        %v3946 = vunpack.c.l.b16 %v3234
        %v3947 = vunpack.c.h.b16 %v3234
        %v3948 = vunpack.c.l.b16 %v3235
        %v3949 = vunpack.c.h.b16 %v3235
        %v3950 = vunpack.c.l.b16 %v3236
        %v3951 = vunpack.c.h.b16 %v3236
        %v3952 = vunpack.c.l.b16 %v3237
        %v3953 = vunpack.c.h.b16 %v3237
        %v3954 = vunpack.c.l.b16 %v3238
        %v3955 = vunpack.c.l.b16 %v3239
        %v3956 = vunpack.c.h.b16 %v3239
        %v3957 = vunpack.c.l.b16 %v3240
        %v3958 = vunpack.c.h.b16 %v3240
        %v3959 = vunpack.c.l.b16 %v3241
        %v3960 = vunpack.c.h.b16 %v3241
        %v3961 = vunpack.c.l.b16 %v3242
        %v3962 = vunpack.c.h.b16 %v3242
        %v3963 = vunpack.c.l.b16 %v3243
        %v3964 = vunpack.c.l.b16 %v3244
        %v3965 = vunpack.c.h.b16 %v3244
        %v3966 = vunpack.c.l.b16 %v3245
        %v3967 = vunpack.c.h.b16 %v3245
        %v3968 = vunpack.c.l.b16 %v3246
        %v3969 = vunpack.c.h.b16 %v3246
        %v3970 = vunpack.c.l.b16 %v3247
        %v3971 = vunpack.c.h.b16 %v3247
        %v3972 = vunpack.c.l.b16 %v3248
        %v3973 = vunpack.c.l.b16 %v3249
        %v3974 = vunpack.c.h.b16 %v3249
        %v3975 = vunpack.c.l.b16 %v3250
        %v3976 = vunpack.c.h.b16 %v3250
        %v3977 = vunpack.c.l.b16 %v3251
        %v3978 = vunpack.c.h.b16 %v3251
        %v3979 = vunpack.c.l.b16 %v3252
        %v3980 = vunpack.c.h.b16 %v3252
        %v3981 = vunpack.c.l.b16 %v3253
        %v3982 = vunpack.c.l.b16 %v3254
        %v3983 = vunpack.c.h.b16 %v3254
        %v3984 = vunpack.c.l.b16 %v3255
        %v3985 = vunpack.c.h.b16 %v3255
        %v3986 = vunpack.c.l.b16 %v3256
        %v3987 = vunpack.c.h.b16 %v3256
        %v3988 = vunpack.c.l.b16 %v3257
        %v3989 = vunpack.c.h.b16 %v3257
        %v3990 = vunpack.c.l.b16 %v3258
        %v3991 = vunpack.c.l.b16 %v3259
        %v3992 = vunpack.c.h.b16 %v3259
        %v3993 = vunpack.c.l.b16 %v3260
        %v3994 = vunpack.c.h.b16 %v3260
        %v3995 = vunpack.c.l.b16 %v3261
        %v3996 = vunpack.c.h.b16 %v3261
        %v3997 = vunpack.c.l.b16 %v3262
        %v3998 = vunpack.c.h.b16 %v3262
        %v3999 = vunpack.c.l.b16 %v3263
        %v4000 = vpack.c.b16 %v3721, %v3712
        %v4001 = vpack.c.b16 %v3722, %v3713
        %v4002 = vpack.c.b16 %v3723, %v3714
        %v4003 = vpack.c.b16 %v3724, %v3715
        %v4004 = vpack.c.b16 %v3725, %v3716
        %v4005 = vpack.c.b16 %v3726, %v3717
        %v4006 = vpack.c.b16 %v3727, %v3718
        %v4007 = vpack.c.b16 %v3728, %v3719
        %v4008 = vpack.c.b16 %v3729, %v3720
        %v4009 = vpack.c.b16 %v3739, %v3730
        %v4010 = vpack.c.b16 %v3740, %v3731
        %v4011 = vpack.c.b16 %v3741, %v3732
        %v4012 = vpack.c.b16 %v3742, %v3733
        %v4013 = vpack.c.b16 %v3743, %v3734
        %v4014 = vpack.c.b16 %v3744, %v3735
        %v4015 = vpack.c.b16 %v3745, %v3736
        %v4016 = vpack.c.b16 %v3746, %v3737
        %v4017 = vpack.c.b16 %v3747, %v3738
        %v4018 = vpack.c.b16 %v3757, %v3748
        %v4019 = vpack.c.b16 %v3758, %v3749
        %v4020 = vpack.c.b16 %v3759, %v3750
        %v4021 = vpack.c.b16 %v3760, %v3751
        %v4022 = vpack.c.b16 %v3761, %v3752
        %v4023 = vpack.c.b16 %v3762, %v3753
        %v4024 = vpack.c.b16 %v3763, %v3754
        %v4025 = vpack.c.b16 %v3764, %v3755
        %v4026 = vpack.c.b16 %v3765, %v3756
        %v4027 = vpack.c.b16 %v3775, %v3766
        %v4028 = vpack.c.b16 %v3776, %v3767
        %v4029 = vpack.c.b16 %v3777, %v3768
        %v4030 = vpack.c.b16 %v3778, %v3769
        %v4031 = vpack.c.b16 %v3779, %v3770
        %v4032 = vpack.c.b16 %v3780, %v3771
        %v4033 = vpack.c.b16 %v3781, %v3772
        %v4034 = vpack.c.b16 %v3782, %v3773
        %v4035 = vpack.c.b16 %v3783, %v3774
        %v4036 = vpack.c.b16 %v3793, %v3784
        %v4037 = vpack.c.b16 %v3794, %v3785
        %v4038 = vpack.c.b16 %v3795, %v3786
        %v4039 = vpack.c.b16 %v3796, %v3787
        %v4040 = vpack.c.b16 %v3797, %v3788
        %v4041 = vpack.c.b16 %v3798, %v3789
        %v4042 = vpack.c.b16 %v3799, %v3790
        %v4043 = vpack.c.b16 %v3800, %v3791
        %v4044 = vpack.c.b16 %v3801, %v3792
        %v4045 = vpack.c.b16 %v3811, %v3802
        %v4046 = vpack.c.b16 %v3812, %v3803
        %v4047 = vpack.c.b16 %v3813, %v3804
        %v4048 = vpack.c.b16 %v3814, %v3805
        %v4049 = vpack.c.b16 %v3815, %v3806
        %v4050 = vpack.c.b16 %v3816, %v3807
        %v4051 = vpack.c.b16 %v3817, %v3808
        %v4052 = vpack.c.b16 %v3818, %v3809
        %v4053 = vpack.c.b16 %v3819, %v3810
        %v4054 = vpack.c.b16 %v3829, %v3820
        %v4055 = vpack.c.b16 %v3830, %v3821
        %v4056 = vpack.c.b16 %v3831, %v3822
        %v4057 = vpack.c.b16 %v3832, %v3823
        %v4058 = vpack.c.b16 %v3833, %v3824
        %v4059 = vpack.c.b16 %v3834, %v3825
        %v4060 = vpack.c.b16 %v3835, %v3826
        %v4061 = vpack.c.b16 %v3836, %v3827
        %v4062 = vpack.c.b16 %v3837, %v3828
        %v4063 = vpack.c.b16 %v3847, %v3838
        %v4064 = vpack.c.b16 %v3848, %v3839
        %v4065 = vpack.c.b16 %v3849, %v3840
        %v4066 = vpack.c.b16 %v3850, %v3841
        %v4067 = vpack.c.b16 %v3851, %v3842
        %v4068 = vpack.c.b16 %v3852, %v3843
        %v4069 = vpack.c.b16 %v3853, %v3844
        %v4070 = vpack.c.b16 %v3854, %v3845
        %v4071 = vpack.c.b16 %v3855, %v3846
        %v4072 = vpack.c.b16 %v3865, %v3856
        %v4073 = vpack.c.b16 %v3866, %v3857
        %v4074 = vpack.c.b16 %v3867, %v3858
        %v4075 = vpack.c.b16 %v3868, %v3859
        %v4076 = vpack.c.b16 %v3869, %v3860
        %v4077 = vpack.c.b16 %v3870, %v3861
        %v4078 = vpack.c.b16 %v3871, %v3862
        %v4079 = vpack.c.b16 %v3872, %v3863
        %v4080 = vpack.c.b16 %v3873, %v3864
        %v4081 = vpack.c.b16 %v3883, %v3874
        %v4082 = vpack.c.b16 %v3884, %v3875
        %v4083 = vpack.c.b16 %v3885, %v3876
        %v4084 = vpack.c.b16 %v3886, %v3877
        %v4085 = vpack.c.b16 %v3887, %v3878
        %v4086 = vpack.c.b16 %v3888, %v3879
        %v4087 = vpack.c.b16 %v3889, %v3880
        %v4088 = vpack.c.b16 %v3890, %v3881
        %v4089 = vpack.c.b16 %v3891, %v3882
        %v4090 = vpack.c.b16 %v3901, %v3892
        %v4091 = vpack.c.b16 %v3902, %v3893
        %v4092 = vpack.c.b16 %v3903, %v3894
        %v4093 = vpack.c.b16 %v3904, %v3895
        %v4094 = vpack.c.b16 %v3905, %v3896
        %v4095 = vpack.c.b16 %v3906, %v3897
        %v4096 = vpack.c.b16 %v3907, %v3898
        %v4097 = vpack.c.b16 %v3908, %v3899
        %v4098 = vpack.c.b16 %v3909, %v3900
        %v4099 = vpack.c.b16 %v3919, %v3910
        %v4100 = vpack.c.b16 %v3920, %v3911
        %v4101 = vpack.c.b16 %v3921, %v3912
        %v4102 = vpack.c.b16 %v3922, %v3913
        %v4103 = vpack.c.b16 %v3923, %v3914
        %v4104 = vpack.c.b16 %v3924, %v3915
        %v4105 = vpack.c.b16 %v3925, %v3916
        %v4106 = vpack.c.b16 %v3926, %v3917
        %v4107 = vpack.c.b16 %v3927, %v3918
        %v4108 = vpack.c.b16 %v3937, %v3928
        %v4109 = vpack.c.b16 %v3938, %v3929
        %v4110 = vpack.c.b16 %v3939, %v3930
        %v4111 = vpack.c.b16 %v3940, %v3931
        %v4112 = vpack.c.b16 %v3941, %v3932
        %v4113 = vpack.c.b16 %v3942, %v3933
        %v4114 = vpack.c.b16 %v3943, %v3934
        %v4115 = vpack.c.b16 %v3944, %v3935
        %v4116 = vpack.c.b16 %v3945, %v3936
        %v4117 = vpack.c.b16 %v3955, %v3946
        %v4118 = vpack.c.b16 %v3956, %v3947
        %v4119 = vpack.c.b16 %v3957, %v3948
        %v4120 = vpack.c.b16 %v3958, %v3949
        %v4121 = vpack.c.b16 %v3959, %v3950
        %v4122 = vpack.c.b16 %v3960, %v3951
        %v4123 = vpack.c.b16 %v3961, %v3952
        %v4124 = vpack.c.b16 %v3962, %v3953
        %v4125 = vpack.c.b16 %v3963, %v3954
        %v4126 = vpack.c.b16 %v3973, %v3964
        %v4127 = vpack.c.b16 %v3974, %v3965
        %v4128 = vpack.c.b16 %v3975, %v3966
        %v4129 = vpack.c.b16 %v3976, %v3967
        %v4130 = vpack.c.b16 %v3977, %v3968
        %v4131 = vpack.c.b16 %v3978, %v3969
        %v4132 = vpack.c.b16 %v3979, %v3970
        %v4133 = vpack.c.b16 %v3980, %v3971
        %v4134 = vpack.c.b16 %v3981, %v3972
        %v4135 = vpack.c.b16 %v3991, %v3982
        %v4136 = vpack.c.b16 %v3992, %v3983
        %v4137 = vpack.c.b16 %v3993, %v3984
        %v4138 = vpack.c.b16 %v3994, %v3985
        %v4139 = vpack.c.b16 %v3995, %v3986
        %v4140 = vpack.c.b16 %v3996, %v3987
        %v4141 = vpack.c.b16 %v3997, %v3988
        %v4142 = vpack.c.b16 %v3998, %v3989
        %v4143 = vpack.c.b16 %v3999, %v3990
        %v4576 = vunpack.c.l.b16 %v3264
        %v4577 = vunpack.c.h.b16 %v3264
        %v4578 = vunpack.c.l.b16 %v3265
        %v4579 = vunpack.c.h.b16 %v3265
        %v4580 = vunpack.c.l.b16 %v3266
        %v4581 = vunpack.c.h.b16 %v3266
        %v4582 = vunpack.c.l.b16 %v3267
        %v4583 = vunpack.c.h.b16 %v3267
        %v4584 = vunpack.c.l.b16 %v3268
        %v4585 = vunpack.c.h.b16 %v3268
        %v4586 = vunpack.c.l.b16 %v3269
        %v4587 = vunpack.c.h.b16 %v3269
        %v4588 = vunpack.c.l.b16 %v3270
        %v4589 = vunpack.c.h.b16 %v3270
        %v4590 = vunpack.c.l.b16 %v3271
        %v4591 = vunpack.c.h.b16 %v3271
        %v4592 = vunpack.c.l.b16 %v3272
        %v4593 = vunpack.c.h.b16 %v3272
        %v4594 = vunpack.c.l.b16 %v3273
        %v4595 = vunpack.c.h.b16 %v3273
        %v4596 = vunpack.c.l.b16 %v3274
        %v4597 = vunpack.c.h.b16 %v3274
        %v4598 = vunpack.c.l.b16 %v3275
        %v4599 = vunpack.c.h.b16 %v3275
        %v4600 = vunpack.c.l.b16 %v3276
        %v4601 = vunpack.c.h.b16 %v3276
        %v4602 = vunpack.c.l.b16 %v3277
        %v4603 = vunpack.c.h.b16 %v3277
        %v4604 = vunpack.c.l.b16 %v3278
        %v4605 = vunpack.c.h.b16 %v3278
        %v4606 = vunpack.c.l.b16 %v3279
        %v4607 = vunpack.c.h.b16 %v3279
        %v4608 = vunpack.c.l.b16 %v3280
        %v4609 = vunpack.c.h.b16 %v3280
        %v4610 = vunpack.c.l.b16 %v3281
        %v4611 = vunpack.c.h.b16 %v3281
        %v4612 = vunpack.c.l.b16 %v3282
        %v4613 = vunpack.c.h.b16 %v3282
        %v4614 = vunpack.c.l.b16 %v3283
        %v4615 = vunpack.c.h.b16 %v3283
        %v4616 = vunpack.c.l.b16 %v3284
        %v4617 = vunpack.c.h.b16 %v3284
        %v4618 = vunpack.c.l.b16 %v3285
        %v4619 = vunpack.c.h.b16 %v3285
        %v4620 = vunpack.c.l.b16 %v3286
        %v4621 = vunpack.c.h.b16 %v3286
        %v4622 = vunpack.c.l.b16 %v3287
        %v4623 = vunpack.c.h.b16 %v3287
        %v4624 = vunpack.c.l.b16 %v3288
        %v4625 = vunpack.c.h.b16 %v3288
        %v4626 = vunpack.c.l.b16 %v3289
        %v4627 = vunpack.c.h.b16 %v3289
        %v4628 = vunpack.c.l.b16 %v3290
        %v4629 = vunpack.c.h.b16 %v3290
        %v4630 = vunpack.c.l.b16 %v3291
        %v4631 = vunpack.c.h.b16 %v3291
        %v4632 = vunpack.c.l.b16 %v3292
        %v4633 = vunpack.c.h.b16 %v3292
        %v4634 = vunpack.c.l.b16 %v3293
        %v4635 = vunpack.c.h.b16 %v3293
        %v4636 = vunpack.c.l.b16 %v3294
        %v4637 = vunpack.c.h.b16 %v3294
        %v4638 = vunpack.c.l.b16 %v3295
        %v4639 = vunpack.c.h.b16 %v3295
        %v4640 = vunpack.c.l.b16 %v3296
        %v4641 = vunpack.c.h.b16 %v3296
        %v4642 = vunpack.c.l.b16 %v3297
        %v4643 = vunpack.c.h.b16 %v3297
        %v4644 = vunpack.c.l.b16 %v3298
        %v4645 = vunpack.c.h.b16 %v3298
        %v4646 = vunpack.c.l.b16 %v3299
        %v4647 = vunpack.c.h.b16 %v3299
        %v4648 = vunpack.c.l.b16 %v3300
        %v4649 = vunpack.c.h.b16 %v3300
        %v4650 = vunpack.c.l.b16 %v3301
        %v4651 = vunpack.c.h.b16 %v3301
        %v4652 = vunpack.c.l.b16 %v3302
        %v4653 = vunpack.c.h.b16 %v3302
        %v4654 = vunpack.c.l.b16 %v3303
        %v4655 = vunpack.c.h.b16 %v3303
        %v4656 = vunpack.c.l.b16 %v3304
        %v4657 = vunpack.c.h.b16 %v3304
        %v4658 = vunpack.c.l.b16 %v3305
        %v4659 = vunpack.c.h.b16 %v3305
        %v4660 = vunpack.c.l.b16 %v3306
        %v4661 = vunpack.c.h.b16 %v3306
        %v4662 = vunpack.c.l.b16 %v3307
        %v4663 = vunpack.c.h.b16 %v3307
        %v4664 = vunpack.c.l.b16 %v3308
        %v4665 = vunpack.c.h.b16 %v3308
        %v4666 = vunpack.c.l.b16 %v3309
        %v4667 = vunpack.c.h.b16 %v3309
        %v4668 = vunpack.c.l.b16 %v3310
        %v4669 = vunpack.c.h.b16 %v3310
        %v4670 = vunpack.c.l.b16 %v3311
        %v4671 = vunpack.c.h.b16 %v3311
        %v4672 = vunpack.c.l.b16 %v3312
        %v4673 = vunpack.c.h.b16 %v3312
        %v4674 = vunpack.c.l.b16 %v3313
        %v4675 = vunpack.c.h.b16 %v3313
        %v4676 = vunpack.c.l.b16 %v3314
        %v4677 = vunpack.c.h.b16 %v3314
        %v4678 = vunpack.c.l.b16 %v3315
        %v4679 = vunpack.c.h.b16 %v3315
        %v4680 = vunpack.c.l.b16 %v3316
        %v4681 = vunpack.c.h.b16 %v3316
        %v4682 = vunpack.c.l.b16 %v3317
        %v4683 = vunpack.c.h.b16 %v3317
        %v4684 = vunpack.c.l.b16 %v3318
        %v4685 = vunpack.c.h.b16 %v3318
        %v4686 = vunpack.c.l.b16 %v3319
        %v4687 = vunpack.c.h.b16 %v3319
        %v4688 = vunpack.c.l.b16 %v3320
        %v4689 = vunpack.c.h.b16 %v3320
        %v4690 = vunpack.c.l.b16 %v3321
        %v4691 = vunpack.c.h.b16 %v3321
        %v4692 = vunpack.c.l.b16 %v3322
        %v4693 = vunpack.c.h.b16 %v3322
        %v4694 = vunpack.c.l.b16 %v3323
        %v4695 = vunpack.c.h.b16 %v3323
        %v4696 = vunpack.c.l.b16 %v3324
        %v4697 = vunpack.c.h.b16 %v3324
        %v4698 = vunpack.c.l.b16 %v3325
        %v4699 = vunpack.c.h.b16 %v3325
        %v4700 = vunpack.c.l.b16 %v3326
        %v4701 = vunpack.c.h.b16 %v3326
        %v4702 = vunpack.c.l.b16 %v3327
        %v4703 = vunpack.c.h.b16 %v3327
        %v4704 = vunpack.c.l.b16 %v3328
        %v4705 = vunpack.c.h.b16 %v3328
        %v4706 = vunpack.c.l.b16 %v3329
        %v4707 = vunpack.c.h.b16 %v3329
        %v4708 = vunpack.c.l.b16 %v3330
        %v4709 = vunpack.c.h.b16 %v3330
        %v4710 = vunpack.c.l.b16 %v3331
        %v4711 = vunpack.c.h.b16 %v3331
        %v4712 = vunpack.c.l.b16 %v3332
        %v4713 = vunpack.c.h.b16 %v3332
        %v4714 = vunpack.c.l.b16 %v3333
        %v4715 = vunpack.c.h.b16 %v3333
        %v4716 = vunpack.c.l.b16 %v3334
        %v4717 = vunpack.c.h.b16 %v3334
        %v4718 = vunpack.c.l.b16 %v3335
        %v4719 = vunpack.c.h.b16 %v3335
        %v4720 = vunpack.c.l.b16 %v3336
        %v4721 = vunpack.c.h.b16 %v3336
        %v4722 = vunpack.c.l.b16 %v3337
        %v4723 = vunpack.c.h.b16 %v3337
        %v4724 = vunpack.c.l.b16 %v3338
        %v4725 = vunpack.c.h.b16 %v3338
        %v4726 = vunpack.c.l.b16 %v3339
        %v4727 = vunpack.c.h.b16 %v3339
        %v4728 = vunpack.c.l.b16 %v3340
        %v4729 = vunpack.c.h.b16 %v3340
        %v4730 = vunpack.c.l.b16 %v3341
        %v4731 = vunpack.c.h.b16 %v3341
        %v4732 = vunpack.c.l.b16 %v3342
        %v4733 = vunpack.c.h.b16 %v3342
        %v4734 = vunpack.c.l.b16 %v3343
        %v4735 = vunpack.c.h.b16 %v3343
        %v4736 = vunpack.c.l.b16 %v3344
        %v4737 = vunpack.c.h.b16 %v3344
        %v4738 = vunpack.c.l.b16 %v3345
        %v4739 = vunpack.c.h.b16 %v3345
        %v4740 = vunpack.c.l.b16 %v3346
        %v4741 = vunpack.c.h.b16 %v3346
        %v4742 = vunpack.c.l.b16 %v3347
        %v4743 = vunpack.c.h.b16 %v3347
        %v4744 = vunpack.c.l.b16 %v3348
        %v4745 = vunpack.c.h.b16 %v3348
        %v4746 = vunpack.c.l.b16 %v3349
        %v4747 = vunpack.c.h.b16 %v3349
        %v4748 = vunpack.c.l.b16 %v3350
        %v4749 = vunpack.c.h.b16 %v3350
        %v4750 = vunpack.c.l.b16 %v3351
        %v4751 = vunpack.c.h.b16 %v3351
        %v4752 = vunpack.c.l.b16 %v3352
        %v4753 = vunpack.c.h.b16 %v3352
        %v4754 = vunpack.c.l.b16 %v3353
        %v4755 = vunpack.c.h.b16 %v3353
        %v4756 = vunpack.c.l.b16 %v3354
        %v4757 = vunpack.c.h.b16 %v3354
        %v4758 = vunpack.c.l.b16 %v3355
        %v4759 = vunpack.c.h.b16 %v3355
        %v4760 = vunpack.c.l.b16 %v3356
        %v4761 = vunpack.c.h.b16 %v3356
        %v4762 = vunpack.c.l.b16 %v3357
        %v4763 = vunpack.c.h.b16 %v3357
        %v4764 = vunpack.c.l.b16 %v3358
        %v4765 = vunpack.c.h.b16 %v3358
        %v4766 = vunpack.c.l.b16 %v3359
        %v4767 = vunpack.c.h.b16 %v3359
        %v4768 = vunpack.c.l.b16 %v3360
        %v4769 = vunpack.c.h.b16 %v3360
        %v4770 = vunpack.c.l.b16 %v3361
        %v4771 = vunpack.c.h.b16 %v3361
        %v4772 = vunpack.c.l.b16 %v3362
        %v4773 = vunpack.c.h.b16 %v3362
        %v4774 = vunpack.c.l.b16 %v3363
        %v4775 = vunpack.c.h.b16 %v3363
        %v4776 = vunpack.c.l.b16 %v3364
        %v4777 = vunpack.c.h.b16 %v3364
        %v4778 = vunpack.c.l.b16 %v3365
        %v4779 = vunpack.c.h.b16 %v3365
        %v4780 = vunpack.c.l.b16 %v3366
        %v4781 = vunpack.c.h.b16 %v3366
        %v4782 = vunpack.c.l.b16 %v3367
        %v4783 = vunpack.c.h.b16 %v3367
        %v4784 = vunpack.c.l.b16 %v3368
        %v4785 = vunpack.c.h.b16 %v3368
        %v4786 = vunpack.c.l.b16 %v3369
        %v4787 = vunpack.c.h.b16 %v3369
        %v4788 = vunpack.c.l.b16 %v3370
        %v4789 = vunpack.c.h.b16 %v3370
        %v4790 = vunpack.c.l.b16 %v3371
        %v4791 = vunpack.c.h.b16 %v3371
        %v4792 = vunpack.c.l.b16 %v3372
        %v4793 = vunpack.c.h.b16 %v3372
        %v4794 = vunpack.c.l.b16 %v3373
        %v4795 = vunpack.c.h.b16 %v3373
        %v4796 = vunpack.c.l.b16 %v3374
        %v4797 = vunpack.c.h.b16 %v3374
        %v4798 = vunpack.c.l.b16 %v3375
        %v4799 = vunpack.c.h.b16 %v3375
        %v4800 = vunpack.c.l.b16 %v3376
        %v4801 = vunpack.c.h.b16 %v3376
        %v4802 = vunpack.c.l.b16 %v3377
        %v4803 = vunpack.c.h.b16 %v3377
        %v4804 = vunpack.c.l.b16 %v3378
        %v4805 = vunpack.c.h.b16 %v3378
        %v4806 = vunpack.c.l.b16 %v3379
        %v4807 = vunpack.c.h.b16 %v3379
        %v4808 = vunpack.c.l.b16 %v3380
        %v4809 = vunpack.c.h.b16 %v3380
        %v4810 = vunpack.c.l.b16 %v3381
        %v4811 = vunpack.c.h.b16 %v3381
        %v4812 = vunpack.c.l.b16 %v3382
        %v4813 = vunpack.c.h.b16 %v3382
        %v4814 = vunpack.c.l.b16 %v3383
        %v4815 = vunpack.c.h.b16 %v3383
        %v4816 = vunpack.c.l.b16 %v3384
        %v4817 = vunpack.c.h.b16 %v3384
        %v4818 = vunpack.c.l.b16 %v3385
        %v4819 = vunpack.c.h.b16 %v3385
        %v4820 = vunpack.c.l.b16 %v3386
        %v4821 = vunpack.c.h.b16 %v3386
        %v4822 = vunpack.c.l.b16 %v3387
        %v4823 = vunpack.c.h.b16 %v3387
        %v4824 = vunpack.c.l.b16 %v3388
        %v4825 = vunpack.c.h.b16 %v3388
        %v4826 = vunpack.c.l.b16 %v3389
        %v4827 = vunpack.c.h.b16 %v3389
        %v4828 = vunpack.c.l.b16 %v3390
        %v4829 = vunpack.c.h.b16 %v3390
        %v4830 = vunpack.c.l.b16 %v3391
        %v4831 = vunpack.c.h.b16 %v3391
        %v4832 = vunpack.c.l.b16 %v3392
        %v4833 = vunpack.c.h.b16 %v3392
        %v4834 = vunpack.c.l.b16 %v3393
        %v4835 = vunpack.c.h.b16 %v3393
        %v4836 = vunpack.c.l.b16 %v3394
        %v4837 = vunpack.c.h.b16 %v3394
        %v4838 = vunpack.c.l.b16 %v3395
        %v4839 = vunpack.c.h.b16 %v3395
        %v4840 = vunpack.c.l.b16 %v3396
        %v4841 = vunpack.c.h.b16 %v3396
        %v4842 = vunpack.c.l.b16 %v3397
        %v4843 = vunpack.c.h.b16 %v3397
        %v4844 = vunpack.c.l.b16 %v3398
        %v4845 = vunpack.c.h.b16 %v3398
        %v4846 = vunpack.c.l.b16 %v3399
        %v4847 = vunpack.c.h.b16 %v3399
        %v4848 = vunpack.c.l.b16 %v3400
        %v4849 = vunpack.c.h.b16 %v3400
        %v4850 = vunpack.c.l.b16 %v3401
        %v4851 = vunpack.c.h.b16 %v3401
        %v4852 = vunpack.c.l.b16 %v3402
        %v4853 = vunpack.c.h.b16 %v3402
        %v4854 = vunpack.c.l.b16 %v3403
        %v4855 = vunpack.c.h.b16 %v3403
        %v4856 = vunpack.c.l.b16 %v3404
        %v4857 = vunpack.c.h.b16 %v3404
        %v4858 = vunpack.c.l.b16 %v3405
        %v4859 = vunpack.c.h.b16 %v3405
        %v4860 = vunpack.c.l.b16 %v3406
        %v4861 = vunpack.c.h.b16 %v3406
        %v4862 = vunpack.c.l.b16 %v3407
        %v4863 = vunpack.c.h.b16 %v3407
        %v4864 = vunpack.c.l.b16 %v3408
        %v4865 = vunpack.c.h.b16 %v3408
        %v4866 = vunpack.c.l.b16 %v3409
        %v4867 = vunpack.c.h.b16 %v3409
        %v4868 = vunpack.c.l.b16 %v3410
        %v4869 = vunpack.c.h.b16 %v3410
        %v4870 = vunpack.c.l.b16 %v3411
        %v4871 = vunpack.c.h.b16 %v3411
        %v4872 = vunpack.c.l.b16 %v3412
        %v4873 = vunpack.c.h.b16 %v3412
        %v4874 = vunpack.c.l.b16 %v3413
        %v4875 = vunpack.c.h.b16 %v3413
        %v4876 = vunpack.c.l.b16 %v3414
        %v4877 = vunpack.c.h.b16 %v3414
        %v4878 = vunpack.c.l.b16 %v3415
        %v4879 = vunpack.c.h.b16 %v3415
        %v4880 = vunpack.c.l.b16 %v3416
        %v4881 = vunpack.c.h.b16 %v3416
        %v4882 = vunpack.c.l.b16 %v3417
        %v4883 = vunpack.c.h.b16 %v3417
        %v4884 = vunpack.c.l.b16 %v3418
        %v4885 = vunpack.c.h.b16 %v3418
        %v4886 = vunpack.c.l.b16 %v3419
        %v4887 = vunpack.c.h.b16 %v3419
        %v4888 = vunpack.c.l.b16 %v3420
        %v4889 = vunpack.c.h.b16 %v3420
        %v4890 = vunpack.c.l.b16 %v3421
        %v4891 = vunpack.c.h.b16 %v3421
        %v4892 = vunpack.c.l.b16 %v3422
        %v4893 = vunpack.c.h.b16 %v3422
        %v4894 = vunpack.c.l.b16 %v3423
        %v4895 = vunpack.c.h.b16 %v3423
        %v4896 = vunpack.c.l.b16 %v3424
        %v4897 = vunpack.c.h.b16 %v3424
        %v4898 = vunpack.c.l.b16 %v3425
        %v4899 = vunpack.c.h.b16 %v3425
        %v4900 = vunpack.c.l.b16 %v3426
        %v4901 = vunpack.c.h.b16 %v3426
        %v4902 = vunpack.c.l.b16 %v3427
        %v4903 = vunpack.c.h.b16 %v3427
        %v4904 = vunpack.c.l.b16 %v3428
        %v4905 = vunpack.c.h.b16 %v3428
        %v4906 = vunpack.c.l.b16 %v3429
        %v4907 = vunpack.c.h.b16 %v3429
        %v4908 = vunpack.c.l.b16 %v3430
        %v4909 = vunpack.c.h.b16 %v3430
        %v4910 = vunpack.c.l.b16 %v3431
        %v4911 = vunpack.c.h.b16 %v3431
        %v4912 = vunpack.c.l.b16 %v3432
        %v4913 = vunpack.c.h.b16 %v3432
        %v4914 = vunpack.c.l.b16 %v3433
        %v4915 = vunpack.c.h.b16 %v3433
        %v4916 = vunpack.c.l.b16 %v3434
        %v4917 = vunpack.c.h.b16 %v3434
        %v4918 = vunpack.c.l.b16 %v3435
        %v4919 = vunpack.c.h.b16 %v3435
        %v4920 = vunpack.c.l.b16 %v3436
        %v4921 = vunpack.c.h.b16 %v3436
        %v4922 = vunpack.c.l.b16 %v3437
        %v4923 = vunpack.c.h.b16 %v3437
        %v4924 = vunpack.c.l.b16 %v3438
        %v4925 = vunpack.c.h.b16 %v3438
        %v4926 = vunpack.c.l.b16 %v3439
        %v4927 = vunpack.c.h.b16 %v3439
        %v4928 = vunpack.c.l.b16 %v3440
        %v4929 = vunpack.c.h.b16 %v3440
        %v4930 = vunpack.c.l.b16 %v3441
        %v4931 = vunpack.c.h.b16 %v3441
        %v4932 = vunpack.c.l.b16 %v3442
        %v4933 = vunpack.c.h.b16 %v3442
        %v4934 = vunpack.c.l.b16 %v3443
        %v4935 = vunpack.c.h.b16 %v3443
        %v4936 = vunpack.c.l.b16 %v3444
        %v4937 = vunpack.c.h.b16 %v3444
        %v4938 = vunpack.c.l.b16 %v3445
        %v4939 = vunpack.c.h.b16 %v3445
        %v4940 = vunpack.c.l.b16 %v3446
        %v4941 = vunpack.c.h.b16 %v3446
        %v4942 = vunpack.c.l.b16 %v3447
        %v4943 = vunpack.c.h.b16 %v3447
        %v4944 = vunpack.c.l.b16 %v3448
        %v4945 = vunpack.c.h.b16 %v3448
        %v4946 = vunpack.c.l.b16 %v3449
        %v4947 = vunpack.c.h.b16 %v3449
        %v4948 = vunpack.c.l.b16 %v3450
        %v4949 = vunpack.c.h.b16 %v3450
        %v4950 = vunpack.c.l.b16 %v3451
        %v4951 = vunpack.c.h.b16 %v3451
        %v4952 = vunpack.c.l.b16 %v3452
        %v4953 = vunpack.c.h.b16 %v3452
        %v4954 = vunpack.c.l.b16 %v3453
        %v4955 = vunpack.c.h.b16 %v3453
        %v4956 = vunpack.c.l.b16 %v3454
        %v4957 = vunpack.c.h.b16 %v3454
        %v4958 = vunpack.c.l.b16 %v3455
        %v4959 = vunpack.c.h.b16 %v3455
        %v4960 = vunpack.c.l.b16 %v3456
        %v4961 = vunpack.c.h.b16 %v3456
        %v4962 = vunpack.c.l.b16 %v3457
        %v4963 = vunpack.c.h.b16 %v3457
        %v4964 = vunpack.c.l.b16 %v3458
        %v4965 = vunpack.c.h.b16 %v3458
        %v4966 = vunpack.c.l.b16 %v3459
        %v4967 = vunpack.c.h.b16 %v3459
        %v4968 = vunpack.c.l.b16 %v3460
        %v4969 = vunpack.c.h.b16 %v3460
        %v4970 = vunpack.c.l.b16 %v3461
        %v4971 = vunpack.c.h.b16 %v3461
        %v4972 = vunpack.c.l.b16 %v3462
        %v4973 = vunpack.c.h.b16 %v3462
        %v4974 = vunpack.c.l.b16 %v3463
        %v4975 = vunpack.c.h.b16 %v3463
        %v4976 = vunpack.c.l.b16 %v3464
        %v4977 = vunpack.c.h.b16 %v3464
        %v4978 = vunpack.c.l.b16 %v3465
        %v4979 = vunpack.c.h.b16 %v3465
        %v4980 = vunpack.c.l.b16 %v3466
        %v4981 = vunpack.c.h.b16 %v3466
        %v4982 = vunpack.c.l.b16 %v3467
        %v4983 = vunpack.c.h.b16 %v3467
        %v4984 = vunpack.c.l.b16 %v3468
        %v4985 = vunpack.c.h.b16 %v3468
        %v4986 = vunpack.c.l.b16 %v3469
        %v4987 = vunpack.c.h.b16 %v3469
        %v4988 = vunpack.c.l.b16 %v3470
        %v4989 = vunpack.c.h.b16 %v3470
        %v4990 = vunpack.c.l.b16 %v3471
        %v4991 = vunpack.c.h.b16 %v3471
        %v4992 = vunpack.c.l.b16 %v3472
        %v4993 = vunpack.c.h.b16 %v3472
        %v4994 = vunpack.c.l.b16 %v3473
        %v4995 = vunpack.c.h.b16 %v3473
        %v4996 = vunpack.c.l.b16 %v3474
        %v4997 = vunpack.c.h.b16 %v3474
        %v4998 = vunpack.c.l.b16 %v3475
        %v4999 = vunpack.c.h.b16 %v3475
        %v5000 = vunpack.c.l.b16 %v3476
        %v5001 = vunpack.c.h.b16 %v3476
        %v5002 = vunpack.c.l.b16 %v3477
        %v5003 = vunpack.c.h.b16 %v3477
        %v5004 = vunpack.c.l.b16 %v3478
        %v5005 = vunpack.c.h.b16 %v3478
        %v5006 = vunpack.c.l.b16 %v3479
        %v5007 = vunpack.c.h.b16 %v3479
        %v5008 = vunpack.c.l.b16 %v3480
        %v5009 = vunpack.c.h.b16 %v3480
        %v5010 = vunpack.c.l.b16 %v3481
        %v5011 = vunpack.c.h.b16 %v3481
        %v5012 = vunpack.c.l.b16 %v3482
        %v5013 = vunpack.c.h.b16 %v3482
        %v5014 = vunpack.c.l.b16 %v3483
        %v5015 = vunpack.c.h.b16 %v3483
        %v5016 = vunpack.c.l.b16 %v3484
        %v5017 = vunpack.c.h.b16 %v3484
        %v5018 = vunpack.c.l.b16 %v3485
        %v5019 = vunpack.c.h.b16 %v3485
        %v5020 = vunpack.c.l.b16 %v3486
        %v5021 = vunpack.c.h.b16 %v3486
        %v5022 = vunpack.c.l.b16 %v3487
        %v5023 = vunpack.c.h.b16 %v3487
        %v5024 = vunpack.c.l.b16 %v3488
        %v5025 = vunpack.c.h.b16 %v3488
        %v5026 = vunpack.c.l.b16 %v3489
        %v5027 = vunpack.c.h.b16 %v3489
        %v5028 = vunpack.c.l.b16 %v3490
        %v5029 = vunpack.c.h.b16 %v3490
        %v5030 = vunpack.c.l.b16 %v3491
        %v5031 = vunpack.c.h.b16 %v3491
        %v5032 = vunpack.c.l.b16 %v3492
        %v5033 = vunpack.c.h.b16 %v3492
        %v5034 = vunpack.c.l.b16 %v3493
        %v5035 = vunpack.c.h.b16 %v3493
        %v5036 = vunpack.c.l.b16 %v3494
        %v5037 = vunpack.c.h.b16 %v3494
        %v5038 = vunpack.c.l.b16 %v3495
        %v5039 = vunpack.c.h.b16 %v3495
        %v5040 = vunpack.c.l.b16 %v3496
        %v5041 = vunpack.c.h.b16 %v3496
        %v5042 = vunpack.c.l.b16 %v3497
        %v5043 = vunpack.c.h.b16 %v3497
        %v5044 = vunpack.c.l.b16 %v3498
        %v5045 = vunpack.c.h.b16 %v3498
        %v5046 = vunpack.c.l.b16 %v3499
        %v5047 = vunpack.c.h.b16 %v3499
        %v5048 = vunpack.c.l.b16 %v3500
        %v5049 = vunpack.c.h.b16 %v3500
        %v5050 = vunpack.c.l.b16 %v3501
        %v5051 = vunpack.c.h.b16 %v3501
        %v5052 = vunpack.c.l.b16 %v3502
        %v5053 = vunpack.c.h.b16 %v3502
        %v5054 = vunpack.c.l.b16 %v3503
        %v5055 = vunpack.c.h.b16 %v3503
        %v5056 = vunpack.c.l.b16 %v3504
        %v5057 = vunpack.c.h.b16 %v3504
        %v5058 = vunpack.c.l.b16 %v3505
        %v5059 = vunpack.c.h.b16 %v3505
        %v5060 = vunpack.c.l.b16 %v3506
        %v5061 = vunpack.c.h.b16 %v3506
        %v5062 = vunpack.c.l.b16 %v3507
        %v5063 = vunpack.c.h.b16 %v3507
        %v5064 = vunpack.c.l.b16 %v3508
        %v5065 = vunpack.c.h.b16 %v3508
        %v5066 = vunpack.c.l.b16 %v3509
        %v5067 = vunpack.c.h.b16 %v3509
        %v5068 = vunpack.c.l.b16 %v3510
        %v5069 = vunpack.c.h.b16 %v3510
        %v5070 = vunpack.c.l.b16 %v3511
        %v5071 = vunpack.c.h.b16 %v3511
        %v5072 = vunpack.c.l.b16 %v3512
        %v5073 = vunpack.c.h.b16 %v3512
        %v5074 = vunpack.c.l.b16 %v3513
        %v5075 = vunpack.c.h.b16 %v3513
        %v5076 = vunpack.c.l.b16 %v3514
        %v5077 = vunpack.c.h.b16 %v3514
        %v5078 = vunpack.c.l.b16 %v3515
        %v5079 = vunpack.c.h.b16 %v3515
        %v5080 = vunpack.c.l.b16 %v3516
        %v5081 = vunpack.c.h.b16 %v3516
        %v5082 = vunpack.c.l.b16 %v3517
        %v5083 = vunpack.c.h.b16 %v3517
        %v5084 = vunpack.c.l.b16 %v3518
        %v5085 = vunpack.c.h.b16 %v3518
        %v5086 = vunpack.c.l.b16 %v3519
        %v5087 = vunpack.c.h.b16 %v3519
        %v5088 = vunpack.c.l.b16 %v3520
        %v5089 = vunpack.c.h.b16 %v3520
        %v5090 = vunpack.c.l.b16 %v3521
        %v5091 = vunpack.c.h.b16 %v3521
        %v5092 = vunpack.c.l.b16 %v3522
        %v5093 = vunpack.c.h.b16 %v3522
        %v5094 = vunpack.c.l.b16 %v3523
        %v5095 = vunpack.c.h.b16 %v3523
        %v5096 = vunpack.c.l.b16 %v3524
        %v5097 = vunpack.c.h.b16 %v3524
        %v5098 = vunpack.c.l.b16 %v3525
        %v5099 = vunpack.c.h.b16 %v3525
        %v5100 = vunpack.c.l.b16 %v3526
        %v5101 = vunpack.c.h.b16 %v3526
        %v5102 = vunpack.c.l.b16 %v3527
        %v5103 = vunpack.c.h.b16 %v3527
        %v5104 = vunpack.c.l.b16 %v3528
        %v5105 = vunpack.c.h.b16 %v3528
        %v5106 = vunpack.c.l.b16 %v3529
        %v5107 = vunpack.c.h.b16 %v3529
        %v5108 = vunpack.c.l.b16 %v3530
        %v5109 = vunpack.c.h.b16 %v3530
        %v5110 = vunpack.c.l.b16 %v3531
        %v5111 = vunpack.c.h.b16 %v3531
        %v5112 = vunpack.c.l.b16 %v3532
        %v5113 = vunpack.c.h.b16 %v3532
        %v5114 = vunpack.c.l.b16 %v3533
        %v5115 = vunpack.c.h.b16 %v3533
        %v5116 = vunpack.c.l.b16 %v3534
        %v5117 = vunpack.c.h.b16 %v3534
        %v5118 = vunpack.c.l.b16 %v3535
        %v5119 = vunpack.c.h.b16 %v3535
        %v5120 = vunpack.c.l.b16 %v3536
        %v5121 = vunpack.c.h.b16 %v3536
        %v5122 = vunpack.c.l.b16 %v3537
        %v5123 = vunpack.c.h.b16 %v3537
        %v5124 = vunpack.c.l.b16 %v3538
        %v5125 = vunpack.c.h.b16 %v3538
        %v5126 = vunpack.c.l.b16 %v3539
        %v5127 = vunpack.c.h.b16 %v3539
        %v5128 = vunpack.c.l.b16 %v3540
        %v5129 = vunpack.c.h.b16 %v3540
        %v5130 = vunpack.c.l.b16 %v3541
        %v5131 = vunpack.c.h.b16 %v3541
        %v5132 = vunpack.c.l.b16 %v3542
        %v5133 = vunpack.c.h.b16 %v3542
        %v5134 = vunpack.c.l.b16 %v3543
        %v5135 = vunpack.c.h.b16 %v3543
        %v5136 = vunpack.c.l.b16 %v3544
        %v5137 = vunpack.c.h.b16 %v3544
        %v5138 = vunpack.c.l.b16 %v3545
        %v5139 = vunpack.c.h.b16 %v3545
        %v5140 = vunpack.c.l.b16 %v3546
        %v5141 = vunpack.c.h.b16 %v3546
        %v5142 = vunpack.c.l.b16 %v3547
        %v5143 = vunpack.c.h.b16 %v3547
        %v5144 = vunpack.c.l.b16 %v3548
        %v5145 = vunpack.c.h.b16 %v3548
        %v5146 = vunpack.c.l.b16 %v3549
        %v5147 = vunpack.c.h.b16 %v3549
        %v5148 = vunpack.c.l.b16 %v3550
        %v5149 = vunpack.c.h.b16 %v3550
        %v5150 = vunpack.c.l.b16 %v3551
        %v5151 = vunpack.c.h.b16 %v3551
        %v5152 = vpack.c.b16 %v4580, %v4576
        %v5153 = vpack.c.b16 %v4581, %v4577
        %v5154 = vpack.c.b16 %v4582, %v4578
        %v5155 = vpack.c.b16 %v4583, %v4579
        %v5156 = vpack.c.b16 %v4588, %v4584
        %v5157 = vpack.c.b16 %v4589, %v4585
        %v5158 = vpack.c.b16 %v4590, %v4586
        %v5159 = vpack.c.b16 %v4591, %v4587
        %v5160 = vpack.c.b16 %v4596, %v4592
        %v5161 = vpack.c.b16 %v4597, %v4593
        %v5162 = vpack.c.b16 %v4598, %v4594
        %v5163 = vpack.c.b16 %v4599, %v4595
        %v5164 = vpack.c.b16 %v4604, %v4600
        %v5165 = vpack.c.b16 %v4605, %v4601
        %v5166 = vpack.c.b16 %v4606, %v4602
        %v5167 = vpack.c.b16 %v4607, %v4603
        %v5168 = vpack.c.b16 %v4612, %v4608
        %v5169 = vpack.c.b16 %v4613, %v4609
        %v5170 = vpack.c.b16 %v4614, %v4610
        %v5171 = vpack.c.b16 %v4615, %v4611
        %v5172 = vpack.c.b16 %v4620, %v4616
        %v5173 = vpack.c.b16 %v4621, %v4617
        %v5174 = vpack.c.b16 %v4622, %v4618
        %v5175 = vpack.c.b16 %v4623, %v4619
        %v5176 = vpack.c.b16 %v4628, %v4624
        %v5177 = vpack.c.b16 %v4629, %v4625
        %v5178 = vpack.c.b16 %v4630, %v4626
        %v5179 = vpack.c.b16 %v4631, %v4627
        %v5180 = vpack.c.b16 %v4636, %v4632
        %v5181 = vpack.c.b16 %v4637, %v4633
        %v5182 = vpack.c.b16 %v4638, %v4634
        %v5183 = vpack.c.b16 %v4639, %v4635
        %v5184 = vpack.c.b16 %v4644, %v4640
        %v5185 = vpack.c.b16 %v4645, %v4641
        %v5186 = vpack.c.b16 %v4646, %v4642
        %v5187 = vpack.c.b16 %v4647, %v4643
        %v5188 = vpack.c.b16 %v4652, %v4648
        %v5189 = vpack.c.b16 %v4653, %v4649
        %v5190 = vpack.c.b16 %v4654, %v4650
        %v5191 = vpack.c.b16 %v4655, %v4651
        %v5192 = vpack.c.b16 %v4660, %v4656
        %v5193 = vpack.c.b16 %v4661, %v4657
        %v5194 = vpack.c.b16 %v4662, %v4658
        %v5195 = vpack.c.b16 %v4663, %v4659
        %v5196 = vpack.c.b16 %v4668, %v4664
        %v5197 = vpack.c.b16 %v4669, %v4665
        %v5198 = vpack.c.b16 %v4670, %v4666
        %v5199 = vpack.c.b16 %v4671, %v4667
        %v5200 = vpack.c.b16 %v4676, %v4672
        %v5201 = vpack.c.b16 %v4677, %v4673
        %v5202 = vpack.c.b16 %v4678, %v4674
        %v5203 = vpack.c.b16 %v4679, %v4675
        %v5204 = vpack.c.b16 %v4684, %v4680
        %v5205 = vpack.c.b16 %v4685, %v4681
        %v5206 = vpack.c.b16 %v4686, %v4682
        %v5207 = vpack.c.b16 %v4687, %v4683
        %v5208 = vpack.c.b16 %v4692, %v4688
        %v5209 = vpack.c.b16 %v4693, %v4689
        %v5210 = vpack.c.b16 %v4694, %v4690
        %v5211 = vpack.c.b16 %v4695, %v4691
        %v5212 = vpack.c.b16 %v4700, %v4696
        %v5213 = vpack.c.b16 %v4701, %v4697
        %v5214 = vpack.c.b16 %v4702, %v4698
        %v5215 = vpack.c.b16 %v4703, %v4699
        %v5216 = vpack.c.b16 %v4708, %v4704
        %v5217 = vpack.c.b16 %v4709, %v4705
        %v5218 = vpack.c.b16 %v4710, %v4706
        %v5219 = vpack.c.b16 %v4711, %v4707
        %v5220 = vpack.c.b16 %v4716, %v4712
        %v5221 = vpack.c.b16 %v4717, %v4713
        %v5222 = vpack.c.b16 %v4718, %v4714
        %v5223 = vpack.c.b16 %v4719, %v4715
        %v5224 = vpack.c.b16 %v4724, %v4720
        %v5225 = vpack.c.b16 %v4725, %v4721
        %v5226 = vpack.c.b16 %v4726, %v4722
        %v5227 = vpack.c.b16 %v4727, %v4723
        %v5228 = vpack.c.b16 %v4732, %v4728
        %v5229 = vpack.c.b16 %v4733, %v4729
        %v5230 = vpack.c.b16 %v4734, %v4730
        %v5231 = vpack.c.b16 %v4735, %v4731
        %v5232 = vpack.c.b16 %v4740, %v4736
        %v5233 = vpack.c.b16 %v4741, %v4737
        %v5234 = vpack.c.b16 %v4742, %v4738
        %v5235 = vpack.c.b16 %v4743, %v4739
        %v5236 = vpack.c.b16 %v4748, %v4744
        %v5237 = vpack.c.b16 %v4749, %v4745
        %v5238 = vpack.c.b16 %v4750, %v4746
        %v5239 = vpack.c.b16 %v4751, %v4747
        %v5240 = vpack.c.b16 %v4756, %v4752
        %v5241 = vpack.c.b16 %v4757, %v4753
        %v5242 = vpack.c.b16 %v4758, %v4754
        %v5243 = vpack.c.b16 %v4759, %v4755
        %v5244 = vpack.c.b16 %v4764, %v4760
        %v5245 = vpack.c.b16 %v4765, %v4761
        %v5246 = vpack.c.b16 %v4766, %v4762
        %v5247 = vpack.c.b16 %v4767, %v4763
        %v5248 = vpack.c.b16 %v4772, %v4768
        %v5249 = vpack.c.b16 %v4773, %v4769
        %v5250 = vpack.c.b16 %v4774, %v4770
        %v5251 = vpack.c.b16 %v4775, %v4771
        %v5252 = vpack.c.b16 %v4780, %v4776
        %v5253 = vpack.c.b16 %v4781, %v4777
        %v5254 = vpack.c.b16 %v4782, %v4778
        %v5255 = vpack.c.b16 %v4783, %v4779
        %v5256 = vpack.c.b16 %v4788, %v4784
        %v5257 = vpack.c.b16 %v4789, %v4785
        %v5258 = vpack.c.b16 %v4790, %v4786
        %v5259 = vpack.c.b16 %v4791, %v4787
        %v5260 = vpack.c.b16 %v4796, %v4792
        %v5261 = vpack.c.b16 %v4797, %v4793
        %v5262 = vpack.c.b16 %v4798, %v4794
        %v5263 = vpack.c.b16 %v4799, %v4795
        %v5264 = vpack.c.b16 %v4804, %v4800
        %v5265 = vpack.c.b16 %v4805, %v4801
        %v5266 = vpack.c.b16 %v4806, %v4802
        %v5267 = vpack.c.b16 %v4807, %v4803
        %v5268 = vpack.c.b16 %v4812, %v4808
        %v5269 = vpack.c.b16 %v4813, %v4809
        %v5270 = vpack.c.b16 %v4814, %v4810
        %v5271 = vpack.c.b16 %v4815, %v4811
        %v5272 = vpack.c.b16 %v4820, %v4816
        %v5273 = vpack.c.b16 %v4821, %v4817
        %v5274 = vpack.c.b16 %v4822, %v4818
        %v5275 = vpack.c.b16 %v4823, %v4819
        %v5276 = vpack.c.b16 %v4828, %v4824
        %v5277 = vpack.c.b16 %v4829, %v4825
        %v5278 = vpack.c.b16 %v4830, %v4826
        %v5279 = vpack.c.b16 %v4831, %v4827
        %v5280 = vpack.c.b16 %v4836, %v4832
        %v5281 = vpack.c.b16 %v4837, %v4833
        %v5282 = vpack.c.b16 %v4838, %v4834
        %v5283 = vpack.c.b16 %v4839, %v4835
        %v5284 = vpack.c.b16 %v4844, %v4840
        %v5285 = vpack.c.b16 %v4845, %v4841
        %v5286 = vpack.c.b16 %v4846, %v4842
        %v5287 = vpack.c.b16 %v4847, %v4843
        %v5288 = vpack.c.b16 %v4852, %v4848
        %v5289 = vpack.c.b16 %v4853, %v4849
        %v5290 = vpack.c.b16 %v4854, %v4850
        %v5291 = vpack.c.b16 %v4855, %v4851
        %v5292 = vpack.c.b16 %v4860, %v4856
        %v5293 = vpack.c.b16 %v4861, %v4857
        %v5294 = vpack.c.b16 %v4862, %v4858
        %v5295 = vpack.c.b16 %v4863, %v4859
        %v5296 = vpack.c.b16 %v4868, %v4864
        %v5297 = vpack.c.b16 %v4869, %v4865
        %v5298 = vpack.c.b16 %v4870, %v4866
        %v5299 = vpack.c.b16 %v4871, %v4867
        %v5300 = vpack.c.b16 %v4876, %v4872
        %v5301 = vpack.c.b16 %v4877, %v4873
        %v5302 = vpack.c.b16 %v4878, %v4874
        %v5303 = vpack.c.b16 %v4879, %v4875
        %v5304 = vpack.c.b16 %v4884, %v4880
        %v5305 = vpack.c.b16 %v4885, %v4881
        %v5306 = vpack.c.b16 %v4886, %v4882
        %v5307 = vpack.c.b16 %v4887, %v4883
        %v5308 = vpack.c.b16 %v4892, %v4888
        %v5309 = vpack.c.b16 %v4893, %v4889
        %v5310 = vpack.c.b16 %v4894, %v4890
        %v5311 = vpack.c.b16 %v4895, %v4891
        %v5312 = vpack.c.b16 %v4900, %v4896
        %v5313 = vpack.c.b16 %v4901, %v4897
        %v5314 = vpack.c.b16 %v4902, %v4898
        %v5315 = vpack.c.b16 %v4903, %v4899
        %v5316 = vpack.c.b16 %v4908, %v4904
        %v5317 = vpack.c.b16 %v4909, %v4905
        %v5318 = vpack.c.b16 %v4910, %v4906
        %v5319 = vpack.c.b16 %v4911, %v4907
        %v5320 = vpack.c.b16 %v4916, %v4912
        %v5321 = vpack.c.b16 %v4917, %v4913
        %v5322 = vpack.c.b16 %v4918, %v4914
        %v5323 = vpack.c.b16 %v4919, %v4915
        %v5324 = vpack.c.b16 %v4924, %v4920
        %v5325 = vpack.c.b16 %v4925, %v4921
        %v5326 = vpack.c.b16 %v4926, %v4922
        %v5327 = vpack.c.b16 %v4927, %v4923
        %v5328 = vpack.c.b16 %v4932, %v4928
        %v5329 = vpack.c.b16 %v4933, %v4929
        %v5330 = vpack.c.b16 %v4934, %v4930
        %v5331 = vpack.c.b16 %v4935, %v4931
        %v5332 = vpack.c.b16 %v4940, %v4936
        %v5333 = vpack.c.b16 %v4941, %v4937
        %v5334 = vpack.c.b16 %v4942, %v4938
        %v5335 = vpack.c.b16 %v4943, %v4939
        %v5336 = vpack.c.b16 %v4948, %v4944
        %v5337 = vpack.c.b16 %v4949, %v4945
        %v5338 = vpack.c.b16 %v4950, %v4946
        %v5339 = vpack.c.b16 %v4951, %v4947
        %v5340 = vpack.c.b16 %v4956, %v4952
        %v5341 = vpack.c.b16 %v4957, %v4953
        %v5342 = vpack.c.b16 %v4958, %v4954
        %v5343 = vpack.c.b16 %v4959, %v4955
        %v5344 = vpack.c.b16 %v4964, %v4960
        %v5345 = vpack.c.b16 %v4965, %v4961
        %v5346 = vpack.c.b16 %v4966, %v4962
        %v5347 = vpack.c.b16 %v4967, %v4963
        %v5348 = vpack.c.b16 %v4972, %v4968
        %v5349 = vpack.c.b16 %v4973, %v4969
        %v5350 = vpack.c.b16 %v4974, %v4970
        %v5351 = vpack.c.b16 %v4975, %v4971
        %v5352 = vpack.c.b16 %v4980, %v4976
        %v5353 = vpack.c.b16 %v4981, %v4977
        %v5354 = vpack.c.b16 %v4982, %v4978
        %v5355 = vpack.c.b16 %v4983, %v4979
        %v5356 = vpack.c.b16 %v4988, %v4984
        %v5357 = vpack.c.b16 %v4989, %v4985
        %v5358 = vpack.c.b16 %v4990, %v4986
        %v5359 = vpack.c.b16 %v4991, %v4987
        %v5360 = vpack.c.b16 %v4996, %v4992
        %v5361 = vpack.c.b16 %v4997, %v4993
        %v5362 = vpack.c.b16 %v4998, %v4994
        %v5363 = vpack.c.b16 %v4999, %v4995
        %v5364 = vpack.c.b16 %v5004, %v5000
        %v5365 = vpack.c.b16 %v5005, %v5001
        %v5366 = vpack.c.b16 %v5006, %v5002
        %v5367 = vpack.c.b16 %v5007, %v5003
        %v5368 = vpack.c.b16 %v5012, %v5008
        %v5369 = vpack.c.b16 %v5013, %v5009
        %v5370 = vpack.c.b16 %v5014, %v5010
        %v5371 = vpack.c.b16 %v5015, %v5011
        %v5372 = vpack.c.b16 %v5020, %v5016
        %v5373 = vpack.c.b16 %v5021, %v5017
        %v5374 = vpack.c.b16 %v5022, %v5018
        %v5375 = vpack.c.b16 %v5023, %v5019
        %v5376 = vpack.c.b16 %v5028, %v5024
        %v5377 = vpack.c.b16 %v5029, %v5025
        %v5378 = vpack.c.b16 %v5030, %v5026
        %v5379 = vpack.c.b16 %v5031, %v5027
        %v5380 = vpack.c.b16 %v5036, %v5032
        %v5381 = vpack.c.b16 %v5037, %v5033
        %v5382 = vpack.c.b16 %v5038, %v5034
        %v5383 = vpack.c.b16 %v5039, %v5035
        %v5384 = vpack.c.b16 %v5044, %v5040
        %v5385 = vpack.c.b16 %v5045, %v5041
        %v5386 = vpack.c.b16 %v5046, %v5042
        %v5387 = vpack.c.b16 %v5047, %v5043
        %v5388 = vpack.c.b16 %v5052, %v5048
        %v5389 = vpack.c.b16 %v5053, %v5049
        %v5390 = vpack.c.b16 %v5054, %v5050
        %v5391 = vpack.c.b16 %v5055, %v5051
        %v5392 = vpack.c.b16 %v5060, %v5056
        %v5393 = vpack.c.b16 %v5061, %v5057
        %v5394 = vpack.c.b16 %v5062, %v5058
        %v5395 = vpack.c.b16 %v5063, %v5059
        %v5396 = vpack.c.b16 %v5068, %v5064
        %v5397 = vpack.c.b16 %v5069, %v5065
        %v5398 = vpack.c.b16 %v5070, %v5066
        %v5399 = vpack.c.b16 %v5071, %v5067
        %v5400 = vpack.c.b16 %v5076, %v5072
        %v5401 = vpack.c.b16 %v5077, %v5073
        %v5402 = vpack.c.b16 %v5078, %v5074
        %v5403 = vpack.c.b16 %v5079, %v5075
        %v5404 = vpack.c.b16 %v5084, %v5080
        %v5405 = vpack.c.b16 %v5085, %v5081
        %v5406 = vpack.c.b16 %v5086, %v5082
        %v5407 = vpack.c.b16 %v5087, %v5083
        %v5408 = vpack.c.b16 %v5092, %v5088
        %v5409 = vpack.c.b16 %v5093, %v5089
        %v5410 = vpack.c.b16 %v5094, %v5090
        %v5411 = vpack.c.b16 %v5095, %v5091
        %v5412 = vpack.c.b16 %v5100, %v5096
        %v5413 = vpack.c.b16 %v5101, %v5097
        %v5414 = vpack.c.b16 %v5102, %v5098
        %v5415 = vpack.c.b16 %v5103, %v5099
        %v5416 = vpack.c.b16 %v5108, %v5104
        %v5417 = vpack.c.b16 %v5109, %v5105
        %v5418 = vpack.c.b16 %v5110, %v5106
        %v5419 = vpack.c.b16 %v5111, %v5107
        %v5420 = vpack.c.b16 %v5116, %v5112
        %v5421 = vpack.c.b16 %v5117, %v5113
        %v5422 = vpack.c.b16 %v5118, %v5114
        %v5423 = vpack.c.b16 %v5119, %v5115
        %v5424 = vpack.c.b16 %v5124, %v5120
        %v5425 = vpack.c.b16 %v5125, %v5121
        %v5426 = vpack.c.b16 %v5126, %v5122
        %v5427 = vpack.c.b16 %v5127, %v5123
        %v5428 = vpack.c.b16 %v5132, %v5128
        %v5429 = vpack.c.b16 %v5133, %v5129
        %v5430 = vpack.c.b16 %v5134, %v5130
        %v5431 = vpack.c.b16 %v5135, %v5131
        %v5432 = vpack.c.b16 %v5140, %v5136
        %v5433 = vpack.c.b16 %v5141, %v5137
        %v5434 = vpack.c.b16 %v5142, %v5138
        %v5435 = vpack.c.b16 %v5143, %v5139
        %v5436 = vpack.c.b16 %v5148, %v5144
        %v5437 = vpack.c.b16 %v5149, %v5145
        %v5438 = vpack.c.b16 %v5150, %v5146
        %v5439 = vpack.c.b16 %v5151, %v5147
        %5728 = vmatpush.bf16.msra.mxu0 %v5180
        %5729 = vmatpush.bf16.msra.mxu0 %v5176
        %5730 = vmatpush.bf16.msra.mxu0 %v5172
        %5731 = vmatpush.bf16.msra.mxu0 %v5168
        %5732 = vmatpush.bf16.msra.mxu0 %v5164
        %5733 = vmatpush.bf16.msra.mxu0 %v5160
        %5734 = vmatpush.bf16.msra.mxu0 %v5156
        %5735 = vmatpush.bf16.msra.mxu0 %v5152
        %5736 = vmatmul.bf16.gmra.mxu0 %v4000
        %v5737 = vpop.f32.mrf.mxu0
        %v5738 = vadd.f32 0.0, %v5737
        %v5739 = vpop.f32.mrf.mxu0
        %v5740 = vadd.f32 0.0, %v5739
        %5741 = vmatmul.bf16.gmra.mxu0 %v4009
        %v5742 = vpop.f32.mrf.mxu0
        %v5743 = vadd.f32 0.0, %v5742
        %v5744 = vpop.f32.mrf.mxu0
        %v5745 = vadd.f32 0.0, %v5744
        %5746 = vmatmul.bf16.gmra.mxu0 %v4018
        %v5747 = vpop.f32.mrf.mxu0
        %v5748 = vadd.f32 0.0, %v5747
        %v5749 = vpop.f32.mrf.mxu0
        %v5750 = vadd.f32 0.0, %v5749
        %5751 = vmatmul.bf16.gmra.mxu0 %v4027
        %v5752 = vpop.f32.mrf.mxu0
        %v5753 = vadd.f32 0.0, %v5752
        %v5754 = vpop.f32.mrf.mxu0
        %v5755 = vadd.f32 0.0, %v5754
        %5756 = vmatmul.bf16.gmra.mxu0 %v4036
        %v5757 = vpop.f32.mrf.mxu0
        %v5758 = vadd.f32 0.0, %v5757
        %v5759 = vpop.f32.mrf.mxu0
        %v5760 = vadd.f32 0.0, %v5759
        %5761 = vmatmul.bf16.gmra.mxu0 %v4045
        %v5762 = vpop.f32.mrf.mxu0
        %v5763 = vadd.f32 0.0, %v5762
        %v5764 = vpop.f32.mrf.mxu0
        %v5765 = vadd.f32 0.0, %v5764
        %5766 = vmatmul.bf16.gmra.mxu0 %v4054
        %v5767 = vpop.f32.mrf.mxu0
        %v5768 = vadd.f32 0.0, %v5767
        %v5769 = vpop.f32.mrf.mxu0
        %v5770 = vadd.f32 0.0, %v5769
        %5771 = vmatmul.bf16.gmra.mxu0 %v4063
        %v5772 = vpop.f32.mrf.mxu0
        %v5773 = vadd.f32 0.0, %v5772
        %v5774 = vpop.f32.mrf.mxu0
        %v5775 = vadd.f32 0.0, %v5774
        %5776 = vmatmul.bf16.gmra.mxu0 %v4072
        %v5777 = vpop.f32.mrf.mxu0
        %v5778 = vadd.f32 0.0, %v5777
        %v5779 = vpop.f32.mrf.mxu0
        %v5780 = vadd.f32 0.0, %v5779
        %5781 = vmatmul.bf16.gmra.mxu0 %v4081
        %v5782 = vpop.f32.mrf.mxu0
        %v5783 = vadd.f32 0.0, %v5782
        %v5784 = vpop.f32.mrf.mxu0
        %v5785 = vadd.f32 0.0, %v5784
        %5786 = vmatmul.bf16.gmra.mxu0 %v4090
        %v5787 = vpop.f32.mrf.mxu0
        %v5788 = vadd.f32 0.0, %v5787
        %v5789 = vpop.f32.mrf.mxu0
        %v5790 = vadd.f32 0.0, %v5789
        %5791 = vmatmul.bf16.gmra.mxu0 %v4099
        %v5792 = vpop.f32.mrf.mxu0
        %v5793 = vadd.f32 0.0, %v5792
        %v5794 = vpop.f32.mrf.mxu0
        %v5795 = vadd.f32 0.0, %v5794
        %5796 = vmatmul.bf16.gmra.mxu0 %v4108
        %v5797 = vpop.f32.mrf.mxu0
        %v5798 = vadd.f32 0.0, %v5797
        %v5799 = vpop.f32.mrf.mxu0
        %v5800 = vadd.f32 0.0, %v5799
        %5801 = vmatmul.bf16.gmra.mxu0 %v4117
        %v5802 = vpop.f32.mrf.mxu0
        %v5803 = vadd.f32 0.0, %v5802
        %v5804 = vpop.f32.mrf.mxu0
        %v5805 = vadd.f32 0.0, %v5804
        %5806 = vmatmul.bf16.gmra.mxu0 %v4126
        %v5807 = vpop.f32.mrf.mxu0
        %v5808 = vadd.f32 0.0, %v5807
        %v5809 = vpop.f32.mrf.mxu0
        %v5810 = vadd.f32 0.0, %v5809
        %5811 = vmatmul.bf16.gmra.mxu0 %v4135
        %v5812 = vpop.f32.mrf.mxu0
        %v5813 = vadd.f32 0.0, %v5812
        %v5814 = vpop.f32.mrf.mxu0
        %v5815 = vadd.f32 0.0, %v5814
        %5816 = vdwg.mxu0
        %5817 = vmatpush.bf16.msra.mxu0 %v5212
        %5818 = vmatpush.bf16.msra.mxu0 %v5208
        %5819 = vmatpush.bf16.msra.mxu0 %v5204
        %5820 = vmatpush.bf16.msra.mxu0 %v5200
        %5821 = vmatpush.bf16.msra.mxu0 %v5196
        %5822 = vmatpush.bf16.msra.mxu0 %v5192
        %5823 = vmatpush.bf16.msra.mxu0 %v5188
        %5824 = vmatpush.bf16.msra.mxu0 %v5184
        %5825 = vmatmul.bf16.gmra.mxu0 %v4001
        %v5826 = vpop.f32.mrf.mxu0
        %v5827 = vadd.f32 %v5738, %v5826
        %v5828 = vpop.f32.mrf.mxu0
        %v5829 = vadd.f32 %v5740, %v5828
        %5830 = vmatmul.bf16.gmra.mxu0 %v4010
        %v5831 = vpop.f32.mrf.mxu0
        %v5832 = vadd.f32 %v5743, %v5831
        %v5833 = vpop.f32.mrf.mxu0
        %v5834 = vadd.f32 %v5745, %v5833
        %5835 = vmatmul.bf16.gmra.mxu0 %v4019
        %v5836 = vpop.f32.mrf.mxu0
        %v5837 = vadd.f32 %v5748, %v5836
        %v5838 = vpop.f32.mrf.mxu0
        %v5839 = vadd.f32 %v5750, %v5838
        %5840 = vmatmul.bf16.gmra.mxu0 %v4028
        %v5841 = vpop.f32.mrf.mxu0
        %v5842 = vadd.f32 %v5753, %v5841
        %v5843 = vpop.f32.mrf.mxu0
        %v5844 = vadd.f32 %v5755, %v5843
        %5845 = vmatmul.bf16.gmra.mxu0 %v4037
        %v5846 = vpop.f32.mrf.mxu0
        %v5847 = vadd.f32 %v5758, %v5846
        %v5848 = vpop.f32.mrf.mxu0
        %v5849 = vadd.f32 %v5760, %v5848
        %5850 = vmatmul.bf16.gmra.mxu0 %v4046
        %v5851 = vpop.f32.mrf.mxu0
        %v5852 = vadd.f32 %v5763, %v5851
        %v5853 = vpop.f32.mrf.mxu0
        %v5854 = vadd.f32 %v5765, %v5853
        %5855 = vmatmul.bf16.gmra.mxu0 %v4055
        %v5856 = vpop.f32.mrf.mxu0
        %v5857 = vadd.f32 %v5768, %v5856
        %v5858 = vpop.f32.mrf.mxu0
        %v5859 = vadd.f32 %v5770, %v5858
        %5860 = vmatmul.bf16.gmra.mxu0 %v4064
        %v5861 = vpop.f32.mrf.mxu0
        %v5862 = vadd.f32 %v5773, %v5861
        %v5863 = vpop.f32.mrf.mxu0
        %v5864 = vadd.f32 %v5775, %v5863
        %5865 = vmatmul.bf16.gmra.mxu0 %v4073
        %v5866 = vpop.f32.mrf.mxu0
        %v5867 = vadd.f32 %v5778, %v5866
        %v5868 = vpop.f32.mrf.mxu0
        %v5869 = vadd.f32 %v5780, %v5868
        %5870 = vmatmul.bf16.gmra.mxu0 %v4082
        %v5871 = vpop.f32.mrf.mxu0
        %v5872 = vadd.f32 %v5783, %v5871
        %v5873 = vpop.f32.mrf.mxu0
        %v5874 = vadd.f32 %v5785, %v5873
        %5875 = vmatmul.bf16.gmra.mxu0 %v4091
        %v5876 = vpop.f32.mrf.mxu0
        %v5877 = vadd.f32 %v5788, %v5876
        %v5878 = vpop.f32.mrf.mxu0
        %v5879 = vadd.f32 %v5790, %v5878
        %5880 = vmatmul.bf16.gmra.mxu0 %v4100
        %v5881 = vpop.f32.mrf.mxu0
        %v5882 = vadd.f32 %v5793, %v5881
        %v5883 = vpop.f32.mrf.mxu0
        %v5884 = vadd.f32 %v5795, %v5883
        %5885 = vmatmul.bf16.gmra.mxu0 %v4109
        %v5886 = vpop.f32.mrf.mxu0
        %v5887 = vadd.f32 %v5798, %v5886
        %v5888 = vpop.f32.mrf.mxu0
        %v5889 = vadd.f32 %v5800, %v5888
        %5890 = vmatmul.bf16.gmra.mxu0 %v4118
        %v5891 = vpop.f32.mrf.mxu0
        %v5892 = vadd.f32 %v5803, %v5891
        %v5893 = vpop.f32.mrf.mxu0
        %v5894 = vadd.f32 %v5805, %v5893
        %5895 = vmatmul.bf16.gmra.mxu0 %v4127
        %v5896 = vpop.f32.mrf.mxu0
        %v5897 = vadd.f32 %v5808, %v5896
        %v5898 = vpop.f32.mrf.mxu0
        %v5899 = vadd.f32 %v5810, %v5898
        %5900 = vmatmul.bf16.gmra.mxu0 %v4136
        %v5901 = vpop.f32.mrf.mxu0
        %v5902 = vadd.f32 %v5813, %v5901
        %v5903 = vpop.f32.mrf.mxu0
        %v5904 = vadd.f32 %v5815, %v5903
        %5905 = vdwg.mxu0
        %5906 = vmatpush.bf16.msra.mxu0 %v5244
        %5907 = vmatpush.bf16.msra.mxu0 %v5240
        %5908 = vmatpush.bf16.msra.mxu0 %v5236
        %5909 = vmatpush.bf16.msra.mxu0 %v5232
        %5910 = vmatpush.bf16.msra.mxu0 %v5228
        %5911 = vmatpush.bf16.msra.mxu0 %v5224
        %5912 = vmatpush.bf16.msra.mxu0 %v5220
        %5913 = vmatpush.bf16.msra.mxu0 %v5216
        %5914 = vmatmul.bf16.gmra.mxu0 %v4002
        %v5915 = vpop.f32.mrf.mxu0
        %v5916 = vadd.f32 %v5827, %v5915
        %v5917 = vpop.f32.mrf.mxu0
        %v5918 = vadd.f32 %v5829, %v5917
        %5919 = vmatmul.bf16.gmra.mxu0 %v4011
        %v5920 = vpop.f32.mrf.mxu0
        %v5921 = vadd.f32 %v5832, %v5920
        %v5922 = vpop.f32.mrf.mxu0
        %v5923 = vadd.f32 %v5834, %v5922
        %5924 = vmatmul.bf16.gmra.mxu0 %v4020
        %v5925 = vpop.f32.mrf.mxu0
        %v5926 = vadd.f32 %v5837, %v5925
        %v5927 = vpop.f32.mrf.mxu0
        %v5928 = vadd.f32 %v5839, %v5927
        %5929 = vmatmul.bf16.gmra.mxu0 %v4029
        %v5930 = vpop.f32.mrf.mxu0
        %v5931 = vadd.f32 %v5842, %v5930
        %v5932 = vpop.f32.mrf.mxu0
        %v5933 = vadd.f32 %v5844, %v5932
        %5934 = vmatmul.bf16.gmra.mxu0 %v4038
        %v5935 = vpop.f32.mrf.mxu0
        %v5936 = vadd.f32 %v5847, %v5935
        %v5937 = vpop.f32.mrf.mxu0
        %v5938 = vadd.f32 %v5849, %v5937
        %5939 = vmatmul.bf16.gmra.mxu0 %v4047
        %v5940 = vpop.f32.mrf.mxu0
        %v5941 = vadd.f32 %v5852, %v5940
        %v5942 = vpop.f32.mrf.mxu0
        %v5943 = vadd.f32 %v5854, %v5942
        %5944 = vmatmul.bf16.gmra.mxu0 %v4056
        %v5945 = vpop.f32.mrf.mxu0
        %v5946 = vadd.f32 %v5857, %v5945
        %v5947 = vpop.f32.mrf.mxu0
        %v5948 = vadd.f32 %v5859, %v5947
        %5949 = vmatmul.bf16.gmra.mxu0 %v4065
        %v5950 = vpop.f32.mrf.mxu0
        %v5951 = vadd.f32 %v5862, %v5950
        %v5952 = vpop.f32.mrf.mxu0
        %v5953 = vadd.f32 %v5864, %v5952
        %5954 = vmatmul.bf16.gmra.mxu0 %v4074
        %v5955 = vpop.f32.mrf.mxu0
        %v5956 = vadd.f32 %v5867, %v5955
        %v5957 = vpop.f32.mrf.mxu0
        %v5958 = vadd.f32 %v5869, %v5957
        %5959 = vmatmul.bf16.gmra.mxu0 %v4083
        %v5960 = vpop.f32.mrf.mxu0
        %v5961 = vadd.f32 %v5872, %v5960
        %v5962 = vpop.f32.mrf.mxu0
        %v5963 = vadd.f32 %v5874, %v5962
        %5964 = vmatmul.bf16.gmra.mxu0 %v4092
        %v5965 = vpop.f32.mrf.mxu0
        %v5966 = vadd.f32 %v5877, %v5965
        %v5967 = vpop.f32.mrf.mxu0
        %v5968 = vadd.f32 %v5879, %v5967
        %5969 = vmatmul.bf16.gmra.mxu0 %v4101
        %v5970 = vpop.f32.mrf.mxu0
        %v5971 = vadd.f32 %v5882, %v5970
        %v5972 = vpop.f32.mrf.mxu0
        %v5973 = vadd.f32 %v5884, %v5972
        %5974 = vmatmul.bf16.gmra.mxu0 %v4110
        %v5975 = vpop.f32.mrf.mxu0
        %v5976 = vadd.f32 %v5887, %v5975
        %v5977 = vpop.f32.mrf.mxu0
        %v5978 = vadd.f32 %v5889, %v5977
        %5979 = vmatmul.bf16.gmra.mxu0 %v4119
        %v5980 = vpop.f32.mrf.mxu0
        %v5981 = vadd.f32 %v5892, %v5980
        %v5982 = vpop.f32.mrf.mxu0
        %v5983 = vadd.f32 %v5894, %v5982
        %5984 = vmatmul.bf16.gmra.mxu0 %v4128
        %v5985 = vpop.f32.mrf.mxu0
        %v5986 = vadd.f32 %v5897, %v5985
        %v5987 = vpop.f32.mrf.mxu0
        %v5988 = vadd.f32 %v5899, %v5987
        %5989 = vmatmul.bf16.gmra.mxu0 %v4137
        %v5990 = vpop.f32.mrf.mxu0
        %v5991 = vadd.f32 %v5902, %v5990
        %v5992 = vpop.f32.mrf.mxu0
        %v5993 = vadd.f32 %v5904, %v5992
        %5994 = vdwg.mxu0
        %5995 = vmatpush.bf16.msra.mxu0 %v5276
        %5996 = vmatpush.bf16.msra.mxu0 %v5272
        %5997 = vmatpush.bf16.msra.mxu0 %v5268
        %5998 = vmatpush.bf16.msra.mxu0 %v5264
        %5999 = vmatpush.bf16.msra.mxu0 %v5260
        %6000 = vmatpush.bf16.msra.mxu0 %v5256
        %6001 = vmatpush.bf16.msra.mxu0 %v5252
        %6002 = vmatpush.bf16.msra.mxu0 %v5248
        %6003 = vmatmul.bf16.gmra.mxu0 %v4003
        %v6004 = vpop.f32.mrf.mxu0
        %v6005 = vadd.f32 %v5916, %v6004
        %v6006 = vpop.f32.mrf.mxu0
        %v6007 = vadd.f32 %v5918, %v6006
        %6008 = vmatmul.bf16.gmra.mxu0 %v4012
        %v6009 = vpop.f32.mrf.mxu0
        %v6010 = vadd.f32 %v5921, %v6009
        %v6011 = vpop.f32.mrf.mxu0
        %v6012 = vadd.f32 %v5923, %v6011
        %6013 = vmatmul.bf16.gmra.mxu0 %v4021
        %v6014 = vpop.f32.mrf.mxu0
        %v6015 = vadd.f32 %v5926, %v6014
        %v6016 = vpop.f32.mrf.mxu0
        %v6017 = vadd.f32 %v5928, %v6016
        %6018 = vmatmul.bf16.gmra.mxu0 %v4030
        %v6019 = vpop.f32.mrf.mxu0
        %v6020 = vadd.f32 %v5931, %v6019
        %v6021 = vpop.f32.mrf.mxu0
        %v6022 = vadd.f32 %v5933, %v6021
        %6023 = vmatmul.bf16.gmra.mxu0 %v4039
        %v6024 = vpop.f32.mrf.mxu0
        %v6025 = vadd.f32 %v5936, %v6024
        %v6026 = vpop.f32.mrf.mxu0
        %v6027 = vadd.f32 %v5938, %v6026
        %6028 = vmatmul.bf16.gmra.mxu0 %v4048
        %v6029 = vpop.f32.mrf.mxu0
        %v6030 = vadd.f32 %v5941, %v6029
        %v6031 = vpop.f32.mrf.mxu0
        %v6032 = vadd.f32 %v5943, %v6031
        %6033 = vmatmul.bf16.gmra.mxu0 %v4057
        %v6034 = vpop.f32.mrf.mxu0
        %v6035 = vadd.f32 %v5946, %v6034
        %v6036 = vpop.f32.mrf.mxu0
        %v6037 = vadd.f32 %v5948, %v6036
        %6038 = vmatmul.bf16.gmra.mxu0 %v4066
        %v6039 = vpop.f32.mrf.mxu0
        %v6040 = vadd.f32 %v5951, %v6039
        %v6041 = vpop.f32.mrf.mxu0
        %v6042 = vadd.f32 %v5953, %v6041
        %6043 = vmatmul.bf16.gmra.mxu0 %v4075
        %v6044 = vpop.f32.mrf.mxu0
        %v6045 = vadd.f32 %v5956, %v6044
        %v6046 = vpop.f32.mrf.mxu0
        %v6047 = vadd.f32 %v5958, %v6046
        %6048 = vmatmul.bf16.gmra.mxu0 %v4084
        %v6049 = vpop.f32.mrf.mxu0
        %v6050 = vadd.f32 %v5961, %v6049
        %v6051 = vpop.f32.mrf.mxu0
        %v6052 = vadd.f32 %v5963, %v6051
        %6053 = vmatmul.bf16.gmra.mxu0 %v4093
        %v6054 = vpop.f32.mrf.mxu0
        %v6055 = vadd.f32 %v5966, %v6054
        %v6056 = vpop.f32.mrf.mxu0
        %v6057 = vadd.f32 %v5968, %v6056
        %6058 = vmatmul.bf16.gmra.mxu0 %v4102
        %v6059 = vpop.f32.mrf.mxu0
        %v6060 = vadd.f32 %v5971, %v6059
        %v6061 = vpop.f32.mrf.mxu0
        %v6062 = vadd.f32 %v5973, %v6061
        %6063 = vmatmul.bf16.gmra.mxu0 %v4111
        %v6064 = vpop.f32.mrf.mxu0
        %v6065 = vadd.f32 %v5976, %v6064
        %v6066 = vpop.f32.mrf.mxu0
        %v6067 = vadd.f32 %v5978, %v6066
        %6068 = vmatmul.bf16.gmra.mxu0 %v4120
        %v6069 = vpop.f32.mrf.mxu0
        %v6070 = vadd.f32 %v5981, %v6069
        %v6071 = vpop.f32.mrf.mxu0
        %v6072 = vadd.f32 %v5983, %v6071
        %6073 = vmatmul.bf16.gmra.mxu0 %v4129
        %v6074 = vpop.f32.mrf.mxu0
        %v6075 = vadd.f32 %v5986, %v6074
        %v6076 = vpop.f32.mrf.mxu0
        %v6077 = vadd.f32 %v5988, %v6076
        %6078 = vmatmul.bf16.gmra.mxu0 %v4138
        %v6079 = vpop.f32.mrf.mxu0
        %v6080 = vadd.f32 %v5991, %v6079
        %v6081 = vpop.f32.mrf.mxu0
        %v6082 = vadd.f32 %v5993, %v6081
        %6083 = vdwg.mxu0
        %6084 = vmatpush.bf16.msra.mxu0 %v5308
        %6085 = vmatpush.bf16.msra.mxu0 %v5304
        %6086 = vmatpush.bf16.msra.mxu0 %v5300
        %6087 = vmatpush.bf16.msra.mxu0 %v5296
        %6088 = vmatpush.bf16.msra.mxu0 %v5292
        %6089 = vmatpush.bf16.msra.mxu0 %v5288
        %6090 = vmatpush.bf16.msra.mxu0 %v5284
        %6091 = vmatpush.bf16.msra.mxu0 %v5280
        %6092 = vmatmul.bf16.gmra.mxu0 %v4004
        %v6093 = vpop.f32.mrf.mxu0
        %v6094 = vadd.f32 %v6005, %v6093
        %v6095 = vpop.f32.mrf.mxu0
        %v6096 = vadd.f32 %v6007, %v6095
        %6097 = vmatmul.bf16.gmra.mxu0 %v4013
        %v6098 = vpop.f32.mrf.mxu0
        %v6099 = vadd.f32 %v6010, %v6098
        %v6100 = vpop.f32.mrf.mxu0
        %v6101 = vadd.f32 %v6012, %v6100
        %6102 = vmatmul.bf16.gmra.mxu0 %v4022
        %v6103 = vpop.f32.mrf.mxu0
        %v6104 = vadd.f32 %v6015, %v6103
        %v6105 = vpop.f32.mrf.mxu0
        %v6106 = vadd.f32 %v6017, %v6105
        %6107 = vmatmul.bf16.gmra.mxu0 %v4031
        %v6108 = vpop.f32.mrf.mxu0
        %v6109 = vadd.f32 %v6020, %v6108
        %v6110 = vpop.f32.mrf.mxu0
        %v6111 = vadd.f32 %v6022, %v6110
        %6112 = vmatmul.bf16.gmra.mxu0 %v4040
        %v6113 = vpop.f32.mrf.mxu0
        %v6114 = vadd.f32 %v6025, %v6113
        %v6115 = vpop.f32.mrf.mxu0
        %v6116 = vadd.f32 %v6027, %v6115
        %6117 = vmatmul.bf16.gmra.mxu0 %v4049
        %v6118 = vpop.f32.mrf.mxu0
        %v6119 = vadd.f32 %v6030, %v6118
        %v6120 = vpop.f32.mrf.mxu0
        %v6121 = vadd.f32 %v6032, %v6120
        %6122 = vmatmul.bf16.gmra.mxu0 %v4058
        %v6123 = vpop.f32.mrf.mxu0
        %v6124 = vadd.f32 %v6035, %v6123
        %v6125 = vpop.f32.mrf.mxu0
        %v6126 = vadd.f32 %v6037, %v6125
        %6127 = vmatmul.bf16.gmra.mxu0 %v4067
        %v6128 = vpop.f32.mrf.mxu0
        %v6129 = vadd.f32 %v6040, %v6128
        %v6130 = vpop.f32.mrf.mxu0
        %v6131 = vadd.f32 %v6042, %v6130
        %6132 = vmatmul.bf16.gmra.mxu0 %v4076
        %v6133 = vpop.f32.mrf.mxu0
        %v6134 = vadd.f32 %v6045, %v6133
        %v6135 = vpop.f32.mrf.mxu0
        %v6136 = vadd.f32 %v6047, %v6135
        %6137 = vmatmul.bf16.gmra.mxu0 %v4085
        %v6138 = vpop.f32.mrf.mxu0
        %v6139 = vadd.f32 %v6050, %v6138
        %v6140 = vpop.f32.mrf.mxu0
        %v6141 = vadd.f32 %v6052, %v6140
        %6142 = vmatmul.bf16.gmra.mxu0 %v4094
        %v6143 = vpop.f32.mrf.mxu0
        %v6144 = vadd.f32 %v6055, %v6143
        %v6145 = vpop.f32.mrf.mxu0
        %v6146 = vadd.f32 %v6057, %v6145
        %6147 = vmatmul.bf16.gmra.mxu0 %v4103
        %v6148 = vpop.f32.mrf.mxu0
        %v6149 = vadd.f32 %v6060, %v6148
        %v6150 = vpop.f32.mrf.mxu0
        %v6151 = vadd.f32 %v6062, %v6150
        %6152 = vmatmul.bf16.gmra.mxu0 %v4112
        %v6153 = vpop.f32.mrf.mxu0
        %v6154 = vadd.f32 %v6065, %v6153
        %v6155 = vpop.f32.mrf.mxu0
        %v6156 = vadd.f32 %v6067, %v6155
        %6157 = vmatmul.bf16.gmra.mxu0 %v4121
        %v6158 = vpop.f32.mrf.mxu0
        %v6159 = vadd.f32 %v6070, %v6158
        %v6160 = vpop.f32.mrf.mxu0
        %v6161 = vadd.f32 %v6072, %v6160
        %6162 = vmatmul.bf16.gmra.mxu0 %v4130
        %v6163 = vpop.f32.mrf.mxu0
        %v6164 = vadd.f32 %v6075, %v6163
        %v6165 = vpop.f32.mrf.mxu0
        %v6166 = vadd.f32 %v6077, %v6165
        %6167 = vmatmul.bf16.gmra.mxu0 %v4139
        %v6168 = vpop.f32.mrf.mxu0
        %v6169 = vadd.f32 %v6080, %v6168
        %v6170 = vpop.f32.mrf.mxu0
        %v6171 = vadd.f32 %v6082, %v6170
        %6172 = vdwg.mxu0
        %6173 = vmatpush.bf16.msra.mxu0 %v5340
        %6174 = vmatpush.bf16.msra.mxu0 %v5336
        %6175 = vmatpush.bf16.msra.mxu0 %v5332
        %6176 = vmatpush.bf16.msra.mxu0 %v5328
        %6177 = vmatpush.bf16.msra.mxu0 %v5324
        %6178 = vmatpush.bf16.msra.mxu0 %v5320
        %6179 = vmatpush.bf16.msra.mxu0 %v5316
        %6180 = vmatpush.bf16.msra.mxu0 %v5312
        %6181 = vmatmul.bf16.gmra.mxu0 %v4005
        %v6182 = vpop.f32.mrf.mxu0
        %v6183 = vadd.f32 %v6094, %v6182
        %v6184 = vpop.f32.mrf.mxu0
        %v6185 = vadd.f32 %v6096, %v6184
        %6186 = vmatmul.bf16.gmra.mxu0 %v4014
        %v6187 = vpop.f32.mrf.mxu0
        %v6188 = vadd.f32 %v6099, %v6187
        %v6189 = vpop.f32.mrf.mxu0
        %v6190 = vadd.f32 %v6101, %v6189
        %6191 = vmatmul.bf16.gmra.mxu0 %v4023
        %v6192 = vpop.f32.mrf.mxu0
        %v6193 = vadd.f32 %v6104, %v6192
        %v6194 = vpop.f32.mrf.mxu0
        %v6195 = vadd.f32 %v6106, %v6194
        %6196 = vmatmul.bf16.gmra.mxu0 %v4032
        %v6197 = vpop.f32.mrf.mxu0
        %v6198 = vadd.f32 %v6109, %v6197
        %v6199 = vpop.f32.mrf.mxu0
        %v6200 = vadd.f32 %v6111, %v6199
        %6201 = vmatmul.bf16.gmra.mxu0 %v4041
        %v6202 = vpop.f32.mrf.mxu0
        %v6203 = vadd.f32 %v6114, %v6202
        %v6204 = vpop.f32.mrf.mxu0
        %v6205 = vadd.f32 %v6116, %v6204
        %6206 = vmatmul.bf16.gmra.mxu0 %v4050
        %v6207 = vpop.f32.mrf.mxu0
        %v6208 = vadd.f32 %v6119, %v6207
        %v6209 = vpop.f32.mrf.mxu0
        %v6210 = vadd.f32 %v6121, %v6209
        %6211 = vmatmul.bf16.gmra.mxu0 %v4059
        %v6212 = vpop.f32.mrf.mxu0
        %v6213 = vadd.f32 %v6124, %v6212
        %v6214 = vpop.f32.mrf.mxu0
        %v6215 = vadd.f32 %v6126, %v6214
        %6216 = vmatmul.bf16.gmra.mxu0 %v4068
        %v6217 = vpop.f32.mrf.mxu0
        %v6218 = vadd.f32 %v6129, %v6217
        %v6219 = vpop.f32.mrf.mxu0
        %v6220 = vadd.f32 %v6131, %v6219
        %6221 = vmatmul.bf16.gmra.mxu0 %v4077
        %v6222 = vpop.f32.mrf.mxu0
        %v6223 = vadd.f32 %v6134, %v6222
        %v6224 = vpop.f32.mrf.mxu0
        %v6225 = vadd.f32 %v6136, %v6224
        %6226 = vmatmul.bf16.gmra.mxu0 %v4086
        %v6227 = vpop.f32.mrf.mxu0
        %v6228 = vadd.f32 %v6139, %v6227
        %v6229 = vpop.f32.mrf.mxu0
        %v6230 = vadd.f32 %v6141, %v6229
        %6231 = vmatmul.bf16.gmra.mxu0 %v4095
        %v6232 = vpop.f32.mrf.mxu0
        %v6233 = vadd.f32 %v6144, %v6232
        %v6234 = vpop.f32.mrf.mxu0
        %v6235 = vadd.f32 %v6146, %v6234
        %6236 = vmatmul.bf16.gmra.mxu0 %v4104
        %v6237 = vpop.f32.mrf.mxu0
        %v6238 = vadd.f32 %v6149, %v6237
        %v6239 = vpop.f32.mrf.mxu0
        %v6240 = vadd.f32 %v6151, %v6239
        %6241 = vmatmul.bf16.gmra.mxu0 %v4113
        %v6242 = vpop.f32.mrf.mxu0
        %v6243 = vadd.f32 %v6154, %v6242
        %v6244 = vpop.f32.mrf.mxu0
        %v6245 = vadd.f32 %v6156, %v6244
        %6246 = vmatmul.bf16.gmra.mxu0 %v4122
        %v6247 = vpop.f32.mrf.mxu0
        %v6248 = vadd.f32 %v6159, %v6247
        %v6249 = vpop.f32.mrf.mxu0
        %v6250 = vadd.f32 %v6161, %v6249
        %6251 = vmatmul.bf16.gmra.mxu0 %v4131
        %v6252 = vpop.f32.mrf.mxu0
        %v6253 = vadd.f32 %v6164, %v6252
        %v6254 = vpop.f32.mrf.mxu0
        %v6255 = vadd.f32 %v6166, %v6254
        %6256 = vmatmul.bf16.gmra.mxu0 %v4140
        %v6257 = vpop.f32.mrf.mxu0
        %v6258 = vadd.f32 %v6169, %v6257
        %v6259 = vpop.f32.mrf.mxu0
        %v6260 = vadd.f32 %v6171, %v6259
        %6261 = vdwg.mxu0
        %6262 = vmatpush.bf16.msra.mxu0 %v5372
        %6263 = vmatpush.bf16.msra.mxu0 %v5368
        %6264 = vmatpush.bf16.msra.mxu0 %v5364
        %6265 = vmatpush.bf16.msra.mxu0 %v5360
        %6266 = vmatpush.bf16.msra.mxu0 %v5356
        %6267 = vmatpush.bf16.msra.mxu0 %v5352
        %6268 = vmatpush.bf16.msra.mxu0 %v5348
        %6269 = vmatpush.bf16.msra.mxu0 %v5344
        %6270 = vmatmul.bf16.gmra.mxu0 %v4006
        %v6271 = vpop.f32.mrf.mxu0
        %v6272 = vadd.f32 %v6183, %v6271
        %v6273 = vpop.f32.mrf.mxu0
        %v6274 = vadd.f32 %v6185, %v6273
        %6275 = vmatmul.bf16.gmra.mxu0 %v4015
        %v6276 = vpop.f32.mrf.mxu0
        %v6277 = vadd.f32 %v6188, %v6276
        %v6278 = vpop.f32.mrf.mxu0
        %v6279 = vadd.f32 %v6190, %v6278
        %6280 = vmatmul.bf16.gmra.mxu0 %v4024
        %v6281 = vpop.f32.mrf.mxu0
        %v6282 = vadd.f32 %v6193, %v6281
        %v6283 = vpop.f32.mrf.mxu0
        %v6284 = vadd.f32 %v6195, %v6283
        %6285 = vmatmul.bf16.gmra.mxu0 %v4033
        %v6286 = vpop.f32.mrf.mxu0
        %v6287 = vadd.f32 %v6198, %v6286
        %v6288 = vpop.f32.mrf.mxu0
        %v6289 = vadd.f32 %v6200, %v6288
        %6290 = vmatmul.bf16.gmra.mxu0 %v4042
        %v6291 = vpop.f32.mrf.mxu0
        %v6292 = vadd.f32 %v6203, %v6291
        %v6293 = vpop.f32.mrf.mxu0
        %v6294 = vadd.f32 %v6205, %v6293
        %6295 = vmatmul.bf16.gmra.mxu0 %v4051
        %v6296 = vpop.f32.mrf.mxu0
        %v6297 = vadd.f32 %v6208, %v6296
        %v6298 = vpop.f32.mrf.mxu0
        %v6299 = vadd.f32 %v6210, %v6298
        %6300 = vmatmul.bf16.gmra.mxu0 %v4060
        %v6301 = vpop.f32.mrf.mxu0
        %v6302 = vadd.f32 %v6213, %v6301
        %v6303 = vpop.f32.mrf.mxu0
        %v6304 = vadd.f32 %v6215, %v6303
        %6305 = vmatmul.bf16.gmra.mxu0 %v4069
        %v6306 = vpop.f32.mrf.mxu0
        %v6307 = vadd.f32 %v6218, %v6306
        %v6308 = vpop.f32.mrf.mxu0
        %v6309 = vadd.f32 %v6220, %v6308
        %6310 = vmatmul.bf16.gmra.mxu0 %v4078
        %v6311 = vpop.f32.mrf.mxu0
        %v6312 = vadd.f32 %v6223, %v6311
        %v6313 = vpop.f32.mrf.mxu0
        %v6314 = vadd.f32 %v6225, %v6313
        %6315 = vmatmul.bf16.gmra.mxu0 %v4087
        %v6316 = vpop.f32.mrf.mxu0
        %v6317 = vadd.f32 %v6228, %v6316
        %v6318 = vpop.f32.mrf.mxu0
        %v6319 = vadd.f32 %v6230, %v6318
        %6320 = vmatmul.bf16.gmra.mxu0 %v4096
        %v6321 = vpop.f32.mrf.mxu0
        %v6322 = vadd.f32 %v6233, %v6321
        %v6323 = vpop.f32.mrf.mxu0
        %v6324 = vadd.f32 %v6235, %v6323
        %6325 = vmatmul.bf16.gmra.mxu0 %v4105
        %v6326 = vpop.f32.mrf.mxu0
        %v6327 = vadd.f32 %v6238, %v6326
        %v6328 = vpop.f32.mrf.mxu0
        %v6329 = vadd.f32 %v6240, %v6328
        %6330 = vmatmul.bf16.gmra.mxu0 %v4114
        %v6331 = vpop.f32.mrf.mxu0
        %v6332 = vadd.f32 %v6243, %v6331
        %v6333 = vpop.f32.mrf.mxu0
        %v6334 = vadd.f32 %v6245, %v6333
        %6335 = vmatmul.bf16.gmra.mxu0 %v4123
        %v6336 = vpop.f32.mrf.mxu0
        %v6337 = vadd.f32 %v6248, %v6336
        %v6338 = vpop.f32.mrf.mxu0
        %v6339 = vadd.f32 %v6250, %v6338
        %6340 = vmatmul.bf16.gmra.mxu0 %v4132
        %v6341 = vpop.f32.mrf.mxu0
        %v6342 = vadd.f32 %v6253, %v6341
        %v6343 = vpop.f32.mrf.mxu0
        %v6344 = vadd.f32 %v6255, %v6343
        %6345 = vmatmul.bf16.gmra.mxu0 %v4141
        %v6346 = vpop.f32.mrf.mxu0
        %v6347 = vadd.f32 %v6258, %v6346
        %v6348 = vpop.f32.mrf.mxu0
        %v6349 = vadd.f32 %v6260, %v6348
        %6350 = vdwg.mxu0
        %6351 = vmatpush.bf16.msra.mxu0 %v5404
        %6352 = vmatpush.bf16.msra.mxu0 %v5400
        %6353 = vmatpush.bf16.msra.mxu0 %v5396
        %6354 = vmatpush.bf16.msra.mxu0 %v5392
        %6355 = vmatpush.bf16.msra.mxu0 %v5388
        %6356 = vmatpush.bf16.msra.mxu0 %v5384
        %6357 = vmatpush.bf16.msra.mxu0 %v5380
        %6358 = vmatpush.bf16.msra.mxu0 %v5376
        %6359 = vmatmul.bf16.gmra.mxu0 %v4007
        %v6360 = vpop.f32.mrf.mxu0
        %v6361 = vadd.f32 %v6272, %v6360
        %v6362 = vpop.f32.mrf.mxu0
        %v6363 = vadd.f32 %v6274, %v6362
        %6364 = vmatmul.bf16.gmra.mxu0 %v4016
        %v6365 = vpop.f32.mrf.mxu0
        %v6366 = vadd.f32 %v6277, %v6365
        %v6367 = vpop.f32.mrf.mxu0
        %v6368 = vadd.f32 %v6279, %v6367
        %6369 = vmatmul.bf16.gmra.mxu0 %v4025
        %v6370 = vpop.f32.mrf.mxu0
        %v6371 = vadd.f32 %v6282, %v6370
        %v6372 = vpop.f32.mrf.mxu0
        %v6373 = vadd.f32 %v6284, %v6372
        %6374 = vmatmul.bf16.gmra.mxu0 %v4034
        %v6375 = vpop.f32.mrf.mxu0
        %v6376 = vadd.f32 %v6287, %v6375
        %v6377 = vpop.f32.mrf.mxu0
        %v6378 = vadd.f32 %v6289, %v6377
        %6379 = vmatmul.bf16.gmra.mxu0 %v4043
        %v6380 = vpop.f32.mrf.mxu0
        %v6381 = vadd.f32 %v6292, %v6380
        %v6382 = vpop.f32.mrf.mxu0
        %v6383 = vadd.f32 %v6294, %v6382
        %6384 = vmatmul.bf16.gmra.mxu0 %v4052
        %v6385 = vpop.f32.mrf.mxu0
        %v6386 = vadd.f32 %v6297, %v6385
        %v6387 = vpop.f32.mrf.mxu0
        %v6388 = vadd.f32 %v6299, %v6387
        %6389 = vmatmul.bf16.gmra.mxu0 %v4061
        %v6390 = vpop.f32.mrf.mxu0
        %v6391 = vadd.f32 %v6302, %v6390
        %v6392 = vpop.f32.mrf.mxu0
        %v6393 = vadd.f32 %v6304, %v6392
        %6394 = vmatmul.bf16.gmra.mxu0 %v4070
        %v6395 = vpop.f32.mrf.mxu0
        %v6396 = vadd.f32 %v6307, %v6395
        %v6397 = vpop.f32.mrf.mxu0
        %v6398 = vadd.f32 %v6309, %v6397
        %6399 = vmatmul.bf16.gmra.mxu0 %v4079
        %v6400 = vpop.f32.mrf.mxu0
        %v6401 = vadd.f32 %v6312, %v6400
        %v6402 = vpop.f32.mrf.mxu0
        %v6403 = vadd.f32 %v6314, %v6402
        %6404 = vmatmul.bf16.gmra.mxu0 %v4088
        %v6405 = vpop.f32.mrf.mxu0
        %v6406 = vadd.f32 %v6317, %v6405
        %v6407 = vpop.f32.mrf.mxu0
        %v6408 = vadd.f32 %v6319, %v6407
        %6409 = vmatmul.bf16.gmra.mxu0 %v4097
        %v6410 = vpop.f32.mrf.mxu0
        %v6411 = vadd.f32 %v6322, %v6410
        %v6412 = vpop.f32.mrf.mxu0
        %v6413 = vadd.f32 %v6324, %v6412
        %6414 = vmatmul.bf16.gmra.mxu0 %v4106
        %v6415 = vpop.f32.mrf.mxu0
        %v6416 = vadd.f32 %v6327, %v6415
        %v6417 = vpop.f32.mrf.mxu0
        %v6418 = vadd.f32 %v6329, %v6417
        %6419 = vmatmul.bf16.gmra.mxu0 %v4115
        %v6420 = vpop.f32.mrf.mxu0
        %v6421 = vadd.f32 %v6332, %v6420
        %v6422 = vpop.f32.mrf.mxu0
        %v6423 = vadd.f32 %v6334, %v6422
        %6424 = vmatmul.bf16.gmra.mxu0 %v4124
        %v6425 = vpop.f32.mrf.mxu0
        %v6426 = vadd.f32 %v6337, %v6425
        %v6427 = vpop.f32.mrf.mxu0
        %v6428 = vadd.f32 %v6339, %v6427
        %6429 = vmatmul.bf16.gmra.mxu0 %v4133
        %v6430 = vpop.f32.mrf.mxu0
        %v6431 = vadd.f32 %v6342, %v6430
        %v6432 = vpop.f32.mrf.mxu0
        %v6433 = vadd.f32 %v6344, %v6432
        %6434 = vmatmul.bf16.gmra.mxu0 %v4142
        %v6435 = vpop.f32.mrf.mxu0
        %v6436 = vadd.f32 %v6347, %v6435
        %v6437 = vpop.f32.mrf.mxu0
        %v6438 = vadd.f32 %v6349, %v6437
        %6439 = vdwg.mxu0
        %6440 = vmatpush.bf16.msra.mxu0 %v5436
        %6441 = vmatpush.bf16.msra.mxu0 %v5432
        %6442 = vmatpush.bf16.msra.mxu0 %v5428
        %6443 = vmatpush.bf16.msra.mxu0 %v5424
        %6444 = vmatpush.bf16.msra.mxu0 %v5420
        %6445 = vmatpush.bf16.msra.mxu0 %v5416
        %6446 = vmatpush.bf16.msra.mxu0 %v5412
        %6447 = vmatpush.bf16.msra.mxu0 %v5408
        %6448 = vmatmul.bf16.gmra.mxu0 %v4008
        %v6449 = vpop.f32.mrf.mxu0
        %v6450 = vadd.f32 %v6361, %v6449
        %v6451 = vpop.f32.mrf.mxu0
        %v6452 = vadd.f32 %v6363, %v6451
        %6453 = vmatmul.bf16.gmra.mxu0 %v4017
        %v6454 = vpop.f32.mrf.mxu0
        %v6455 = vadd.f32 %v6366, %v6454
        %v6456 = vpop.f32.mrf.mxu0
        %v6457 = vadd.f32 %v6368, %v6456
        %6458 = vmatmul.bf16.gmra.mxu0 %v4026
        %v6459 = vpop.f32.mrf.mxu0
        %v6460 = vadd.f32 %v6371, %v6459
        %v6461 = vpop.f32.mrf.mxu0
        %v6462 = vadd.f32 %v6373, %v6461
        %6463 = vmatmul.bf16.gmra.mxu0 %v4035
        %v6464 = vpop.f32.mrf.mxu0
        %v6465 = vadd.f32 %v6376, %v6464
        %v6466 = vpop.f32.mrf.mxu0
        %v6467 = vadd.f32 %v6378, %v6466
        %6468 = vmatmul.bf16.gmra.mxu0 %v4044
        %v6469 = vpop.f32.mrf.mxu0
        %v6470 = vadd.f32 %v6381, %v6469
        %v6471 = vpop.f32.mrf.mxu0
        %v6472 = vadd.f32 %v6383, %v6471
        %6473 = vmatmul.bf16.gmra.mxu0 %v4053
        %v6474 = vpop.f32.mrf.mxu0
        %v6475 = vadd.f32 %v6386, %v6474
        %v6476 = vpop.f32.mrf.mxu0
        %v6477 = vadd.f32 %v6388, %v6476
        %6478 = vmatmul.bf16.gmra.mxu0 %v4062
        %v6479 = vpop.f32.mrf.mxu0
        %v6480 = vadd.f32 %v6391, %v6479
        %v6481 = vpop.f32.mrf.mxu0
        %v6482 = vadd.f32 %v6393, %v6481
        %6483 = vmatmul.bf16.gmra.mxu0 %v4071
        %v6484 = vpop.f32.mrf.mxu0
        %v6485 = vadd.f32 %v6396, %v6484
        %v6486 = vpop.f32.mrf.mxu0
        %v6487 = vadd.f32 %v6398, %v6486
        %6488 = vmatmul.bf16.gmra.mxu0 %v4080
        %v6489 = vpop.f32.mrf.mxu0
        %v6490 = vadd.f32 %v6401, %v6489
        %v6491 = vpop.f32.mrf.mxu0
        %v6492 = vadd.f32 %v6403, %v6491
        %6493 = vmatmul.bf16.gmra.mxu0 %v4089
        %v6494 = vpop.f32.mrf.mxu0
        %v6495 = vadd.f32 %v6406, %v6494
        %v6496 = vpop.f32.mrf.mxu0
        %v6497 = vadd.f32 %v6408, %v6496
        %6498 = vmatmul.bf16.gmra.mxu0 %v4098
        %v6499 = vpop.f32.mrf.mxu0
        %v6500 = vadd.f32 %v6411, %v6499
        %v6501 = vpop.f32.mrf.mxu0
        %v6502 = vadd.f32 %v6413, %v6501
        %6503 = vmatmul.bf16.gmra.mxu0 %v4107
        %v6504 = vpop.f32.mrf.mxu0
        %v6505 = vadd.f32 %v6416, %v6504
        %v6506 = vpop.f32.mrf.mxu0
        %v6507 = vadd.f32 %v6418, %v6506
        %6508 = vmatmul.bf16.gmra.mxu0 %v4116
        %v6509 = vpop.f32.mrf.mxu0
        %v6510 = vadd.f32 %v6421, %v6509
        %v6511 = vpop.f32.mrf.mxu0
        %v6512 = vadd.f32 %v6423, %v6511
        %6513 = vmatmul.bf16.gmra.mxu0 %v4125
        %v6514 = vpop.f32.mrf.mxu0
        %v6515 = vadd.f32 %v6426, %v6514
        %v6516 = vpop.f32.mrf.mxu0
        %v6517 = vadd.f32 %v6428, %v6516
        %6518 = vmatmul.bf16.gmra.mxu0 %v4134
        %v6519 = vpop.f32.mrf.mxu0
        %v6520 = vadd.f32 %v6431, %v6519
        %v6521 = vpop.f32.mrf.mxu0
        %v6522 = vadd.f32 %v6433, %v6521
        %6523 = vmatmul.bf16.gmra.mxu0 %v4143
        %v6524 = vpop.f32.mrf.mxu0
        %v6525 = vadd.f32 %v6436, %v6524
        %v6526 = vpop.f32.mrf.mxu0
        %v6527 = vadd.f32 %v6438, %v6526
        %6528 = vdwg.mxu0
        %6529 = vmatpush.bf16.msra.mxu0 %v5181
        %6530 = vmatpush.bf16.msra.mxu0 %v5177
        %6531 = vmatpush.bf16.msra.mxu0 %v5173
        %6532 = vmatpush.bf16.msra.mxu0 %v5169
        %6533 = vmatpush.bf16.msra.mxu0 %v5165
        %6534 = vmatpush.bf16.msra.mxu0 %v5161
        %6535 = vmatpush.bf16.msra.mxu0 %v5157
        %6536 = vmatpush.bf16.msra.mxu0 %v5153
        %6537 = vmatmul.bf16.gmra.mxu0 %v4000
        %v6538 = vpop.f32.mrf.mxu0
        %v6539 = vadd.f32 0.0, %v6538
        %v6540 = vpop.f32.mrf.mxu0
        %v6541 = vadd.f32 0.0, %v6540
        %6542 = vmatmul.bf16.gmra.mxu0 %v4009
        %v6543 = vpop.f32.mrf.mxu0
        %v6544 = vadd.f32 0.0, %v6543
        %v6545 = vpop.f32.mrf.mxu0
        %v6546 = vadd.f32 0.0, %v6545
        %6547 = vmatmul.bf16.gmra.mxu0 %v4018
        %v6548 = vpop.f32.mrf.mxu0
        %v6549 = vadd.f32 0.0, %v6548
        %v6550 = vpop.f32.mrf.mxu0
        %v6551 = vadd.f32 0.0, %v6550
        %6552 = vmatmul.bf16.gmra.mxu0 %v4027
        %v6553 = vpop.f32.mrf.mxu0
        %v6554 = vadd.f32 0.0, %v6553
        %v6555 = vpop.f32.mrf.mxu0
        %v6556 = vadd.f32 0.0, %v6555
        %6557 = vmatmul.bf16.gmra.mxu0 %v4036
        %v6558 = vpop.f32.mrf.mxu0
        %v6559 = vadd.f32 0.0, %v6558
        %v6560 = vpop.f32.mrf.mxu0
        %v6561 = vadd.f32 0.0, %v6560
        %6562 = vmatmul.bf16.gmra.mxu0 %v4045
        %v6563 = vpop.f32.mrf.mxu0
        %v6564 = vadd.f32 0.0, %v6563
        %v6565 = vpop.f32.mrf.mxu0
        %v6566 = vadd.f32 0.0, %v6565
        %6567 = vmatmul.bf16.gmra.mxu0 %v4054
        %v6568 = vpop.f32.mrf.mxu0
        %v6569 = vadd.f32 0.0, %v6568
        %v6570 = vpop.f32.mrf.mxu0
        %v6571 = vadd.f32 0.0, %v6570
        %6572 = vmatmul.bf16.gmra.mxu0 %v4063
        %v6573 = vpop.f32.mrf.mxu0
        %v6574 = vadd.f32 0.0, %v6573
        %v6575 = vpop.f32.mrf.mxu0
        %v6576 = vadd.f32 0.0, %v6575
        %6577 = vmatmul.bf16.gmra.mxu0 %v4072
        %v6578 = vpop.f32.mrf.mxu0
        %v6579 = vadd.f32 0.0, %v6578
        %v6580 = vpop.f32.mrf.mxu0
        %v6581 = vadd.f32 0.0, %v6580
        %6582 = vmatmul.bf16.gmra.mxu0 %v4081
        %v6583 = vpop.f32.mrf.mxu0
        %v6584 = vadd.f32 0.0, %v6583
        %v6585 = vpop.f32.mrf.mxu0
        %v6586 = vadd.f32 0.0, %v6585
        %6587 = vmatmul.bf16.gmra.mxu0 %v4090
        %v6588 = vpop.f32.mrf.mxu0
        %v6589 = vadd.f32 0.0, %v6588
        %v6590 = vpop.f32.mrf.mxu0
        %v6591 = vadd.f32 0.0, %v6590
        %6592 = vmatmul.bf16.gmra.mxu0 %v4099
        %v6593 = vpop.f32.mrf.mxu0
        %v6594 = vadd.f32 0.0, %v6593
        %v6595 = vpop.f32.mrf.mxu0
        %v6596 = vadd.f32 0.0, %v6595
        %6597 = vmatmul.bf16.gmra.mxu0 %v4108
        %v6598 = vpop.f32.mrf.mxu0
        %v6599 = vadd.f32 0.0, %v6598
        %v6600 = vpop.f32.mrf.mxu0
        %v6601 = vadd.f32 0.0, %v6600
        %6602 = vmatmul.bf16.gmra.mxu0 %v4117
        %v6603 = vpop.f32.mrf.mxu0
        %v6604 = vadd.f32 0.0, %v6603
        %v6605 = vpop.f32.mrf.mxu0
        %v6606 = vadd.f32 0.0, %v6605
        %6607 = vmatmul.bf16.gmra.mxu0 %v4126
        %v6608 = vpop.f32.mrf.mxu0
        %v6609 = vadd.f32 0.0, %v6608
        %v6610 = vpop.f32.mrf.mxu0
        %v6611 = vadd.f32 0.0, %v6610
        %6612 = vmatmul.bf16.gmra.mxu0 %v4135
        %v6613 = vpop.f32.mrf.mxu0
        %v6614 = vadd.f32 0.0, %v6613
        %v6615 = vpop.f32.mrf.mxu0
        %v6616 = vadd.f32 0.0, %v6615
        %6617 = vdwg.mxu0
        %6618 = vmatpush.bf16.msra.mxu0 %v5213
        %6619 = vmatpush.bf16.msra.mxu0 %v5209
        %6620 = vmatpush.bf16.msra.mxu0 %v5205
        %6621 = vmatpush.bf16.msra.mxu0 %v5201
        %6622 = vmatpush.bf16.msra.mxu0 %v5197
        %6623 = vmatpush.bf16.msra.mxu0 %v5193
        %6624 = vmatpush.bf16.msra.mxu0 %v5189
        %6625 = vmatpush.bf16.msra.mxu0 %v5185
        %6626 = vmatmul.bf16.gmra.mxu0 %v4001
        %v6627 = vpop.f32.mrf.mxu0
        %v6628 = vadd.f32 %v6539, %v6627
        %v6629 = vpop.f32.mrf.mxu0
        %v6630 = vadd.f32 %v6541, %v6629
        %6631 = vmatmul.bf16.gmra.mxu0 %v4010
        %v6632 = vpop.f32.mrf.mxu0
        %v6633 = vadd.f32 %v6544, %v6632
        %v6634 = vpop.f32.mrf.mxu0
        %v6635 = vadd.f32 %v6546, %v6634
        %6636 = vmatmul.bf16.gmra.mxu0 %v4019
        %v6637 = vpop.f32.mrf.mxu0
        %v6638 = vadd.f32 %v6549, %v6637
        %v6639 = vpop.f32.mrf.mxu0
        %v6640 = vadd.f32 %v6551, %v6639
        %6641 = vmatmul.bf16.gmra.mxu0 %v4028
        %v6642 = vpop.f32.mrf.mxu0
        %v6643 = vadd.f32 %v6554, %v6642
        %v6644 = vpop.f32.mrf.mxu0
        %v6645 = vadd.f32 %v6556, %v6644
        %6646 = vmatmul.bf16.gmra.mxu0 %v4037
        %v6647 = vpop.f32.mrf.mxu0
        %v6648 = vadd.f32 %v6559, %v6647
        %v6649 = vpop.f32.mrf.mxu0
        %v6650 = vadd.f32 %v6561, %v6649
        %6651 = vmatmul.bf16.gmra.mxu0 %v4046
        %v6652 = vpop.f32.mrf.mxu0
        %v6653 = vadd.f32 %v6564, %v6652
        %v6654 = vpop.f32.mrf.mxu0
        %v6655 = vadd.f32 %v6566, %v6654
        %6656 = vmatmul.bf16.gmra.mxu0 %v4055
        %v6657 = vpop.f32.mrf.mxu0
        %v6658 = vadd.f32 %v6569, %v6657
        %v6659 = vpop.f32.mrf.mxu0
        %v6660 = vadd.f32 %v6571, %v6659
        %6661 = vmatmul.bf16.gmra.mxu0 %v4064
        %v6662 = vpop.f32.mrf.mxu0
        %v6663 = vadd.f32 %v6574, %v6662
        %v6664 = vpop.f32.mrf.mxu0
        %v6665 = vadd.f32 %v6576, %v6664
        %6666 = vmatmul.bf16.gmra.mxu0 %v4073
        %v6667 = vpop.f32.mrf.mxu0
        %v6668 = vadd.f32 %v6579, %v6667
        %v6669 = vpop.f32.mrf.mxu0
        %v6670 = vadd.f32 %v6581, %v6669
        %6671 = vmatmul.bf16.gmra.mxu0 %v4082
        %v6672 = vpop.f32.mrf.mxu0
        %v6673 = vadd.f32 %v6584, %v6672
        %v6674 = vpop.f32.mrf.mxu0
        %v6675 = vadd.f32 %v6586, %v6674
        %6676 = vmatmul.bf16.gmra.mxu0 %v4091
        %v6677 = vpop.f32.mrf.mxu0
        %v6678 = vadd.f32 %v6589, %v6677
        %v6679 = vpop.f32.mrf.mxu0
        %v6680 = vadd.f32 %v6591, %v6679
        %6681 = vmatmul.bf16.gmra.mxu0 %v4100
        %v6682 = vpop.f32.mrf.mxu0
        %v6683 = vadd.f32 %v6594, %v6682
        %v6684 = vpop.f32.mrf.mxu0
        %v6685 = vadd.f32 %v6596, %v6684
        %6686 = vmatmul.bf16.gmra.mxu0 %v4109
        %v6687 = vpop.f32.mrf.mxu0
        %v6688 = vadd.f32 %v6599, %v6687
        %v6689 = vpop.f32.mrf.mxu0
        %v6690 = vadd.f32 %v6601, %v6689
        %6691 = vmatmul.bf16.gmra.mxu0 %v4118
        %v6692 = vpop.f32.mrf.mxu0
        %v6693 = vadd.f32 %v6604, %v6692
        %v6694 = vpop.f32.mrf.mxu0
        %v6695 = vadd.f32 %v6606, %v6694
        %6696 = vmatmul.bf16.gmra.mxu0 %v4127
        %v6697 = vpop.f32.mrf.mxu0
        %v6698 = vadd.f32 %v6609, %v6697
        %v6699 = vpop.f32.mrf.mxu0
        %v6700 = vadd.f32 %v6611, %v6699
        %6701 = vmatmul.bf16.gmra.mxu0 %v4136
        %v6702 = vpop.f32.mrf.mxu0
        %v6703 = vadd.f32 %v6614, %v6702
        %v6704 = vpop.f32.mrf.mxu0
        %v6705 = vadd.f32 %v6616, %v6704
        %6706 = vdwg.mxu0
        %6707 = vmatpush.bf16.msra.mxu0 %v5245
        %6708 = vmatpush.bf16.msra.mxu0 %v5241
        %6709 = vmatpush.bf16.msra.mxu0 %v5237
        %6710 = vmatpush.bf16.msra.mxu0 %v5233
        %6711 = vmatpush.bf16.msra.mxu0 %v5229
        %6712 = vmatpush.bf16.msra.mxu0 %v5225
        %6713 = vmatpush.bf16.msra.mxu0 %v5221
        %6714 = vmatpush.bf16.msra.mxu0 %v5217
        %6715 = vmatmul.bf16.gmra.mxu0 %v4002
        %v6716 = vpop.f32.mrf.mxu0
        %v6717 = vadd.f32 %v6628, %v6716
        %v6718 = vpop.f32.mrf.mxu0
        %v6719 = vadd.f32 %v6630, %v6718
        %6720 = vmatmul.bf16.gmra.mxu0 %v4011
        %v6721 = vpop.f32.mrf.mxu0
        %v6722 = vadd.f32 %v6633, %v6721
        %v6723 = vpop.f32.mrf.mxu0
        %v6724 = vadd.f32 %v6635, %v6723
        %6725 = vmatmul.bf16.gmra.mxu0 %v4020
        %v6726 = vpop.f32.mrf.mxu0
        %v6727 = vadd.f32 %v6638, %v6726
        %v6728 = vpop.f32.mrf.mxu0
        %v6729 = vadd.f32 %v6640, %v6728
        %6730 = vmatmul.bf16.gmra.mxu0 %v4029
        %v6731 = vpop.f32.mrf.mxu0
        %v6732 = vadd.f32 %v6643, %v6731
        %v6733 = vpop.f32.mrf.mxu0
        %v6734 = vadd.f32 %v6645, %v6733
        %6735 = vmatmul.bf16.gmra.mxu0 %v4038
        %v6736 = vpop.f32.mrf.mxu0
        %v6737 = vadd.f32 %v6648, %v6736
        %v6738 = vpop.f32.mrf.mxu0
        %v6739 = vadd.f32 %v6650, %v6738
        %6740 = vmatmul.bf16.gmra.mxu0 %v4047
        %v6741 = vpop.f32.mrf.mxu0
        %v6742 = vadd.f32 %v6653, %v6741
        %v6743 = vpop.f32.mrf.mxu0
        %v6744 = vadd.f32 %v6655, %v6743
        %6745 = vmatmul.bf16.gmra.mxu0 %v4056
        %v6746 = vpop.f32.mrf.mxu0
        %v6747 = vadd.f32 %v6658, %v6746
        %v6748 = vpop.f32.mrf.mxu0
        %v6749 = vadd.f32 %v6660, %v6748
        %6750 = vmatmul.bf16.gmra.mxu0 %v4065
        %v6751 = vpop.f32.mrf.mxu0
        %v6752 = vadd.f32 %v6663, %v6751
        %v6753 = vpop.f32.mrf.mxu0
        %v6754 = vadd.f32 %v6665, %v6753
        %6755 = vmatmul.bf16.gmra.mxu0 %v4074
        %v6756 = vpop.f32.mrf.mxu0
        %v6757 = vadd.f32 %v6668, %v6756
        %v6758 = vpop.f32.mrf.mxu0
        %v6759 = vadd.f32 %v6670, %v6758
        %6760 = vmatmul.bf16.gmra.mxu0 %v4083
        %v6761 = vpop.f32.mrf.mxu0
        %v6762 = vadd.f32 %v6673, %v6761
        %v6763 = vpop.f32.mrf.mxu0
        %v6764 = vadd.f32 %v6675, %v6763
        %6765 = vmatmul.bf16.gmra.mxu0 %v4092
        %v6766 = vpop.f32.mrf.mxu0
        %v6767 = vadd.f32 %v6678, %v6766
        %v6768 = vpop.f32.mrf.mxu0
        %v6769 = vadd.f32 %v6680, %v6768
        %6770 = vmatmul.bf16.gmra.mxu0 %v4101
        %v6771 = vpop.f32.mrf.mxu0
        %v6772 = vadd.f32 %v6683, %v6771
        %v6773 = vpop.f32.mrf.mxu0
        %v6774 = vadd.f32 %v6685, %v6773
        %6775 = vmatmul.bf16.gmra.mxu0 %v4110
        %v6776 = vpop.f32.mrf.mxu0
        %v6777 = vadd.f32 %v6688, %v6776
        %v6778 = vpop.f32.mrf.mxu0
        %v6779 = vadd.f32 %v6690, %v6778
        %6780 = vmatmul.bf16.gmra.mxu0 %v4119
        %v6781 = vpop.f32.mrf.mxu0
        %v6782 = vadd.f32 %v6693, %v6781
        %v6783 = vpop.f32.mrf.mxu0
        %v6784 = vadd.f32 %v6695, %v6783
        %6785 = vmatmul.bf16.gmra.mxu0 %v4128
        %v6786 = vpop.f32.mrf.mxu0
        %v6787 = vadd.f32 %v6698, %v6786
        %v6788 = vpop.f32.mrf.mxu0
        %v6789 = vadd.f32 %v6700, %v6788
        %6790 = vmatmul.bf16.gmra.mxu0 %v4137
        %v6791 = vpop.f32.mrf.mxu0
        %v6792 = vadd.f32 %v6703, %v6791
        %v6793 = vpop.f32.mrf.mxu0
        %v6794 = vadd.f32 %v6705, %v6793
        %6795 = vdwg.mxu0
        %6796 = vmatpush.bf16.msra.mxu0 %v5277
        %6797 = vmatpush.bf16.msra.mxu0 %v5273
        %6798 = vmatpush.bf16.msra.mxu0 %v5269
        %6799 = vmatpush.bf16.msra.mxu0 %v5265
        %6800 = vmatpush.bf16.msra.mxu0 %v5261
        %6801 = vmatpush.bf16.msra.mxu0 %v5257
        %6802 = vmatpush.bf16.msra.mxu0 %v5253
        %6803 = vmatpush.bf16.msra.mxu0 %v5249
        %6804 = vmatmul.bf16.gmra.mxu0 %v4003
        %v6805 = vpop.f32.mrf.mxu0
        %v6806 = vadd.f32 %v6717, %v6805
        %v6807 = vpop.f32.mrf.mxu0
        %v6808 = vadd.f32 %v6719, %v6807
        %6809 = vmatmul.bf16.gmra.mxu0 %v4012
        %v6810 = vpop.f32.mrf.mxu0
        %v6811 = vadd.f32 %v6722, %v6810
        %v6812 = vpop.f32.mrf.mxu0
        %v6813 = vadd.f32 %v6724, %v6812
        %6814 = vmatmul.bf16.gmra.mxu0 %v4021
        %v6815 = vpop.f32.mrf.mxu0
        %v6816 = vadd.f32 %v6727, %v6815
        %v6817 = vpop.f32.mrf.mxu0
        %v6818 = vadd.f32 %v6729, %v6817
        %6819 = vmatmul.bf16.gmra.mxu0 %v4030
        %v6820 = vpop.f32.mrf.mxu0
        %v6821 = vadd.f32 %v6732, %v6820
        %v6822 = vpop.f32.mrf.mxu0
        %v6823 = vadd.f32 %v6734, %v6822
        %6824 = vmatmul.bf16.gmra.mxu0 %v4039
        %v6825 = vpop.f32.mrf.mxu0
        %v6826 = vadd.f32 %v6737, %v6825
        %v6827 = vpop.f32.mrf.mxu0
        %v6828 = vadd.f32 %v6739, %v6827
        %6829 = vmatmul.bf16.gmra.mxu0 %v4048
        %v6830 = vpop.f32.mrf.mxu0
        %v6831 = vadd.f32 %v6742, %v6830
        %v6832 = vpop.f32.mrf.mxu0
        %v6833 = vadd.f32 %v6744, %v6832
        %6834 = vmatmul.bf16.gmra.mxu0 %v4057
        %v6835 = vpop.f32.mrf.mxu0
        %v6836 = vadd.f32 %v6747, %v6835
        %v6837 = vpop.f32.mrf.mxu0
        %v6838 = vadd.f32 %v6749, %v6837
        %6839 = vmatmul.bf16.gmra.mxu0 %v4066
        %v6840 = vpop.f32.mrf.mxu0
        %v6841 = vadd.f32 %v6752, %v6840
        %v6842 = vpop.f32.mrf.mxu0
        %v6843 = vadd.f32 %v6754, %v6842
        %6844 = vmatmul.bf16.gmra.mxu0 %v4075
        %v6845 = vpop.f32.mrf.mxu0
        %v6846 = vadd.f32 %v6757, %v6845
        %v6847 = vpop.f32.mrf.mxu0
        %v6848 = vadd.f32 %v6759, %v6847
        %6849 = vmatmul.bf16.gmra.mxu0 %v4084
        %v6850 = vpop.f32.mrf.mxu0
        %v6851 = vadd.f32 %v6762, %v6850
        %v6852 = vpop.f32.mrf.mxu0
        %v6853 = vadd.f32 %v6764, %v6852
        %6854 = vmatmul.bf16.gmra.mxu0 %v4093
        %v6855 = vpop.f32.mrf.mxu0
        %v6856 = vadd.f32 %v6767, %v6855
        %v6857 = vpop.f32.mrf.mxu0
        %v6858 = vadd.f32 %v6769, %v6857
        %6859 = vmatmul.bf16.gmra.mxu0 %v4102
        %v6860 = vpop.f32.mrf.mxu0
        %v6861 = vadd.f32 %v6772, %v6860
        %v6862 = vpop.f32.mrf.mxu0
        %v6863 = vadd.f32 %v6774, %v6862
        %6864 = vmatmul.bf16.gmra.mxu0 %v4111
        %v6865 = vpop.f32.mrf.mxu0
        %v6866 = vadd.f32 %v6777, %v6865
        %v6867 = vpop.f32.mrf.mxu0
        %v6868 = vadd.f32 %v6779, %v6867
        %6869 = vmatmul.bf16.gmra.mxu0 %v4120
        %v6870 = vpop.f32.mrf.mxu0
        %v6871 = vadd.f32 %v6782, %v6870
        %v6872 = vpop.f32.mrf.mxu0
        %v6873 = vadd.f32 %v6784, %v6872
        %6874 = vmatmul.bf16.gmra.mxu0 %v4129
        %v6875 = vpop.f32.mrf.mxu0
        %v6876 = vadd.f32 %v6787, %v6875
        %v6877 = vpop.f32.mrf.mxu0
        %v6878 = vadd.f32 %v6789, %v6877
        %6879 = vmatmul.bf16.gmra.mxu0 %v4138
        %v6880 = vpop.f32.mrf.mxu0
        %v6881 = vadd.f32 %v6792, %v6880
        %v6882 = vpop.f32.mrf.mxu0
        %v6883 = vadd.f32 %v6794, %v6882
        %6884 = vdwg.mxu0
        %6885 = vmatpush.bf16.msra.mxu0 %v5309
        %6886 = vmatpush.bf16.msra.mxu0 %v5305
        %6887 = vmatpush.bf16.msra.mxu0 %v5301
        %6888 = vmatpush.bf16.msra.mxu0 %v5297
        %6889 = vmatpush.bf16.msra.mxu0 %v5293
        %6890 = vmatpush.bf16.msra.mxu0 %v5289
        %6891 = vmatpush.bf16.msra.mxu0 %v5285
        %6892 = vmatpush.bf16.msra.mxu0 %v5281
        %6893 = vmatmul.bf16.gmra.mxu0 %v4004
        %v6894 = vpop.f32.mrf.mxu0
        %v6895 = vadd.f32 %v6806, %v6894
        %v6896 = vpop.f32.mrf.mxu0
        %v6897 = vadd.f32 %v6808, %v6896
        %6898 = vmatmul.bf16.gmra.mxu0 %v4013
        %v6899 = vpop.f32.mrf.mxu0
        %v6900 = vadd.f32 %v6811, %v6899
        %v6901 = vpop.f32.mrf.mxu0
        %v6902 = vadd.f32 %v6813, %v6901
        %6903 = vmatmul.bf16.gmra.mxu0 %v4022
        %v6904 = vpop.f32.mrf.mxu0
        %v6905 = vadd.f32 %v6816, %v6904
        %v6906 = vpop.f32.mrf.mxu0
        %v6907 = vadd.f32 %v6818, %v6906
        %6908 = vmatmul.bf16.gmra.mxu0 %v4031
        %v6909 = vpop.f32.mrf.mxu0
        %v6910 = vadd.f32 %v6821, %v6909
        %v6911 = vpop.f32.mrf.mxu0
        %v6912 = vadd.f32 %v6823, %v6911
        %6913 = vmatmul.bf16.gmra.mxu0 %v4040
        %v6914 = vpop.f32.mrf.mxu0
        %v6915 = vadd.f32 %v6826, %v6914
        %v6916 = vpop.f32.mrf.mxu0
        %v6917 = vadd.f32 %v6828, %v6916
        %6918 = vmatmul.bf16.gmra.mxu0 %v4049
        %v6919 = vpop.f32.mrf.mxu0
        %v6920 = vadd.f32 %v6831, %v6919
        %v6921 = vpop.f32.mrf.mxu0
        %v6922 = vadd.f32 %v6833, %v6921
        %6923 = vmatmul.bf16.gmra.mxu0 %v4058
        %v6924 = vpop.f32.mrf.mxu0
        %v6925 = vadd.f32 %v6836, %v6924
        %v6926 = vpop.f32.mrf.mxu0
        %v6927 = vadd.f32 %v6838, %v6926
        %6928 = vmatmul.bf16.gmra.mxu0 %v4067
        %v6929 = vpop.f32.mrf.mxu0
        %v6930 = vadd.f32 %v6841, %v6929
        %v6931 = vpop.f32.mrf.mxu0
        %v6932 = vadd.f32 %v6843, %v6931
        %6933 = vmatmul.bf16.gmra.mxu0 %v4076
        %v6934 = vpop.f32.mrf.mxu0
        %v6935 = vadd.f32 %v6846, %v6934
        %v6936 = vpop.f32.mrf.mxu0
        %v6937 = vadd.f32 %v6848, %v6936
        %6938 = vmatmul.bf16.gmra.mxu0 %v4085
        %v6939 = vpop.f32.mrf.mxu0
        %v6940 = vadd.f32 %v6851, %v6939
        %v6941 = vpop.f32.mrf.mxu0
        %v6942 = vadd.f32 %v6853, %v6941
        %6943 = vmatmul.bf16.gmra.mxu0 %v4094
        %v6944 = vpop.f32.mrf.mxu0
        %v6945 = vadd.f32 %v6856, %v6944
        %v6946 = vpop.f32.mrf.mxu0
        %v6947 = vadd.f32 %v6858, %v6946
        %6948 = vmatmul.bf16.gmra.mxu0 %v4103
        %v6949 = vpop.f32.mrf.mxu0
        %v6950 = vadd.f32 %v6861, %v6949
        %v6951 = vpop.f32.mrf.mxu0
        %v6952 = vadd.f32 %v6863, %v6951
        %6953 = vmatmul.bf16.gmra.mxu0 %v4112
        %v6954 = vpop.f32.mrf.mxu0
        %v6955 = vadd.f32 %v6866, %v6954
        %v6956 = vpop.f32.mrf.mxu0
        %v6957 = vadd.f32 %v6868, %v6956
        %6958 = vmatmul.bf16.gmra.mxu0 %v4121
        %v6959 = vpop.f32.mrf.mxu0
        %v6960 = vadd.f32 %v6871, %v6959
        %v6961 = vpop.f32.mrf.mxu0
        %v6962 = vadd.f32 %v6873, %v6961
        %6963 = vmatmul.bf16.gmra.mxu0 %v4130
        %v6964 = vpop.f32.mrf.mxu0
        %v6965 = vadd.f32 %v6876, %v6964
        %v6966 = vpop.f32.mrf.mxu0
        %v6967 = vadd.f32 %v6878, %v6966
        %6968 = vmatmul.bf16.gmra.mxu0 %v4139
        %v6969 = vpop.f32.mrf.mxu0
        %v6970 = vadd.f32 %v6881, %v6969
        %v6971 = vpop.f32.mrf.mxu0
        %v6972 = vadd.f32 %v6883, %v6971
        %6973 = vdwg.mxu0
        %6974 = vmatpush.bf16.msra.mxu0 %v5341
        %6975 = vmatpush.bf16.msra.mxu0 %v5337
        %6976 = vmatpush.bf16.msra.mxu0 %v5333
        %6977 = vmatpush.bf16.msra.mxu0 %v5329
        %6978 = vmatpush.bf16.msra.mxu0 %v5325
        %6979 = vmatpush.bf16.msra.mxu0 %v5321
        %6980 = vmatpush.bf16.msra.mxu0 %v5317
        %6981 = vmatpush.bf16.msra.mxu0 %v5313
        %6982 = vmatmul.bf16.gmra.mxu0 %v4005
        %v6983 = vpop.f32.mrf.mxu0
        %v6984 = vadd.f32 %v6895, %v6983
        %v6985 = vpop.f32.mrf.mxu0
        %v6986 = vadd.f32 %v6897, %v6985
        %6987 = vmatmul.bf16.gmra.mxu0 %v4014
        %v6988 = vpop.f32.mrf.mxu0
        %v6989 = vadd.f32 %v6900, %v6988
        %v6990 = vpop.f32.mrf.mxu0
        %v6991 = vadd.f32 %v6902, %v6990
        %6992 = vmatmul.bf16.gmra.mxu0 %v4023
        %v6993 = vpop.f32.mrf.mxu0
        %v6994 = vadd.f32 %v6905, %v6993
        %v6995 = vpop.f32.mrf.mxu0
        %v6996 = vadd.f32 %v6907, %v6995
        %6997 = vmatmul.bf16.gmra.mxu0 %v4032
        %v6998 = vpop.f32.mrf.mxu0
        %v6999 = vadd.f32 %v6910, %v6998
        %v7000 = vpop.f32.mrf.mxu0
        %v7001 = vadd.f32 %v6912, %v7000
        %7002 = vmatmul.bf16.gmra.mxu0 %v4041
        %v7003 = vpop.f32.mrf.mxu0
        %v7004 = vadd.f32 %v6915, %v7003
        %v7005 = vpop.f32.mrf.mxu0
        %v7006 = vadd.f32 %v6917, %v7005
        %7007 = vmatmul.bf16.gmra.mxu0 %v4050
        %v7008 = vpop.f32.mrf.mxu0
        %v7009 = vadd.f32 %v6920, %v7008
        %v7010 = vpop.f32.mrf.mxu0
        %v7011 = vadd.f32 %v6922, %v7010
        %7012 = vmatmul.bf16.gmra.mxu0 %v4059
        %v7013 = vpop.f32.mrf.mxu0
        %v7014 = vadd.f32 %v6925, %v7013
        %v7015 = vpop.f32.mrf.mxu0
        %v7016 = vadd.f32 %v6927, %v7015
        %7017 = vmatmul.bf16.gmra.mxu0 %v4068
        %v7018 = vpop.f32.mrf.mxu0
        %v7019 = vadd.f32 %v6930, %v7018
        %v7020 = vpop.f32.mrf.mxu0
        %v7021 = vadd.f32 %v6932, %v7020
        %7022 = vmatmul.bf16.gmra.mxu0 %v4077
        %v7023 = vpop.f32.mrf.mxu0
        %v7024 = vadd.f32 %v6935, %v7023
        %v7025 = vpop.f32.mrf.mxu0
        %v7026 = vadd.f32 %v6937, %v7025
        %7027 = vmatmul.bf16.gmra.mxu0 %v4086
        %v7028 = vpop.f32.mrf.mxu0
        %v7029 = vadd.f32 %v6940, %v7028
        %v7030 = vpop.f32.mrf.mxu0
        %v7031 = vadd.f32 %v6942, %v7030
        %7032 = vmatmul.bf16.gmra.mxu0 %v4095
        %v7033 = vpop.f32.mrf.mxu0
        %v7034 = vadd.f32 %v6945, %v7033
        %v7035 = vpop.f32.mrf.mxu0
        %v7036 = vadd.f32 %v6947, %v7035
        %7037 = vmatmul.bf16.gmra.mxu0 %v4104
        %v7038 = vpop.f32.mrf.mxu0
        %v7039 = vadd.f32 %v6950, %v7038
        %v7040 = vpop.f32.mrf.mxu0
        %v7041 = vadd.f32 %v6952, %v7040
        %7042 = vmatmul.bf16.gmra.mxu0 %v4113
        %v7043 = vpop.f32.mrf.mxu0
        %v7044 = vadd.f32 %v6955, %v7043
        %v7045 = vpop.f32.mrf.mxu0
        %v7046 = vadd.f32 %v6957, %v7045
        %7047 = vmatmul.bf16.gmra.mxu0 %v4122
        %v7048 = vpop.f32.mrf.mxu0
        %v7049 = vadd.f32 %v6960, %v7048
        %v7050 = vpop.f32.mrf.mxu0
        %v7051 = vadd.f32 %v6962, %v7050
        %7052 = vmatmul.bf16.gmra.mxu0 %v4131
        %v7053 = vpop.f32.mrf.mxu0
        %v7054 = vadd.f32 %v6965, %v7053
        %v7055 = vpop.f32.mrf.mxu0
        %v7056 = vadd.f32 %v6967, %v7055
        %7057 = vmatmul.bf16.gmra.mxu0 %v4140
        %v7058 = vpop.f32.mrf.mxu0
        %v7059 = vadd.f32 %v6970, %v7058
        %v7060 = vpop.f32.mrf.mxu0
        %v7061 = vadd.f32 %v6972, %v7060
        %7062 = vdwg.mxu0
        %7063 = vmatpush.bf16.msra.mxu0 %v5373
        %7064 = vmatpush.bf16.msra.mxu0 %v5369
        %7065 = vmatpush.bf16.msra.mxu0 %v5365
        %7066 = vmatpush.bf16.msra.mxu0 %v5361
        %7067 = vmatpush.bf16.msra.mxu0 %v5357
        %7068 = vmatpush.bf16.msra.mxu0 %v5353
        %7069 = vmatpush.bf16.msra.mxu0 %v5349
        %7070 = vmatpush.bf16.msra.mxu0 %v5345
        %7071 = vmatmul.bf16.gmra.mxu0 %v4006
        %v7072 = vpop.f32.mrf.mxu0
        %v7073 = vadd.f32 %v6984, %v7072
        %v7074 = vpop.f32.mrf.mxu0
        %v7075 = vadd.f32 %v6986, %v7074
        %7076 = vmatmul.bf16.gmra.mxu0 %v4015
        %v7077 = vpop.f32.mrf.mxu0
        %v7078 = vadd.f32 %v6989, %v7077
        %v7079 = vpop.f32.mrf.mxu0
        %v7080 = vadd.f32 %v6991, %v7079
        %7081 = vmatmul.bf16.gmra.mxu0 %v4024
        %v7082 = vpop.f32.mrf.mxu0
        %v7083 = vadd.f32 %v6994, %v7082
        %v7084 = vpop.f32.mrf.mxu0
        %v7085 = vadd.f32 %v6996, %v7084
        %7086 = vmatmul.bf16.gmra.mxu0 %v4033
        %v7087 = vpop.f32.mrf.mxu0
        %v7088 = vadd.f32 %v6999, %v7087
        %v7089 = vpop.f32.mrf.mxu0
        %v7090 = vadd.f32 %v7001, %v7089
        %7091 = vmatmul.bf16.gmra.mxu0 %v4042
        %v7092 = vpop.f32.mrf.mxu0
        %v7093 = vadd.f32 %v7004, %v7092
        %v7094 = vpop.f32.mrf.mxu0
        %v7095 = vadd.f32 %v7006, %v7094
        %7096 = vmatmul.bf16.gmra.mxu0 %v4051
        %v7097 = vpop.f32.mrf.mxu0
        %v7098 = vadd.f32 %v7009, %v7097
        %v7099 = vpop.f32.mrf.mxu0
        %v7100 = vadd.f32 %v7011, %v7099
        %7101 = vmatmul.bf16.gmra.mxu0 %v4060
        %v7102 = vpop.f32.mrf.mxu0
        %v7103 = vadd.f32 %v7014, %v7102
        %v7104 = vpop.f32.mrf.mxu0
        %v7105 = vadd.f32 %v7016, %v7104
        %7106 = vmatmul.bf16.gmra.mxu0 %v4069
        %v7107 = vpop.f32.mrf.mxu0
        %v7108 = vadd.f32 %v7019, %v7107
        %v7109 = vpop.f32.mrf.mxu0
        %v7110 = vadd.f32 %v7021, %v7109
        %7111 = vmatmul.bf16.gmra.mxu0 %v4078
        %v7112 = vpop.f32.mrf.mxu0
        %v7113 = vadd.f32 %v7024, %v7112
        %v7114 = vpop.f32.mrf.mxu0
        %v7115 = vadd.f32 %v7026, %v7114
        %7116 = vmatmul.bf16.gmra.mxu0 %v4087
        %v7117 = vpop.f32.mrf.mxu0
        %v7118 = vadd.f32 %v7029, %v7117
        %v7119 = vpop.f32.mrf.mxu0
        %v7120 = vadd.f32 %v7031, %v7119
        %7121 = vmatmul.bf16.gmra.mxu0 %v4096
        %v7122 = vpop.f32.mrf.mxu0
        %v7123 = vadd.f32 %v7034, %v7122
        %v7124 = vpop.f32.mrf.mxu0
        %v7125 = vadd.f32 %v7036, %v7124
        %7126 = vmatmul.bf16.gmra.mxu0 %v4105
        %v7127 = vpop.f32.mrf.mxu0
        %v7128 = vadd.f32 %v7039, %v7127
        %v7129 = vpop.f32.mrf.mxu0
        %v7130 = vadd.f32 %v7041, %v7129
        %7131 = vmatmul.bf16.gmra.mxu0 %v4114
        %v7132 = vpop.f32.mrf.mxu0
        %v7133 = vadd.f32 %v7044, %v7132
        %v7134 = vpop.f32.mrf.mxu0
        %v7135 = vadd.f32 %v7046, %v7134
        %7136 = vmatmul.bf16.gmra.mxu0 %v4123
        %v7137 = vpop.f32.mrf.mxu0
        %v7138 = vadd.f32 %v7049, %v7137
        %v7139 = vpop.f32.mrf.mxu0
        %v7140 = vadd.f32 %v7051, %v7139
        %7141 = vmatmul.bf16.gmra.mxu0 %v4132
        %v7142 = vpop.f32.mrf.mxu0
        %v7143 = vadd.f32 %v7054, %v7142
        %v7144 = vpop.f32.mrf.mxu0
        %v7145 = vadd.f32 %v7056, %v7144
        %7146 = vmatmul.bf16.gmra.mxu0 %v4141
        %v7147 = vpop.f32.mrf.mxu0
        %v7148 = vadd.f32 %v7059, %v7147
        %v7149 = vpop.f32.mrf.mxu0
        %v7150 = vadd.f32 %v7061, %v7149
        %7151 = vdwg.mxu0
        %7152 = vmatpush.bf16.msra.mxu0 %v5405
        %7153 = vmatpush.bf16.msra.mxu0 %v5401
        %7154 = vmatpush.bf16.msra.mxu0 %v5397
        %7155 = vmatpush.bf16.msra.mxu0 %v5393
        %7156 = vmatpush.bf16.msra.mxu0 %v5389
        %7157 = vmatpush.bf16.msra.mxu0 %v5385
        %7158 = vmatpush.bf16.msra.mxu0 %v5381
        %7159 = vmatpush.bf16.msra.mxu0 %v5377
        %7160 = vmatmul.bf16.gmra.mxu0 %v4007
        %v7161 = vpop.f32.mrf.mxu0
        %v7162 = vadd.f32 %v7073, %v7161
        %v7163 = vpop.f32.mrf.mxu0
        %v7164 = vadd.f32 %v7075, %v7163
        %7165 = vmatmul.bf16.gmra.mxu0 %v4016
        %v7166 = vpop.f32.mrf.mxu0
        %v7167 = vadd.f32 %v7078, %v7166
        %v7168 = vpop.f32.mrf.mxu0
        %v7169 = vadd.f32 %v7080, %v7168
        %7170 = vmatmul.bf16.gmra.mxu0 %v4025
        %v7171 = vpop.f32.mrf.mxu0
        %v7172 = vadd.f32 %v7083, %v7171
        %v7173 = vpop.f32.mrf.mxu0
        %v7174 = vadd.f32 %v7085, %v7173
        %7175 = vmatmul.bf16.gmra.mxu0 %v4034
        %v7176 = vpop.f32.mrf.mxu0
        %v7177 = vadd.f32 %v7088, %v7176
        %v7178 = vpop.f32.mrf.mxu0
        %v7179 = vadd.f32 %v7090, %v7178
        %7180 = vmatmul.bf16.gmra.mxu0 %v4043
        %v7181 = vpop.f32.mrf.mxu0
        %v7182 = vadd.f32 %v7093, %v7181
        %v7183 = vpop.f32.mrf.mxu0
        %v7184 = vadd.f32 %v7095, %v7183
        %7185 = vmatmul.bf16.gmra.mxu0 %v4052
        %v7186 = vpop.f32.mrf.mxu0
        %v7187 = vadd.f32 %v7098, %v7186
        %v7188 = vpop.f32.mrf.mxu0
        %v7189 = vadd.f32 %v7100, %v7188
        %7190 = vmatmul.bf16.gmra.mxu0 %v4061
        %v7191 = vpop.f32.mrf.mxu0
        %v7192 = vadd.f32 %v7103, %v7191
        %v7193 = vpop.f32.mrf.mxu0
        %v7194 = vadd.f32 %v7105, %v7193
        %7195 = vmatmul.bf16.gmra.mxu0 %v4070
        %v7196 = vpop.f32.mrf.mxu0
        %v7197 = vadd.f32 %v7108, %v7196
        %v7198 = vpop.f32.mrf.mxu0
        %v7199 = vadd.f32 %v7110, %v7198
        %7200 = vmatmul.bf16.gmra.mxu0 %v4079
        %v7201 = vpop.f32.mrf.mxu0
        %v7202 = vadd.f32 %v7113, %v7201
        %v7203 = vpop.f32.mrf.mxu0
        %v7204 = vadd.f32 %v7115, %v7203
        %7205 = vmatmul.bf16.gmra.mxu0 %v4088
        %v7206 = vpop.f32.mrf.mxu0
        %v7207 = vadd.f32 %v7118, %v7206
        %v7208 = vpop.f32.mrf.mxu0
        %v7209 = vadd.f32 %v7120, %v7208
        %7210 = vmatmul.bf16.gmra.mxu0 %v4097
        %v7211 = vpop.f32.mrf.mxu0
        %v7212 = vadd.f32 %v7123, %v7211
        %v7213 = vpop.f32.mrf.mxu0
        %v7214 = vadd.f32 %v7125, %v7213
        %7215 = vmatmul.bf16.gmra.mxu0 %v4106
        %v7216 = vpop.f32.mrf.mxu0
        %v7217 = vadd.f32 %v7128, %v7216
        %v7218 = vpop.f32.mrf.mxu0
        %v7219 = vadd.f32 %v7130, %v7218
        %7220 = vmatmul.bf16.gmra.mxu0 %v4115
        %v7221 = vpop.f32.mrf.mxu0
        %v7222 = vadd.f32 %v7133, %v7221
        %v7223 = vpop.f32.mrf.mxu0
        %v7224 = vadd.f32 %v7135, %v7223
        %7225 = vmatmul.bf16.gmra.mxu0 %v4124
        %v7226 = vpop.f32.mrf.mxu0
        %v7227 = vadd.f32 %v7138, %v7226
        %v7228 = vpop.f32.mrf.mxu0
        %v7229 = vadd.f32 %v7140, %v7228
        %7230 = vmatmul.bf16.gmra.mxu0 %v4133
        %v7231 = vpop.f32.mrf.mxu0
        %v7232 = vadd.f32 %v7143, %v7231
        %v7233 = vpop.f32.mrf.mxu0
        %v7234 = vadd.f32 %v7145, %v7233
        %7235 = vmatmul.bf16.gmra.mxu0 %v4142
        %v7236 = vpop.f32.mrf.mxu0
        %v7237 = vadd.f32 %v7148, %v7236
        %v7238 = vpop.f32.mrf.mxu0
        %v7239 = vadd.f32 %v7150, %v7238
        %7240 = vdwg.mxu0
        %7241 = vmatpush.bf16.msra.mxu0 %v5437
        %7242 = vmatpush.bf16.msra.mxu0 %v5433
        %7243 = vmatpush.bf16.msra.mxu0 %v5429
        %7244 = vmatpush.bf16.msra.mxu0 %v5425
        %7245 = vmatpush.bf16.msra.mxu0 %v5421
        %7246 = vmatpush.bf16.msra.mxu0 %v5417
        %7247 = vmatpush.bf16.msra.mxu0 %v5413
        %7248 = vmatpush.bf16.msra.mxu0 %v5409
        %7249 = vmatmul.bf16.gmra.mxu0 %v4008
        %v7250 = vpop.f32.mrf.mxu0
        %v7251 = vadd.f32 %v7162, %v7250
        %v7252 = vpop.f32.mrf.mxu0
        %v7253 = vadd.f32 %v7164, %v7252
        %7254 = vmatmul.bf16.gmra.mxu0 %v4017
        %v7255 = vpop.f32.mrf.mxu0
        %v7256 = vadd.f32 %v7167, %v7255
        %v7257 = vpop.f32.mrf.mxu0
        %v7258 = vadd.f32 %v7169, %v7257
        %7259 = vmatmul.bf16.gmra.mxu0 %v4026
        %v7260 = vpop.f32.mrf.mxu0
        %v7261 = vadd.f32 %v7172, %v7260
        %v7262 = vpop.f32.mrf.mxu0
        %v7263 = vadd.f32 %v7174, %v7262
        %7264 = vmatmul.bf16.gmra.mxu0 %v4035
        %v7265 = vpop.f32.mrf.mxu0
        %v7266 = vadd.f32 %v7177, %v7265
        %v7267 = vpop.f32.mrf.mxu0
        %v7268 = vadd.f32 %v7179, %v7267
        %7269 = vmatmul.bf16.gmra.mxu0 %v4044
        %v7270 = vpop.f32.mrf.mxu0
        %v7271 = vadd.f32 %v7182, %v7270
        %v7272 = vpop.f32.mrf.mxu0
        %v7273 = vadd.f32 %v7184, %v7272
        %7274 = vmatmul.bf16.gmra.mxu0 %v4053
        %v7275 = vpop.f32.mrf.mxu0
        %v7276 = vadd.f32 %v7187, %v7275
        %v7277 = vpop.f32.mrf.mxu0
        %v7278 = vadd.f32 %v7189, %v7277
        %7279 = vmatmul.bf16.gmra.mxu0 %v4062
        %v7280 = vpop.f32.mrf.mxu0
        %v7281 = vadd.f32 %v7192, %v7280
        %v7282 = vpop.f32.mrf.mxu0
        %v7283 = vadd.f32 %v7194, %v7282
        %7284 = vmatmul.bf16.gmra.mxu0 %v4071
        %v7285 = vpop.f32.mrf.mxu0
        %v7286 = vadd.f32 %v7197, %v7285
        %v7287 = vpop.f32.mrf.mxu0
        %v7288 = vadd.f32 %v7199, %v7287
        %7289 = vmatmul.bf16.gmra.mxu0 %v4080
        %v7290 = vpop.f32.mrf.mxu0
        %v7291 = vadd.f32 %v7202, %v7290
        %v7292 = vpop.f32.mrf.mxu0
        %v7293 = vadd.f32 %v7204, %v7292
        %7294 = vmatmul.bf16.gmra.mxu0 %v4089
        %v7295 = vpop.f32.mrf.mxu0
        %v7296 = vadd.f32 %v7207, %v7295
        %v7297 = vpop.f32.mrf.mxu0
        %v7298 = vadd.f32 %v7209, %v7297
        %7299 = vmatmul.bf16.gmra.mxu0 %v4098
        %v7300 = vpop.f32.mrf.mxu0
        %v7301 = vadd.f32 %v7212, %v7300
        %v7302 = vpop.f32.mrf.mxu0
        %v7303 = vadd.f32 %v7214, %v7302
        %7304 = vmatmul.bf16.gmra.mxu0 %v4107
        %v7305 = vpop.f32.mrf.mxu0
        %v7306 = vadd.f32 %v7217, %v7305
        %v7307 = vpop.f32.mrf.mxu0
        %v7308 = vadd.f32 %v7219, %v7307
        %7309 = vmatmul.bf16.gmra.mxu0 %v4116
        %v7310 = vpop.f32.mrf.mxu0
        %v7311 = vadd.f32 %v7222, %v7310
        %v7312 = vpop.f32.mrf.mxu0
        %v7313 = vadd.f32 %v7224, %v7312
        %7314 = vmatmul.bf16.gmra.mxu0 %v4125
        %v7315 = vpop.f32.mrf.mxu0
        %v7316 = vadd.f32 %v7227, %v7315
        %v7317 = vpop.f32.mrf.mxu0
        %v7318 = vadd.f32 %v7229, %v7317
        %7319 = vmatmul.bf16.gmra.mxu0 %v4134
        %v7320 = vpop.f32.mrf.mxu0
        %v7321 = vadd.f32 %v7232, %v7320
        %v7322 = vpop.f32.mrf.mxu0
        %v7323 = vadd.f32 %v7234, %v7322
        %7324 = vmatmul.bf16.gmra.mxu0 %v4143
        %v7325 = vpop.f32.mrf.mxu0
        %v7326 = vadd.f32 %v7237, %v7325
        %v7327 = vpop.f32.mrf.mxu0
        %v7328 = vadd.f32 %v7239, %v7327
        %7329 = vdwg.mxu0
        %7330 = vmatpush.bf16.msra.mxu0 %v5182
        %7331 = vmatpush.bf16.msra.mxu0 %v5178
        %7332 = vmatpush.bf16.msra.mxu0 %v5174
        %7333 = vmatpush.bf16.msra.mxu0 %v5170
        %7334 = vmatpush.bf16.msra.mxu0 %v5166
        %7335 = vmatpush.bf16.msra.mxu0 %v5162
        %7336 = vmatpush.bf16.msra.mxu0 %v5158
        %7337 = vmatpush.bf16.msra.mxu0 %v5154
        %7338 = vmatmul.bf16.gmra.mxu0 %v4000
        %v7339 = vpop.f32.mrf.mxu0
        %v7340 = vadd.f32 0.0, %v7339
        %v7341 = vpop.f32.mrf.mxu0
        %v7342 = vadd.f32 0.0, %v7341
        %7343 = vmatmul.bf16.gmra.mxu0 %v4009
        %v7344 = vpop.f32.mrf.mxu0
        %v7345 = vadd.f32 0.0, %v7344
        %v7346 = vpop.f32.mrf.mxu0
        %v7347 = vadd.f32 0.0, %v7346
        %7348 = vmatmul.bf16.gmra.mxu0 %v4018
        %v7349 = vpop.f32.mrf.mxu0
        %v7350 = vadd.f32 0.0, %v7349
        %v7351 = vpop.f32.mrf.mxu0
        %v7352 = vadd.f32 0.0, %v7351
        %7353 = vmatmul.bf16.gmra.mxu0 %v4027
        %v7354 = vpop.f32.mrf.mxu0
        %v7355 = vadd.f32 0.0, %v7354
        %v7356 = vpop.f32.mrf.mxu0
        %v7357 = vadd.f32 0.0, %v7356
        %7358 = vmatmul.bf16.gmra.mxu0 %v4036
        %v7359 = vpop.f32.mrf.mxu0
        %v7360 = vadd.f32 0.0, %v7359
        %v7361 = vpop.f32.mrf.mxu0
        %v7362 = vadd.f32 0.0, %v7361
        %7363 = vmatmul.bf16.gmra.mxu0 %v4045
        %v7364 = vpop.f32.mrf.mxu0
        %v7365 = vadd.f32 0.0, %v7364
        %v7366 = vpop.f32.mrf.mxu0
        %v7367 = vadd.f32 0.0, %v7366
        %7368 = vmatmul.bf16.gmra.mxu0 %v4054
        %v7369 = vpop.f32.mrf.mxu0
        %v7370 = vadd.f32 0.0, %v7369
        %v7371 = vpop.f32.mrf.mxu0
        %v7372 = vadd.f32 0.0, %v7371
        %7373 = vmatmul.bf16.gmra.mxu0 %v4063
        %v7374 = vpop.f32.mrf.mxu0
        %v7375 = vadd.f32 0.0, %v7374
        %v7376 = vpop.f32.mrf.mxu0
        %v7377 = vadd.f32 0.0, %v7376
        %7378 = vmatmul.bf16.gmra.mxu0 %v4072
        %v7379 = vpop.f32.mrf.mxu0
        %v7380 = vadd.f32 0.0, %v7379
        %v7381 = vpop.f32.mrf.mxu0
        %v7382 = vadd.f32 0.0, %v7381
        %7383 = vmatmul.bf16.gmra.mxu0 %v4081
        %v7384 = vpop.f32.mrf.mxu0
        %v7385 = vadd.f32 0.0, %v7384
        %v7386 = vpop.f32.mrf.mxu0
        %v7387 = vadd.f32 0.0, %v7386
        %7388 = vmatmul.bf16.gmra.mxu0 %v4090
        %v7389 = vpop.f32.mrf.mxu0
        %v7390 = vadd.f32 0.0, %v7389
        %v7391 = vpop.f32.mrf.mxu0
        %v7392 = vadd.f32 0.0, %v7391
        %7393 = vmatmul.bf16.gmra.mxu0 %v4099
        %v7394 = vpop.f32.mrf.mxu0
        %v7395 = vadd.f32 0.0, %v7394
        %v7396 = vpop.f32.mrf.mxu0
        %v7397 = vadd.f32 0.0, %v7396
        %7398 = vmatmul.bf16.gmra.mxu0 %v4108
        %v7399 = vpop.f32.mrf.mxu0
        %v7400 = vadd.f32 0.0, %v7399
        %v7401 = vpop.f32.mrf.mxu0
        %v7402 = vadd.f32 0.0, %v7401
        %7403 = vmatmul.bf16.gmra.mxu0 %v4117
        %v7404 = vpop.f32.mrf.mxu0
        %v7405 = vadd.f32 0.0, %v7404
        %v7406 = vpop.f32.mrf.mxu0
        %v7407 = vadd.f32 0.0, %v7406
        %7408 = vmatmul.bf16.gmra.mxu0 %v4126
        %v7409 = vpop.f32.mrf.mxu0
        %v7410 = vadd.f32 0.0, %v7409
        %v7411 = vpop.f32.mrf.mxu0
        %v7412 = vadd.f32 0.0, %v7411
        %7413 = vmatmul.bf16.gmra.mxu0 %v4135
        %v7414 = vpop.f32.mrf.mxu0
        %v7415 = vadd.f32 0.0, %v7414
        %v7416 = vpop.f32.mrf.mxu0
        %v7417 = vadd.f32 0.0, %v7416
        %7418 = vdwg.mxu0
        %7419 = vmatpush.bf16.msra.mxu0 %v5214
        %7420 = vmatpush.bf16.msra.mxu0 %v5210
        %7421 = vmatpush.bf16.msra.mxu0 %v5206
        %7422 = vmatpush.bf16.msra.mxu0 %v5202
        %7423 = vmatpush.bf16.msra.mxu0 %v5198
        %7424 = vmatpush.bf16.msra.mxu0 %v5194
        %7425 = vmatpush.bf16.msra.mxu0 %v5190
        %7426 = vmatpush.bf16.msra.mxu0 %v5186
        %7427 = vmatmul.bf16.gmra.mxu0 %v4001
        %v7428 = vpop.f32.mrf.mxu0
        %v7429 = vadd.f32 %v7340, %v7428
        %v7430 = vpop.f32.mrf.mxu0
        %v7431 = vadd.f32 %v7342, %v7430
        %7432 = vmatmul.bf16.gmra.mxu0 %v4010
        %v7433 = vpop.f32.mrf.mxu0
        %v7434 = vadd.f32 %v7345, %v7433
        %v7435 = vpop.f32.mrf.mxu0
        %v7436 = vadd.f32 %v7347, %v7435
        %7437 = vmatmul.bf16.gmra.mxu0 %v4019
        %v7438 = vpop.f32.mrf.mxu0
        %v7439 = vadd.f32 %v7350, %v7438
        %v7440 = vpop.f32.mrf.mxu0
        %v7441 = vadd.f32 %v7352, %v7440
        %7442 = vmatmul.bf16.gmra.mxu0 %v4028
        %v7443 = vpop.f32.mrf.mxu0
        %v7444 = vadd.f32 %v7355, %v7443
        %v7445 = vpop.f32.mrf.mxu0
        %v7446 = vadd.f32 %v7357, %v7445
        %7447 = vmatmul.bf16.gmra.mxu0 %v4037
        %v7448 = vpop.f32.mrf.mxu0
        %v7449 = vadd.f32 %v7360, %v7448
        %v7450 = vpop.f32.mrf.mxu0
        %v7451 = vadd.f32 %v7362, %v7450
        %7452 = vmatmul.bf16.gmra.mxu0 %v4046
        %v7453 = vpop.f32.mrf.mxu0
        %v7454 = vadd.f32 %v7365, %v7453
        %v7455 = vpop.f32.mrf.mxu0
        %v7456 = vadd.f32 %v7367, %v7455
        %7457 = vmatmul.bf16.gmra.mxu0 %v4055
        %v7458 = vpop.f32.mrf.mxu0
        %v7459 = vadd.f32 %v7370, %v7458
        %v7460 = vpop.f32.mrf.mxu0
        %v7461 = vadd.f32 %v7372, %v7460
        %7462 = vmatmul.bf16.gmra.mxu0 %v4064
        %v7463 = vpop.f32.mrf.mxu0
        %v7464 = vadd.f32 %v7375, %v7463
        %v7465 = vpop.f32.mrf.mxu0
        %v7466 = vadd.f32 %v7377, %v7465
        %7467 = vmatmul.bf16.gmra.mxu0 %v4073
        %v7468 = vpop.f32.mrf.mxu0
        %v7469 = vadd.f32 %v7380, %v7468
        %v7470 = vpop.f32.mrf.mxu0
        %v7471 = vadd.f32 %v7382, %v7470
        %7472 = vmatmul.bf16.gmra.mxu0 %v4082
        %v7473 = vpop.f32.mrf.mxu0
        %v7474 = vadd.f32 %v7385, %v7473
        %v7475 = vpop.f32.mrf.mxu0
        %v7476 = vadd.f32 %v7387, %v7475
        %7477 = vmatmul.bf16.gmra.mxu0 %v4091
        %v7478 = vpop.f32.mrf.mxu0
        %v7479 = vadd.f32 %v7390, %v7478
        %v7480 = vpop.f32.mrf.mxu0
        %v7481 = vadd.f32 %v7392, %v7480
        %7482 = vmatmul.bf16.gmra.mxu0 %v4100
        %v7483 = vpop.f32.mrf.mxu0
        %v7484 = vadd.f32 %v7395, %v7483
        %v7485 = vpop.f32.mrf.mxu0
        %v7486 = vadd.f32 %v7397, %v7485
        %7487 = vmatmul.bf16.gmra.mxu0 %v4109
        %v7488 = vpop.f32.mrf.mxu0
        %v7489 = vadd.f32 %v7400, %v7488
        %v7490 = vpop.f32.mrf.mxu0
        %v7491 = vadd.f32 %v7402, %v7490
        %7492 = vmatmul.bf16.gmra.mxu0 %v4118
        %v7493 = vpop.f32.mrf.mxu0
        %v7494 = vadd.f32 %v7405, %v7493
        %v7495 = vpop.f32.mrf.mxu0
        %v7496 = vadd.f32 %v7407, %v7495
        %7497 = vmatmul.bf16.gmra.mxu0 %v4127
        %v7498 = vpop.f32.mrf.mxu0
        %v7499 = vadd.f32 %v7410, %v7498
        %v7500 = vpop.f32.mrf.mxu0
        %v7501 = vadd.f32 %v7412, %v7500
        %7502 = vmatmul.bf16.gmra.mxu0 %v4136
        %v7503 = vpop.f32.mrf.mxu0
        %v7504 = vadd.f32 %v7415, %v7503
        %v7505 = vpop.f32.mrf.mxu0
        %v7506 = vadd.f32 %v7417, %v7505
        %7507 = vdwg.mxu0
        %7508 = vmatpush.bf16.msra.mxu0 %v5246
        %7509 = vmatpush.bf16.msra.mxu0 %v5242
        %7510 = vmatpush.bf16.msra.mxu0 %v5238
        %7511 = vmatpush.bf16.msra.mxu0 %v5234
        %7512 = vmatpush.bf16.msra.mxu0 %v5230
        %7513 = vmatpush.bf16.msra.mxu0 %v5226
        %7514 = vmatpush.bf16.msra.mxu0 %v5222
        %7515 = vmatpush.bf16.msra.mxu0 %v5218
        %7516 = vmatmul.bf16.gmra.mxu0 %v4002
        %v7517 = vpop.f32.mrf.mxu0
        %v7518 = vadd.f32 %v7429, %v7517
        %v7519 = vpop.f32.mrf.mxu0
        %v7520 = vadd.f32 %v7431, %v7519
        %7521 = vmatmul.bf16.gmra.mxu0 %v4011
        %v7522 = vpop.f32.mrf.mxu0
        %v7523 = vadd.f32 %v7434, %v7522
        %v7524 = vpop.f32.mrf.mxu0
        %v7525 = vadd.f32 %v7436, %v7524
        %7526 = vmatmul.bf16.gmra.mxu0 %v4020
        %v7527 = vpop.f32.mrf.mxu0
        %v7528 = vadd.f32 %v7439, %v7527
        %v7529 = vpop.f32.mrf.mxu0
        %v7530 = vadd.f32 %v7441, %v7529
        %7531 = vmatmul.bf16.gmra.mxu0 %v4029
        %v7532 = vpop.f32.mrf.mxu0
        %v7533 = vadd.f32 %v7444, %v7532
        %v7534 = vpop.f32.mrf.mxu0
        %v7535 = vadd.f32 %v7446, %v7534
        %7536 = vmatmul.bf16.gmra.mxu0 %v4038
        %v7537 = vpop.f32.mrf.mxu0
        %v7538 = vadd.f32 %v7449, %v7537
        %v7539 = vpop.f32.mrf.mxu0
        %v7540 = vadd.f32 %v7451, %v7539
        %7541 = vmatmul.bf16.gmra.mxu0 %v4047
        %v7542 = vpop.f32.mrf.mxu0
        %v7543 = vadd.f32 %v7454, %v7542
        %v7544 = vpop.f32.mrf.mxu0
        %v7545 = vadd.f32 %v7456, %v7544
        %7546 = vmatmul.bf16.gmra.mxu0 %v4056
        %v7547 = vpop.f32.mrf.mxu0
        %v7548 = vadd.f32 %v7459, %v7547
        %v7549 = vpop.f32.mrf.mxu0
        %v7550 = vadd.f32 %v7461, %v7549
        %7551 = vmatmul.bf16.gmra.mxu0 %v4065
        %v7552 = vpop.f32.mrf.mxu0
        %v7553 = vadd.f32 %v7464, %v7552
        %v7554 = vpop.f32.mrf.mxu0
        %v7555 = vadd.f32 %v7466, %v7554
        %7556 = vmatmul.bf16.gmra.mxu0 %v4074
        %v7557 = vpop.f32.mrf.mxu0
        %v7558 = vadd.f32 %v7469, %v7557
        %v7559 = vpop.f32.mrf.mxu0
        %v7560 = vadd.f32 %v7471, %v7559
        %7561 = vmatmul.bf16.gmra.mxu0 %v4083
        %v7562 = vpop.f32.mrf.mxu0
        %v7563 = vadd.f32 %v7474, %v7562
        %v7564 = vpop.f32.mrf.mxu0
        %v7565 = vadd.f32 %v7476, %v7564
        %7566 = vmatmul.bf16.gmra.mxu0 %v4092
        %v7567 = vpop.f32.mrf.mxu0
        %v7568 = vadd.f32 %v7479, %v7567
        %v7569 = vpop.f32.mrf.mxu0
        %v7570 = vadd.f32 %v7481, %v7569
        %7571 = vmatmul.bf16.gmra.mxu0 %v4101
        %v7572 = vpop.f32.mrf.mxu0
        %v7573 = vadd.f32 %v7484, %v7572
        %v7574 = vpop.f32.mrf.mxu0
        %v7575 = vadd.f32 %v7486, %v7574
        %7576 = vmatmul.bf16.gmra.mxu0 %v4110
        %v7577 = vpop.f32.mrf.mxu0
        %v7578 = vadd.f32 %v7489, %v7577
        %v7579 = vpop.f32.mrf.mxu0
        %v7580 = vadd.f32 %v7491, %v7579
        %7581 = vmatmul.bf16.gmra.mxu0 %v4119
        %v7582 = vpop.f32.mrf.mxu0
        %v7583 = vadd.f32 %v7494, %v7582
        %v7584 = vpop.f32.mrf.mxu0
        %v7585 = vadd.f32 %v7496, %v7584
        %7586 = vmatmul.bf16.gmra.mxu0 %v4128
        %v7587 = vpop.f32.mrf.mxu0
        %v7588 = vadd.f32 %v7499, %v7587
        %v7589 = vpop.f32.mrf.mxu0
        %v7590 = vadd.f32 %v7501, %v7589
        %7591 = vmatmul.bf16.gmra.mxu0 %v4137
        %v7592 = vpop.f32.mrf.mxu0
        %v7593 = vadd.f32 %v7504, %v7592
        %v7594 = vpop.f32.mrf.mxu0
        %v7595 = vadd.f32 %v7506, %v7594
        %7596 = vdwg.mxu0
        %7597 = vmatpush.bf16.msra.mxu0 %v5278
        %7598 = vmatpush.bf16.msra.mxu0 %v5274
        %7599 = vmatpush.bf16.msra.mxu0 %v5270
        %7600 = vmatpush.bf16.msra.mxu0 %v5266
        %7601 = vmatpush.bf16.msra.mxu0 %v5262
        %7602 = vmatpush.bf16.msra.mxu0 %v5258
        %7603 = vmatpush.bf16.msra.mxu0 %v5254
        %7604 = vmatpush.bf16.msra.mxu0 %v5250
        %7605 = vmatmul.bf16.gmra.mxu0 %v4003
        %v7606 = vpop.f32.mrf.mxu0
        %v7607 = vadd.f32 %v7518, %v7606
        %v7608 = vpop.f32.mrf.mxu0
        %v7609 = vadd.f32 %v7520, %v7608
        %7610 = vmatmul.bf16.gmra.mxu0 %v4012
        %v7611 = vpop.f32.mrf.mxu0
        %v7612 = vadd.f32 %v7523, %v7611
        %v7613 = vpop.f32.mrf.mxu0
        %v7614 = vadd.f32 %v7525, %v7613
        %7615 = vmatmul.bf16.gmra.mxu0 %v4021
        %v7616 = vpop.f32.mrf.mxu0
        %v7617 = vadd.f32 %v7528, %v7616
        %v7618 = vpop.f32.mrf.mxu0
        %v7619 = vadd.f32 %v7530, %v7618
        %7620 = vmatmul.bf16.gmra.mxu0 %v4030
        %v7621 = vpop.f32.mrf.mxu0
        %v7622 = vadd.f32 %v7533, %v7621
        %v7623 = vpop.f32.mrf.mxu0
        %v7624 = vadd.f32 %v7535, %v7623
        %7625 = vmatmul.bf16.gmra.mxu0 %v4039
        %v7626 = vpop.f32.mrf.mxu0
        %v7627 = vadd.f32 %v7538, %v7626
        %v7628 = vpop.f32.mrf.mxu0
        %v7629 = vadd.f32 %v7540, %v7628
        %7630 = vmatmul.bf16.gmra.mxu0 %v4048
        %v7631 = vpop.f32.mrf.mxu0
        %v7632 = vadd.f32 %v7543, %v7631
        %v7633 = vpop.f32.mrf.mxu0
        %v7634 = vadd.f32 %v7545, %v7633
        %7635 = vmatmul.bf16.gmra.mxu0 %v4057
        %v7636 = vpop.f32.mrf.mxu0
        %v7637 = vadd.f32 %v7548, %v7636
        %v7638 = vpop.f32.mrf.mxu0
        %v7639 = vadd.f32 %v7550, %v7638
        %7640 = vmatmul.bf16.gmra.mxu0 %v4066
        %v7641 = vpop.f32.mrf.mxu0
        %v7642 = vadd.f32 %v7553, %v7641
        %v7643 = vpop.f32.mrf.mxu0
        %v7644 = vadd.f32 %v7555, %v7643
        %7645 = vmatmul.bf16.gmra.mxu0 %v4075
        %v7646 = vpop.f32.mrf.mxu0
        %v7647 = vadd.f32 %v7558, %v7646
        %v7648 = vpop.f32.mrf.mxu0
        %v7649 = vadd.f32 %v7560, %v7648
        %7650 = vmatmul.bf16.gmra.mxu0 %v4084
        %v7651 = vpop.f32.mrf.mxu0
        %v7652 = vadd.f32 %v7563, %v7651
        %v7653 = vpop.f32.mrf.mxu0
        %v7654 = vadd.f32 %v7565, %v7653
        %7655 = vmatmul.bf16.gmra.mxu0 %v4093
        %v7656 = vpop.f32.mrf.mxu0
        %v7657 = vadd.f32 %v7568, %v7656
        %v7658 = vpop.f32.mrf.mxu0
        %v7659 = vadd.f32 %v7570, %v7658
        %7660 = vmatmul.bf16.gmra.mxu0 %v4102
        %v7661 = vpop.f32.mrf.mxu0
        %v7662 = vadd.f32 %v7573, %v7661
        %v7663 = vpop.f32.mrf.mxu0
        %v7664 = vadd.f32 %v7575, %v7663
        %7665 = vmatmul.bf16.gmra.mxu0 %v4111
        %v7666 = vpop.f32.mrf.mxu0
        %v7667 = vadd.f32 %v7578, %v7666
        %v7668 = vpop.f32.mrf.mxu0
        %v7669 = vadd.f32 %v7580, %v7668
        %7670 = vmatmul.bf16.gmra.mxu0 %v4120
        %v7671 = vpop.f32.mrf.mxu0
        %v7672 = vadd.f32 %v7583, %v7671
        %v7673 = vpop.f32.mrf.mxu0
        %v7674 = vadd.f32 %v7585, %v7673
        %7675 = vmatmul.bf16.gmra.mxu0 %v4129
        %v7676 = vpop.f32.mrf.mxu0
        %v7677 = vadd.f32 %v7588, %v7676
        %v7678 = vpop.f32.mrf.mxu0
        %v7679 = vadd.f32 %v7590, %v7678
        %7680 = vmatmul.bf16.gmra.mxu0 %v4138
        %v7681 = vpop.f32.mrf.mxu0
        %v7682 = vadd.f32 %v7593, %v7681
        %v7683 = vpop.f32.mrf.mxu0
        %v7684 = vadd.f32 %v7595, %v7683
        %7685 = vdwg.mxu0
        %7686 = vmatpush.bf16.msra.mxu0 %v5310
        %7687 = vmatpush.bf16.msra.mxu0 %v5306
        %7688 = vmatpush.bf16.msra.mxu0 %v5302
        %7689 = vmatpush.bf16.msra.mxu0 %v5298
        %7690 = vmatpush.bf16.msra.mxu0 %v5294
        %7691 = vmatpush.bf16.msra.mxu0 %v5290
        %7692 = vmatpush.bf16.msra.mxu0 %v5286
        %7693 = vmatpush.bf16.msra.mxu0 %v5282
        %7694 = vmatmul.bf16.gmra.mxu0 %v4004
        %v7695 = vpop.f32.mrf.mxu0
        %v7696 = vadd.f32 %v7607, %v7695
        %v7697 = vpop.f32.mrf.mxu0
        %v7698 = vadd.f32 %v7609, %v7697
        %7699 = vmatmul.bf16.gmra.mxu0 %v4013
        %v7700 = vpop.f32.mrf.mxu0
        %v7701 = vadd.f32 %v7612, %v7700
        %v7702 = vpop.f32.mrf.mxu0
        %v7703 = vadd.f32 %v7614, %v7702
        %7704 = vmatmul.bf16.gmra.mxu0 %v4022
        %v7705 = vpop.f32.mrf.mxu0
        %v7706 = vadd.f32 %v7617, %v7705
        %v7707 = vpop.f32.mrf.mxu0
        %v7708 = vadd.f32 %v7619, %v7707
        %7709 = vmatmul.bf16.gmra.mxu0 %v4031
        %v7710 = vpop.f32.mrf.mxu0
        %v7711 = vadd.f32 %v7622, %v7710
        %v7712 = vpop.f32.mrf.mxu0
        %v7713 = vadd.f32 %v7624, %v7712
        %7714 = vmatmul.bf16.gmra.mxu0 %v4040
        %v7715 = vpop.f32.mrf.mxu0
        %v7716 = vadd.f32 %v7627, %v7715
        %v7717 = vpop.f32.mrf.mxu0
        %v7718 = vadd.f32 %v7629, %v7717
        %7719 = vmatmul.bf16.gmra.mxu0 %v4049
        %v7720 = vpop.f32.mrf.mxu0
        %v7721 = vadd.f32 %v7632, %v7720
        %v7722 = vpop.f32.mrf.mxu0
        %v7723 = vadd.f32 %v7634, %v7722
        %7724 = vmatmul.bf16.gmra.mxu0 %v4058
        %v7725 = vpop.f32.mrf.mxu0
        %v7726 = vadd.f32 %v7637, %v7725
        %v7727 = vpop.f32.mrf.mxu0
        %v7728 = vadd.f32 %v7639, %v7727
        %7729 = vmatmul.bf16.gmra.mxu0 %v4067
        %v7730 = vpop.f32.mrf.mxu0
        %v7731 = vadd.f32 %v7642, %v7730
        %v7732 = vpop.f32.mrf.mxu0
        %v7733 = vadd.f32 %v7644, %v7732
        %7734 = vmatmul.bf16.gmra.mxu0 %v4076
        %v7735 = vpop.f32.mrf.mxu0
        %v7736 = vadd.f32 %v7647, %v7735
        %v7737 = vpop.f32.mrf.mxu0
        %v7738 = vadd.f32 %v7649, %v7737
        %7739 = vmatmul.bf16.gmra.mxu0 %v4085
        %v7740 = vpop.f32.mrf.mxu0
        %v7741 = vadd.f32 %v7652, %v7740
        %v7742 = vpop.f32.mrf.mxu0
        %v7743 = vadd.f32 %v7654, %v7742
        %7744 = vmatmul.bf16.gmra.mxu0 %v4094
        %v7745 = vpop.f32.mrf.mxu0
        %v7746 = vadd.f32 %v7657, %v7745
        %v7747 = vpop.f32.mrf.mxu0
        %v7748 = vadd.f32 %v7659, %v7747
        %7749 = vmatmul.bf16.gmra.mxu0 %v4103
        %v7750 = vpop.f32.mrf.mxu0
        %v7751 = vadd.f32 %v7662, %v7750
        %v7752 = vpop.f32.mrf.mxu0
        %v7753 = vadd.f32 %v7664, %v7752
        %7754 = vmatmul.bf16.gmra.mxu0 %v4112
        %v7755 = vpop.f32.mrf.mxu0
        %v7756 = vadd.f32 %v7667, %v7755
        %v7757 = vpop.f32.mrf.mxu0
        %v7758 = vadd.f32 %v7669, %v7757
        %7759 = vmatmul.bf16.gmra.mxu0 %v4121
        %v7760 = vpop.f32.mrf.mxu0
        %v7761 = vadd.f32 %v7672, %v7760
        %v7762 = vpop.f32.mrf.mxu0
        %v7763 = vadd.f32 %v7674, %v7762
        %7764 = vmatmul.bf16.gmra.mxu0 %v4130
        %v7765 = vpop.f32.mrf.mxu0
        %v7766 = vadd.f32 %v7677, %v7765
        %v7767 = vpop.f32.mrf.mxu0
        %v7768 = vadd.f32 %v7679, %v7767
        %7769 = vmatmul.bf16.gmra.mxu0 %v4139
        %v7770 = vpop.f32.mrf.mxu0
        %v7771 = vadd.f32 %v7682, %v7770
        %v7772 = vpop.f32.mrf.mxu0
        %v7773 = vadd.f32 %v7684, %v7772
        %7774 = vdwg.mxu0
        %7775 = vmatpush.bf16.msra.mxu0 %v5342
        %7776 = vmatpush.bf16.msra.mxu0 %v5338
        %7777 = vmatpush.bf16.msra.mxu0 %v5334
        %7778 = vmatpush.bf16.msra.mxu0 %v5330
        %7779 = vmatpush.bf16.msra.mxu0 %v5326
        %7780 = vmatpush.bf16.msra.mxu0 %v5322
        %7781 = vmatpush.bf16.msra.mxu0 %v5318
        %7782 = vmatpush.bf16.msra.mxu0 %v5314
        %7783 = vmatmul.bf16.gmra.mxu0 %v4005
        %v7784 = vpop.f32.mrf.mxu0
        %v7785 = vadd.f32 %v7696, %v7784
        %v7786 = vpop.f32.mrf.mxu0
        %v7787 = vadd.f32 %v7698, %v7786
        %7788 = vmatmul.bf16.gmra.mxu0 %v4014
        %v7789 = vpop.f32.mrf.mxu0
        %v7790 = vadd.f32 %v7701, %v7789
        %v7791 = vpop.f32.mrf.mxu0
        %v7792 = vadd.f32 %v7703, %v7791
        %7793 = vmatmul.bf16.gmra.mxu0 %v4023
        %v7794 = vpop.f32.mrf.mxu0
        %v7795 = vadd.f32 %v7706, %v7794
        %v7796 = vpop.f32.mrf.mxu0
        %v7797 = vadd.f32 %v7708, %v7796
        %7798 = vmatmul.bf16.gmra.mxu0 %v4032
        %v7799 = vpop.f32.mrf.mxu0
        %v7800 = vadd.f32 %v7711, %v7799
        %v7801 = vpop.f32.mrf.mxu0
        %v7802 = vadd.f32 %v7713, %v7801
        %7803 = vmatmul.bf16.gmra.mxu0 %v4041
        %v7804 = vpop.f32.mrf.mxu0
        %v7805 = vadd.f32 %v7716, %v7804
        %v7806 = vpop.f32.mrf.mxu0
        %v7807 = vadd.f32 %v7718, %v7806
        %7808 = vmatmul.bf16.gmra.mxu0 %v4050
        %v7809 = vpop.f32.mrf.mxu0
        %v7810 = vadd.f32 %v7721, %v7809
        %v7811 = vpop.f32.mrf.mxu0
        %v7812 = vadd.f32 %v7723, %v7811
        %7813 = vmatmul.bf16.gmra.mxu0 %v4059
        %v7814 = vpop.f32.mrf.mxu0
        %v7815 = vadd.f32 %v7726, %v7814
        %v7816 = vpop.f32.mrf.mxu0
        %v7817 = vadd.f32 %v7728, %v7816
        %7818 = vmatmul.bf16.gmra.mxu0 %v4068
        %v7819 = vpop.f32.mrf.mxu0
        %v7820 = vadd.f32 %v7731, %v7819
        %v7821 = vpop.f32.mrf.mxu0
        %v7822 = vadd.f32 %v7733, %v7821
        %7823 = vmatmul.bf16.gmra.mxu0 %v4077
        %v7824 = vpop.f32.mrf.mxu0
        %v7825 = vadd.f32 %v7736, %v7824
        %v7826 = vpop.f32.mrf.mxu0
        %v7827 = vadd.f32 %v7738, %v7826
        %7828 = vmatmul.bf16.gmra.mxu0 %v4086
        %v7829 = vpop.f32.mrf.mxu0
        %v7830 = vadd.f32 %v7741, %v7829
        %v7831 = vpop.f32.mrf.mxu0
        %v7832 = vadd.f32 %v7743, %v7831
        %7833 = vmatmul.bf16.gmra.mxu0 %v4095
        %v7834 = vpop.f32.mrf.mxu0
        %v7835 = vadd.f32 %v7746, %v7834
        %v7836 = vpop.f32.mrf.mxu0
        %v7837 = vadd.f32 %v7748, %v7836
        %7838 = vmatmul.bf16.gmra.mxu0 %v4104
        %v7839 = vpop.f32.mrf.mxu0
        %v7840 = vadd.f32 %v7751, %v7839
        %v7841 = vpop.f32.mrf.mxu0
        %v7842 = vadd.f32 %v7753, %v7841
        %7843 = vmatmul.bf16.gmra.mxu0 %v4113
        %v7844 = vpop.f32.mrf.mxu0
        %v7845 = vadd.f32 %v7756, %v7844
        %v7846 = vpop.f32.mrf.mxu0
        %v7847 = vadd.f32 %v7758, %v7846
        %7848 = vmatmul.bf16.gmra.mxu0 %v4122
        %v7849 = vpop.f32.mrf.mxu0
        %v7850 = vadd.f32 %v7761, %v7849
        %v7851 = vpop.f32.mrf.mxu0
        %v7852 = vadd.f32 %v7763, %v7851
        %7853 = vmatmul.bf16.gmra.mxu0 %v4131
        %v7854 = vpop.f32.mrf.mxu0
        %v7855 = vadd.f32 %v7766, %v7854
        %v7856 = vpop.f32.mrf.mxu0
        %v7857 = vadd.f32 %v7768, %v7856
        %7858 = vmatmul.bf16.gmra.mxu0 %v4140
        %v7859 = vpop.f32.mrf.mxu0
        %v7860 = vadd.f32 %v7771, %v7859
        %v7861 = vpop.f32.mrf.mxu0
        %v7862 = vadd.f32 %v7773, %v7861
        %7863 = vdwg.mxu0
        %7864 = vmatpush.bf16.msra.mxu0 %v5374
        %7865 = vmatpush.bf16.msra.mxu0 %v5370
        %7866 = vmatpush.bf16.msra.mxu0 %v5366
        %7867 = vmatpush.bf16.msra.mxu0 %v5362
        %7868 = vmatpush.bf16.msra.mxu0 %v5358
        %7869 = vmatpush.bf16.msra.mxu0 %v5354
        %7870 = vmatpush.bf16.msra.mxu0 %v5350
        %7871 = vmatpush.bf16.msra.mxu0 %v5346
        %7872 = vmatmul.bf16.gmra.mxu0 %v4006
        %v7873 = vpop.f32.mrf.mxu0
        %v7874 = vadd.f32 %v7785, %v7873
        %v7875 = vpop.f32.mrf.mxu0
        %v7876 = vadd.f32 %v7787, %v7875
        %7877 = vmatmul.bf16.gmra.mxu0 %v4015
        %v7878 = vpop.f32.mrf.mxu0
        %v7879 = vadd.f32 %v7790, %v7878
        %v7880 = vpop.f32.mrf.mxu0
        %v7881 = vadd.f32 %v7792, %v7880
        %7882 = vmatmul.bf16.gmra.mxu0 %v4024
        %v7883 = vpop.f32.mrf.mxu0
        %v7884 = vadd.f32 %v7795, %v7883
        %v7885 = vpop.f32.mrf.mxu0
        %v7886 = vadd.f32 %v7797, %v7885
        %7887 = vmatmul.bf16.gmra.mxu0 %v4033
        %v7888 = vpop.f32.mrf.mxu0
        %v7889 = vadd.f32 %v7800, %v7888
        %v7890 = vpop.f32.mrf.mxu0
        %v7891 = vadd.f32 %v7802, %v7890
        %7892 = vmatmul.bf16.gmra.mxu0 %v4042
        %v7893 = vpop.f32.mrf.mxu0
        %v7894 = vadd.f32 %v7805, %v7893
        %v7895 = vpop.f32.mrf.mxu0
        %v7896 = vadd.f32 %v7807, %v7895
        %7897 = vmatmul.bf16.gmra.mxu0 %v4051
        %v7898 = vpop.f32.mrf.mxu0
        %v7899 = vadd.f32 %v7810, %v7898
        %v7900 = vpop.f32.mrf.mxu0
        %v7901 = vadd.f32 %v7812, %v7900
        %7902 = vmatmul.bf16.gmra.mxu0 %v4060
        %v7903 = vpop.f32.mrf.mxu0
        %v7904 = vadd.f32 %v7815, %v7903
        %v7905 = vpop.f32.mrf.mxu0
        %v7906 = vadd.f32 %v7817, %v7905
        %7907 = vmatmul.bf16.gmra.mxu0 %v4069
        %v7908 = vpop.f32.mrf.mxu0
        %v7909 = vadd.f32 %v7820, %v7908
        %v7910 = vpop.f32.mrf.mxu0
        %v7911 = vadd.f32 %v7822, %v7910
        %7912 = vmatmul.bf16.gmra.mxu0 %v4078
        %v7913 = vpop.f32.mrf.mxu0
        %v7914 = vadd.f32 %v7825, %v7913
        %v7915 = vpop.f32.mrf.mxu0
        %v7916 = vadd.f32 %v7827, %v7915
        %7917 = vmatmul.bf16.gmra.mxu0 %v4087
        %v7918 = vpop.f32.mrf.mxu0
        %v7919 = vadd.f32 %v7830, %v7918
        %v7920 = vpop.f32.mrf.mxu0
        %v7921 = vadd.f32 %v7832, %v7920
        %7922 = vmatmul.bf16.gmra.mxu0 %v4096
        %v7923 = vpop.f32.mrf.mxu0
        %v7924 = vadd.f32 %v7835, %v7923
        %v7925 = vpop.f32.mrf.mxu0
        %v7926 = vadd.f32 %v7837, %v7925
        %7927 = vmatmul.bf16.gmra.mxu0 %v4105
        %v7928 = vpop.f32.mrf.mxu0
        %v7929 = vadd.f32 %v7840, %v7928
        %v7930 = vpop.f32.mrf.mxu0
        %v7931 = vadd.f32 %v7842, %v7930
        %7932 = vmatmul.bf16.gmra.mxu0 %v4114
        %v7933 = vpop.f32.mrf.mxu0
        %v7934 = vadd.f32 %v7845, %v7933
        %v7935 = vpop.f32.mrf.mxu0
        %v7936 = vadd.f32 %v7847, %v7935
        %7937 = vmatmul.bf16.gmra.mxu0 %v4123
        %v7938 = vpop.f32.mrf.mxu0
        %v7939 = vadd.f32 %v7850, %v7938
        %v7940 = vpop.f32.mrf.mxu0
        %v7941 = vadd.f32 %v7852, %v7940
        %7942 = vmatmul.bf16.gmra.mxu0 %v4132
        %v7943 = vpop.f32.mrf.mxu0
        %v7944 = vadd.f32 %v7855, %v7943
        %v7945 = vpop.f32.mrf.mxu0
        %v7946 = vadd.f32 %v7857, %v7945
        %7947 = vmatmul.bf16.gmra.mxu0 %v4141
        %v7948 = vpop.f32.mrf.mxu0
        %v7949 = vadd.f32 %v7860, %v7948
        %v7950 = vpop.f32.mrf.mxu0
        %v7951 = vadd.f32 %v7862, %v7950
        %7952 = vdwg.mxu0
        %7953 = vmatpush.bf16.msra.mxu0 %v5406
        %7954 = vmatpush.bf16.msra.mxu0 %v5402
        %7955 = vmatpush.bf16.msra.mxu0 %v5398
        %7956 = vmatpush.bf16.msra.mxu0 %v5394
        %7957 = vmatpush.bf16.msra.mxu0 %v5390
        %7958 = vmatpush.bf16.msra.mxu0 %v5386
        %7959 = vmatpush.bf16.msra.mxu0 %v5382
        %7960 = vmatpush.bf16.msra.mxu0 %v5378
        %7961 = vmatmul.bf16.gmra.mxu0 %v4007
        %v7962 = vpop.f32.mrf.mxu0
        %v7963 = vadd.f32 %v7874, %v7962
        %v7964 = vpop.f32.mrf.mxu0
        %v7965 = vadd.f32 %v7876, %v7964
        %7966 = vmatmul.bf16.gmra.mxu0 %v4016
        %v7967 = vpop.f32.mrf.mxu0
        %v7968 = vadd.f32 %v7879, %v7967
        %v7969 = vpop.f32.mrf.mxu0
        %v7970 = vadd.f32 %v7881, %v7969
        %7971 = vmatmul.bf16.gmra.mxu0 %v4025
        %v7972 = vpop.f32.mrf.mxu0
        %v7973 = vadd.f32 %v7884, %v7972
        %v7974 = vpop.f32.mrf.mxu0
        %v7975 = vadd.f32 %v7886, %v7974
        %7976 = vmatmul.bf16.gmra.mxu0 %v4034
        %v7977 = vpop.f32.mrf.mxu0
        %v7978 = vadd.f32 %v7889, %v7977
        %v7979 = vpop.f32.mrf.mxu0
        %v7980 = vadd.f32 %v7891, %v7979
        %7981 = vmatmul.bf16.gmra.mxu0 %v4043
        %v7982 = vpop.f32.mrf.mxu0
        %v7983 = vadd.f32 %v7894, %v7982
        %v7984 = vpop.f32.mrf.mxu0
        %v7985 = vadd.f32 %v7896, %v7984
        %7986 = vmatmul.bf16.gmra.mxu0 %v4052
        %v7987 = vpop.f32.mrf.mxu0
        %v7988 = vadd.f32 %v7899, %v7987
        %v7989 = vpop.f32.mrf.mxu0
        %v7990 = vadd.f32 %v7901, %v7989
        %7991 = vmatmul.bf16.gmra.mxu0 %v4061
        %v7992 = vpop.f32.mrf.mxu0
        %v7993 = vadd.f32 %v7904, %v7992
        %v7994 = vpop.f32.mrf.mxu0
        %v7995 = vadd.f32 %v7906, %v7994
        %7996 = vmatmul.bf16.gmra.mxu0 %v4070
        %v7997 = vpop.f32.mrf.mxu0
        %v7998 = vadd.f32 %v7909, %v7997
        %v7999 = vpop.f32.mrf.mxu0
        %v8000 = vadd.f32 %v7911, %v7999
        %8001 = vmatmul.bf16.gmra.mxu0 %v4079
        %v8002 = vpop.f32.mrf.mxu0
        %v8003 = vadd.f32 %v7914, %v8002
        %v8004 = vpop.f32.mrf.mxu0
        %v8005 = vadd.f32 %v7916, %v8004
        %8006 = vmatmul.bf16.gmra.mxu0 %v4088
        %v8007 = vpop.f32.mrf.mxu0
        %v8008 = vadd.f32 %v7919, %v8007
        %v8009 = vpop.f32.mrf.mxu0
        %v8010 = vadd.f32 %v7921, %v8009
        %8011 = vmatmul.bf16.gmra.mxu0 %v4097
        %v8012 = vpop.f32.mrf.mxu0
        %v8013 = vadd.f32 %v7924, %v8012
        %v8014 = vpop.f32.mrf.mxu0
        %v8015 = vadd.f32 %v7926, %v8014
        %8016 = vmatmul.bf16.gmra.mxu0 %v4106
        %v8017 = vpop.f32.mrf.mxu0
        %v8018 = vadd.f32 %v7929, %v8017
        %v8019 = vpop.f32.mrf.mxu0
        %v8020 = vadd.f32 %v7931, %v8019
        %8021 = vmatmul.bf16.gmra.mxu0 %v4115
        %v8022 = vpop.f32.mrf.mxu0
        %v8023 = vadd.f32 %v7934, %v8022
        %v8024 = vpop.f32.mrf.mxu0
        %v8025 = vadd.f32 %v7936, %v8024
        %8026 = vmatmul.bf16.gmra.mxu0 %v4124
        %v8027 = vpop.f32.mrf.mxu0
        %v8028 = vadd.f32 %v7939, %v8027
        %v8029 = vpop.f32.mrf.mxu0
        %v8030 = vadd.f32 %v7941, %v8029
        %8031 = vmatmul.bf16.gmra.mxu0 %v4133
        %v8032 = vpop.f32.mrf.mxu0
        %v8033 = vadd.f32 %v7944, %v8032
        %v8034 = vpop.f32.mrf.mxu0
        %v8035 = vadd.f32 %v7946, %v8034
        %8036 = vmatmul.bf16.gmra.mxu0 %v4142
        %v8037 = vpop.f32.mrf.mxu0
        %v8038 = vadd.f32 %v7949, %v8037
        %v8039 = vpop.f32.mrf.mxu0
        %v8040 = vadd.f32 %v7951, %v8039
        %8041 = vdwg.mxu0
        %8042 = vmatpush.bf16.msra.mxu0 %v5438
        %8043 = vmatpush.bf16.msra.mxu0 %v5434
        %8044 = vmatpush.bf16.msra.mxu0 %v5430
        %8045 = vmatpush.bf16.msra.mxu0 %v5426
        %8046 = vmatpush.bf16.msra.mxu0 %v5422
        %8047 = vmatpush.bf16.msra.mxu0 %v5418
        %8048 = vmatpush.bf16.msra.mxu0 %v5414
        %8049 = vmatpush.bf16.msra.mxu0 %v5410
        %8050 = vmatmul.bf16.gmra.mxu0 %v4008
        %v8051 = vpop.f32.mrf.mxu0
        %v8052 = vadd.f32 %v7963, %v8051
        %v8053 = vpop.f32.mrf.mxu0
        %v8054 = vadd.f32 %v7965, %v8053
        %8055 = vmatmul.bf16.gmra.mxu0 %v4017
        %v8056 = vpop.f32.mrf.mxu0
        %v8057 = vadd.f32 %v7968, %v8056
        %v8058 = vpop.f32.mrf.mxu0
        %v8059 = vadd.f32 %v7970, %v8058
        %8060 = vmatmul.bf16.gmra.mxu0 %v4026
        %v8061 = vpop.f32.mrf.mxu0
        %v8062 = vadd.f32 %v7973, %v8061
        %v8063 = vpop.f32.mrf.mxu0
        %v8064 = vadd.f32 %v7975, %v8063
        %8065 = vmatmul.bf16.gmra.mxu0 %v4035
        %v8066 = vpop.f32.mrf.mxu0
        %v8067 = vadd.f32 %v7978, %v8066
        %v8068 = vpop.f32.mrf.mxu0
        %v8069 = vadd.f32 %v7980, %v8068
        %8070 = vmatmul.bf16.gmra.mxu0 %v4044
        %v8071 = vpop.f32.mrf.mxu0
        %v8072 = vadd.f32 %v7983, %v8071
        %v8073 = vpop.f32.mrf.mxu0
        %v8074 = vadd.f32 %v7985, %v8073
        %8075 = vmatmul.bf16.gmra.mxu0 %v4053
        %v8076 = vpop.f32.mrf.mxu0
        %v8077 = vadd.f32 %v7988, %v8076
        %v8078 = vpop.f32.mrf.mxu0
        %v8079 = vadd.f32 %v7990, %v8078
        %8080 = vmatmul.bf16.gmra.mxu0 %v4062
        %v8081 = vpop.f32.mrf.mxu0
        %v8082 = vadd.f32 %v7993, %v8081
        %v8083 = vpop.f32.mrf.mxu0
        %v8084 = vadd.f32 %v7995, %v8083
        %8085 = vmatmul.bf16.gmra.mxu0 %v4071
        %v8086 = vpop.f32.mrf.mxu0
        %v8087 = vadd.f32 %v7998, %v8086
        %v8088 = vpop.f32.mrf.mxu0
        %v8089 = vadd.f32 %v8000, %v8088
        %8090 = vmatmul.bf16.gmra.mxu0 %v4080
        %v8091 = vpop.f32.mrf.mxu0
        %v8092 = vadd.f32 %v8003, %v8091
        %v8093 = vpop.f32.mrf.mxu0
        %v8094 = vadd.f32 %v8005, %v8093
        %8095 = vmatmul.bf16.gmra.mxu0 %v4089
        %v8096 = vpop.f32.mrf.mxu0
        %v8097 = vadd.f32 %v8008, %v8096
        %v8098 = vpop.f32.mrf.mxu0
        %v8099 = vadd.f32 %v8010, %v8098
        %8100 = vmatmul.bf16.gmra.mxu0 %v4098
        %v8101 = vpop.f32.mrf.mxu0
        %v8102 = vadd.f32 %v8013, %v8101
        %v8103 = vpop.f32.mrf.mxu0
        %v8104 = vadd.f32 %v8015, %v8103
        %8105 = vmatmul.bf16.gmra.mxu0 %v4107
        %v8106 = vpop.f32.mrf.mxu0
        %v8107 = vadd.f32 %v8018, %v8106
        %v8108 = vpop.f32.mrf.mxu0
        %v8109 = vadd.f32 %v8020, %v8108
        %8110 = vmatmul.bf16.gmra.mxu0 %v4116
        %v8111 = vpop.f32.mrf.mxu0
        %v8112 = vadd.f32 %v8023, %v8111
        %v8113 = vpop.f32.mrf.mxu0
        %v8114 = vadd.f32 %v8025, %v8113
        %8115 = vmatmul.bf16.gmra.mxu0 %v4125
        %v8116 = vpop.f32.mrf.mxu0
        %v8117 = vadd.f32 %v8028, %v8116
        %v8118 = vpop.f32.mrf.mxu0
        %v8119 = vadd.f32 %v8030, %v8118
        %8120 = vmatmul.bf16.gmra.mxu0 %v4134
        %v8121 = vpop.f32.mrf.mxu0
        %v8122 = vadd.f32 %v8033, %v8121
        %v8123 = vpop.f32.mrf.mxu0
        %v8124 = vadd.f32 %v8035, %v8123
        %8125 = vmatmul.bf16.gmra.mxu0 %v4143
        %v8126 = vpop.f32.mrf.mxu0
        %v8127 = vadd.f32 %v8038, %v8126
        %v8128 = vpop.f32.mrf.mxu0
        %v8129 = vadd.f32 %v8040, %v8128
        %8130 = vdwg.mxu0
        %8131 = vmatpush.bf16.msra.mxu0 %v5183
        %8132 = vmatpush.bf16.msra.mxu0 %v5179
        %8133 = vmatpush.bf16.msra.mxu0 %v5175
        %8134 = vmatpush.bf16.msra.mxu0 %v5171
        %8135 = vmatpush.bf16.msra.mxu0 %v5167
        %8136 = vmatpush.bf16.msra.mxu0 %v5163
        %8137 = vmatpush.bf16.msra.mxu0 %v5159
        %8138 = vmatpush.bf16.msra.mxu0 %v5155
        %8139 = vmatmul.bf16.gmra.mxu0 %v4000
        %v8140 = vpop.f32.mrf.mxu0
        %v8141 = vadd.f32 0.0, %v8140
        %v8142 = vpop.f32.mrf.mxu0
        %v8143 = vadd.f32 0.0, %v8142
        %8144 = vmatmul.bf16.gmra.mxu0 %v4009
        %v8145 = vpop.f32.mrf.mxu0
        %v8146 = vadd.f32 0.0, %v8145
        %v8147 = vpop.f32.mrf.mxu0
        %v8148 = vadd.f32 0.0, %v8147
        %8149 = vmatmul.bf16.gmra.mxu0 %v4018
        %v8150 = vpop.f32.mrf.mxu0
        %v8151 = vadd.f32 0.0, %v8150
        %v8152 = vpop.f32.mrf.mxu0
        %v8153 = vadd.f32 0.0, %v8152
        %8154 = vmatmul.bf16.gmra.mxu0 %v4027
        %v8155 = vpop.f32.mrf.mxu0
        %v8156 = vadd.f32 0.0, %v8155
        %v8157 = vpop.f32.mrf.mxu0
        %v8158 = vadd.f32 0.0, %v8157
        %8159 = vmatmul.bf16.gmra.mxu0 %v4036
        %v8160 = vpop.f32.mrf.mxu0
        %v8161 = vadd.f32 0.0, %v8160
        %v8162 = vpop.f32.mrf.mxu0
        %v8163 = vadd.f32 0.0, %v8162
        %8164 = vmatmul.bf16.gmra.mxu0 %v4045
        %v8165 = vpop.f32.mrf.mxu0
        %v8166 = vadd.f32 0.0, %v8165
        %v8167 = vpop.f32.mrf.mxu0
        %v8168 = vadd.f32 0.0, %v8167
        %8169 = vmatmul.bf16.gmra.mxu0 %v4054
        %v8170 = vpop.f32.mrf.mxu0
        %v8171 = vadd.f32 0.0, %v8170
        %v8172 = vpop.f32.mrf.mxu0
        %v8173 = vadd.f32 0.0, %v8172
        %8174 = vmatmul.bf16.gmra.mxu0 %v4063
        %v8175 = vpop.f32.mrf.mxu0
        %v8176 = vadd.f32 0.0, %v8175
        %v8177 = vpop.f32.mrf.mxu0
        %v8178 = vadd.f32 0.0, %v8177
        %8179 = vmatmul.bf16.gmra.mxu0 %v4072
        %v8180 = vpop.f32.mrf.mxu0
        %v8181 = vadd.f32 0.0, %v8180
        %v8182 = vpop.f32.mrf.mxu0
        %v8183 = vadd.f32 0.0, %v8182
        %8184 = vmatmul.bf16.gmra.mxu0 %v4081
        %v8185 = vpop.f32.mrf.mxu0
        %v8186 = vadd.f32 0.0, %v8185
        %v8187 = vpop.f32.mrf.mxu0
        %v8188 = vadd.f32 0.0, %v8187
        %8189 = vmatmul.bf16.gmra.mxu0 %v4090
        %v8190 = vpop.f32.mrf.mxu0
        %v8191 = vadd.f32 0.0, %v8190
        %v8192 = vpop.f32.mrf.mxu0
        %v8193 = vadd.f32 0.0, %v8192
        %8194 = vmatmul.bf16.gmra.mxu0 %v4099
        %v8195 = vpop.f32.mrf.mxu0
        %v8196 = vadd.f32 0.0, %v8195
        %v8197 = vpop.f32.mrf.mxu0
        %v8198 = vadd.f32 0.0, %v8197
        %8199 = vmatmul.bf16.gmra.mxu0 %v4108
        %v8200 = vpop.f32.mrf.mxu0
        %v8201 = vadd.f32 0.0, %v8200
        %v8202 = vpop.f32.mrf.mxu0
        %v8203 = vadd.f32 0.0, %v8202
        %8204 = vmatmul.bf16.gmra.mxu0 %v4117
        %v8205 = vpop.f32.mrf.mxu0
        %v8206 = vadd.f32 0.0, %v8205
        %v8207 = vpop.f32.mrf.mxu0
        %v8208 = vadd.f32 0.0, %v8207
        %8209 = vmatmul.bf16.gmra.mxu0 %v4126
        %v8210 = vpop.f32.mrf.mxu0
        %v8211 = vadd.f32 0.0, %v8210
        %v8212 = vpop.f32.mrf.mxu0
        %v8213 = vadd.f32 0.0, %v8212
        %8214 = vmatmul.bf16.gmra.mxu0 %v4135
        %v8215 = vpop.f32.mrf.mxu0
        %v8216 = vadd.f32 0.0, %v8215
        %v8217 = vpop.f32.mrf.mxu0
        %v8218 = vadd.f32 0.0, %v8217
        %8219 = vdwg.mxu0
        %8220 = vmatpush.bf16.msra.mxu0 %v5215
        %8221 = vmatpush.bf16.msra.mxu0 %v5211
        %8222 = vmatpush.bf16.msra.mxu0 %v5207
        %8223 = vmatpush.bf16.msra.mxu0 %v5203
        %8224 = vmatpush.bf16.msra.mxu0 %v5199
        %8225 = vmatpush.bf16.msra.mxu0 %v5195
        %8226 = vmatpush.bf16.msra.mxu0 %v5191
        %8227 = vmatpush.bf16.msra.mxu0 %v5187
        %8228 = vmatmul.bf16.gmra.mxu0 %v4001
        %v8229 = vpop.f32.mrf.mxu0
        %v8230 = vadd.f32 %v8141, %v8229
        %v8231 = vpop.f32.mrf.mxu0
        %v8232 = vadd.f32 %v8143, %v8231
        %8233 = vmatmul.bf16.gmra.mxu0 %v4010
        %v8234 = vpop.f32.mrf.mxu0
        %v8235 = vadd.f32 %v8146, %v8234
        %v8236 = vpop.f32.mrf.mxu0
        %v8237 = vadd.f32 %v8148, %v8236
        %8238 = vmatmul.bf16.gmra.mxu0 %v4019
        %v8239 = vpop.f32.mrf.mxu0
        %v8240 = vadd.f32 %v8151, %v8239
        %v8241 = vpop.f32.mrf.mxu0
        %v8242 = vadd.f32 %v8153, %v8241
        %8243 = vmatmul.bf16.gmra.mxu0 %v4028
        %v8244 = vpop.f32.mrf.mxu0
        %v8245 = vadd.f32 %v8156, %v8244
        %v8246 = vpop.f32.mrf.mxu0
        %v8247 = vadd.f32 %v8158, %v8246
        %8248 = vmatmul.bf16.gmra.mxu0 %v4037
        %v8249 = vpop.f32.mrf.mxu0
        %v8250 = vadd.f32 %v8161, %v8249
        %v8251 = vpop.f32.mrf.mxu0
        %v8252 = vadd.f32 %v8163, %v8251
        %8253 = vmatmul.bf16.gmra.mxu0 %v4046
        %v8254 = vpop.f32.mrf.mxu0
        %v8255 = vadd.f32 %v8166, %v8254
        %v8256 = vpop.f32.mrf.mxu0
        %v8257 = vadd.f32 %v8168, %v8256
        %8258 = vmatmul.bf16.gmra.mxu0 %v4055
        %v8259 = vpop.f32.mrf.mxu0
        %v8260 = vadd.f32 %v8171, %v8259
        %v8261 = vpop.f32.mrf.mxu0
        %v8262 = vadd.f32 %v8173, %v8261
        %8263 = vmatmul.bf16.gmra.mxu0 %v4064
        %v8264 = vpop.f32.mrf.mxu0
        %v8265 = vadd.f32 %v8176, %v8264
        %v8266 = vpop.f32.mrf.mxu0
        %v8267 = vadd.f32 %v8178, %v8266
        %8268 = vmatmul.bf16.gmra.mxu0 %v4073
        %v8269 = vpop.f32.mrf.mxu0
        %v8270 = vadd.f32 %v8181, %v8269
        %v8271 = vpop.f32.mrf.mxu0
        %v8272 = vadd.f32 %v8183, %v8271
        %8273 = vmatmul.bf16.gmra.mxu0 %v4082
        %v8274 = vpop.f32.mrf.mxu0
        %v8275 = vadd.f32 %v8186, %v8274
        %v8276 = vpop.f32.mrf.mxu0
        %v8277 = vadd.f32 %v8188, %v8276
        %8278 = vmatmul.bf16.gmra.mxu0 %v4091
        %v8279 = vpop.f32.mrf.mxu0
        %v8280 = vadd.f32 %v8191, %v8279
        %v8281 = vpop.f32.mrf.mxu0
        %v8282 = vadd.f32 %v8193, %v8281
        %8283 = vmatmul.bf16.gmra.mxu0 %v4100
        %v8284 = vpop.f32.mrf.mxu0
        %v8285 = vadd.f32 %v8196, %v8284
        %v8286 = vpop.f32.mrf.mxu0
        %v8287 = vadd.f32 %v8198, %v8286
        %8288 = vmatmul.bf16.gmra.mxu0 %v4109
        %v8289 = vpop.f32.mrf.mxu0
        %v8290 = vadd.f32 %v8201, %v8289
        %v8291 = vpop.f32.mrf.mxu0
        %v8292 = vadd.f32 %v8203, %v8291
        %8293 = vmatmul.bf16.gmra.mxu0 %v4118
        %v8294 = vpop.f32.mrf.mxu0
        %v8295 = vadd.f32 %v8206, %v8294
        %v8296 = vpop.f32.mrf.mxu0
        %v8297 = vadd.f32 %v8208, %v8296
        %8298 = vmatmul.bf16.gmra.mxu0 %v4127
        %v8299 = vpop.f32.mrf.mxu0
        %v8300 = vadd.f32 %v8211, %v8299
        %v8301 = vpop.f32.mrf.mxu0
        %v8302 = vadd.f32 %v8213, %v8301
        %8303 = vmatmul.bf16.gmra.mxu0 %v4136
        %v8304 = vpop.f32.mrf.mxu0
        %v8305 = vadd.f32 %v8216, %v8304
        %v8306 = vpop.f32.mrf.mxu0
        %v8307 = vadd.f32 %v8218, %v8306
        %8308 = vdwg.mxu0
        %8309 = vmatpush.bf16.msra.mxu0 %v5247
        %8310 = vmatpush.bf16.msra.mxu0 %v5243
        %8311 = vmatpush.bf16.msra.mxu0 %v5239
        %8312 = vmatpush.bf16.msra.mxu0 %v5235
        %8313 = vmatpush.bf16.msra.mxu0 %v5231
        %8314 = vmatpush.bf16.msra.mxu0 %v5227
        %8315 = vmatpush.bf16.msra.mxu0 %v5223
        %8316 = vmatpush.bf16.msra.mxu0 %v5219
        %8317 = vmatmul.bf16.gmra.mxu0 %v4002
        %v8318 = vpop.f32.mrf.mxu0
        %v8319 = vadd.f32 %v8230, %v8318
        %v8320 = vpop.f32.mrf.mxu0
        %v8321 = vadd.f32 %v8232, %v8320
        %8322 = vmatmul.bf16.gmra.mxu0 %v4011
        %v8323 = vpop.f32.mrf.mxu0
        %v8324 = vadd.f32 %v8235, %v8323
        %v8325 = vpop.f32.mrf.mxu0
        %v8326 = vadd.f32 %v8237, %v8325
        %8327 = vmatmul.bf16.gmra.mxu0 %v4020
        %v8328 = vpop.f32.mrf.mxu0
        %v8329 = vadd.f32 %v8240, %v8328
        %v8330 = vpop.f32.mrf.mxu0
        %v8331 = vadd.f32 %v8242, %v8330
        %8332 = vmatmul.bf16.gmra.mxu0 %v4029
        %v8333 = vpop.f32.mrf.mxu0
        %v8334 = vadd.f32 %v8245, %v8333
        %v8335 = vpop.f32.mrf.mxu0
        %v8336 = vadd.f32 %v8247, %v8335
        %8337 = vmatmul.bf16.gmra.mxu0 %v4038
        %v8338 = vpop.f32.mrf.mxu0
        %v8339 = vadd.f32 %v8250, %v8338
        %v8340 = vpop.f32.mrf.mxu0
        %v8341 = vadd.f32 %v8252, %v8340
        %8342 = vmatmul.bf16.gmra.mxu0 %v4047
        %v8343 = vpop.f32.mrf.mxu0
        %v8344 = vadd.f32 %v8255, %v8343
        %v8345 = vpop.f32.mrf.mxu0
        %v8346 = vadd.f32 %v8257, %v8345
        %8347 = vmatmul.bf16.gmra.mxu0 %v4056
        %v8348 = vpop.f32.mrf.mxu0
        %v8349 = vadd.f32 %v8260, %v8348
        %v8350 = vpop.f32.mrf.mxu0
        %v8351 = vadd.f32 %v8262, %v8350
        %8352 = vmatmul.bf16.gmra.mxu0 %v4065
        %v8353 = vpop.f32.mrf.mxu0
        %v8354 = vadd.f32 %v8265, %v8353
        %v8355 = vpop.f32.mrf.mxu0
        %v8356 = vadd.f32 %v8267, %v8355
        %8357 = vmatmul.bf16.gmra.mxu0 %v4074
        %v8358 = vpop.f32.mrf.mxu0
        %v8359 = vadd.f32 %v8270, %v8358
        %v8360 = vpop.f32.mrf.mxu0
        %v8361 = vadd.f32 %v8272, %v8360
        %8362 = vmatmul.bf16.gmra.mxu0 %v4083
        %v8363 = vpop.f32.mrf.mxu0
        %v8364 = vadd.f32 %v8275, %v8363
        %v8365 = vpop.f32.mrf.mxu0
        %v8366 = vadd.f32 %v8277, %v8365
        %8367 = vmatmul.bf16.gmra.mxu0 %v4092
        %v8368 = vpop.f32.mrf.mxu0
        %v8369 = vadd.f32 %v8280, %v8368
        %v8370 = vpop.f32.mrf.mxu0
        %v8371 = vadd.f32 %v8282, %v8370
        %8372 = vmatmul.bf16.gmra.mxu0 %v4101
        %v8373 = vpop.f32.mrf.mxu0
        %v8374 = vadd.f32 %v8285, %v8373
        %v8375 = vpop.f32.mrf.mxu0
        %v8376 = vadd.f32 %v8287, %v8375
        %8377 = vmatmul.bf16.gmra.mxu0 %v4110
        %v8378 = vpop.f32.mrf.mxu0
        %v8379 = vadd.f32 %v8290, %v8378
        %v8380 = vpop.f32.mrf.mxu0
        %v8381 = vadd.f32 %v8292, %v8380
        %8382 = vmatmul.bf16.gmra.mxu0 %v4119
        %v8383 = vpop.f32.mrf.mxu0
        %v8384 = vadd.f32 %v8295, %v8383
        %v8385 = vpop.f32.mrf.mxu0
        %v8386 = vadd.f32 %v8297, %v8385
        %8387 = vmatmul.bf16.gmra.mxu0 %v4128
        %v8388 = vpop.f32.mrf.mxu0
        %v8389 = vadd.f32 %v8300, %v8388
        %v8390 = vpop.f32.mrf.mxu0
        %v8391 = vadd.f32 %v8302, %v8390
        %8392 = vmatmul.bf16.gmra.mxu0 %v4137
        %v8393 = vpop.f32.mrf.mxu0
        %v8394 = vadd.f32 %v8305, %v8393
        %v8395 = vpop.f32.mrf.mxu0
        %v8396 = vadd.f32 %v8307, %v8395
        %8397 = vdwg.mxu0
        %8398 = vmatpush.bf16.msra.mxu0 %v5279
        %8399 = vmatpush.bf16.msra.mxu0 %v5275
        %8400 = vmatpush.bf16.msra.mxu0 %v5271
        %8401 = vmatpush.bf16.msra.mxu0 %v5267
        %8402 = vmatpush.bf16.msra.mxu0 %v5263
        %8403 = vmatpush.bf16.msra.mxu0 %v5259
        %8404 = vmatpush.bf16.msra.mxu0 %v5255
        %8405 = vmatpush.bf16.msra.mxu0 %v5251
        %8406 = vmatmul.bf16.gmra.mxu0 %v4003
        %v8407 = vpop.f32.mrf.mxu0
        %v8408 = vadd.f32 %v8319, %v8407
        %v8409 = vpop.f32.mrf.mxu0
        %v8410 = vadd.f32 %v8321, %v8409
        %8411 = vmatmul.bf16.gmra.mxu0 %v4012
        %v8412 = vpop.f32.mrf.mxu0
        %v8413 = vadd.f32 %v8324, %v8412
        %v8414 = vpop.f32.mrf.mxu0
        %v8415 = vadd.f32 %v8326, %v8414
        %8416 = vmatmul.bf16.gmra.mxu0 %v4021
        %v8417 = vpop.f32.mrf.mxu0
        %v8418 = vadd.f32 %v8329, %v8417
        %v8419 = vpop.f32.mrf.mxu0
        %v8420 = vadd.f32 %v8331, %v8419
        %8421 = vmatmul.bf16.gmra.mxu0 %v4030
        %v8422 = vpop.f32.mrf.mxu0
        %v8423 = vadd.f32 %v8334, %v8422
        %v8424 = vpop.f32.mrf.mxu0
        %v8425 = vadd.f32 %v8336, %v8424
        %8426 = vmatmul.bf16.gmra.mxu0 %v4039
        %v8427 = vpop.f32.mrf.mxu0
        %v8428 = vadd.f32 %v8339, %v8427
        %v8429 = vpop.f32.mrf.mxu0
        %v8430 = vadd.f32 %v8341, %v8429
        %8431 = vmatmul.bf16.gmra.mxu0 %v4048
        %v8432 = vpop.f32.mrf.mxu0
        %v8433 = vadd.f32 %v8344, %v8432
        %v8434 = vpop.f32.mrf.mxu0
        %v8435 = vadd.f32 %v8346, %v8434
        %8436 = vmatmul.bf16.gmra.mxu0 %v4057
        %v8437 = vpop.f32.mrf.mxu0
        %v8438 = vadd.f32 %v8349, %v8437
        %v8439 = vpop.f32.mrf.mxu0
        %v8440 = vadd.f32 %v8351, %v8439
        %8441 = vmatmul.bf16.gmra.mxu0 %v4066
        %v8442 = vpop.f32.mrf.mxu0
        %v8443 = vadd.f32 %v8354, %v8442
        %v8444 = vpop.f32.mrf.mxu0
        %v8445 = vadd.f32 %v8356, %v8444
        %8446 = vmatmul.bf16.gmra.mxu0 %v4075
        %v8447 = vpop.f32.mrf.mxu0
        %v8448 = vadd.f32 %v8359, %v8447
        %v8449 = vpop.f32.mrf.mxu0
        %v8450 = vadd.f32 %v8361, %v8449
        %8451 = vmatmul.bf16.gmra.mxu0 %v4084
        %v8452 = vpop.f32.mrf.mxu0
        %v8453 = vadd.f32 %v8364, %v8452
        %v8454 = vpop.f32.mrf.mxu0
        %v8455 = vadd.f32 %v8366, %v8454
        %8456 = vmatmul.bf16.gmra.mxu0 %v4093
        %v8457 = vpop.f32.mrf.mxu0
        %v8458 = vadd.f32 %v8369, %v8457
        %v8459 = vpop.f32.mrf.mxu0
        %v8460 = vadd.f32 %v8371, %v8459
        %8461 = vmatmul.bf16.gmra.mxu0 %v4102
        %v8462 = vpop.f32.mrf.mxu0
        %v8463 = vadd.f32 %v8374, %v8462
        %v8464 = vpop.f32.mrf.mxu0
        %v8465 = vadd.f32 %v8376, %v8464
        %8466 = vmatmul.bf16.gmra.mxu0 %v4111
        %v8467 = vpop.f32.mrf.mxu0
        %v8468 = vadd.f32 %v8379, %v8467
        %v8469 = vpop.f32.mrf.mxu0
        %v8470 = vadd.f32 %v8381, %v8469
        %8471 = vmatmul.bf16.gmra.mxu0 %v4120
        %v8472 = vpop.f32.mrf.mxu0
        %v8473 = vadd.f32 %v8384, %v8472
        %v8474 = vpop.f32.mrf.mxu0
        %v8475 = vadd.f32 %v8386, %v8474
        %8476 = vmatmul.bf16.gmra.mxu0 %v4129
        %v8477 = vpop.f32.mrf.mxu0
        %v8478 = vadd.f32 %v8389, %v8477
        %v8479 = vpop.f32.mrf.mxu0
        %v8480 = vadd.f32 %v8391, %v8479
        %8481 = vmatmul.bf16.gmra.mxu0 %v4138
        %v8482 = vpop.f32.mrf.mxu0
        %v8483 = vadd.f32 %v8394, %v8482
        %v8484 = vpop.f32.mrf.mxu0
        %v8485 = vadd.f32 %v8396, %v8484
        %8486 = vdwg.mxu0
        %8487 = vmatpush.bf16.msra.mxu0 %v5311
        %8488 = vmatpush.bf16.msra.mxu0 %v5307
        %8489 = vmatpush.bf16.msra.mxu0 %v5303
        %8490 = vmatpush.bf16.msra.mxu0 %v5299
        %8491 = vmatpush.bf16.msra.mxu0 %v5295
        %8492 = vmatpush.bf16.msra.mxu0 %v5291
        %8493 = vmatpush.bf16.msra.mxu0 %v5287
        %8494 = vmatpush.bf16.msra.mxu0 %v5283
        %8495 = vmatmul.bf16.gmra.mxu0 %v4004
        %v8496 = vpop.f32.mrf.mxu0
        %v8497 = vadd.f32 %v8408, %v8496
        %v8498 = vpop.f32.mrf.mxu0
        %v8499 = vadd.f32 %v8410, %v8498
        %8500 = vmatmul.bf16.gmra.mxu0 %v4013
        %v8501 = vpop.f32.mrf.mxu0
        %v8502 = vadd.f32 %v8413, %v8501
        %v8503 = vpop.f32.mrf.mxu0
        %v8504 = vadd.f32 %v8415, %v8503
        %8505 = vmatmul.bf16.gmra.mxu0 %v4022
        %v8506 = vpop.f32.mrf.mxu0
        %v8507 = vadd.f32 %v8418, %v8506
        %v8508 = vpop.f32.mrf.mxu0
        %v8509 = vadd.f32 %v8420, %v8508
        %8510 = vmatmul.bf16.gmra.mxu0 %v4031
        %v8511 = vpop.f32.mrf.mxu0
        %v8512 = vadd.f32 %v8423, %v8511
        %v8513 = vpop.f32.mrf.mxu0
        %v8514 = vadd.f32 %v8425, %v8513
        %8515 = vmatmul.bf16.gmra.mxu0 %v4040
        %v8516 = vpop.f32.mrf.mxu0
        %v8517 = vadd.f32 %v8428, %v8516
        %v8518 = vpop.f32.mrf.mxu0
        %v8519 = vadd.f32 %v8430, %v8518
        %8520 = vmatmul.bf16.gmra.mxu0 %v4049
        %v8521 = vpop.f32.mrf.mxu0
        %v8522 = vadd.f32 %v8433, %v8521
        %v8523 = vpop.f32.mrf.mxu0
        %v8524 = vadd.f32 %v8435, %v8523
        %8525 = vmatmul.bf16.gmra.mxu0 %v4058
        %v8526 = vpop.f32.mrf.mxu0
        %v8527 = vadd.f32 %v8438, %v8526
        %v8528 = vpop.f32.mrf.mxu0
        %v8529 = vadd.f32 %v8440, %v8528
        %8530 = vmatmul.bf16.gmra.mxu0 %v4067
        %v8531 = vpop.f32.mrf.mxu0
        %v8532 = vadd.f32 %v8443, %v8531
        %v8533 = vpop.f32.mrf.mxu0
        %v8534 = vadd.f32 %v8445, %v8533
        %8535 = vmatmul.bf16.gmra.mxu0 %v4076
        %v8536 = vpop.f32.mrf.mxu0
        %v8537 = vadd.f32 %v8448, %v8536
        %v8538 = vpop.f32.mrf.mxu0
        %v8539 = vadd.f32 %v8450, %v8538
        %8540 = vmatmul.bf16.gmra.mxu0 %v4085
        %v8541 = vpop.f32.mrf.mxu0
        %v8542 = vadd.f32 %v8453, %v8541
        %v8543 = vpop.f32.mrf.mxu0
        %v8544 = vadd.f32 %v8455, %v8543
        %8545 = vmatmul.bf16.gmra.mxu0 %v4094
        %v8546 = vpop.f32.mrf.mxu0
        %v8547 = vadd.f32 %v8458, %v8546
        %v8548 = vpop.f32.mrf.mxu0
        %v8549 = vadd.f32 %v8460, %v8548
        %8550 = vmatmul.bf16.gmra.mxu0 %v4103
        %v8551 = vpop.f32.mrf.mxu0
        %v8552 = vadd.f32 %v8463, %v8551
        %v8553 = vpop.f32.mrf.mxu0
        %v8554 = vadd.f32 %v8465, %v8553
        %8555 = vmatmul.bf16.gmra.mxu0 %v4112
        %v8556 = vpop.f32.mrf.mxu0
        %v8557 = vadd.f32 %v8468, %v8556
        %v8558 = vpop.f32.mrf.mxu0
        %v8559 = vadd.f32 %v8470, %v8558
        %8560 = vmatmul.bf16.gmra.mxu0 %v4121
        %v8561 = vpop.f32.mrf.mxu0
        %v8562 = vadd.f32 %v8473, %v8561
        %v8563 = vpop.f32.mrf.mxu0
        %v8564 = vadd.f32 %v8475, %v8563
        %8565 = vmatmul.bf16.gmra.mxu0 %v4130
        %v8566 = vpop.f32.mrf.mxu0
        %v8567 = vadd.f32 %v8478, %v8566
        %v8568 = vpop.f32.mrf.mxu0
        %v8569 = vadd.f32 %v8480, %v8568
        %8570 = vmatmul.bf16.gmra.mxu0 %v4139
        %v8571 = vpop.f32.mrf.mxu0
        %v8572 = vadd.f32 %v8483, %v8571
        %v8573 = vpop.f32.mrf.mxu0
        %v8574 = vadd.f32 %v8485, %v8573
        %8575 = vdwg.mxu0
        %8576 = vmatpush.bf16.msra.mxu0 %v5343
        %8577 = vmatpush.bf16.msra.mxu0 %v5339
        %8578 = vmatpush.bf16.msra.mxu0 %v5335
        %8579 = vmatpush.bf16.msra.mxu0 %v5331
        %8580 = vmatpush.bf16.msra.mxu0 %v5327
        %8581 = vmatpush.bf16.msra.mxu0 %v5323
        %8582 = vmatpush.bf16.msra.mxu0 %v5319
        %8583 = vmatpush.bf16.msra.mxu0 %v5315
        %8584 = vmatmul.bf16.gmra.mxu0 %v4005
        %v8585 = vpop.f32.mrf.mxu0
        %v8586 = vadd.f32 %v8497, %v8585
        %v8587 = vpop.f32.mrf.mxu0
        %v8588 = vadd.f32 %v8499, %v8587
        %8589 = vmatmul.bf16.gmra.mxu0 %v4014
        %v8590 = vpop.f32.mrf.mxu0
        %v8591 = vadd.f32 %v8502, %v8590
        %v8592 = vpop.f32.mrf.mxu0
        %v8593 = vadd.f32 %v8504, %v8592
        %8594 = vmatmul.bf16.gmra.mxu0 %v4023
        %v8595 = vpop.f32.mrf.mxu0
        %v8596 = vadd.f32 %v8507, %v8595
        %v8597 = vpop.f32.mrf.mxu0
        %v8598 = vadd.f32 %v8509, %v8597
        %8599 = vmatmul.bf16.gmra.mxu0 %v4032
        %v8600 = vpop.f32.mrf.mxu0
        %v8601 = vadd.f32 %v8512, %v8600
        %v8602 = vpop.f32.mrf.mxu0
        %v8603 = vadd.f32 %v8514, %v8602
        %8604 = vmatmul.bf16.gmra.mxu0 %v4041
        %v8605 = vpop.f32.mrf.mxu0
        %v8606 = vadd.f32 %v8517, %v8605
        %v8607 = vpop.f32.mrf.mxu0
        %v8608 = vadd.f32 %v8519, %v8607
        %8609 = vmatmul.bf16.gmra.mxu0 %v4050
        %v8610 = vpop.f32.mrf.mxu0
        %v8611 = vadd.f32 %v8522, %v8610
        %v8612 = vpop.f32.mrf.mxu0
        %v8613 = vadd.f32 %v8524, %v8612
        %8614 = vmatmul.bf16.gmra.mxu0 %v4059
        %v8615 = vpop.f32.mrf.mxu0
        %v8616 = vadd.f32 %v8527, %v8615
        %v8617 = vpop.f32.mrf.mxu0
        %v8618 = vadd.f32 %v8529, %v8617
        %8619 = vmatmul.bf16.gmra.mxu0 %v4068
        %v8620 = vpop.f32.mrf.mxu0
        %v8621 = vadd.f32 %v8532, %v8620
        %v8622 = vpop.f32.mrf.mxu0
        %v8623 = vadd.f32 %v8534, %v8622
        %8624 = vmatmul.bf16.gmra.mxu0 %v4077
        %v8625 = vpop.f32.mrf.mxu0
        %v8626 = vadd.f32 %v8537, %v8625
        %v8627 = vpop.f32.mrf.mxu0
        %v8628 = vadd.f32 %v8539, %v8627
        %8629 = vmatmul.bf16.gmra.mxu0 %v4086
        %v8630 = vpop.f32.mrf.mxu0
        %v8631 = vadd.f32 %v8542, %v8630
        %v8632 = vpop.f32.mrf.mxu0
        %v8633 = vadd.f32 %v8544, %v8632
        %8634 = vmatmul.bf16.gmra.mxu0 %v4095
        %v8635 = vpop.f32.mrf.mxu0
        %v8636 = vadd.f32 %v8547, %v8635
        %v8637 = vpop.f32.mrf.mxu0
        %v8638 = vadd.f32 %v8549, %v8637
        %8639 = vmatmul.bf16.gmra.mxu0 %v4104
        %v8640 = vpop.f32.mrf.mxu0
        %v8641 = vadd.f32 %v8552, %v8640
        %v8642 = vpop.f32.mrf.mxu0
        %v8643 = vadd.f32 %v8554, %v8642
        %8644 = vmatmul.bf16.gmra.mxu0 %v4113
        %v8645 = vpop.f32.mrf.mxu0
        %v8646 = vadd.f32 %v8557, %v8645
        %v8647 = vpop.f32.mrf.mxu0
        %v8648 = vadd.f32 %v8559, %v8647
        %8649 = vmatmul.bf16.gmra.mxu0 %v4122
        %v8650 = vpop.f32.mrf.mxu0
        %v8651 = vadd.f32 %v8562, %v8650
        %v8652 = vpop.f32.mrf.mxu0
        %v8653 = vadd.f32 %v8564, %v8652
        %8654 = vmatmul.bf16.gmra.mxu0 %v4131
        %v8655 = vpop.f32.mrf.mxu0
        %v8656 = vadd.f32 %v8567, %v8655
        %v8657 = vpop.f32.mrf.mxu0
        %v8658 = vadd.f32 %v8569, %v8657
        %8659 = vmatmul.bf16.gmra.mxu0 %v4140
        %v8660 = vpop.f32.mrf.mxu0
        %v8661 = vadd.f32 %v8572, %v8660
        %v8662 = vpop.f32.mrf.mxu0
        %v8663 = vadd.f32 %v8574, %v8662
        %8664 = vdwg.mxu0
        %8665 = vmatpush.bf16.msra.mxu0 %v5375
        %8666 = vmatpush.bf16.msra.mxu0 %v5371
        %8667 = vmatpush.bf16.msra.mxu0 %v5367
        %8668 = vmatpush.bf16.msra.mxu0 %v5363
        %8669 = vmatpush.bf16.msra.mxu0 %v5359
        %8670 = vmatpush.bf16.msra.mxu0 %v5355
        %8671 = vmatpush.bf16.msra.mxu0 %v5351
        %8672 = vmatpush.bf16.msra.mxu0 %v5347
        %8673 = vmatmul.bf16.gmra.mxu0 %v4006
        %v8674 = vpop.f32.mrf.mxu0
        %v8675 = vadd.f32 %v8586, %v8674
        %v8676 = vpop.f32.mrf.mxu0
        %v8677 = vadd.f32 %v8588, %v8676
        %8678 = vmatmul.bf16.gmra.mxu0 %v4015
        %v8679 = vpop.f32.mrf.mxu0
        %v8680 = vadd.f32 %v8591, %v8679
        %v8681 = vpop.f32.mrf.mxu0
        %v8682 = vadd.f32 %v8593, %v8681
        %8683 = vmatmul.bf16.gmra.mxu0 %v4024
        %v8684 = vpop.f32.mrf.mxu0
        %v8685 = vadd.f32 %v8596, %v8684
        %v8686 = vpop.f32.mrf.mxu0
        %v8687 = vadd.f32 %v8598, %v8686
        %8688 = vmatmul.bf16.gmra.mxu0 %v4033
        %v8689 = vpop.f32.mrf.mxu0
        %v8690 = vadd.f32 %v8601, %v8689
        %v8691 = vpop.f32.mrf.mxu0
        %v8692 = vadd.f32 %v8603, %v8691
        %8693 = vmatmul.bf16.gmra.mxu0 %v4042
        %v8694 = vpop.f32.mrf.mxu0
        %v8695 = vadd.f32 %v8606, %v8694
        %v8696 = vpop.f32.mrf.mxu0
        %v8697 = vadd.f32 %v8608, %v8696
        %8698 = vmatmul.bf16.gmra.mxu0 %v4051
        %v8699 = vpop.f32.mrf.mxu0
        %v8700 = vadd.f32 %v8611, %v8699
        %v8701 = vpop.f32.mrf.mxu0
        %v8702 = vadd.f32 %v8613, %v8701
        %8703 = vmatmul.bf16.gmra.mxu0 %v4060
        %v8704 = vpop.f32.mrf.mxu0
        %v8705 = vadd.f32 %v8616, %v8704
        %v8706 = vpop.f32.mrf.mxu0
        %v8707 = vadd.f32 %v8618, %v8706
        %8708 = vmatmul.bf16.gmra.mxu0 %v4069
        %v8709 = vpop.f32.mrf.mxu0
        %v8710 = vadd.f32 %v8621, %v8709
        %v8711 = vpop.f32.mrf.mxu0
        %v8712 = vadd.f32 %v8623, %v8711
        %8713 = vmatmul.bf16.gmra.mxu0 %v4078
        %v8714 = vpop.f32.mrf.mxu0
        %v8715 = vadd.f32 %v8626, %v8714
        %v8716 = vpop.f32.mrf.mxu0
        %v8717 = vadd.f32 %v8628, %v8716
        %8718 = vmatmul.bf16.gmra.mxu0 %v4087
        %v8719 = vpop.f32.mrf.mxu0
        %v8720 = vadd.f32 %v8631, %v8719
        %v8721 = vpop.f32.mrf.mxu0
        %v8722 = vadd.f32 %v8633, %v8721
        %8723 = vmatmul.bf16.gmra.mxu0 %v4096
        %v8724 = vpop.f32.mrf.mxu0
        %v8725 = vadd.f32 %v8636, %v8724
        %v8726 = vpop.f32.mrf.mxu0
        %v8727 = vadd.f32 %v8638, %v8726
        %8728 = vmatmul.bf16.gmra.mxu0 %v4105
        %v8729 = vpop.f32.mrf.mxu0
        %v8730 = vadd.f32 %v8641, %v8729
        %v8731 = vpop.f32.mrf.mxu0
        %v8732 = vadd.f32 %v8643, %v8731
        %8733 = vmatmul.bf16.gmra.mxu0 %v4114
        %v8734 = vpop.f32.mrf.mxu0
        %v8735 = vadd.f32 %v8646, %v8734
        %v8736 = vpop.f32.mrf.mxu0
        %v8737 = vadd.f32 %v8648, %v8736
        %8738 = vmatmul.bf16.gmra.mxu0 %v4123
        %v8739 = vpop.f32.mrf.mxu0
        %v8740 = vadd.f32 %v8651, %v8739
        %v8741 = vpop.f32.mrf.mxu0
        %v8742 = vadd.f32 %v8653, %v8741
        %8743 = vmatmul.bf16.gmra.mxu0 %v4132
        %v8744 = vpop.f32.mrf.mxu0
        %v8745 = vadd.f32 %v8656, %v8744
        %v8746 = vpop.f32.mrf.mxu0
        %v8747 = vadd.f32 %v8658, %v8746
        %8748 = vmatmul.bf16.gmra.mxu0 %v4141
        %v8749 = vpop.f32.mrf.mxu0
        %v8750 = vadd.f32 %v8661, %v8749
        %v8751 = vpop.f32.mrf.mxu0
        %v8752 = vadd.f32 %v8663, %v8751
        %8753 = vdwg.mxu0
        %8754 = vmatpush.bf16.msra.mxu0 %v5407
        %8755 = vmatpush.bf16.msra.mxu0 %v5403
        %8756 = vmatpush.bf16.msra.mxu0 %v5399
        %8757 = vmatpush.bf16.msra.mxu0 %v5395
        %8758 = vmatpush.bf16.msra.mxu0 %v5391
        %8759 = vmatpush.bf16.msra.mxu0 %v5387
        %8760 = vmatpush.bf16.msra.mxu0 %v5383
        %8761 = vmatpush.bf16.msra.mxu0 %v5379
        %8762 = vmatmul.bf16.gmra.mxu0 %v4007
        %v8763 = vpop.f32.mrf.mxu0
        %v8764 = vadd.f32 %v8675, %v8763
        %v8765 = vpop.f32.mrf.mxu0
        %v8766 = vadd.f32 %v8677, %v8765
        %8767 = vmatmul.bf16.gmra.mxu0 %v4016
        %v8768 = vpop.f32.mrf.mxu0
        %v8769 = vadd.f32 %v8680, %v8768
        %v8770 = vpop.f32.mrf.mxu0
        %v8771 = vadd.f32 %v8682, %v8770
        %8772 = vmatmul.bf16.gmra.mxu0 %v4025
        %v8773 = vpop.f32.mrf.mxu0
        %v8774 = vadd.f32 %v8685, %v8773
        %v8775 = vpop.f32.mrf.mxu0
        %v8776 = vadd.f32 %v8687, %v8775
        %8777 = vmatmul.bf16.gmra.mxu0 %v4034
        %v8778 = vpop.f32.mrf.mxu0
        %v8779 = vadd.f32 %v8690, %v8778
        %v8780 = vpop.f32.mrf.mxu0
        %v8781 = vadd.f32 %v8692, %v8780
        %8782 = vmatmul.bf16.gmra.mxu0 %v4043
        %v8783 = vpop.f32.mrf.mxu0
        %v8784 = vadd.f32 %v8695, %v8783
        %v8785 = vpop.f32.mrf.mxu0
        %v8786 = vadd.f32 %v8697, %v8785
        %8787 = vmatmul.bf16.gmra.mxu0 %v4052
        %v8788 = vpop.f32.mrf.mxu0
        %v8789 = vadd.f32 %v8700, %v8788
        %v8790 = vpop.f32.mrf.mxu0
        %v8791 = vadd.f32 %v8702, %v8790
        %8792 = vmatmul.bf16.gmra.mxu0 %v4061
        %v8793 = vpop.f32.mrf.mxu0
        %v8794 = vadd.f32 %v8705, %v8793
        %v8795 = vpop.f32.mrf.mxu0
        %v8796 = vadd.f32 %v8707, %v8795
        %8797 = vmatmul.bf16.gmra.mxu0 %v4070
        %v8798 = vpop.f32.mrf.mxu0
        %v8799 = vadd.f32 %v8710, %v8798
        %v8800 = vpop.f32.mrf.mxu0
        %v8801 = vadd.f32 %v8712, %v8800
        %8802 = vmatmul.bf16.gmra.mxu0 %v4079
        %v8803 = vpop.f32.mrf.mxu0
        %v8804 = vadd.f32 %v8715, %v8803
        %v8805 = vpop.f32.mrf.mxu0
        %v8806 = vadd.f32 %v8717, %v8805
        %8807 = vmatmul.bf16.gmra.mxu0 %v4088
        %v8808 = vpop.f32.mrf.mxu0
        %v8809 = vadd.f32 %v8720, %v8808
        %v8810 = vpop.f32.mrf.mxu0
        %v8811 = vadd.f32 %v8722, %v8810
        %8812 = vmatmul.bf16.gmra.mxu0 %v4097
        %v8813 = vpop.f32.mrf.mxu0
        %v8814 = vadd.f32 %v8725, %v8813
        %v8815 = vpop.f32.mrf.mxu0
        %v8816 = vadd.f32 %v8727, %v8815
        %8817 = vmatmul.bf16.gmra.mxu0 %v4106
        %v8818 = vpop.f32.mrf.mxu0
        %v8819 = vadd.f32 %v8730, %v8818
        %v8820 = vpop.f32.mrf.mxu0
        %v8821 = vadd.f32 %v8732, %v8820
        %8822 = vmatmul.bf16.gmra.mxu0 %v4115
        %v8823 = vpop.f32.mrf.mxu0
        %v8824 = vadd.f32 %v8735, %v8823
        %v8825 = vpop.f32.mrf.mxu0
        %v8826 = vadd.f32 %v8737, %v8825
        %8827 = vmatmul.bf16.gmra.mxu0 %v4124
        %v8828 = vpop.f32.mrf.mxu0
        %v8829 = vadd.f32 %v8740, %v8828
        %v8830 = vpop.f32.mrf.mxu0
        %v8831 = vadd.f32 %v8742, %v8830
        %8832 = vmatmul.bf16.gmra.mxu0 %v4133
        %v8833 = vpop.f32.mrf.mxu0
        %v8834 = vadd.f32 %v8745, %v8833
        %v8835 = vpop.f32.mrf.mxu0
        %v8836 = vadd.f32 %v8747, %v8835
        %8837 = vmatmul.bf16.gmra.mxu0 %v4142
        %v8838 = vpop.f32.mrf.mxu0
        %v8839 = vadd.f32 %v8750, %v8838
        %v8840 = vpop.f32.mrf.mxu0
        %v8841 = vadd.f32 %v8752, %v8840
        %8842 = vdwg.mxu0
        %8843 = vmatpush.bf16.msra.mxu0 %v5439
        %8844 = vmatpush.bf16.msra.mxu0 %v5435
        %8845 = vmatpush.bf16.msra.mxu0 %v5431
        %8846 = vmatpush.bf16.msra.mxu0 %v5427
        %8847 = vmatpush.bf16.msra.mxu0 %v5423
        %8848 = vmatpush.bf16.msra.mxu0 %v5419
        %8849 = vmatpush.bf16.msra.mxu0 %v5415
        %8850 = vmatpush.bf16.msra.mxu0 %v5411
        %8851 = vmatmul.bf16.gmra.mxu0 %v4008
        %v8852 = vpop.f32.mrf.mxu0
        %v8853 = vadd.f32 %v8764, %v8852
        %v8854 = vpop.f32.mrf.mxu0
        %v8855 = vadd.f32 %v8766, %v8854
        %8856 = vmatmul.bf16.gmra.mxu0 %v4017
        %v8857 = vpop.f32.mrf.mxu0
        %v8858 = vadd.f32 %v8769, %v8857
        %v8859 = vpop.f32.mrf.mxu0
        %v8860 = vadd.f32 %v8771, %v8859
        %8861 = vmatmul.bf16.gmra.mxu0 %v4026
        %v8862 = vpop.f32.mrf.mxu0
        %v8863 = vadd.f32 %v8774, %v8862
        %v8864 = vpop.f32.mrf.mxu0
        %v8865 = vadd.f32 %v8776, %v8864
        %8866 = vmatmul.bf16.gmra.mxu0 %v4035
        %v8867 = vpop.f32.mrf.mxu0
        %v8868 = vadd.f32 %v8779, %v8867
        %v8869 = vpop.f32.mrf.mxu0
        %v8870 = vadd.f32 %v8781, %v8869
        %8871 = vmatmul.bf16.gmra.mxu0 %v4044
        %v8872 = vpop.f32.mrf.mxu0
        %v8873 = vadd.f32 %v8784, %v8872
        %v8874 = vpop.f32.mrf.mxu0
        %v8875 = vadd.f32 %v8786, %v8874
        %8876 = vmatmul.bf16.gmra.mxu0 %v4053
        %v8877 = vpop.f32.mrf.mxu0
        %v8878 = vadd.f32 %v8789, %v8877
        %v8879 = vpop.f32.mrf.mxu0
        %v8880 = vadd.f32 %v8791, %v8879
        %8881 = vmatmul.bf16.gmra.mxu0 %v4062
        %v8882 = vpop.f32.mrf.mxu0
        %v8883 = vadd.f32 %v8794, %v8882
        %v8884 = vpop.f32.mrf.mxu0
        %v8885 = vadd.f32 %v8796, %v8884
        %8886 = vmatmul.bf16.gmra.mxu0 %v4071
        %v8887 = vpop.f32.mrf.mxu0
        %v8888 = vadd.f32 %v8799, %v8887
        %v8889 = vpop.f32.mrf.mxu0
        %v8890 = vadd.f32 %v8801, %v8889
        %8891 = vmatmul.bf16.gmra.mxu0 %v4080
        %v8892 = vpop.f32.mrf.mxu0
        %v8893 = vadd.f32 %v8804, %v8892
        %v8894 = vpop.f32.mrf.mxu0
        %v8895 = vadd.f32 %v8806, %v8894
        %8896 = vmatmul.bf16.gmra.mxu0 %v4089
        %v8897 = vpop.f32.mrf.mxu0
        %v8898 = vadd.f32 %v8809, %v8897
        %v8899 = vpop.f32.mrf.mxu0
        %v8900 = vadd.f32 %v8811, %v8899
        %8901 = vmatmul.bf16.gmra.mxu0 %v4098
        %v8902 = vpop.f32.mrf.mxu0
        %v8903 = vadd.f32 %v8814, %v8902
        %v8904 = vpop.f32.mrf.mxu0
        %v8905 = vadd.f32 %v8816, %v8904
        %8906 = vmatmul.bf16.gmra.mxu0 %v4107
        %v8907 = vpop.f32.mrf.mxu0
        %v8908 = vadd.f32 %v8819, %v8907
        %v8909 = vpop.f32.mrf.mxu0
        %v8910 = vadd.f32 %v8821, %v8909
        %8911 = vmatmul.bf16.gmra.mxu0 %v4116
        %v8912 = vpop.f32.mrf.mxu0
        %v8913 = vadd.f32 %v8824, %v8912
        %v8914 = vpop.f32.mrf.mxu0
        %v8915 = vadd.f32 %v8826, %v8914
        %8916 = vmatmul.bf16.gmra.mxu0 %v4125
        %v8917 = vpop.f32.mrf.mxu0
        %v8918 = vadd.f32 %v8829, %v8917
        %v8919 = vpop.f32.mrf.mxu0
        %v8920 = vadd.f32 %v8831, %v8919
        %8921 = vmatmul.bf16.gmra.mxu0 %v4134
        %v8922 = vpop.f32.mrf.mxu0
        %v8923 = vadd.f32 %v8834, %v8922
        %v8924 = vpop.f32.mrf.mxu0
        %v8925 = vadd.f32 %v8836, %v8924
        %8926 = vmatmul.bf16.gmra.mxu0 %v4143
        %v8927 = vpop.f32.mrf.mxu0
        %v8928 = vadd.f32 %v8839, %v8927
        %v8929 = vpop.f32.mrf.mxu0
        %v8930 = vadd.f32 %v8841, %v8929
        %8931 = vdwg.mxu0
        %8932 = vst [vmem:[#allocation3] sm:$0xff] %v6450
        %8933 = vst [vmem:[#allocation3 + $0x8] sm:$0xff] %v7251
        %8934 = vst [vmem:[#allocation3 + $0x10] sm:$0xff] %v8052
        %8935 = vst [vmem:[#allocation3 + $0x18] sm:$0xff] %v8853
        %8936 = vst [vmem:[#allocation3 + $0x20] sm:$0xff] %v6452
        %8937 = vst [vmem:[#allocation3 + $0x28] sm:$0xff] %v7253
        %8938 = vst [vmem:[#allocation3 + $0x30] sm:$0xff] %v8054
        %8939 = vst [vmem:[#allocation3 + $0x38] sm:$0xff] %v8855
        %8940 = vst [vmem:[#allocation3 + $0x40] sm:$0xff] %v6455
        %8941 = vst [vmem:[#allocation3 + $0x48] sm:$0xff] %v7256
        %8942 = vst [vmem:[#allocation3 + $0x50] sm:$0xff] %v8057
        %8943 = vst [vmem:[#allocation3 + $0x58] sm:$0xff] %v8858
        %8944 = vst [vmem:[#allocation3 + $0x60] sm:$0xff] %v6457
        %8945 = vst [vmem:[#allocation3 + $0x68] sm:$0xff] %v7258
        %8946 = vst [vmem:[#allocation3 + $0x70] sm:$0xff] %v8059
        %8947 = vst [vmem:[#allocation3 + $0x78] sm:$0xff] %v8860
        %8948 = vst [vmem:[#allocation3 + $0x80] sm:$0xff] %v6460
        %8949 = vst [vmem:[#allocation3 + $0x88] sm:$0xff] %v7261
        %8950 = vst [vmem:[#allocation3 + $0x90] sm:$0xff] %v8062
        %8951 = vst [vmem:[#allocation3 + $0x98] sm:$0xff] %v8863
        %8952 = vst [vmem:[#allocation3 + $0xa0] sm:$0xff] %v6462
        %8953 = vst [vmem:[#allocation3 + $0xa8] sm:$0xff] %v7263
        %8954 = vst [vmem:[#allocation3 + $0xb0] sm:$0xff] %v8064
        %8955 = vst [vmem:[#allocation3 + $0xb8] sm:$0xff] %v8865
        %8956 = vst [vmem:[#allocation3 + $0xc0] sm:$0xff] %v6465
        %8957 = vst [vmem:[#allocation3 + $0xc8] sm:$0xff] %v7266
        %8958 = vst [vmem:[#allocation3 + $0xd0] sm:$0xff] %v8067
        %8959 = vst [vmem:[#allocation3 + $0xd8] sm:$0xff] %v8868
        %8960 = vst [vmem:[#allocation3 + $0xe0] sm:$0xff] %v6467
        %8961 = vst [vmem:[#allocation3 + $0xe8] sm:$0xff] %v7268
        %8962 = vst [vmem:[#allocation3 + $0xf0] sm:$0xff] %v8069
        %8963 = vst [vmem:[#allocation3 + $0xf8] sm:$0xff] %v8870
        %8964 = vst [vmem:[#allocation3 + $0x100] sm:$0xff] %v6470
        %8965 = vst [vmem:[#allocation3 + $0x108] sm:$0xff] %v7271
        %8966 = vst [vmem:[#allocation3 + $0x110] sm:$0xff] %v8072
        %8967 = vst [vmem:[#allocation3 + $0x118] sm:$0xff] %v8873
        %8968 = vst [vmem:[#allocation3 + $0x120] sm:$0xff] %v6472
        %8969 = vst [vmem:[#allocation3 + $0x128] sm:$0xff] %v7273
        %8970 = vst [vmem:[#allocation3 + $0x130] sm:$0xff] %v8074
        %8971 = vst [vmem:[#allocation3 + $0x138] sm:$0xff] %v8875
        %8972 = vst [vmem:[#allocation3 + $0x140] sm:$0xff] %v6475
        %8973 = vst [vmem:[#allocation3 + $0x148] sm:$0xff] %v7276
        %8974 = vst [vmem:[#allocation3 + $0x150] sm:$0xff] %v8077
        %8975 = vst [vmem:[#allocation3 + $0x158] sm:$0xff] %v8878
        %8976 = vst [vmem:[#allocation3 + $0x160] sm:$0xff] %v6477
        %8977 = vst [vmem:[#allocation3 + $0x168] sm:$0xff] %v7278
        %8978 = vst [vmem:[#allocation3 + $0x170] sm:$0xff] %v8079
        %8979 = vst [vmem:[#allocation3 + $0x178] sm:$0xff] %v8880
        %8980 = vst [vmem:[#allocation3 + $0x180] sm:$0xff] %v6480
        %8981 = vst [vmem:[#allocation3 + $0x188] sm:$0xff] %v7281
        %8982 = vst [vmem:[#allocation3 + $0x190] sm:$0xff] %v8082
        %8983 = vst [vmem:[#allocation3 + $0x198] sm:$0xff] %v8883
        %8984 = vst [vmem:[#allocation3 + $0x1a0] sm:$0xff] %v6482
        %8985 = vst [vmem:[#allocation3 + $0x1a8] sm:$0xff] %v7283
        %8986 = vst [vmem:[#allocation3 + $0x1b0] sm:$0xff] %v8084
        %8987 = vst [vmem:[#allocation3 + $0x1b8] sm:$0xff] %v8885
        %8988 = vst [vmem:[#allocation3 + $0x1c0] sm:$0xff] %v6485
        %8989 = vst [vmem:[#allocation3 + $0x1c8] sm:$0xff] %v7286
        %8990 = vst [vmem:[#allocation3 + $0x1d0] sm:$0xff] %v8087
        %8991 = vst [vmem:[#allocation3 + $0x1d8] sm:$0xff] %v8888
        %8992 = vst [vmem:[#allocation3 + $0x1e0] sm:$0xff] %v6487
        %8993 = vst [vmem:[#allocation3 + $0x1e8] sm:$0xff] %v7288
        %8994 = vst [vmem:[#allocation3 + $0x1f0] sm:$0xff] %v8089
        %8995 = vst [vmem:[#allocation3 + $0x1f8] sm:$0xff] %v8890
        %8996 = vst [vmem:[#allocation3 + $0x200] sm:$0xff] %v6490
        %8997 = vst [vmem:[#allocation3 + $0x208] sm:$0xff] %v7291
        %8998 = vst [vmem:[#allocation3 + $0x210] sm:$0xff] %v8092
        %8999 = vst [vmem:[#allocation3 + $0x218] sm:$0xff] %v8893
        %9000 = vst [vmem:[#allocation3 + $0x220] sm:$0xff] %v6492
        %9001 = vst [vmem:[#allocation3 + $0x228] sm:$0xff] %v7293
        %9002 = vst [vmem:[#allocation3 + $0x230] sm:$0xff] %v8094
        %9003 = vst [vmem:[#allocation3 + $0x238] sm:$0xff] %v8895
        %9004 = vst [vmem:[#allocation3 + $0x240] sm:$0xff] %v6495
        %9005 = vst [vmem:[#allocation3 + $0x248] sm:$0xff] %v7296
        %9006 = vst [vmem:[#allocation3 + $0x250] sm:$0xff] %v8097
        %9007 = vst [vmem:[#allocation3 + $0x258] sm:$0xff] %v8898
        %9008 = vst [vmem:[#allocation3 + $0x260] sm:$0xff] %v6497
        %9009 = vst [vmem:[#allocation3 + $0x268] sm:$0xff] %v7298
        %9010 = vst [vmem:[#allocation3 + $0x270] sm:$0xff] %v8099
        %9011 = vst [vmem:[#allocation3 + $0x278] sm:$0xff] %v8900
        %9012 = vst [vmem:[#allocation3 + $0x280] sm:$0xff] %v6500
        %9013 = vst [vmem:[#allocation3 + $0x288] sm:$0xff] %v7301
        %9014 = vst [vmem:[#allocation3 + $0x290] sm:$0xff] %v8102
        %9015 = vst [vmem:[#allocation3 + $0x298] sm:$0xff] %v8903
        %9016 = vst [vmem:[#allocation3 + $0x2a0] sm:$0xff] %v6502
        %9017 = vst [vmem:[#allocation3 + $0x2a8] sm:$0xff] %v7303
        %9018 = vst [vmem:[#allocation3 + $0x2b0] sm:$0xff] %v8104
        %9019 = vst [vmem:[#allocation3 + $0x2b8] sm:$0xff] %v8905
        %9020 = vst [vmem:[#allocation3 + $0x2c0] sm:$0xff] %v6505
        %9021 = vst [vmem:[#allocation3 + $0x2c8] sm:$0xff] %v7306
        %9022 = vst [vmem:[#allocation3 + $0x2d0] sm:$0xff] %v8107
        %9023 = vst [vmem:[#allocation3 + $0x2d8] sm:$0xff] %v8908
        %9024 = vst [vmem:[#allocation3 + $0x2e0] sm:$0xff] %v6507
        %9025 = vst [vmem:[#allocation3 + $0x2e8] sm:$0xff] %v7308
        %9026 = vst [vmem:[#allocation3 + $0x2f0] sm:$0xff] %v8109
        %9027 = vst [vmem:[#allocation3 + $0x2f8] sm:$0xff] %v8910
        %9028 = vst [vmem:[#allocation3 + $0x300] sm:$0xff] %v6510
        %9029 = vst [vmem:[#allocation3 + $0x308] sm:$0xff] %v7311
        %9030 = vst [vmem:[#allocation3 + $0x310] sm:$0xff] %v8112
        %9031 = vst [vmem:[#allocation3 + $0x318] sm:$0xff] %v8913
        %9032 = vst [vmem:[#allocation3 + $0x320] sm:$0xff] %v6512
        %9033 = vst [vmem:[#allocation3 + $0x328] sm:$0xff] %v7313
        %9034 = vst [vmem:[#allocation3 + $0x330] sm:$0xff] %v8114
        %9035 = vst [vmem:[#allocation3 + $0x338] sm:$0xff] %v8915
        %9036 = vst [vmem:[#allocation3 + $0x340] sm:$0xff] %v6515
        %9037 = vst [vmem:[#allocation3 + $0x348] sm:$0xff] %v7316
        %9038 = vst [vmem:[#allocation3 + $0x350] sm:$0xff] %v8117
        %9039 = vst [vmem:[#allocation3 + $0x358] sm:$0xff] %v8918
        %9040 = vst [vmem:[#allocation3 + $0x360] sm:$0xff] %v6517
        %9041 = vst [vmem:[#allocation3 + $0x368] sm:$0xff] %v7318
        %9042 = vst [vmem:[#allocation3 + $0x370] sm:$0xff] %v8119
        %9043 = vst [vmem:[#allocation3 + $0x378] sm:$0xff] %v8920
        %9044 = vst [vmem:[#allocation3 + $0x380] sm:$0xff] %v6520
        %9045 = vst [vmem:[#allocation3 + $0x388] sm:$0xff] %v7321
        %9046 = vst [vmem:[#allocation3 + $0x390] sm:$0xff] %v8122
        %9047 = vst [vmem:[#allocation3 + $0x398] sm:$0xff] %v8923
        %9048 = vst [vmem:[#allocation3 + $0x3a0] sm:$0xff] %v6522
        %9049 = vst [vmem:[#allocation3 + $0x3a8] sm:$0xff] %v7323
        %9050 = vst [vmem:[#allocation3 + $0x3b0] sm:$0xff] %v8124
        %9051 = vst [vmem:[#allocation3 + $0x3b8] sm:$0xff] %v8925
        %9052 = vst [vmem:[#allocation3 + $0x3c0] sm:$0xff] %v6525
        %9053 = vst [vmem:[#allocation3 + $0x3c8] sm:$0xff] %v7326
        %9054 = vst [vmem:[#allocation3 + $0x3d0] sm:$0xff] %v8127
        %9055 = vst [vmem:[#allocation3 + $0x3d8] sm:$0xff] %v8928
        %9056 = vst [vmem:[#allocation3 + $0x3e0] sm:$0xff] %v6527
        %9057 = vst [vmem:[#allocation3 + $0x3e8] sm:$0xff] %v7328
        %9058 = vst [vmem:[#allocation3 + $0x3f0] sm:$0xff] %v8129
        %9059 = vst [vmem:[#allocation3 + $0x3f8] sm:$0xff] %v8930
        %s9060 = smul.u32 %s28, 16
        %s9061 = sld [smem:[#allocation5 + %s9060]]
        %s9062 = sadd.s32 %s9060, 1
        %s9063 = sld [smem:[#allocation5 + %s9062]]
        %s9064 = sadd.s32 %s9060, 2
        %s9065 = sld [smem:[#allocation5 + %s9064]]
        %s9066 = sadd.s32 %s9060, 3
        %s9067 = sld [smem:[#allocation5 + %s9066]]
        %v9068 = vld [vmem:[#allocation9] sm:$0x1]
        %v9069 = vstv %s9061
        %v9070 = vmul.f32 %v9069, %v9068
        %v9071 = vld [vmem:[#allocation9 + $0x1] sm:$0x1]
        %v9072 = vstv %s9063
        %v9073 = vmul.f32 %v9072, %v9071
        %v9074 = vadd.f32 %v9070, %v9073
        %v9075 = vld [vmem:[#allocation9 + $0x2] sm:$0x1]
        %v9076 = vstv %s9065
        %v9077 = vmul.f32 %v9076, %v9075
        %v9078 = vadd.f32 %v9074, %v9077
        %v9079 = vld [vmem:[#allocation9 + $0x3] sm:$0x1]
        %v9080 = vstv %s9067
        %v9081 = vmul.f32 %v9080, %v9079
        %v9082 = vadd.f32 %v9078, %v9081
        %v9083 = vld [vmem:[#allocation3] sm:$0xff]
        %v9084 = vld [vmem:[#allocation3 + $0x20] sm:$0xff]
        %v9085 = vld [vmem:[#allocation3 + $0x40] sm:$0xff]
        %v9086 = vld [vmem:[#allocation3 + $0x60] sm:$0xff]
        %v9087 = vld [vmem:[#allocation3 + $0x80] sm:$0xff]
        %v9088 = vld [vmem:[#allocation3 + $0xa0] sm:$0xff]
        %v9089 = vld [vmem:[#allocation3 + $0xc0] sm:$0xff]
        %v9090 = vld [vmem:[#allocation3 + $0xe0] sm:$0xff]
        %v9091 = vmul.f32 %v9069, %v9083
        %v9092 = vmul.f32 %v9069, %v9084
        %v9093 = vmul.f32 %v9069, %v9085
        %v9094 = vmul.f32 %v9069, %v9086
        %v9095 = vmul.f32 %v9069, %v9087
        %v9096 = vmul.f32 %v9069, %v9088
        %v9097 = vmul.f32 %v9069, %v9089
        %v9098 = vmul.f32 %v9069, %v9090
        %v9099 = vld [vmem:[#allocation3 + $0x8] sm:$0xff]
        %v9100 = vld [vmem:[#allocation3 + $0x28] sm:$0xff]
        %v9101 = vld [vmem:[#allocation3 + $0x48] sm:$0xff]
        %v9102 = vld [vmem:[#allocation3 + $0x68] sm:$0xff]
        %v9103 = vld [vmem:[#allocation3 + $0x88] sm:$0xff]
        %v9104 = vld [vmem:[#allocation3 + $0xa8] sm:$0xff]
        %v9105 = vld [vmem:[#allocation3 + $0xc8] sm:$0xff]
        %v9106 = vld [vmem:[#allocation3 + $0xe8] sm:$0xff]
        %v9107 = vmul.f32 %v9072, %v9099
        %v9108 = vmul.f32 %v9072, %v9100
        %v9109 = vmul.f32 %v9072, %v9101
        %v9110 = vmul.f32 %v9072, %v9102
        %v9111 = vmul.f32 %v9072, %v9103
        %v9112 = vmul.f32 %v9072, %v9104
        %v9113 = vmul.f32 %v9072, %v9105
        %v9114 = vmul.f32 %v9072, %v9106
        %v9115 = vadd.f32 %v9091, %v9107
        %v9116 = vadd.f32 %v9092, %v9108
        %v9117 = vadd.f32 %v9093, %v9109
        %v9118 = vadd.f32 %v9094, %v9110
        %v9119 = vadd.f32 %v9095, %v9111
        %v9120 = vadd.f32 %v9096, %v9112
        %v9121 = vadd.f32 %v9097, %v9113
        %v9122 = vadd.f32 %v9098, %v9114
        %v9123 = vld [vmem:[#allocation3 + $0x10] sm:$0xff]
        %v9124 = vld [vmem:[#allocation3 + $0x30] sm:$0xff]
        %v9125 = vld [vmem:[#allocation3 + $0x50] sm:$0xff]
        %v9126 = vld [vmem:[#allocation3 + $0x70] sm:$0xff]
        %v9127 = vld [vmem:[#allocation3 + $0x90] sm:$0xff]
        %v9128 = vld [vmem:[#allocation3 + $0xb0] sm:$0xff]
        %v9129 = vld [vmem:[#allocation3 + $0xd0] sm:$0xff]
        %v9130 = vld [vmem:[#allocation3 + $0xf0] sm:$0xff]
        %v9131 = vmul.f32 %v9076, %v9123
        %v9132 = vmul.f32 %v9076, %v9124
        %v9133 = vmul.f32 %v9076, %v9125
        %v9134 = vmul.f32 %v9076, %v9126
        %v9135 = vmul.f32 %v9076, %v9127
        %v9136 = vmul.f32 %v9076, %v9128
        %v9137 = vmul.f32 %v9076, %v9129
        %v9138 = vmul.f32 %v9076, %v9130
        %v9139 = vadd.f32 %v9115, %v9131
        %v9140 = vadd.f32 %v9116, %v9132
        %v9141 = vadd.f32 %v9117, %v9133
        %v9142 = vadd.f32 %v9118, %v9134
        %v9143 = vadd.f32 %v9119, %v9135
        %v9144 = vadd.f32 %v9120, %v9136
        %v9145 = vadd.f32 %v9121, %v9137
        %v9146 = vadd.f32 %v9122, %v9138
        %v9147 = vld [vmem:[#allocation3 + $0x18] sm:$0xff]
        %v9148 = vld [vmem:[#allocation3 + $0x38] sm:$0xff]
        %v9149 = vld [vmem:[#allocation3 + $0x58] sm:$0xff]
        %v9150 = vld [vmem:[#allocation3 + $0x78] sm:$0xff]
        %v9151 = vld [vmem:[#allocation3 + $0x98] sm:$0xff]
        %v9152 = vld [vmem:[#allocation3 + $0xb8] sm:$0xff]
        %v9153 = vld [vmem:[#allocation3 + $0xd8] sm:$0xff]
        %v9154 = vld [vmem:[#allocation3 + $0xf8] sm:$0xff]
        %v9155 = vmul.f32 %v9080, %v9147
        %v9156 = vmul.f32 %v9080, %v9148
        %v9157 = vmul.f32 %v9080, %v9149
        %v9158 = vmul.f32 %v9080, %v9150
        %v9159 = vmul.f32 %v9080, %v9151
        %v9160 = vmul.f32 %v9080, %v9152
        %v9161 = vmul.f32 %v9080, %v9153
        %v9162 = vmul.f32 %v9080, %v9154
        %v9163 = vadd.f32 %v9139, %v9155
        %v9164 = vadd.f32 %v9140, %v9156
        %v9165 = vadd.f32 %v9141, %v9157
        %v9166 = vadd.f32 %v9142, %v9158
        %v9167 = vadd.f32 %v9143, %v9159
        %v9168 = vadd.f32 %v9144, %v9160
        %v9169 = vadd.f32 %v9145, %v9161
        %v9170 = vadd.f32 %v9146, %v9162
        %v9171 = vperm.slane %v9082, 0
        %v9172 = vadd.f32 %v9163, %v9171
        %v9173 = vadd.f32 %v9164, %v9171
        %v9174 = vadd.f32 %v9165, %v9171
        %v9175 = vadd.f32 %v9166, %v9171
        %v9176 = vadd.f32 %v9167, %v9171
        %v9177 = vadd.f32 %v9168, %v9171
        %v9178 = vadd.f32 %v9169, %v9171
        %v9179 = vadd.f32 %v9170, %v9171
        %9180 = vst [vmem:[%s207] sm:$0xff] %v9172
        %9181 = vst [vmem:[%s207 + $0x8] sm:$0xff] %v9173
        %9182 = vst [vmem:[%s207 + $0x10] sm:$0xff] %v9174
        %9183 = vst [vmem:[%s207 + $0x18] sm:$0xff] %v9175
        %9184 = vst [vmem:[%s207 + $0x20] sm:$0xff] %v9176
        %9185 = vst [vmem:[%s207 + $0x28] sm:$0xff] %v9177
        %9186 = vst [vmem:[%s207 + $0x30] sm:$0xff] %v9178
        %9187 = vst [vmem:[%s207 + $0x38] sm:$0xff] %v9179
        %s9188 = smul.u32 %s28, 4
        %s9189 = sadd.s32 %s9188, 1
        %s9190 = smul.u32 %s9189, 4
        %s9191 = sld [smem:[#allocation5 + %s9190]]
        %s9192 = sadd.s32 %s9190, 1
        %s9193 = sld [smem:[#allocation5 + %s9192]]
        %s9194 = sadd.s32 %s9190, 2
        %s9195 = sld [smem:[#allocation5 + %s9194]]
        %s9196 = sadd.s32 %s9190, 3
        %s9197 = sld [smem:[#allocation5 + %s9196]]
        %v9198 = vld [vmem:[#allocation9] sm:$0x1]
        %v9199 = vstv %s9191
        %v9200 = vmul.f32 %v9199, %v9198
        %v9201 = vld [vmem:[#allocation9 + $0x1] sm:$0x1]
        %v9202 = vstv %s9193
        %v9203 = vmul.f32 %v9202, %v9201
        %v9204 = vadd.f32 %v9200, %v9203
        %v9205 = vld [vmem:[#allocation9 + $0x2] sm:$0x1]
        %v9206 = vstv %s9195
        %v9207 = vmul.f32 %v9206, %v9205
        %v9208 = vadd.f32 %v9204, %v9207
        %v9209 = vld [vmem:[#allocation9 + $0x3] sm:$0x1]
        %v9210 = vstv %s9197
        %v9211 = vmul.f32 %v9210, %v9209
        %v9212 = vadd.f32 %v9208, %v9211
        %v9213 = vld [vmem:[#allocation3 + $0x100] sm:$0xff]
        %v9214 = vld [vmem:[#allocation3 + $0x120] sm:$0xff]
        %v9215 = vld [vmem:[#allocation3 + $0x140] sm:$0xff]
        %v9216 = vld [vmem:[#allocation3 + $0x160] sm:$0xff]
        %v9217 = vld [vmem:[#allocation3 + $0x180] sm:$0xff]
        %v9218 = vld [vmem:[#allocation3 + $0x1a0] sm:$0xff]
        %v9219 = vld [vmem:[#allocation3 + $0x1c0] sm:$0xff]
        %v9220 = vld [vmem:[#allocation3 + $0x1e0] sm:$0xff]
        %v9221 = vmul.f32 %v9199, %v9213
        %v9222 = vmul.f32 %v9199, %v9214
        %v9223 = vmul.f32 %v9199, %v9215
        %v9224 = vmul.f32 %v9199, %v9216
        %v9225 = vmul.f32 %v9199, %v9217
        %v9226 = vmul.f32 %v9199, %v9218
        %v9227 = vmul.f32 %v9199, %v9219
        %v9228 = vmul.f32 %v9199, %v9220
        %v9229 = vld [vmem:[#allocation3 + $0x108] sm:$0xff]
        %v9230 = vld [vmem:[#allocation3 + $0x128] sm:$0xff]
        %v9231 = vld [vmem:[#allocation3 + $0x148] sm:$0xff]
        %v9232 = vld [vmem:[#allocation3 + $0x168] sm:$0xff]
        %v9233 = vld [vmem:[#allocation3 + $0x188] sm:$0xff]
        %v9234 = vld [vmem:[#allocation3 + $0x1a8] sm:$0xff]
        %v9235 = vld [vmem:[#allocation3 + $0x1c8] sm:$0xff]
        %v9236 = vld [vmem:[#allocation3 + $0x1e8] sm:$0xff]
        %v9237 = vmul.f32 %v9202, %v9229
        %v9238 = vmul.f32 %v9202, %v9230
        %v9239 = vmul.f32 %v9202, %v9231
        %v9240 = vmul.f32 %v9202, %v9232
        %v9241 = vmul.f32 %v9202, %v9233
        %v9242 = vmul.f32 %v9202, %v9234
        %v9243 = vmul.f32 %v9202, %v9235
        %v9244 = vmul.f32 %v9202, %v9236
        %v9245 = vadd.f32 %v9221, %v9237
        %v9246 = vadd.f32 %v9222, %v9238
        %v9247 = vadd.f32 %v9223, %v9239
        %v9248 = vadd.f32 %v9224, %v9240
        %v9249 = vadd.f32 %v9225, %v9241
        %v9250 = vadd.f32 %v9226, %v9242
        %v9251 = vadd.f32 %v9227, %v9243
        %v9252 = vadd.f32 %v9228, %v9244
        %v9253 = vld [vmem:[#allocation3 + $0x110] sm:$0xff]
        %v9254 = vld [vmem:[#allocation3 + $0x130] sm:$0xff]
        %v9255 = vld [vmem:[#allocation3 + $0x150] sm:$0xff]
        %v9256 = vld [vmem:[#allocation3 + $0x170] sm:$0xff]
        %v9257 = vld [vmem:[#allocation3 + $0x190] sm:$0xff]
        %v9258 = vld [vmem:[#allocation3 + $0x1b0] sm:$0xff]
        %v9259 = vld [vmem:[#allocation3 + $0x1d0] sm:$0xff]
        %v9260 = vld [vmem:[#allocation3 + $0x1f0] sm:$0xff]
        %v9261 = vmul.f32 %v9206, %v9253
        %v9262 = vmul.f32 %v9206, %v9254
        %v9263 = vmul.f32 %v9206, %v9255
        %v9264 = vmul.f32 %v9206, %v9256
        %v9265 = vmul.f32 %v9206, %v9257
        %v9266 = vmul.f32 %v9206, %v9258
        %v9267 = vmul.f32 %v9206, %v9259
        %v9268 = vmul.f32 %v9206, %v9260
        %v9269 = vadd.f32 %v9245, %v9261
        %v9270 = vadd.f32 %v9246, %v9262
        %v9271 = vadd.f32 %v9247, %v9263
        %v9272 = vadd.f32 %v9248, %v9264
        %v9273 = vadd.f32 %v9249, %v9265
        %v9274 = vadd.f32 %v9250, %v9266
        %v9275 = vadd.f32 %v9251, %v9267
        %v9276 = vadd.f32 %v9252, %v9268
        %v9277 = vld [vmem:[#allocation3 + $0x118] sm:$0xff]
        %v9278 = vld [vmem:[#allocation3 + $0x138] sm:$0xff]
        %v9279 = vld [vmem:[#allocation3 + $0x158] sm:$0xff]
        %v9280 = vld [vmem:[#allocation3 + $0x178] sm:$0xff]
        %v9281 = vld [vmem:[#allocation3 + $0x198] sm:$0xff]
        %v9282 = vld [vmem:[#allocation3 + $0x1b8] sm:$0xff]
        %v9283 = vld [vmem:[#allocation3 + $0x1d8] sm:$0xff]
        %v9284 = vld [vmem:[#allocation3 + $0x1f8] sm:$0xff]
        %v9285 = vmul.f32 %v9210, %v9277
        %v9286 = vmul.f32 %v9210, %v9278
        %v9287 = vmul.f32 %v9210, %v9279
        %v9288 = vmul.f32 %v9210, %v9280
        %v9289 = vmul.f32 %v9210, %v9281
        %v9290 = vmul.f32 %v9210, %v9282
        %v9291 = vmul.f32 %v9210, %v9283
        %v9292 = vmul.f32 %v9210, %v9284
        %v9293 = vadd.f32 %v9269, %v9285
        %v9294 = vadd.f32 %v9270, %v9286
        %v9295 = vadd.f32 %v9271, %v9287
        %v9296 = vadd.f32 %v9272, %v9288
        %v9297 = vadd.f32 %v9273, %v9289
        %v9298 = vadd.f32 %v9274, %v9290
        %v9299 = vadd.f32 %v9275, %v9291
        %v9300 = vadd.f32 %v9276, %v9292
        %v9301 = vperm.slane %v9212, 0
        %v9302 = vadd.f32 %v9293, %v9301
        %v9303 = vadd.f32 %v9294, %v9301
        %v9304 = vadd.f32 %v9295, %v9301
        %v9305 = vadd.f32 %v9296, %v9301
        %v9306 = vadd.f32 %v9297, %v9301
        %v9307 = vadd.f32 %v9298, %v9301
        %v9308 = vadd.f32 %v9299, %v9301
        %v9309 = vadd.f32 %v9300, %v9301
        %s9310 = scalar_lea.vmem %s207, 64 [#allocation11]
        %9311 = vst [vmem:[%s9310] sm:$0xff] %v9302
        %9312 = vst [vmem:[%s9310 + $0x8] sm:$0xff] %v9303
        %9313 = vst [vmem:[%s9310 + $0x10] sm:$0xff] %v9304
        %9314 = vst [vmem:[%s9310 + $0x18] sm:$0xff] %v9305
        %9315 = vst [vmem:[%s9310 + $0x20] sm:$0xff] %v9306
        %9316 = vst [vmem:[%s9310 + $0x28] sm:$0xff] %v9307
        %9317 = vst [vmem:[%s9310 + $0x30] sm:$0xff] %v9308
        %9318 = vst [vmem:[%s9310 + $0x38] sm:$0xff] %v9309
        %s9319 = sadd.s32 %s9188, 2
        %s9320 = smul.u32 %s9319, 4
        %s9321 = sld [smem:[#allocation5 + %s9320]]
        %s9322 = sadd.s32 %s9320, 1
        %s9323 = sld [smem:[#allocation5 + %s9322]]
        %s9324 = sadd.s32 %s9320, 2
        %s9325 = sld [smem:[#allocation5 + %s9324]]
        %s9326 = sadd.s32 %s9320, 3
        %s9327 = sld [smem:[#allocation5 + %s9326]]
        %v9328 = vld [vmem:[#allocation9] sm:$0x1]
        %v9329 = vstv %s9321
        %v9330 = vmul.f32 %v9329, %v9328
        %v9331 = vld [vmem:[#allocation9 + $0x1] sm:$0x1]
        %v9332 = vstv %s9323
        %v9333 = vmul.f32 %v9332, %v9331
        %v9334 = vadd.f32 %v9330, %v9333
        %v9335 = vld [vmem:[#allocation9 + $0x2] sm:$0x1]
        %v9336 = vstv %s9325
        %v9337 = vmul.f32 %v9336, %v9335
        %v9338 = vadd.f32 %v9334, %v9337
        %v9339 = vld [vmem:[#allocation9 + $0x3] sm:$0x1]
        %v9340 = vstv %s9327
        %v9341 = vmul.f32 %v9340, %v9339
        %v9342 = vadd.f32 %v9338, %v9341
        %v9343 = vld [vmem:[#allocation3 + $0x200] sm:$0xff]
        %v9344 = vld [vmem:[#allocation3 + $0x220] sm:$0xff]
        %v9345 = vld [vmem:[#allocation3 + $0x240] sm:$0xff]
        %v9346 = vld [vmem:[#allocation3 + $0x260] sm:$0xff]
        %v9347 = vld [vmem:[#allocation3 + $0x280] sm:$0xff]
        %v9348 = vld [vmem:[#allocation3 + $0x2a0] sm:$0xff]
        %v9349 = vld [vmem:[#allocation3 + $0x2c0] sm:$0xff]
        %v9350 = vld [vmem:[#allocation3 + $0x2e0] sm:$0xff]
        %v9351 = vmul.f32 %v9329, %v9343
        %v9352 = vmul.f32 %v9329, %v9344
        %v9353 = vmul.f32 %v9329, %v9345
        %v9354 = vmul.f32 %v9329, %v9346
        %v9355 = vmul.f32 %v9329, %v9347
        %v9356 = vmul.f32 %v9329, %v9348
        %v9357 = vmul.f32 %v9329, %v9349
        %v9358 = vmul.f32 %v9329, %v9350
        %v9359 = vld [vmem:[#allocation3 + $0x208] sm:$0xff]
        %v9360 = vld [vmem:[#allocation3 + $0x228] sm:$0xff]
        %v9361 = vld [vmem:[#allocation3 + $0x248] sm:$0xff]
        %v9362 = vld [vmem:[#allocation3 + $0x268] sm:$0xff]
        %v9363 = vld [vmem:[#allocation3 + $0x288] sm:$0xff]
        %v9364 = vld [vmem:[#allocation3 + $0x2a8] sm:$0xff]
        %v9365 = vld [vmem:[#allocation3 + $0x2c8] sm:$0xff]
        %v9366 = vld [vmem:[#allocation3 + $0x2e8] sm:$0xff]
        %v9367 = vmul.f32 %v9332, %v9359
        %v9368 = vmul.f32 %v9332, %v9360
        %v9369 = vmul.f32 %v9332, %v9361
        %v9370 = vmul.f32 %v9332, %v9362
        %v9371 = vmul.f32 %v9332, %v9363
        %v9372 = vmul.f32 %v9332, %v9364
        %v9373 = vmul.f32 %v9332, %v9365
        %v9374 = vmul.f32 %v9332, %v9366
        %v9375 = vadd.f32 %v9351, %v9367
        %v9376 = vadd.f32 %v9352, %v9368
        %v9377 = vadd.f32 %v9353, %v9369
        %v9378 = vadd.f32 %v9354, %v9370
        %v9379 = vadd.f32 %v9355, %v9371
        %v9380 = vadd.f32 %v9356, %v9372
        %v9381 = vadd.f32 %v9357, %v9373
        %v9382 = vadd.f32 %v9358, %v9374
        %v9383 = vld [vmem:[#allocation3 + $0x210] sm:$0xff]
        %v9384 = vld [vmem:[#allocation3 + $0x230] sm:$0xff]
        %v9385 = vld [vmem:[#allocation3 + $0x250] sm:$0xff]
        %v9386 = vld [vmem:[#allocation3 + $0x270] sm:$0xff]
        %v9387 = vld [vmem:[#allocation3 + $0x290] sm:$0xff]
        %v9388 = vld [vmem:[#allocation3 + $0x2b0] sm:$0xff]
        %v9389 = vld [vmem:[#allocation3 + $0x2d0] sm:$0xff]
        %v9390 = vld [vmem:[#allocation3 + $0x2f0] sm:$0xff]
        %v9391 = vmul.f32 %v9336, %v9383
        %v9392 = vmul.f32 %v9336, %v9384
        %v9393 = vmul.f32 %v9336, %v9385
        %v9394 = vmul.f32 %v9336, %v9386
        %v9395 = vmul.f32 %v9336, %v9387
        %v9396 = vmul.f32 %v9336, %v9388
        %v9397 = vmul.f32 %v9336, %v9389
        %v9398 = vmul.f32 %v9336, %v9390
        %v9399 = vadd.f32 %v9375, %v9391
        %v9400 = vadd.f32 %v9376, %v9392
        %v9401 = vadd.f32 %v9377, %v9393
        %v9402 = vadd.f32 %v9378, %v9394
        %v9403 = vadd.f32 %v9379, %v9395
        %v9404 = vadd.f32 %v9380, %v9396
        %v9405 = vadd.f32 %v9381, %v9397
        %v9406 = vadd.f32 %v9382, %v9398
        %v9407 = vld [vmem:[#allocation3 + $0x218] sm:$0xff]
        %v9408 = vld [vmem:[#allocation3 + $0x238] sm:$0xff]
        %v9409 = vld [vmem:[#allocation3 + $0x258] sm:$0xff]
        %v9410 = vld [vmem:[#allocation3 + $0x278] sm:$0xff]
        %v9411 = vld [vmem:[#allocation3 + $0x298] sm:$0xff]
        %v9412 = vld [vmem:[#allocation3 + $0x2b8] sm:$0xff]
        %v9413 = vld [vmem:[#allocation3 + $0x2d8] sm:$0xff]
        %v9414 = vld [vmem:[#allocation3 + $0x2f8] sm:$0xff]
        %v9415 = vmul.f32 %v9340, %v9407
        %v9416 = vmul.f32 %v9340, %v9408
        %v9417 = vmul.f32 %v9340, %v9409
        %v9418 = vmul.f32 %v9340, %v9410
        %v9419 = vmul.f32 %v9340, %v9411
        %v9420 = vmul.f32 %v9340, %v9412
        %v9421 = vmul.f32 %v9340, %v9413
        %v9422 = vmul.f32 %v9340, %v9414
        %v9423 = vadd.f32 %v9399, %v9415
        %v9424 = vadd.f32 %v9400, %v9416
        %v9425 = vadd.f32 %v9401, %v9417
        %v9426 = vadd.f32 %v9402, %v9418
        %v9427 = vadd.f32 %v9403, %v9419
        %v9428 = vadd.f32 %v9404, %v9420
        %v9429 = vadd.f32 %v9405, %v9421
        %v9430 = vadd.f32 %v9406, %v9422
        %v9431 = vperm.slane %v9342, 0
        %v9432 = vadd.f32 %v9423, %v9431
        %v9433 = vadd.f32 %v9424, %v9431
        %v9434 = vadd.f32 %v9425, %v9431
        %v9435 = vadd.f32 %v9426, %v9431
        %v9436 = vadd.f32 %v9427, %v9431
        %v9437 = vadd.f32 %v9428, %v9431
        %v9438 = vadd.f32 %v9429, %v9431
        %v9439 = vadd.f32 %v9430, %v9431
        %s9440 = scalar_lea.vmem %s207, 128 [#allocation11]
        %9441 = vst [vmem:[%s9440] sm:$0xff] %v9432
        %9442 = vst [vmem:[%s9440 + $0x8] sm:$0xff] %v9433
        %9443 = vst [vmem:[%s9440 + $0x10] sm:$0xff] %v9434
        %9444 = vst [vmem:[%s9440 + $0x18] sm:$0xff] %v9435
        %9445 = vst [vmem:[%s9440 + $0x20] sm:$0xff] %v9436
        %9446 = vst [vmem:[%s9440 + $0x28] sm:$0xff] %v9437
        %9447 = vst [vmem:[%s9440 + $0x30] sm:$0xff] %v9438
        %9448 = vst [vmem:[%s9440 + $0x38] sm:$0xff] %v9439
        %s9449 = sadd.s32 %s9188, 3
        %s9450 = smul.u32 %s9449, 4
        %s9451 = sld [smem:[#allocation5 + %s9450]]
        %s9452 = sadd.s32 %s9450, 1
        %s9453 = sld [smem:[#allocation5 + %s9452]]
        %s9454 = sadd.s32 %s9450, 2
        %s9455 = sld [smem:[#allocation5 + %s9454]]
        %s9456 = sadd.s32 %s9450, 3
        %s9457 = sld [smem:[#allocation5 + %s9456]]
        %v9458 = vld [vmem:[#allocation9] sm:$0x1]
        %v9459 = vstv %s9451
        %v9460 = vmul.f32 %v9459, %v9458
        %v9461 = vld [vmem:[#allocation9 + $0x1] sm:$0x1]
        %v9462 = vstv %s9453
        %v9463 = vmul.f32 %v9462, %v9461
        %v9464 = vadd.f32 %v9460, %v9463
        %v9465 = vld [vmem:[#allocation9 + $0x2] sm:$0x1]
        %v9466 = vstv %s9455
        %v9467 = vmul.f32 %v9466, %v9465
        %v9468 = vadd.f32 %v9464, %v9467
        %v9469 = vld [vmem:[#allocation9 + $0x3] sm:$0x1]
        %v9470 = vstv %s9457
        %v9471 = vmul.f32 %v9470, %v9469
        %v9472 = vadd.f32 %v9468, %v9471
        %v9473 = vld [vmem:[#allocation3 + $0x300] sm:$0xff]
        %v9474 = vld [vmem:[#allocation3 + $0x320] sm:$0xff]
        %v9475 = vld [vmem:[#allocation3 + $0x340] sm:$0xff]
        %v9476 = vld [vmem:[#allocation3 + $0x360] sm:$0xff]
        %v9477 = vld [vmem:[#allocation3 + $0x380] sm:$0xff]
        %v9478 = vld [vmem:[#allocation3 + $0x3a0] sm:$0xff]
        %v9479 = vld [vmem:[#allocation3 + $0x3c0] sm:$0xff]
        %v9480 = vld [vmem:[#allocation3 + $0x3e0] sm:$0xff]
        %v9481 = vmul.f32 %v9459, %v9473
        %v9482 = vmul.f32 %v9459, %v9474
        %v9483 = vmul.f32 %v9459, %v9475
        %v9484 = vmul.f32 %v9459, %v9476
        %v9485 = vmul.f32 %v9459, %v9477
        %v9486 = vmul.f32 %v9459, %v9478
        %v9487 = vmul.f32 %v9459, %v9479
        %v9488 = vmul.f32 %v9459, %v9480
        %v9489 = vld [vmem:[#allocation3 + $0x308] sm:$0xff]
        %v9490 = vld [vmem:[#allocation3 + $0x328] sm:$0xff]
        %v9491 = vld [vmem:[#allocation3 + $0x348] sm:$0xff]
        %v9492 = vld [vmem:[#allocation3 + $0x368] sm:$0xff]
        %v9493 = vld [vmem:[#allocation3 + $0x388] sm:$0xff]
        %v9494 = vld [vmem:[#allocation3 + $0x3a8] sm:$0xff]
        %v9495 = vld [vmem:[#allocation3 + $0x3c8] sm:$0xff]
        %v9496 = vld [vmem:[#allocation3 + $0x3e8] sm:$0xff]
        %v9497 = vmul.f32 %v9462, %v9489
        %v9498 = vmul.f32 %v9462, %v9490
        %v9499 = vmul.f32 %v9462, %v9491
        %v9500 = vmul.f32 %v9462, %v9492
        %v9501 = vmul.f32 %v9462, %v9493
        %v9502 = vmul.f32 %v9462, %v9494
        %v9503 = vmul.f32 %v9462, %v9495
        %v9504 = vmul.f32 %v9462, %v9496
        %v9505 = vadd.f32 %v9481, %v9497
        %v9506 = vadd.f32 %v9482, %v9498
        %v9507 = vadd.f32 %v9483, %v9499
        %v9508 = vadd.f32 %v9484, %v9500
        %v9509 = vadd.f32 %v9485, %v9501
        %v9510 = vadd.f32 %v9486, %v9502
        %v9511 = vadd.f32 %v9487, %v9503
        %v9512 = vadd.f32 %v9488, %v9504
        %v9513 = vld [vmem:[#allocation3 + $0x310] sm:$0xff]
        %v9514 = vld [vmem:[#allocation3 + $0x330] sm:$0xff]
        %v9515 = vld [vmem:[#allocation3 + $0x350] sm:$0xff]
        %v9516 = vld [vmem:[#allocation3 + $0x370] sm:$0xff]
        %v9517 = vld [vmem:[#allocation3 + $0x390] sm:$0xff]
        %v9518 = vld [vmem:[#allocation3 + $0x3b0] sm:$0xff]
        %v9519 = vld [vmem:[#allocation3 + $0x3d0] sm:$0xff]
        %v9520 = vld [vmem:[#allocation3 + $0x3f0] sm:$0xff]
        %v9521 = vmul.f32 %v9466, %v9513
        %v9522 = vmul.f32 %v9466, %v9514
        %v9523 = vmul.f32 %v9466, %v9515
        %v9524 = vmul.f32 %v9466, %v9516
        %v9525 = vmul.f32 %v9466, %v9517
        %v9526 = vmul.f32 %v9466, %v9518
        %v9527 = vmul.f32 %v9466, %v9519
        %v9528 = vmul.f32 %v9466, %v9520
        %v9529 = vadd.f32 %v9505, %v9521
        %v9530 = vadd.f32 %v9506, %v9522
        %v9531 = vadd.f32 %v9507, %v9523
        %v9532 = vadd.f32 %v9508, %v9524
        %v9533 = vadd.f32 %v9509, %v9525
        %v9534 = vadd.f32 %v9510, %v9526
        %v9535 = vadd.f32 %v9511, %v9527
        %v9536 = vadd.f32 %v9512, %v9528
        %v9537 = vld [vmem:[#allocation3 + $0x318] sm:$0xff]
        %v9538 = vld [vmem:[#allocation3 + $0x338] sm:$0xff]
        %v9539 = vld [vmem:[#allocation3 + $0x358] sm:$0xff]
        %v9540 = vld [vmem:[#allocation3 + $0x378] sm:$0xff]
        %v9541 = vld [vmem:[#allocation3 + $0x398] sm:$0xff]
        %v9542 = vld [vmem:[#allocation3 + $0x3b8] sm:$0xff]
        %v9543 = vld [vmem:[#allocation3 + $0x3d8] sm:$0xff]
        %v9544 = vld [vmem:[#allocation3 + $0x3f8] sm:$0xff]
        %v9545 = vmul.f32 %v9470, %v9537
        %v9546 = vmul.f32 %v9470, %v9538
        %v9547 = vmul.f32 %v9470, %v9539
        %v9548 = vmul.f32 %v9470, %v9540
        %v9549 = vmul.f32 %v9470, %v9541
        %v9550 = vmul.f32 %v9470, %v9542
        %v9551 = vmul.f32 %v9470, %v9543
        %v9552 = vmul.f32 %v9470, %v9544
        %v9553 = vadd.f32 %v9529, %v9545
        %v9554 = vadd.f32 %v9530, %v9546
        %v9555 = vadd.f32 %v9531, %v9547
        %v9556 = vadd.f32 %v9532, %v9548
        %v9557 = vadd.f32 %v9533, %v9549
        %v9558 = vadd.f32 %v9534, %v9550
        %v9559 = vadd.f32 %v9535, %v9551
        %v9560 = vadd.f32 %v9536, %v9552
        %v9561 = vperm.slane %v9472, 0
        %v9562 = vadd.f32 %v9553, %v9561
        %v9563 = vadd.f32 %v9554, %v9561
        %v9564 = vadd.f32 %v9555, %v9561
        %v9565 = vadd.f32 %v9556, %v9561
        %v9566 = vadd.f32 %v9557, %v9561
        %v9567 = vadd.f32 %v9558, %v9561
        %v9568 = vadd.f32 %v9559, %v9561
        %v9569 = vadd.f32 %v9560, %v9561
        %s9570 = scalar_lea.vmem %s207, 192 [#allocation11]
        %9571 = vst [vmem:[%s9570] sm:$0xff] %v9562
        %9572 = vst [vmem:[%s9570 + $0x8] sm:$0xff] %v9563
        %9573 = vst [vmem:[%s9570 + $0x10] sm:$0xff] %v9564
        %9574 = vst [vmem:[%s9570 + $0x18] sm:$0xff] %v9565
        %9575 = vst [vmem:[%s9570 + $0x20] sm:$0xff] %v9566
        %9576 = vst [vmem:[%s9570 + $0x28] sm:$0xff] %v9567
        %9577 = vst [vmem:[%s9570 + $0x30] sm:$0xff] %v9568
        %9578 = vst [vmem:[%s9570 + $0x38] sm:$0xff] %v9569
        %s9579 = sand.u32 %s104, 1
        %s9580 = scalar_lea.sflag [#allocation8], %s9579
        %s9581 = sand.u32 %s104, 1
        %s9582 = smul.addr %s9581, 256
        %s9583 = scalar_lea.vmem [#allocation11], %s9582
        // Predicated region
        $region41: #{tpu_custom_call.1} parent=31 // pred_check
          %p9584 = pneg %p114
        $region42: #{tpu_custom_call.1} parent=31 // pred_check_branch
          %9586 = sbr.rel (%p9584) target = $region44
        $region43: #{tpu_custom_call.1} parent=31 // pred_region
          %s9587 = smul.u32 4, %s28
          %9589 = vsyncadd %s9580, 0
          %s9590 = smul.addr %s9587, 8
          %s9591 = smul.addr %s9590, 8
          %s9592 = scalar_lea.hbm %s4, %s9591
          %s9593 = sshll.u32 %s9583, 4
          %s9594 = int_to_ptr.vmem [resolvable:$true] %s9593
          %s9595 = sshll.u32 %s9592, 4
          %s9596 = int_to_ptr.hbm [resolvable:$true] %s9595
          %9601 = dma.vmem_to_hbm [thread:$0]  %s9594, 4096, %s9596, %s9580, 128, 128, 8
        $region44: #{tpu_custom_call.1} parent=31 // pred_fallthru
          _
      $region32: #{tpu_custom_call.1} parent=5 // pred_fallthru
        _
      %p9602 = scmp.le.s32.totalorder 2, %s23
      // Predicated region
      $region45: #{tpu_custom_call.1} parent=5 // pred_check
        %p9603 = pneg %p9602
      $region46: #{tpu_custom_call.1} parent=5 // pred_check_branch
        %9605 = sbr.rel (%p9603) target = $region48
      $region47: #{tpu_custom_call.1} parent=5 // pred_region
        %s9606 = ssub.s32 %s23, 2
        // Predicated region
        $region49: #{tpu_custom_call.1} parent=47 // pred_check
          %p9607 = pneg %p120
        $region50: #{tpu_custom_call.1} parent=47 // pred_check_branch
          %9609 = sbr.rel (%p9607) target = $region52
        $region51: #{tpu_custom_call.1} parent=47 // pred_region
          %s9610 = sand.u32 %s105, 1
          %s9611 = scalar_lea.sflag [#allocation8], %s9610
          %s9612 = sand.u32 %s105, 1
          %s9613 = smul.addr %s9612, 256
          %s9614 = scalar_lea.vmem [#allocation11], %s9613
          %9616 = dma.done %s9611, 4096
        $region52: #{tpu_custom_call.1} parent=47 // pred_fallthru
          _
      $region48: #{tpu_custom_call.1} parent=5 // pred_fallthru
        _
    $region6: #{tpu_custom_call.1} parent=1 // loop_footer
      %s27 = sadd.s32 1, %s23
    $region7: #{tpu_custom_call.1} parent=1 // loop_footer_branch
      %22 = sbr.rel target = $region3
    $region8: #{tpu_custom_call.1} parent=1 // loop_exit
      _
    %9617 = vsyncpa [#allocation7], 1
    %s9618 = scalar_lea.sflag [#allocation7], 1
    %9619 = vsyncpa %s9618, 1
    %9620 = vsyncpa [#allocation10], 1
    %9621 = vsyncpa [#allocation8], 1
    %s9622 = scalar_lea.sflag [#allocation8], 1
    %9623 = vsyncpa %s9622, 1

</llo_original>
